<compile_context>
chip_gen: v7x
topology: tpu7x:2x2x1
jax: 0.10.0
libtpu: 0.0.40
codegen_flags: <defaults>
</compile_context>

<pallas_src>
import functools

import jax
import jax.numpy as jnp
from jax.experimental import pallas as pl
from jax.experimental.pallas import tpu as pltpu


def _conv_rows_kernel(x_ref, w_ref, b_ref, o_ref, *, KH, KW, TH, Wout, stride):
    # x_ref: (1, Hp, Wp, C)   padded NHWC image (bf16), resident across the row axis
    # w_ref: (KH, KW, C, O8)  weights (bf16), tap-major
    # b_ref: (1, O8)          bias (f32, zeros in padded channels)
    # o_ref: (1, O8, TM)      lane-dense output tile, TM = TH * Wout
    C = x_ref.shape[-1]
    O8 = o_ref.shape[1]
    TM = TH * Wout

    row0 = pl.program_id(1) * (TH * stride)      # first padded input row of this tile
    span = (TH - 1) * stride + 1                 # input rows needed per (kh) tap
    w_all = w_ref[...]                           # (KH, KW, C, O8)

    acc = jnp.zeros((TM, O8), jnp.float32)
    for kh in range(KH):
        rows = x_ref[0, pl.ds(row0 + kh, span), :, :]              # (span, Wp, C)
        for kw in range(KW):
            tap = rows[::stride, kw:kw + (Wout - 1) * stride + 1:stride, :]  # (TH, Wout, C)
            acc += jnp.dot(tap.reshape(TM, C), w_all[kh, kw],
                           preferred_element_type=jnp.float32)
    acc += b_ref[...]                                              # broadcast (1, O8)
    # (TM, O8) -> (O8, TM): one small XLU transpose, then a full-lane vst.
    o_ref[0] = jnp.transpose(acc, (1, 0)).astype(o_ref.dtype)


def _pick_block_rows(hout, wout, target_rows):
    """Largest row-block TH with TH | Hout and (TH*Wout) lane-aligned, capped by target."""
    max_th = max(1, target_rows // max(wout, 1))
    if max_th >= hout:
        return hout
    for th in range(max_th, 0, -1):
        if hout % th == 0 and (th * wout) % 128 == 0:
            return th
    return hout  # fallback: whole image in one tile (always correct)


def _pick_vmem_limit():
    try:
        cap = pltpu.get_tpu_info().vmem_capacity_bytes
    except Exception:
        return 32 * 1024 * 1024          # known-safe scoped limit on all generations
    return int(min(100 * 1024 * 1024, (cap * 3) // 4))


def conv2d_same(x_nchw, weight_ochw, bias_o=None, *, stride=1, block_rows=512,
                compute_dtype=jnp.bfloat16):
    """Zero-padded conv matching nn.Conv2d(..., padding=kernel_size // 2, stride=stride).

    x_nchw:      (N, C, H, W)   float32
    weight_ochw: (O, C, KH, KW) float32 (PyTorch layout)
    bias_o:      (O,) float32 or None
    """
    N, C, H, W = x_nchw.shape
    O, C_w, KH, KW = weight_ochw.shape
    assert C_w == C, "channel mismatch"
    assert stride >= 1
    pad_h, pad_w = KH // 2, KW // 2

    # PyTorch output-size formula (handles even kernels and stride > 1).
    Hout = (H + 2 * pad_h - KH) // stride + 1
    Wout = (W + 2 * pad_w - KW) // stride + 1
    M = Hout * Wout
    Hp, Wp = H + 2 * pad_h, W + 2 * pad_w

    O8 = ((O + 7) // 8) * 8              # sublane-align out channels (NOT 128-lane pad)

    if bias_o is None:
        bias_o = jnp.zeros((O,), jnp.float32)

    # ---- wrapper glue (one fused XLA pass): pad, NCHW->NHWC, cast to bf16 ----
    xp = jnp.pad(x_nchw, ((0, 0), (0, 0), (pad_h, pad_h), (pad_w, pad_w)))
    xp = jnp.transpose(xp, (0, 2, 3, 1)).astype(compute_dtype)    # (N, Hp, Wp, C)

    # Weights -> (KH, KW, C, O8) bf16; bias -> (1, O8) f32 (zeros in padded cols).
    w = jnp.transpose(weight_ochw, (2, 3, 1, 0))
    w = jnp.pad(w, ((0, 0), (0, 0), (0, 0), (0, O8 - O))).astype(compute_dtype)
    b = jnp.pad(bias_o.astype(jnp.float32), (0, O8 - O)).reshape(1, O8)

    TH = _pick_block_rows(Hout, Wout, block_rows)
    TM = TH * Wout
    num_h = Hout // TH

    kernel = functools.partial(_conv_rows_kernel, KH=KH, KW=KW, TH=TH,
                               Wout=Wout, stride=stride)

    def build(single_buffer_consts):
        const_kw = dict(pipeline_mode=pl.Buffered(1)) if single_buffer_consts else {}
        return pl.pallas_call(
            kernel,
            out_shape=jax.ShapeDtypeStruct((N, O8, M), x_nchw.dtype),
            grid_spec=pltpu.PrefetchScalarGridSpec(
                num_scalar_prefetch=0,
                grid=(N, num_h),
                in_specs=[
                    # Whole padded image per n; block index constant over the row axis
                    # -> fetched from HBM exactly once per batch element.
                    pl.BlockSpec((1, Hp, Wp, C), lambda n, h: (n, 0, 0, 0)),
                    pl.BlockSpec((KH, KW, C, O8), lambda n, h: (0, 0, 0, 0), **const_kw),
                    pl.BlockSpec((1, O8), lambda n, h: (0, 0), **const_kw),
                ],
                out_specs=pl.BlockSpec((1, O8, TM), lambda n, h: (n, 0, h)),
            ),
            compiler_params=pltpu.CompilerParams(
                dimension_semantics=("parallel", "parallel"),
                vmem_limit_bytes=_pick_vmem_limit(),
            ),
        )

    try:
        out = build(True)(xp, w, b)      # single-buffered constant blocks (saves VMEM)
    except Exception:
        out = build(False)(xp, w, b)     # fallback: default double-buffering

    if O8 != O:
        out = out[:, :O, :]
    # (N, O, Hout*Wout) -> (N, O, Hout, Wout) is a free view (no transpose/HBM pass).
    return out.reshape(N, O, Hout, Wout)


if __name__ == "__main__":
    # Conv2dSame(in_channels=4, out_channels=8, kernel_size=3, bias=True, stride=1)
    N, C, H, W = 2, 4, 16, 16
    O, K = 8, 3

    key = jax.random.PRNGKey(0)
    kx, kw, kb = jax.random.split(key, 3)
    x = jax.random.normal(kx, (N, C, H, W), dtype=jnp.float32)
    weight = jax.random.normal(kw, (O, C, K, K), dtype=jnp.float32) * 0.1
    bias = jax.random.normal(kb, (O,), dtype=jnp.float32) * 0.1

    out = conv2d_same(x, weight, bias, stride=1)
    out = jax.block_until_ready(out)

    # Reference: XLA conv with the same semantics as nn.Conv2d(padding=k//2).
    ref = jax.lax.conv_general_dilated(
        x, weight,
        window_strides=(1, 1),
        padding=((K // 2, K // 2), (K // 2, K // 2)),
        dimension_numbers=("NCHW", "OIHW", "NCHW"),
    ) + bias[None, :, None, None]
    ref = jax.block_until_ready(ref)

    assert out.shape == (N, O, H, W), out.shape
    # bf16 compute path -> relaxed tolerance (f32 accumulation keeps it tight).
    err = float(jnp.max(jnp.abs(out - ref)))
    assert jnp.allclose(out, ref, atol=3e-2, rtol=3e-2), err

    print("KERNEL_OK")
</pallas_src>

<mosaic_0001>
module attributes {stable_mosaic.version = 11 : i64} {
  func.func @_conv_rows_kernel(%arg0: i32, %arg1: i32, %arg2: memref<1x18x18x4xbf16, #tpu.memory_space<vmem>>, %arg3: memref<3x3x4x8xbf16, #tpu.memory_space<vmem>>, %arg4: memref<1x8xf32, #tpu.memory_space<vmem>>, %arg5: memref<1x8x256xf32, #tpu.memory_space<vmem>>) attributes {dimension_semantics = [#tpu.dimension_semantics<parallel>, #tpu.dimension_semantics<parallel>], iteration_bounds = array<i64: 2, 1>, scalar_prefetch = 0 : i64, scratch_operands = 0 : i64, tpu.core_type = #tpu.core_type<tc>, window_params = [{transform_indices = @transform_0, window_bounds = array<i64: 1, 18, 18, 4>}, {pipeline_mode = #tpu.pipeline_mode<synchronous>, transform_indices = @transform_1, window_bounds = array<i64: 3, 3, 4, 8>}, {pipeline_mode = #tpu.pipeline_mode<synchronous>, transform_indices = @transform_2, window_bounds = array<i64: 1, 8>}, {transform_indices = @transform_3, window_bounds = array<i64: 1, 8, 256>}]} {
    %c16_i32 = arith.constant 16 : i32
    %0 = arith.muli %arg1, %c16_i32 : i32
    %c0 = arith.constant 0 : index
    %c0_0 = arith.constant 0 : index
    %c0_1 = arith.constant 0 : index
    %c0_2 = arith.constant 0 : index
    %1 = vector.load %arg3[%c0, %c0_0, %c0_1, %c0_2] : memref<3x3x4x8xbf16, #tpu.memory_space<vmem>>, vector<3x3x4x8xbf16>
    %cst = arith.constant 0.000000e+00 : f32
    %2 = vector.broadcast %cst : f32 to vector<256x8xf32>
    %c0_i32 = arith.constant 0 : i32
    %3 = arith.addi %0, %c0_i32 : i32
    %c0_3 = arith.constant 0 : index
    %4 = arith.index_cast %3 : i32 to index
    %c0_4 = arith.constant 0 : index
    %c0_5 = arith.constant 0 : index
    %5 = vector.load %arg2[%c0_3, %4, %c0_4, %c0_5] : memref<1x18x18x4xbf16, #tpu.memory_space<vmem>>, vector<1x16x18x4xbf16>
    %6 = vector.shape_cast %5 : vector<1x16x18x4xbf16> to vector<16x18x4xbf16>
    %7 = vector.extract_strided_slice %6 {offsets = [0, 0, 0], sizes = [16, 16, 4], strides = [1, 1, 1]} : vector<16x18x4xbf16> to vector<16x16x4xbf16>
    %8 = vector.shape_cast %7 : vector<16x16x4xbf16> to vector<256x4xbf16>
    %9 = vector.extract_strided_slice %1 {offsets = [0, 0, 0, 0], sizes = [1, 1, 4, 8], strides = [1, 1, 1, 1]} : vector<3x3x4x8xbf16> to vector<1x1x4x8xbf16>
    %10 = vector.shape_cast %9 : vector<1x1x4x8xbf16> to vector<4x8xbf16>
    %cst_6 = arith.constant dense<0.000000e+00> : vector<256x8xf32>
    %11 = tpu.matmul %8, %10, %cst_6 {dimension_numbers = #tpu.dot_dimension_numbers<[1], [0], [0], [1], [0, 0, 1, 1], [], []>} : vector<256x4xbf16>, vector<4x8xbf16>, vector<256x8xf32> -> vector<256x8xf32>
    %12 = arith.addf %2, %11 : vector<256x8xf32>
    %13 = vector.extract_strided_slice %6 {offsets = [0, 1, 0], sizes = [16, 16, 4], strides = [1, 1, 1]} : vector<16x18x4xbf16> to vector<16x16x4xbf16>
    %14 = vector.shape_cast %13 : vector<16x16x4xbf16> to vector<256x4xbf16>
    %15 = vector.extract_strided_slice %1 {offsets = [0, 1, 0, 0], sizes = [1, 1, 4, 8], strides = [1, 1, 1, 1]} : vector<3x3x4x8xbf16> to vector<1x1x4x8xbf16>
    %16 = vector.shape_cast %15 : vector<1x1x4x8xbf16> to vector<4x8xbf16>
    %cst_7 = arith.constant dense<0.000000e+00> : vector<256x8xf32>
    %17 = tpu.matmul %14, %16, %cst_7 {dimension_numbers = #tpu.dot_dimension_numbers<[1], [0], [0], [1], [0, 0, 1, 1], [], []>} : vector<256x4xbf16>, vector<4x8xbf16>, vector<256x8xf32> -> vector<256x8xf32>
    %18 = arith.addf %12, %17 : vector<256x8xf32>
    %19 = vector.extract_strided_slice %6 {offsets = [0, 2, 0], sizes = [16, 16, 4], strides = [1, 1, 1]} : vector<16x18x4xbf16> to vector<16x16x4xbf16>
    %20 = vector.shape_cast %19 : vector<16x16x4xbf16> to vector<256x4xbf16>
    %21 = vector.extract_strided_slice %1 {offsets = [0, 2, 0, 0], sizes = [1, 1, 4, 8], strides = [1, 1, 1, 1]} : vector<3x3x4x8xbf16> to vector<1x1x4x8xbf16>
    %22 = vector.shape_cast %21 : vector<1x1x4x8xbf16> to vector<4x8xbf16>
    %cst_8 = arith.constant dense<0.000000e+00> : vector<256x8xf32>
    %23 = tpu.matmul %20, %22, %cst_8 {dimension_numbers = #tpu.dot_dimension_numbers<[1], [0], [0], [1], [0, 0, 1, 1], [], []>} : vector<256x4xbf16>, vector<4x8xbf16>, vector<256x8xf32> -> vector<256x8xf32>
    %24 = arith.addf %18, %23 : vector<256x8xf32>
    %c1_i32 = arith.constant 1 : i32
    %25 = arith.addi %0, %c1_i32 : i32
    %c0_9 = arith.constant 0 : index
    %26 = arith.index_cast %25 : i32 to index
    %c0_10 = arith.constant 0 : index
    %c0_11 = arith.constant 0 : index
    %27 = vector.load %arg2[%c0_9, %26, %c0_10, %c0_11] : memref<1x18x18x4xbf16, #tpu.memory_space<vmem>>, vector<1x16x18x4xbf16>
    %28 = vector.shape_cast %27 : vector<1x16x18x4xbf16> to vector<16x18x4xbf16>
    %29 = vector.extract_strided_slice %28 {offsets = [0, 0, 0], sizes = [16, 16, 4], strides = [1, 1, 1]} : vector<16x18x4xbf16> to vector<16x16x4xbf16>
    %30 = vector.shape_cast %29 : vector<16x16x4xbf16> to vector<256x4xbf16>
    %31 = vector.extract_strided_slice %1 {offsets = [1, 0, 0, 0], sizes = [1, 1, 4, 8], strides = [1, 1, 1, 1]} : vector<3x3x4x8xbf16> to vector<1x1x4x8xbf16>
    %32 = vector.shape_cast %31 : vector<1x1x4x8xbf16> to vector<4x8xbf16>
    %cst_12 = arith.constant dense<0.000000e+00> : vector<256x8xf32>
    %33 = tpu.matmul %30, %32, %cst_12 {dimension_numbers = #tpu.dot_dimension_numbers<[1], [0], [0], [1], [0, 0, 1, 1], [], []>} : vector<256x4xbf16>, vector<4x8xbf16>, vector<256x8xf32> -> vector<256x8xf32>
    %34 = arith.addf %24, %33 : vector<256x8xf32>
    %35 = vector.extract_strided_slice %28 {offsets = [0, 1, 0], sizes = [16, 16, 4], strides = [1, 1, 1]} : vector<16x18x4xbf16> to vector<16x16x4xbf16>
    %36 = vector.shape_cast %35 : vector<16x16x4xbf16> to vector<256x4xbf16>
    %37 = vector.extract_strided_slice %1 {offsets = [1, 1, 0, 0], sizes = [1, 1, 4, 8], strides = [1, 1, 1, 1]} : vector<3x3x4x8xbf16> to vector<1x1x4x8xbf16>
    %38 = vector.shape_cast %37 : vector<1x1x4x8xbf16> to vector<4x8xbf16>
    %cst_13 = arith.constant dense<0.000000e+00> : vector<256x8xf32>
    %39 = tpu.matmul %36, %38, %cst_13 {dimension_numbers = #tpu.dot_dimension_numbers<[1], [0], [0], [1], [0, 0, 1, 1], [], []>} : vector<256x4xbf16>, vector<4x8xbf16>, vector<256x8xf32> -> vector<256x8xf32>
    %40 = arith.addf %34, %39 : vector<256x8xf32>
    %41 = vector.extract_strided_slice %28 {offsets = [0, 2, 0], sizes = [16, 16, 4], strides = [1, 1, 1]} : vector<16x18x4xbf16> to vector<16x16x4xbf16>
    %42 = vector.shape_cast %41 : vector<16x16x4xbf16> to vector<256x4xbf16>
    %43 = vector.extract_strided_slice %1 {offsets = [1, 2, 0, 0], sizes = [1, 1, 4, 8], strides = [1, 1, 1, 1]} : vector<3x3x4x8xbf16> to vector<1x1x4x8xbf16>
    %44 = vector.shape_cast %43 : vector<1x1x4x8xbf16> to vector<4x8xbf16>
    %cst_14 = arith.constant dense<0.000000e+00> : vector<256x8xf32>
    %45 = tpu.matmul %42, %44, %cst_14 {dimension_numbers = #tpu.dot_dimension_numbers<[1], [0], [0], [1], [0, 0, 1, 1], [], []>} : vector<256x4xbf16>, vector<4x8xbf16>, vector<256x8xf32> -> vector<256x8xf32>
    %46 = arith.addf %40, %45 : vector<256x8xf32>
    %c2_i32 = arith.constant 2 : i32
    %47 = arith.addi %0, %c2_i32 : i32
    %c0_15 = arith.constant 0 : index
    %48 = arith.index_cast %47 : i32 to index
    %c0_16 = arith.constant 0 : index
    %c0_17 = arith.constant 0 : index
    %49 = vector.load %arg2[%c0_15, %48, %c0_16, %c0_17] : memref<1x18x18x4xbf16, #tpu.memory_space<vmem>>, vector<1x16x18x4xbf16>
    %50 = vector.shape_cast %49 : vector<1x16x18x4xbf16> to vector<16x18x4xbf16>
    %51 = vector.extract_strided_slice %50 {offsets = [0, 0, 0], sizes = [16, 16, 4], strides = [1, 1, 1]} : vector<16x18x4xbf16> to vector<16x16x4xbf16>
    %52 = vector.shape_cast %51 : vector<16x16x4xbf16> to vector<256x4xbf16>
    %53 = vector.extract_strided_slice %1 {offsets = [2, 0, 0, 0], sizes = [1, 1, 4, 8], strides = [1, 1, 1, 1]} : vector<3x3x4x8xbf16> to vector<1x1x4x8xbf16>
    %54 = vector.shape_cast %53 : vector<1x1x4x8xbf16> to vector<4x8xbf16>
    %cst_18 = arith.constant dense<0.000000e+00> : vector<256x8xf32>
    %55 = tpu.matmul %52, %54, %cst_18 {dimension_numbers = #tpu.dot_dimension_numbers<[1], [0], [0], [1], [0, 0, 1, 1], [], []>} : vector<256x4xbf16>, vector<4x8xbf16>, vector<256x8xf32> -> vector<256x8xf32>
    %56 = arith.addf %46, %55 : vector<256x8xf32>
    %57 = vector.extract_strided_slice %50 {offsets = [0, 1, 0], sizes = [16, 16, 4], strides = [1, 1, 1]} : vector<16x18x4xbf16> to vector<16x16x4xbf16>
    %58 = vector.shape_cast %57 : vector<16x16x4xbf16> to vector<256x4xbf16>
    %59 = vector.extract_strided_slice %1 {offsets = [2, 1, 0, 0], sizes = [1, 1, 4, 8], strides = [1, 1, 1, 1]} : vector<3x3x4x8xbf16> to vector<1x1x4x8xbf16>
    %60 = vector.shape_cast %59 : vector<1x1x4x8xbf16> to vector<4x8xbf16>
    %cst_19 = arith.constant dense<0.000000e+00> : vector<256x8xf32>
    %61 = tpu.matmul %58, %60, %cst_19 {dimension_numbers = #tpu.dot_dimension_numbers<[1], [0], [0], [1], [0, 0, 1, 1], [], []>} : vector<256x4xbf16>, vector<4x8xbf16>, vector<256x8xf32> -> vector<256x8xf32>
    %62 = arith.addf %56, %61 : vector<256x8xf32>
    %63 = vector.extract_strided_slice %50 {offsets = [0, 2, 0], sizes = [16, 16, 4], strides = [1, 1, 1]} : vector<16x18x4xbf16> to vector<16x16x4xbf16>
    %64 = vector.shape_cast %63 : vector<16x16x4xbf16> to vector<256x4xbf16>
    %65 = vector.extract_strided_slice %1 {offsets = [2, 2, 0, 0], sizes = [1, 1, 4, 8], strides = [1, 1, 1, 1]} : vector<3x3x4x8xbf16> to vector<1x1x4x8xbf16>
    %66 = vector.shape_cast %65 : vector<1x1x4x8xbf16> to vector<4x8xbf16>
    %cst_20 = arith.constant dense<0.000000e+00> : vector<256x8xf32>
    %67 = tpu.matmul %64, %66, %cst_20 {dimension_numbers = #tpu.dot_dimension_numbers<[1], [0], [0], [1], [0, 0, 1, 1], [], []>} : vector<256x4xbf16>, vector<4x8xbf16>, vector<256x8xf32> -> vector<256x8xf32>
    %68 = arith.addf %62, %67 : vector<256x8xf32>
    %c0_21 = arith.constant 0 : index
    %c0_22 = arith.constant 0 : index
    %69 = vector.load %arg4[%c0_21, %c0_22] : memref<1x8xf32, #tpu.memory_space<vmem>>, vector<1x8xf32>
    %70 = vector.broadcast %69 : vector<1x8xf32> to vector<256x8xf32>
    %71 = arith.addf %68, %70 : vector<256x8xf32>
    %72 = tpu.transpose %71, [1, 0] : vector<256x8xf32> -> vector<8x256xf32>
    %c0_23 = arith.constant 0 : index
    %c0_24 = arith.constant 0 : index
    %c0_25 = arith.constant 0 : index
    %73 = vector.load %arg5[%c0_23, %c0_24, %c0_25] : memref<1x8x256xf32, #tpu.memory_space<vmem>>, vector<1x8x256xf32>
    %74 = vector.shape_cast %73 : vector<1x8x256xf32> to vector<8x256xf32>
    %75 = vector.shape_cast %72 : vector<8x256xf32> to vector<1x8x256xf32>
    tpu.vector_store %arg5[%c0_23, %c0_24, %c0_25], %75 {strides = array<i32>} : memref<1x8x256xf32, #tpu.memory_space<vmem>>, vector<1x8x256xf32>,
    return
  }
  func.func @transform_0(%arg0: i32, %arg1: i32) -> (i32, i32, i32, i32) {
    %c0_i32 = arith.constant 0 : i32
    %c0_i32_0 = arith.constant 0 : i32
    %c0_i32_1 = arith.constant 0 : i32
    %c0_i32_2 = arith.constant 0 : i32
    return %arg0, %c0_i32, %c0_i32_0, %c0_i32_1 : i32, i32, i32, i32
  }
  func.func @transform_1(%arg0: i32, %arg1: i32) -> (i32, i32, i32, i32) {
    %c0_i32 = arith.constant 0 : i32
    %c0_i32_0 = arith.constant 0 : i32
    %c0_i32_1 = arith.constant 0 : i32
    %c0_i32_2 = arith.constant 0 : i32
    %c0_i32_3 = arith.constant 0 : i32
    return %c0_i32, %c0_i32_0, %c0_i32_1, %c0_i32_2 : i32, i32, i32, i32
  }
  func.func @transform_2(%arg0: i32, %arg1: i32) -> (i32, i32) {
    %c0_i32 = arith.constant 0 : i32
    %c0_i32_0 = arith.constant 0 : i32
    %c0_i32_1 = arith.constant 0 : i32
    return %c0_i32, %c0_i32_0 : i32, i32
  }
  func.func @transform_3(%arg0: i32, %arg1: i32) -> (i32, i32, i32) {
    %c0_i32 = arith.constant 0 : i32
    %c0_i32_0 = arith.constant 0 : i32
    return %arg0, %c0_i32, %arg1 : i32, i32, i32
  }
}

module attributes {stable_mosaic.version = 11 : i64} {
  func.func @_conv_rows_kernel(%arg0: i32, %arg1: i32, %arg2: memref<1x18x18x4xbf16, #tpu.memory_space<vmem>>, %arg3: memref<3x3x4x8xbf16, #tpu.memory_space<vmem>>, %arg4: memref<1x8xf32, #tpu.memory_space<vmem>>, %arg5: memref<1x8x256xf32, #tpu.memory_space<vmem>>) attributes {dimension_semantics = [#tpu.dimension_semantics<parallel>, #tpu.dimension_semantics<parallel>], iteration_bounds = array<i64: 2, 1>, scalar_prefetch = 0 : i64, scratch_operands = 0 : i64, tpu.core_type = #tpu.core_type<tc>, window_params = [{transform_indices = @transform_0, window_bounds = array<i64: 1, 18, 18, 4>}, {pipeline_mode = #tpu.pipeline_mode<synchronous>, transform_indices = @transform_1, window_bounds = array<i64: 3, 3, 4, 8>}, {pipeline_mode = #tpu.pipeline_mode<synchronous>, transform_indices = @transform_2, window_bounds = array<i64: 1, 8>}, {transform_indices = @transform_3, window_bounds = array<i64: 1, 8, 256>}]} {
    %c16_i32 = arith.constant 16 : i32
    %0 = arith.muli %arg1, %c16_i32 : i32
    %c0 = arith.constant 0 : index
    %c0_0 = arith.constant 0 : index
    %c0_1 = arith.constant 0 : index
    %c0_2 = arith.constant 0 : index
    %1 = vector.load %arg3[%c0, %c0_0, %c0_1, %c0_2] : memref<3x3x4x8xbf16, #tpu.memory_space<vmem>>, vector<3x3x4x8xbf16>
    %cst = arith.constant 0.000000e+00 : f32
    %2 = vector.broadcast %cst : f32 to vector<256x8xf32>
    %c0_i32 = arith.constant 0 : i32
    %3 = arith.addi %0, %c0_i32 : i32
    %c0_3 = arith.constant 0 : index
    %4 = arith.index_cast %3 : i32 to index
    %c0_4 = arith.constant 0 : index
    %c0_5 = arith.constant 0 : index
    %5 = vector.load %arg2[%c0_3, %4, %c0_4, %c0_5] : memref<1x18x18x4xbf16, #tpu.memory_space<vmem>>, vector<1x16x18x4xbf16>
    %6 = vector.shape_cast %5 : vector<1x16x18x4xbf16> to vector<16x18x4xbf16>
    %7 = vector.extract_strided_slice %6 {offsets = [0, 0, 0], sizes = [16, 16, 4], strides = [1, 1, 1]} : vector<16x18x4xbf16> to vector<16x16x4xbf16>
    %8 = vector.shape_cast %7 : vector<16x16x4xbf16> to vector<256x4xbf16>
    %9 = vector.extract_strided_slice %1 {offsets = [0, 0, 0, 0], sizes = [1, 1, 4, 8], strides = [1, 1, 1, 1]} : vector<3x3x4x8xbf16> to vector<1x1x4x8xbf16>
    %10 = vector.shape_cast %9 : vector<1x1x4x8xbf16> to vector<4x8xbf16>
    %cst_6 = arith.constant dense<0.000000e+00> : vector<256x8xf32>
    %11 = tpu.matmul %8, %10, %cst_6 {dimension_numbers = #tpu.dot_dimension_numbers<[1], [0], [0], [1], [0, 0, 1, 1], [], []>} : vector<256x4xbf16>, vector<4x8xbf16>, vector<256x8xf32> -> vector<256x8xf32>
    %12 = arith.addf %2, %11 : vector<256x8xf32>
    %13 = vector.extract_strided_slice %6 {offsets = [0, 1, 0], sizes = [16, 16, 4], strides = [1, 1, 1]} : vector<16x18x4xbf16> to vector<16x16x4xbf16>
    %14 = vector.shape_cast %13 : vector<16x16x4xbf16> to vector<256x4xbf16>
    %15 = vector.extract_strided_slice %1 {offsets = [0, 1, 0, 0], sizes = [1, 1, 4, 8], strides = [1, 1, 1, 1]} : vector<3x3x4x8xbf16> to vector<1x1x4x8xbf16>
    %16 = vector.shape_cast %15 : vector<1x1x4x8xbf16> to vector<4x8xbf16>
    %cst_7 = arith.constant dense<0.000000e+00> : vector<256x8xf32>
    %17 = tpu.matmul %14, %16, %cst_7 {dimension_numbers = #tpu.dot_dimension_numbers<[1], [0], [0], [1], [0, 0, 1, 1], [], []>} : vector<256x4xbf16>, vector<4x8xbf16>, vector<256x8xf32> -> vector<256x8xf32>
    %18 = arith.addf %12, %17 : vector<256x8xf32>
    %19 = vector.extract_strided_slice %6 {offsets = [0, 2, 0], sizes = [16, 16, 4], strides = [1, 1, 1]} : vector<16x18x4xbf16> to vector<16x16x4xbf16>
    %20 = vector.shape_cast %19 : vector<16x16x4xbf16> to vector<256x4xbf16>
    %21 = vector.extract_strided_slice %1 {offsets = [0, 2, 0, 0], sizes = [1, 1, 4, 8], strides = [1, 1, 1, 1]} : vector<3x3x4x8xbf16> to vector<1x1x4x8xbf16>
    %22 = vector.shape_cast %21 : vector<1x1x4x8xbf16> to vector<4x8xbf16>
    %cst_8 = arith.constant dense<0.000000e+00> : vector<256x8xf32>
    %23 = tpu.matmul %20, %22, %cst_8 {dimension_numbers = #tpu.dot_dimension_numbers<[1], [0], [0], [1], [0, 0, 1, 1], [], []>} : vector<256x4xbf16>, vector<4x8xbf16>, vector<256x8xf32> -> vector<256x8xf32>
    %24 = arith.addf %18, %23 : vector<256x8xf32>
    %c1_i32 = arith.constant 1 : i32
    %25 = arith.addi %0, %c1_i32 : i32
    %c0_9 = arith.constant 0 : index
    %26 = arith.index_cast %25 : i32 to index
    %c0_10 = arith.constant 0 : index
    %c0_11 = arith.constant 0 : index
    %27 = vector.load %arg2[%c0_9, %26, %c0_10, %c0_11] : memref<1x18x18x4xbf16, #tpu.memory_space<vmem>>, vector<1x16x18x4xbf16>
    %28 = vector.shape_cast %27 : vector<1x16x18x4xbf16> to vector<16x18x4xbf16>
    %29 = vector.extract_strided_slice %28 {offsets = [0, 0, 0], sizes = [16, 16, 4], strides = [1, 1, 1]} : vector<16x18x4xbf16> to vector<16x16x4xbf16>
    %30 = vector.shape_cast %29 : vector<16x16x4xbf16> to vector<256x4xbf16>
    %31 = vector.extract_strided_slice %1 {offsets = [1, 0, 0, 0], sizes = [1, 1, 4, 8], strides = [1, 1, 1, 1]} : vector<3x3x4x8xbf16> to vector<1x1x4x8xbf16>
    %32 = vector.shape_cast %31 : vector<1x1x4x8xbf16> to vector<4x8xbf16>
    %cst_12 = arith.constant dense<0.000000e+00> : vector<256x8xf32>
    %33 = tpu.matmul %30, %32, %cst_12 {dimension_numbers = #tpu.dot_dimension_numbers<[1], [0], [0], [1], [0, 0, 1, 1], [], []>} : vector<256x4xbf16>, vector<4x8xbf16>, vector<256x8xf32> -> vector<256x8xf32>
    %34 = arith.addf %24, %33 : vector<256x8xf32>
    %35 = vector.extract_strided_slice %28 {offsets = [0, 1, 0], sizes = [16, 16, 4], strides = [1, 1, 1]} : vector<16x18x4xbf16> to vector<16x16x4xbf16>
    %36 = vector.shape_cast %35 : vector<16x16x4xbf16> to vector<256x4xbf16>
    %37 = vector.extract_strided_slice %1 {offsets = [1, 1, 0, 0], sizes = [1, 1, 4, 8], strides = [1, 1, 1, 1]} : vector<3x3x4x8xbf16> to vector<1x1x4x8xbf16>
    %38 = vector.shape_cast %37 : vector<1x1x4x8xbf16> to vector<4x8xbf16>
    %cst_13 = arith.constant dense<0.000000e+00> : vector<256x8xf32>
    %39 = tpu.matmul %36, %38, %cst_13 {dimension_numbers = #tpu.dot_dimension_numbers<[1], [0], [0], [1], [0, 0, 1, 1], [], []>} : vector<256x4xbf16>, vector<4x8xbf16>, vector<256x8xf32> -> vector<256x8xf32>
    %40 = arith.addf %34, %39 : vector<256x8xf32>
    %41 = vector.extract_strided_slice %28 {offsets = [0, 2, 0], sizes = [16, 16, 4], strides = [1, 1, 1]} : vector<16x18x4xbf16> to vector<16x16x4xbf16>
    %42 = vector.shape_cast %41 : vector<16x16x4xbf16> to vector<256x4xbf16>
    %43 = vector.extract_strided_slice %1 {offsets = [1, 2, 0, 0], sizes = [1, 1, 4, 8], strides = [1, 1, 1, 1]} : vector<3x3x4x8xbf16> to vector<1x1x4x8xbf16>
    %44 = vector.shape_cast %43 : vector<1x1x4x8xbf16> to vector<4x8xbf16>
    %cst_14 = arith.constant dense<0.000000e+00> : vector<256x8xf32>
    %45 = tpu.matmul %42, %44, %cst_14 {dimension_numbers = #tpu.dot_dimension_numbers<[1], [0], [0], [1], [0, 0, 1, 1], [], []>} : vector<256x4xbf16>, vector<4x8xbf16>, vector<256x8xf32> -> vector<256x8xf32>
    %46 = arith.addf %40, %45 : vector<256x8xf32>
    %c2_i32 = arith.constant 2 : i32
    %47 = arith.addi %0, %c2_i32 : i32
    %c0_15 = arith.constant 0 : index
    %48 = arith.index_cast %47 : i32 to index
    %c0_16 = arith.constant 0 : index
    %c0_17 = arith.constant 0 : index
    %49 = vector.load %arg2[%c0_15, %48, %c0_16, %c0_17] : memref<1x18x18x4xbf16, #tpu.memory_space<vmem>>, vector<1x16x18x4xbf16>
    %50 = vector.shape_cast %49 : vector<1x16x18x4xbf16> to vector<16x18x4xbf16>
    %51 = vector.extract_strided_slice %50 {offsets = [0, 0, 0], sizes = [16, 16, 4], strides = [1, 1, 1]} : vector<16x18x4xbf16> to vector<16x16x4xbf16>
    %52 = vector.shape_cast %51 : vector<16x16x4xbf16> to vector<256x4xbf16>
    %53 = vector.extract_strided_slice %1 {offsets = [2, 0, 0, 0], sizes = [1, 1, 4, 8], strides = [1, 1, 1, 1]} : vector<3x3x4x8xbf16> to vector<1x1x4x8xbf16>
    %54 = vector.shape_cast %53 : vector<1x1x4x8xbf16> to vector<4x8xbf16>
    %cst_18 = arith.constant dense<0.000000e+00> : vector<256x8xf32>
    %55 = tpu.matmul %52, %54, %cst_18 {dimension_numbers = #tpu.dot_dimension_numbers<[1], [0], [0], [1], [0, 0, 1, 1], [], []>} : vector<256x4xbf16>, vector<4x8xbf16>, vector<256x8xf32> -> vector<256x8xf32>
    %56 = arith.addf %46, %55 : vector<256x8xf32>
    %57 = vector.extract_strided_slice %50 {offsets = [0, 1, 0], sizes = [16, 16, 4], strides = [1, 1, 1]} : vector<16x18x4xbf16> to vector<16x16x4xbf16>
    %58 = vector.shape_cast %57 : vector<16x16x4xbf16> to vector<256x4xbf16>
    %59 = vector.extract_strided_slice %1 {offsets = [2, 1, 0, 0], sizes = [1, 1, 4, 8], strides = [1, 1, 1, 1]} : vector<3x3x4x8xbf16> to vector<1x1x4x8xbf16>
    %60 = vector.shape_cast %59 : vector<1x1x4x8xbf16> to vector<4x8xbf16>
    %cst_19 = arith.constant dense<0.000000e+00> : vector<256x8xf32>
    %61 = tpu.matmul %58, %60, %cst_19 {dimension_numbers = #tpu.dot_dimension_numbers<[1], [0], [0], [1], [0, 0, 1, 1], [], []>} : vector<256x4xbf16>, vector<4x8xbf16>, vector<256x8xf32> -> vector<256x8xf32>
    %62 = arith.addf %56, %61 : vector<256x8xf32>
    %63 = vector.extract_strided_slice %50 {offsets = [0, 2, 0], sizes = [16, 16, 4], strides = [1, 1, 1]} : vector<16x18x4xbf16> to vector<16x16x4xbf16>
    %64 = vector.shape_cast %63 : vector<16x16x4xbf16> to vector<256x4xbf16>
    %65 = vector.extract_strided_slice %1 {offsets = [2, 2, 0, 0], sizes = [1, 1, 4, 8], strides = [1, 1, 1, 1]} : vector<3x3x4x8xbf16> to vector<1x1x4x8xbf16>
    %66 = vector.shape_cast %65 : vector<1x1x4x8xbf16> to vector<4x8xbf16>
    %cst_20 = arith.constant dense<0.000000e+00> : vector<256x8xf32>
    %67 = tpu.matmul %64, %66, %cst_20 {dimension_numbers = #tpu.dot_dimension_numbers<[1], [0], [0], [1], [0, 0, 1, 1], [], []>} : vector<256x4xbf16>, vector<4x8xbf16>, vector<256x8xf32> -> vector<256x8xf32>
    %68 = arith.addf %62, %67 : vector<256x8xf32>
    %c0_21 = arith.constant 0 : index
    %c0_22 = arith.constant 0 : index
    %69 = vector.load %arg4[%c0_21, %c0_22] : memref<1x8xf32, #tpu.memory_space<vmem>>, vector<1x8xf32>
    %70 = vector.broadcast %69 : vector<1x8xf32> to vector<256x8xf32>
    %71 = arith.addf %68, %70 : vector<256x8xf32>
    %72 = tpu.transpose %71, [1, 0] : vector<256x8xf32> -> vector<8x256xf32>
    %c0_23 = arith.constant 0 : index
    %c0_24 = arith.constant 0 : index
    %c0_25 = arith.constant 0 : index
    %73 = vector.load %arg5[%c0_23, %c0_24, %c0_25] : memref<1x8x256xf32, #tpu.memory_space<vmem>>, vector<1x8x256xf32>
    %74 = vector.shape_cast %73 : vector<1x8x256xf32> to vector<8x256xf32>
    %75 = vector.shape_cast %72 : vector<8x256xf32> to vector<1x8x256xf32>
    tpu.vector_store %arg5[%c0_23, %c0_24, %c0_25], %75 {strides = array<i32>} : memref<1x8x256xf32, #tpu.memory_space<vmem>>, vector<1x8x256xf32>,
    return
  }
  func.func @transform_0(%arg0: i32, %arg1: i32) -> (i32, i32, i32, i32) {
    %c0_i32 = arith.constant 0 : i32
    %c0_i32_0 = arith.constant 0 : i32
    %c0_i32_1 = arith.constant 0 : i32
    %c0_i32_2 = arith.constant 0 : i32
    return %arg0, %c0_i32, %c0_i32_0, %c0_i32_1 : i32, i32, i32, i32
  }
  func.func @transform_1(%arg0: i32, %arg1: i32) -> (i32, i32, i32, i32) {
    %c0_i32 = arith.constant 0 : i32
    %c0_i32_0 = arith.constant 0 : i32
    %c0_i32_1 = arith.constant 0 : i32
    %c0_i32_2 = arith.constant 0 : i32
    %c0_i32_3 = arith.constant 0 : i32
    return %c0_i32, %c0_i32_0, %c0_i32_1, %c0_i32_2 : i32, i32, i32, i32
  }
  func.func @transform_2(%arg0: i32, %arg1: i32) -> (i32, i32) {
    %c0_i32 = arith.constant 0 : i32
    %c0_i32_0 = arith.constant 0 : i32
    %c0_i32_1 = arith.constant 0 : i32
    return %c0_i32, %c0_i32_0 : i32, i32
  }
  func.func @transform_3(%arg0: i32, %arg1: i32) -> (i32, i32, i32) {
    %c0_i32 = arith.constant 0 : i32
    %c0_i32_0 = arith.constant 0 : i32
    return %arg0, %c0_i32, %arg1 : i32, i32, i32
  }
}

</mosaic_0001>

<llo_original>
// kernel: tpu_custom_call.1
$region0: #{tpu_custom_call.1}
  #allocation0 [shape = 'u32[]', space=smem, size = 0x4, offset = 0x4, fixed_abs, tag = 'smem constant byte address 0x4 - core index']
  #allocation1 [shape = 'u32[144,128]{1,0:T(1,128)}', space=vmem, size = 0x12000, scoped, tag = 'internal scratch']
  %s0 = inlined_call_operand.vmem [shape: bf16[2,18,18,4], index: 0, kind: input, shape index: {}]
  %s1 = inlined_call_operand.vmem [shape: bf16[3,3,4,8], index: 1, kind: input, shape index: {}]
  %s2 = inlined_call_operand.vmem [shape: f32[1,8], index: 2, kind: input, shape index: {}]
  %s3 = inlined_call_operand.hbm [shape: f32[2,8,256], index: 3, kind: output, shape index: {}]
  %s4 = sld [smem:[#allocation0]]
  $region45: #{tpu_custom_call.1} parent=0
    _
  %s6 = ssub.s32 1, %s4
  %s7 = scalar_select 0, %s6, %s4
  $region1: #{tpu_custom_call.1} parent=0
    #allocation2 [shape = 'u8[16384]{0}', space=vmem, size = 0x4000, scoped, tag = 'output window, operand 0']
    #allocation3 [shape = 's32[2]{0}', space=sflag, size = 0x8, scoped, tag = 'scoped memory for tpu_custom_call.1']
    %8 = vsyncpa [#allocation3], 0
    %s9 = scalar_lea.sflag [#allocation3], 1
    %10 = vsyncpa %s9, 0
    loop: start=0, step=1, limit=4
    $region2: #{tpu_custom_call.1} parent=1 // loop_pre_header
      _
    $region3: #{tpu_custom_call.1} parent=1 // loop_header
      %s12 = sphi 0, %s16
      %p13 = scmp.ge.s32.totalorder %s12, 4
      %s19 = sphi 0, %s31
      %s20 = sphi 0, %s27
      %s21 = sphi 0, %s19
      %s22 = sphi 0, %s20
      %s23 = sphi 0, %s21
      %s24 = sphi 0, %s22
      %s34 = sphi 0, %s36
      %s37 = sphi 0, %s34
      %s38 = sphi 0, %s37
      %s54 = sphi 0, %s38
      %s58 = sphi 0, %s58
      %s60 = sphi 0, %s58
      %s61 = sphi 0, %s60
      %s75 = sphi 0, %s61
      %s79 = sphi 0, %s79
      %s81 = sphi 0, %s79
      %s82 = sphi 0, %s81
      %s96 = sphi 0, %s82
      %s104 = sphi 0, %s106
      %s107 = sphi 0, %s104
      %s108 = sphi 0, %s107
      %s124 = sphi 0, %s108
    $region4: #{tpu_custom_call.1} parent=1 // loop_header_branch
      %15 = sbr.rel (%p13) target = $region8
    $region5: #{tpu_custom_call.1} parent=1 // loop_body
      %s17 = ssub.s32 %s12, 1
      %s18 = ssub.s32 %s12, 2
      %s25 = sadd.s32 1, %s20
      %p26 = scmp.ge.s32.totalorder %s25, 1
      %s27 = scalar_select %p26, 0, %s25
      %s28 = sadd.s32 1, %s19
      %s29 = scalar_select %p26, %s28, %s19
      %p30 = scmp.ge.s32.totalorder %s29, 2
      %s31 = scalar_select %p30, 0, %s29
      %s32 = ssub.s32 %s19, %s31
      %p33 = scmp.eq.s32.totalorder %s32, 0
      %s35 = sadd.s32 %s34, 1
      %s36 = scalar_select %p33, %s34, %s35
      %p39 = pneg %p33
      %p40 = scmp.eq.s32.totalorder %s12, 1
      %p41 = por %p39, %p40
      %p42 = scmp.ne.s32.totalorder %s34, %s37
      %p43 = scmp.eq.s32.totalorder %s12, 0
      %p44 = por %p42, %p43
      %p45 = scmp.ne.s32.totalorder %s34, %s37
      %p46 = scmp.eq.s32.totalorder %s17, 1
      %p47 = por %p45, %p46
      %p48 = scmp.ne.s32.totalorder %s37, %s38
      %p49 = scmp.eq.s32.totalorder %s17, 0
      %p50 = por %p48, %p49
      %p51 = scmp.ne.s32.totalorder %s37, %s38
      %p52 = scmp.eq.s32.totalorder %s18, 1
      %p53 = por %p51, %p52
      %p55 = scmp.ne.s32.totalorder %s38, %s54
      %p56 = scmp.eq.s32.totalorder %s18, 0
      %p57 = por %p55, %p56
      %s59 = sadd.s32 %s58, 1
      %p62 = scmp.eq.s32.totalorder %s12, 1
      %p63 = scmp.ne.s32.totalorder %s58, %s60
      %p64 = scmp.eq.s32.totalorder %s12, 0
      %p65 = por %p63, %p64
      %p66 = scmp.ne.s32.totalorder %s58, %s60
      %p67 = scmp.eq.s32.totalorder %s17, 1
      %p68 = por %p66, %p67
      %p69 = scmp.ne.s32.totalorder %s60, %s61
      %p70 = scmp.eq.s32.totalorder %s17, 0
      %p71 = por %p69, %p70
      %p72 = scmp.ne.s32.totalorder %s60, %s61
      %p73 = scmp.eq.s32.totalorder %s18, 1
      %p74 = por %p72, %p73
      %p76 = scmp.ne.s32.totalorder %s61, %s75
      %p77 = scmp.eq.s32.totalorder %s18, 0
      %p78 = por %p76, %p77
      %s80 = sadd.s32 %s79, 1
      %p83 = scmp.eq.s32.totalorder %s12, 1
      %p84 = scmp.ne.s32.totalorder %s79, %s81
      %p85 = scmp.eq.s32.totalorder %s12, 0
      %p86 = por %p84, %p85
      %p87 = scmp.ne.s32.totalorder %s79, %s81
      %p88 = scmp.eq.s32.totalorder %s17, 1
      %p89 = por %p87, %p88
      %p90 = scmp.ne.s32.totalorder %s81, %s82
      %p91 = scmp.eq.s32.totalorder %s17, 0
      %p92 = por %p90, %p91
      %p93 = scmp.ne.s32.totalorder %s81, %s82
      %p94 = scmp.eq.s32.totalorder %s18, 1
      %p95 = por %p93, %p94
      %p97 = scmp.ne.s32.totalorder %s82, %s96
      %p98 = scmp.eq.s32.totalorder %s18, 0
      %p99 = por %p97, %p98
      %s100 = ssub.s32 %s19, %s31
      %s101 = ssub.s32 %s20, %s27
      %s102 = sor.u32 %s100, %s101
      %p103 = scmp.eq.s32.totalorder %s102, 0
      %s105 = sadd.s32 %s104, 1
      %s106 = scalar_select %p103, %s104, %s105
      %p109 = pneg %p103
      %p110 = scmp.eq.s32.totalorder %s12, 1
      %p111 = por %p109, %p110
      %p112 = scmp.ne.s32.totalorder %s104, %s107
      %p113 = scmp.eq.s32.totalorder %s12, 0
      %p114 = por %p112, %p113
      %p115 = scmp.ne.s32.totalorder %s104, %s107
      %p116 = scmp.eq.s32.totalorder %s17, 1
      %p117 = por %p115, %p116
      %p118 = scmp.ne.s32.totalorder %s107, %s108
      %p119 = scmp.eq.s32.totalorder %s17, 0
      %p120 = por %p118, %p119
      %p121 = scmp.ne.s32.totalorder %s107, %s108
      %p122 = scmp.eq.s32.totalorder %s18, 1
      %p123 = por %p121, %p122
      %p125 = scmp.ne.s32.totalorder %s108, %s124
      %p126 = scmp.eq.s32.totalorder %s18, 0
      %p127 = por %p125, %p126
      %p128 = scmp.le.s32.totalorder 1, %s12
      %p129 = scmp.lt.s32.totalorder %s12, 3
      %p130 = pnand %p128, %p129
      %p131 = pneg %p130
      // Predicated region
      $region9: #{tpu_custom_call.1} parent=5 // pred_check
        _
      $region10: #{tpu_custom_call.1} parent=5 // pred_check_branch
        %133 = sbr.rel (%p130) target = $region12
      $region11: #{tpu_custom_call.1} parent=5 // pred_region
        %s134 = ssub.s32 %s12, 1
        // Predicated region
        $region13: #{tpu_custom_call.1} parent=11 // pred_check
          %p135 = pneg %p71
        $region14: #{tpu_custom_call.1} parent=11 // pred_check_branch
          %137 = sbr.rel (%p135) target = $region16
        $region15: #{tpu_custom_call.1} parent=11 // pred_region
          _
        $region16: #{tpu_custom_call.1} parent=11 // pred_fallthru
          _
        // Predicated region
        $region17: #{tpu_custom_call.1} parent=11 // pred_check
          %p138 = pneg %p92
        $region18: #{tpu_custom_call.1} parent=11 // pred_check_branch
          %140 = sbr.rel (%p138) target = $region20
        $region19: #{tpu_custom_call.1} parent=11 // pred_region
          _
        $region20: #{tpu_custom_call.1} parent=11 // pred_fallthru
          _
      $region12: #{tpu_custom_call.1} parent=5 // pred_fallthru
        _
      %p141 = scmp.lt.s32.totalorder %s12, 2
      // Predicated region
      $region21: #{tpu_custom_call.1} parent=5 // pred_check
        %p142 = pneg %p141
      $region22: #{tpu_custom_call.1} parent=5 // pred_check_branch
        %144 = sbr.rel (%p142) target = $region24
      $region23: #{tpu_custom_call.1} parent=5 // pred_region
        // Predicated region
        $region25: #{tpu_custom_call.1} parent=23 // pred_check
          %p145 = pneg %p44
        $region26: #{tpu_custom_call.1} parent=23 // pred_check_branch
          %147 = sbr.rel (%p145) target = $region28
        $region27: #{tpu_custom_call.1} parent=23 // pred_region
          %p148 = scmp.lt.s32.totalorder %s19, 1
          %s149 = scalar_select %p148, %s19, 1
          %s150 = smul.addr %s149, 54
          %s151 = smul.addr %s150, 4
          %s152 = scalar_lea.vmem %s0, %s151
        $region28: #{tpu_custom_call.1} parent=23 // pred_fallthru
          _
      $region24: #{tpu_custom_call.1} parent=5 // pred_fallthru
        _
      %p153 = scmp.le.s32.totalorder 1, %s12
      %p154 = scmp.lt.s32.totalorder %s12, 3
      %p155 = pnand %p153, %p154
      %p156 = pneg %p155
      // Predicated region
      $region29: #{tpu_custom_call.1} parent=5 // pred_check
        _
      $region30: #{tpu_custom_call.1} parent=5 // pred_check_branch
        %158 = sbr.rel (%p155) target = $region32
      $region31: #{tpu_custom_call.1} parent=5 // pred_region
        %s159 = ssub.s32 %s12, 1
        %p160 = scmp.lt.s32.totalorder %s21, 1
        %s161 = scalar_select %p160, %s21, 1
        %s162 = smul.addr %s161, 54
        %s163 = smul.addr %s162, 4
        %s164 = scalar_lea.vmem %s0, %s163
        %p165 = pneg %p50
        %p166 = pneg %p47
        %p167 = pneg %p71
        %p168 = pneg %p68
        %p169 = pneg %p92
        %p170 = pneg %p89
        %p171 = pneg %p120
        %p172 = pneg %p117
        %s173 = sand.u32 %s107, 1
        %s174 = scalar_lea.sflag [#allocation3], %s173
        %s175 = sand.u32 %s107, 1
        %s176 = smul.addr %s175, 16
        %s177 = scalar_lea.vmem [#allocation2], %s176
        %p178 = scmp.lt.s32.totalorder %s21, 1
        %s179 = scalar_select %p178, %s21, 1
        %s180 = smul.addr %s179, 54
        %s181 = smul.addr %s180, 4
        %s182 = scalar_lea.vmem %s0, %s181
        %s183 = smul.u32 2, %s22
        %s185 = smul.u32 %s22, 16
        %v186 = vld [vmem:[%s1] sm:$0x3]
        %v187 = vld [vmem:[%s1 + $0x2] sm:$0x3]
        %v188 = vld [vmem:[%s1 + $0x4] sm:$0x3]
        %v189 = vld [vmem:[%s1 + $0x6] sm:$0x3]
        %v190 = vld [vmem:[%s1 + $0x8] sm:$0x3]
        %v191 = vld [vmem:[%s1 + $0xa] sm:$0x3]
        %v192 = vld [vmem:[%s1 + $0xc] sm:$0x3]
        %v193 = vld [vmem:[%s1 + $0xe] sm:$0x3]
        %v194 = vld [vmem:[%s1 + $0x10] sm:$0x3]
        %s195 = smul.u32 %s185, 3
        %s196 = smul.addr %s195, 4
        %s197 = scalar_lea.vmem %s182, %s196
        %v198 = vld [vmem:[%s197] sm:$0xf]
        %v199 = vld [vmem:[%s197 + $0x4] sm:$0xf]
        %v200 = vld [vmem:[%s197 + $0x8] sm:$0x1]
        %v201 = vld [vmem:[%s197 + $0xc] sm:$0xf]
        %v202 = vld [vmem:[%s197 + $0x10] sm:$0xf]
        %v203 = vld [vmem:[%s197 + $0x14] sm:$0x1]
        %v204 = vld [vmem:[%s197 + $0x18] sm:$0xf]
        %v205 = vld [vmem:[%s197 + $0x1c] sm:$0xf]
        %v206 = vld [vmem:[%s197 + $0x20] sm:$0x1]
        %v207 = vld [vmem:[%s197 + $0x24] sm:$0xf]
        %v208 = vld [vmem:[%s197 + $0x28] sm:$0xf]
        %v209 = vld [vmem:[%s197 + $0x2c] sm:$0x1]
        %v210 = vld [vmem:[%s197 + $0x30] sm:$0xf]
        %v211 = vld [vmem:[%s197 + $0x34] sm:$0xf]
        %v212 = vld [vmem:[%s197 + $0x38] sm:$0x1]
        %v213 = vld [vmem:[%s197 + $0x3c] sm:$0xf]
        %v214 = vld [vmem:[%s197 + $0x40] sm:$0xf]
        %v215 = vld [vmem:[%s197 + $0x44] sm:$0x1]
        %v216 = vld [vmem:[%s197 + $0x48] sm:$0xf]
        %v217 = vld [vmem:[%s197 + $0x4c] sm:$0xf]
        %v218 = vld [vmem:[%s197 + $0x50] sm:$0x1]
        %v219 = vld [vmem:[%s197 + $0x54] sm:$0xf]
        %v220 = vld [vmem:[%s197 + $0x58] sm:$0xf]
        %v221 = vld [vmem:[%s197 + $0x5c] sm:$0x1]
        %v222 = vld [vmem:[%s197 + $0x60] sm:$0xf]
        %v223 = vld [vmem:[%s197 + $0x64] sm:$0xf]
        %v224 = vld [vmem:[%s197 + $0x68] sm:$0x1]
        %v225 = vld [vmem:[%s197 + $0x6c] sm:$0xf]
        %v226 = vld [vmem:[%s197 + $0x70] sm:$0xf]
        %v227 = vld [vmem:[%s197 + $0x74] sm:$0x1]
        %v228 = vld [vmem:[%s197 + $0x78] sm:$0xf]
        %v229 = vld [vmem:[%s197 + $0x7c] sm:$0xf]
        %v230 = vld [vmem:[%s197 + $0x80] sm:$0x1]
        %v231 = vld [vmem:[%s197 + $0x84] sm:$0xf]
        %v232 = vld [vmem:[%s197 + $0x88] sm:$0xf]
        %v233 = vld [vmem:[%s197 + $0x8c] sm:$0x1]
        %v234 = vld [vmem:[%s197 + $0x90] sm:$0xf]
        %v235 = vld [vmem:[%s197 + $0x94] sm:$0xf]
        %v236 = vld [vmem:[%s197 + $0x98] sm:$0x1]
        %v237 = vld [vmem:[%s197 + $0x9c] sm:$0xf]
        %v238 = vld [vmem:[%s197 + $0xa0] sm:$0xf]
        %v239 = vld [vmem:[%s197 + $0xa4] sm:$0x1]
        %v240 = vld [vmem:[%s197 + $0xa8] sm:$0xf]
        %v241 = vld [vmem:[%s197 + $0xac] sm:$0xf]
        %v242 = vld [vmem:[%s197 + $0xb0] sm:$0x1]
        %v243 = vld [vmem:[%s197 + $0xb4] sm:$0xf]
        %v244 = vld [vmem:[%s197 + $0xb8] sm:$0xf]
        %v245 = vld [vmem:[%s197 + $0xbc] sm:$0x1]
        %vm246 = vsmask.f32 3328
        %vm247 = vsmask.f32 7440
        %vm248 = vmor %vm246, %vm247
        %v250 = vshrl.u32 %v198, 16
        %v252 = vrot.slane %v250, 4
        %v253 = vshll.u32 %v198, 16
        %v255 = vrot.slane %v253, 5
        %v256 = vor.u32 %v252, %v255
        %v257 = vrot.slane %v256, 4
        %v259 = vshll.u32 %v199, 16
        %v261 = vrot.slane %v259, 5
        %v262 = vsel %vm248, %v257, %v261
        %v263 = vshrl.u32 %v199, 16
        %v265 = vrot.slane %v263, 4
        %v266 = vor.u32 %v265, %v261
        %v267 = vrot.slane %v266, 4
        %v269 = vshll.u32 %v200, 16
        %v271 = vrot.slane %v269, 5
        %v272 = vsel %vm248, %v267, %v271
        %v274 = vshrl.u32 %v201, 16
        %v276 = vrot.slane %v274, 4
        %v277 = vshll.u32 %v201, 16
        %v279 = vrot.slane %v277, 5
        %v280 = vor.u32 %v276, %v279
        %v281 = vrot.slane %v280, 4
        %v283 = vshll.u32 %v202, 16
        %v285 = vrot.slane %v283, 5
        %v286 = vsel %vm248, %v281, %v285
        %v287 = vshrl.u32 %v202, 16
        %v289 = vrot.slane %v287, 4
        %v290 = vor.u32 %v289, %v285
        %v291 = vrot.slane %v290, 4
        %v293 = vshll.u32 %v203, 16
        %v295 = vrot.slane %v293, 5
        %v296 = vsel %vm248, %v291, %v295
        %v298 = vshrl.u32 %v204, 16
        %v300 = vrot.slane %v298, 4
        %v301 = vshll.u32 %v204, 16
        %v303 = vrot.slane %v301, 5
        %v304 = vor.u32 %v300, %v303
        %v305 = vrot.slane %v304, 4
        %v307 = vshll.u32 %v205, 16
        %v309 = vrot.slane %v307, 5
        %v310 = vsel %vm248, %v305, %v309
        %v311 = vshrl.u32 %v205, 16
        %v313 = vrot.slane %v311, 4
        %v314 = vor.u32 %v313, %v309
        %v315 = vrot.slane %v314, 4
        %v317 = vshll.u32 %v206, 16
        %v319 = vrot.slane %v317, 5
        %v320 = vsel %vm248, %v315, %v319
        %v322 = vshrl.u32 %v207, 16
        %v324 = vrot.slane %v322, 4
        %v325 = vshll.u32 %v207, 16
        %v327 = vrot.slane %v325, 5
        %v328 = vor.u32 %v324, %v327
        %v329 = vrot.slane %v328, 4
        %v331 = vshll.u32 %v208, 16
        %v333 = vrot.slane %v331, 5
        %v334 = vsel %vm248, %v329, %v333
        %v335 = vshrl.u32 %v208, 16
        %v337 = vrot.slane %v335, 4
        %v338 = vor.u32 %v337, %v333
        %v339 = vrot.slane %v338, 4
        %v341 = vshll.u32 %v209, 16
        %v343 = vrot.slane %v341, 5
        %v344 = vsel %vm248, %v339, %v343
        %v346 = vshrl.u32 %v210, 16
        %v348 = vrot.slane %v346, 4
        %v349 = vshll.u32 %v210, 16
        %v351 = vrot.slane %v349, 5
        %v352 = vor.u32 %v348, %v351
        %v353 = vrot.slane %v352, 4
        %v355 = vshll.u32 %v211, 16
        %v357 = vrot.slane %v355, 5
        %v358 = vsel %vm248, %v353, %v357
        %v359 = vshrl.u32 %v211, 16
        %v361 = vrot.slane %v359, 4
        %v362 = vor.u32 %v361, %v357
        %v363 = vrot.slane %v362, 4
        %v365 = vshll.u32 %v212, 16
        %v367 = vrot.slane %v365, 5
        %v368 = vsel %vm248, %v363, %v367
        %v370 = vshrl.u32 %v213, 16
        %v372 = vrot.slane %v370, 4
        %v373 = vshll.u32 %v213, 16
        %v375 = vrot.slane %v373, 5
        %v376 = vor.u32 %v372, %v375
        %v377 = vrot.slane %v376, 4
        %v379 = vshll.u32 %v214, 16
        %v381 = vrot.slane %v379, 5
        %v382 = vsel %vm248, %v377, %v381
        %v383 = vshrl.u32 %v214, 16
        %v385 = vrot.slane %v383, 4
        %v386 = vor.u32 %v385, %v381
        %v387 = vrot.slane %v386, 4
        %v389 = vshll.u32 %v215, 16
        %v391 = vrot.slane %v389, 5
        %v392 = vsel %vm248, %v387, %v391
        %v394 = vshrl.u32 %v216, 16
        %v396 = vrot.slane %v394, 4
        %v397 = vshll.u32 %v216, 16
        %v399 = vrot.slane %v397, 5
        %v400 = vor.u32 %v396, %v399
        %v401 = vrot.slane %v400, 4
        %v403 = vshll.u32 %v217, 16
        %v405 = vrot.slane %v403, 5
        %v406 = vsel %vm248, %v401, %v405
        %v407 = vshrl.u32 %v217, 16
        %v409 = vrot.slane %v407, 4
        %v410 = vor.u32 %v409, %v405
        %v411 = vrot.slane %v410, 4
        %v413 = vshll.u32 %v218, 16
        %v415 = vrot.slane %v413, 5
        %v416 = vsel %vm248, %v411, %v415
        %v418 = vshrl.u32 %v219, 16
        %v420 = vrot.slane %v418, 4
        %v421 = vshll.u32 %v219, 16
        %v423 = vrot.slane %v421, 5
        %v424 = vor.u32 %v420, %v423
        %v425 = vrot.slane %v424, 4
        %v427 = vshll.u32 %v220, 16
        %v429 = vrot.slane %v427, 5
        %v430 = vsel %vm248, %v425, %v429
        %v431 = vshrl.u32 %v220, 16
        %v433 = vrot.slane %v431, 4
        %v434 = vor.u32 %v433, %v429
        %v435 = vrot.slane %v434, 4
        %v437 = vshll.u32 %v221, 16
        %v439 = vrot.slane %v437, 5
        %v440 = vsel %vm248, %v435, %v439
        %v442 = vshrl.u32 %v222, 16
        %v444 = vrot.slane %v442, 4
        %v445 = vshll.u32 %v222, 16
        %v447 = vrot.slane %v445, 5
        %v448 = vor.u32 %v444, %v447
        %v449 = vrot.slane %v448, 4
        %v451 = vshll.u32 %v223, 16
        %v453 = vrot.slane %v451, 5
        %v454 = vsel %vm248, %v449, %v453
        %v455 = vshrl.u32 %v223, 16
        %v457 = vrot.slane %v455, 4
        %v458 = vor.u32 %v457, %v453
        %v459 = vrot.slane %v458, 4
        %v461 = vshll.u32 %v224, 16
        %v463 = vrot.slane %v461, 5
        %v464 = vsel %vm248, %v459, %v463
        %v466 = vshrl.u32 %v225, 16
        %v468 = vrot.slane %v466, 4
        %v469 = vshll.u32 %v225, 16
        %v471 = vrot.slane %v469, 5
        %v472 = vor.u32 %v468, %v471
        %v473 = vrot.slane %v472, 4
        %v475 = vshll.u32 %v226, 16
        %v477 = vrot.slane %v475, 5
        %v478 = vsel %vm248, %v473, %v477
        %v479 = vshrl.u32 %v226, 16
        %v481 = vrot.slane %v479, 4
        %v482 = vor.u32 %v481, %v477
        %v483 = vrot.slane %v482, 4
        %v485 = vshll.u32 %v227, 16
        %v487 = vrot.slane %v485, 5
        %v488 = vsel %vm248, %v483, %v487
        %v490 = vshrl.u32 %v228, 16
        %v492 = vrot.slane %v490, 4
        %v493 = vshll.u32 %v228, 16
        %v495 = vrot.slane %v493, 5
        %v496 = vor.u32 %v492, %v495
        %v497 = vrot.slane %v496, 4
        %v499 = vshll.u32 %v229, 16
        %v501 = vrot.slane %v499, 5
        %v502 = vsel %vm248, %v497, %v501
        %v503 = vshrl.u32 %v229, 16
        %v505 = vrot.slane %v503, 4
        %v506 = vor.u32 %v505, %v501
        %v507 = vrot.slane %v506, 4
        %v509 = vshll.u32 %v230, 16
        %v511 = vrot.slane %v509, 5
        %v512 = vsel %vm248, %v507, %v511
        %v514 = vshrl.u32 %v231, 16
        %v516 = vrot.slane %v514, 4
        %v517 = vshll.u32 %v231, 16
        %v519 = vrot.slane %v517, 5
        %v520 = vor.u32 %v516, %v519
        %v521 = vrot.slane %v520, 4
        %v523 = vshll.u32 %v232, 16
        %v525 = vrot.slane %v523, 5
        %v526 = vsel %vm248, %v521, %v525
        %v527 = vshrl.u32 %v232, 16
        %v529 = vrot.slane %v527, 4
        %v530 = vor.u32 %v529, %v525
        %v531 = vrot.slane %v530, 4
        %v533 = vshll.u32 %v233, 16
        %v535 = vrot.slane %v533, 5
        %v536 = vsel %vm248, %v531, %v535
        %v538 = vshrl.u32 %v234, 16
        %v540 = vrot.slane %v538, 4
        %v541 = vshll.u32 %v234, 16
        %v543 = vrot.slane %v541, 5
        %v544 = vor.u32 %v540, %v543
        %v545 = vrot.slane %v544, 4
        %v547 = vshll.u32 %v235, 16
        %v549 = vrot.slane %v547, 5
        %v550 = vsel %vm248, %v545, %v549
        %v551 = vshrl.u32 %v235, 16
        %v553 = vrot.slane %v551, 4
        %v554 = vor.u32 %v553, %v549
        %v555 = vrot.slane %v554, 4
        %v557 = vshll.u32 %v236, 16
        %v559 = vrot.slane %v557, 5
        %v560 = vsel %vm248, %v555, %v559
        %v562 = vshrl.u32 %v237, 16
        %v564 = vrot.slane %v562, 4
        %v565 = vshll.u32 %v237, 16
        %v567 = vrot.slane %v565, 5
        %v568 = vor.u32 %v564, %v567
        %v569 = vrot.slane %v568, 4
        %v571 = vshll.u32 %v238, 16
        %v573 = vrot.slane %v571, 5
        %v574 = vsel %vm248, %v569, %v573
        %v575 = vshrl.u32 %v238, 16
        %v577 = vrot.slane %v575, 4
        %v578 = vor.u32 %v577, %v573
        %v579 = vrot.slane %v578, 4
        %v581 = vshll.u32 %v239, 16
        %v583 = vrot.slane %v581, 5
        %v584 = vsel %vm248, %v579, %v583
        %v586 = vshrl.u32 %v240, 16
        %v588 = vrot.slane %v586, 4
        %v589 = vshll.u32 %v240, 16
        %v591 = vrot.slane %v589, 5
        %v592 = vor.u32 %v588, %v591
        %v593 = vrot.slane %v592, 4
        %v595 = vshll.u32 %v241, 16
        %v597 = vrot.slane %v595, 5
        %v598 = vsel %vm248, %v593, %v597
        %v599 = vshrl.u32 %v241, 16
        %v601 = vrot.slane %v599, 4
        %v602 = vor.u32 %v601, %v597
        %v603 = vrot.slane %v602, 4
        %v605 = vshll.u32 %v242, 16
        %v607 = vrot.slane %v605, 5
        %v608 = vsel %vm248, %v603, %v607
        %v610 = vshrl.u32 %v243, 16
        %v612 = vrot.slane %v610, 4
        %v613 = vshll.u32 %v243, 16
        %v615 = vrot.slane %v613, 5
        %v616 = vor.u32 %v612, %v615
        %v617 = vrot.slane %v616, 4
        %v619 = vshll.u32 %v244, 16
        %v621 = vrot.slane %v619, 5
        %v622 = vsel %vm248, %v617, %v621
        %v623 = vshrl.u32 %v244, 16
        %v625 = vrot.slane %v623, 4
        %v626 = vor.u32 %v625, %v621
        %v627 = vrot.slane %v626, 4
        %v629 = vshll.u32 %v245, 16
        %v631 = vrot.slane %v629, 5
        %v632 = vsel %vm248, %v627, %v631
        %v633 = vunpack.c.l.b16 %v262
        %v634 = vunpack.c.l.b16 %v272
        %v635 = vunpack.c.l.b16 %v286
        %v636 = vunpack.c.l.b16 %v296
        %v637 = vunpack.c.l.b16 %v310
        %v638 = vunpack.c.l.b16 %v320
        %v639 = vunpack.c.l.b16 %v334
        %v640 = vunpack.c.l.b16 %v344
        %v641 = vunpack.c.l.b16 %v358
        %v642 = vunpack.c.l.b16 %v368
        %v643 = vunpack.c.l.b16 %v382
        %v644 = vunpack.c.l.b16 %v392
        %v645 = vunpack.c.l.b16 %v406
        %v646 = vunpack.c.l.b16 %v416
        %v647 = vunpack.c.l.b16 %v430
        %v648 = vunpack.c.l.b16 %v440
        %v649 = vunpack.c.l.b16 %v454
        %v650 = vunpack.c.l.b16 %v464
        %v651 = vunpack.c.l.b16 %v478
        %v652 = vunpack.c.l.b16 %v488
        %v653 = vunpack.c.l.b16 %v502
        %v654 = vunpack.c.l.b16 %v512
        %v655 = vunpack.c.l.b16 %v526
        %v656 = vunpack.c.l.b16 %v536
        %v657 = vunpack.c.l.b16 %v550
        %v658 = vunpack.c.l.b16 %v560
        %v659 = vunpack.c.l.b16 %v574
        %v660 = vunpack.c.l.b16 %v584
        %v661 = vunpack.c.l.b16 %v598
        %v662 = vunpack.c.l.b16 %v608
        %v663 = vunpack.c.l.b16 %v622
        %v664 = vunpack.c.l.b16 %v632
        %v665 = vpack.c.b16 %v634, %v633
        %v666 = vpack.c.b16 %v636, %v635
        %v667 = vpack.c.b16 %v638, %v637
        %v668 = vpack.c.b16 %v640, %v639
        %v669 = vpack.c.b16 %v642, %v641
        %v670 = vpack.c.b16 %v644, %v643
        %v671 = vpack.c.b16 %v646, %v645
        %v672 = vpack.c.b16 %v648, %v647
        %v673 = vpack.c.b16 %v650, %v649
        %v674 = vpack.c.b16 %v652, %v651
        %v675 = vpack.c.b16 %v654, %v653
        %v676 = vpack.c.b16 %v656, %v655
        %v677 = vpack.c.b16 %v658, %v657
        %v678 = vpack.c.b16 %v660, %v659
        %v679 = vpack.c.b16 %v662, %v661
        %v680 = vpack.c.b16 %v664, %v663
        %vm681 = vcmask 31744
        %v683 = vsel %vm681, %v665, 0
        %v686 = vsel %vm681, %v666, 0
        %v689 = vsel %vm681, %v667, 0
        %v692 = vsel %vm681, %v668, 0
        %v695 = vsel %vm681, %v669, 0
        %v698 = vsel %vm681, %v670, 0
        %v701 = vsel %vm681, %v671, 0
        %v704 = vsel %vm681, %v672, 0
        %v707 = vsel %vm681, %v673, 0
        %v710 = vsel %vm681, %v674, 0
        %v713 = vsel %vm681, %v675, 0
        %v716 = vsel %vm681, %v676, 0
        %v719 = vsel %vm681, %v677, 0
        %v722 = vsel %vm681, %v678, 0
        %v725 = vsel %vm681, %v679, 0
        %v728 = vsel %vm681, %v680, 0
        %vm730 = vcmask 1041408
        %v732 = vsel %vm730, %v187, 0
        %734 = vmatprep.subr.bf16.mxu0 0
        %735 = vmatpush1.bf16.msra.mxu0 %v732
        %736 = vmatprep.subr.bf16.mxu0 0
        %737 = vmatpush1.bf16.msra.mxu0 0
        %738 = vmatprep.subr.bf16.mxu0 0
        %739 = vmatpush1.bf16.msra.mxu0 0
        %740 = vmatprep.subr.bf16.mxu0 0
        %741 = vmatpush1.bf16.msra.mxu0 0
        %742 = vmatprep.subr.bf16.mxu0 0
        %743 = vmatpush1.bf16.msra.mxu0 0
        %744 = vmatprep.subr.bf16.mxu0 0
        %745 = vmatpush1.bf16.msra.mxu0 0
        %746 = vmatprep.subr.bf16.mxu0 0
        %747 = vmatpush1.bf16.msra.mxu0 0
        %748 = vmatprep.subr.bf16.mxu0 0
        %749 = vmatpush1.bf16.msra.mxu0 0
        %750 = vmatprep.subr.bf16.mxu0 0
        %751 = vmatpush1.bf16.msra.mxu0 0
        %752 = vmatprep.subr.bf16.mxu0 0
        %753 = vmatpush1.bf16.msra.mxu0 0
        %754 = vmatprep.subr.bf16.mxu0 0
        %755 = vmatpush1.bf16.msra.mxu0 0
        %756 = vmatprep.subr.bf16.mxu0 0
        %757 = vmatpush1.bf16.msra.mxu0 0
        %758 = vmatprep.subr.bf16.mxu0 0
        %759 = vmatpush1.bf16.msra.mxu0 0
        %760 = vmatprep.subr.bf16.mxu0 0
        %761 = vmatpush1.bf16.msra.mxu0 0
        %762 = vmatprep.subr.bf16.mxu0 0
        %763 = vmatpush1.bf16.msra.mxu0 0
        %764 = vmatprep.subr.bf16.mxu0 0
        %765 = vmatpush1.bf16.msra.mxu0 0
        %766 = vmatprep.mubr.bf16.mxu0 0
        %767 = vmatmul.mubr.bf16.gmra.mrb[0].mxu0 %v683
        %v768 = vpop.f32.mrb[0].mxu0
        %v769 = vadd.f32 0.0, %v768
        %v770 = vpop.f32.mrb[0].mxu0
        %v771 = vpop.f32.mrb[0].mxu0
        %v772 = vadd.f32 0.0, %v771
        %v773 = vpop.f32.mrb[0].mxu0
        %774 = vmatprep.mubr.bf16.mxu0 0
        %775 = vmatmul.mubr.bf16.gmra.mrb[0].mxu0 %v686
        %v776 = vpop.f32.mrb[0].mxu0
        %v777 = vadd.f32 0.0, %v776
        %v778 = vpop.f32.mrb[0].mxu0
        %v779 = vpop.f32.mrb[0].mxu0
        %v780 = vadd.f32 0.0, %v779
        %v781 = vpop.f32.mrb[0].mxu0
        %782 = vmatprep.mubr.bf16.mxu0 0
        %783 = vmatmul.mubr.bf16.gmra.mrb[0].mxu0 %v689
        %v784 = vpop.f32.mrb[0].mxu0
        %v785 = vadd.f32 0.0, %v784
        %v786 = vpop.f32.mrb[0].mxu0
        %v787 = vpop.f32.mrb[0].mxu0
        %v788 = vadd.f32 0.0, %v787
        %v789 = vpop.f32.mrb[0].mxu0
        %790 = vmatprep.mubr.bf16.mxu0 0
        %791 = vmatmul.mubr.bf16.gmra.mrb[0].mxu0 %v692
        %v792 = vpop.f32.mrb[0].mxu0
        %v793 = vadd.f32 0.0, %v792
        %v794 = vpop.f32.mrb[0].mxu0
        %v795 = vpop.f32.mrb[0].mxu0
        %v796 = vadd.f32 0.0, %v795
        %v797 = vpop.f32.mrb[0].mxu0
        %798 = vmatprep.mubr.bf16.mxu0 0
        %799 = vmatmul.mubr.bf16.gmra.mrb[0].mxu0 %v695
        %v800 = vpop.f32.mrb[0].mxu0
        %v801 = vadd.f32 0.0, %v800
        %v802 = vpop.f32.mrb[0].mxu0
        %v803 = vpop.f32.mrb[0].mxu0
        %v804 = vadd.f32 0.0, %v803
        %v805 = vpop.f32.mrb[0].mxu0
        %806 = vmatprep.mubr.bf16.mxu0 0
        %807 = vmatmul.mubr.bf16.gmra.mrb[0].mxu0 %v698
        %v808 = vpop.f32.mrb[0].mxu0
        %v809 = vadd.f32 0.0, %v808
        %v810 = vpop.f32.mrb[0].mxu0
        %v811 = vpop.f32.mrb[0].mxu0
        %v812 = vadd.f32 0.0, %v811
        %v813 = vpop.f32.mrb[0].mxu0
        %814 = vmatprep.mubr.bf16.mxu0 0
        %815 = vmatmul.mubr.bf16.gmra.mrb[0].mxu0 %v701
        %v816 = vpop.f32.mrb[0].mxu0
        %v817 = vadd.f32 0.0, %v816
        %v818 = vpop.f32.mrb[0].mxu0
        %v819 = vpop.f32.mrb[0].mxu0
        %v820 = vadd.f32 0.0, %v819
        %v821 = vpop.f32.mrb[0].mxu0
        %822 = vmatprep.mubr.bf16.mxu0 0
        %823 = vmatmul.mubr.bf16.gmra.mrb[0].mxu0 %v704
        %v824 = vpop.f32.mrb[0].mxu0
        %v825 = vadd.f32 0.0, %v824
        %v826 = vpop.f32.mrb[0].mxu0
        %v827 = vpop.f32.mrb[0].mxu0
        %v828 = vadd.f32 0.0, %v827
        %v829 = vpop.f32.mrb[0].mxu0
        %830 = vmatprep.mubr.bf16.mxu0 0
        %831 = vmatmul.mubr.bf16.gmra.mrb[0].mxu0 %v707
        %v832 = vpop.f32.mrb[0].mxu0
        %v833 = vadd.f32 0.0, %v832
        %v834 = vpop.f32.mrb[0].mxu0
        %v835 = vpop.f32.mrb[0].mxu0
        %v836 = vadd.f32 0.0, %v835
        %v837 = vpop.f32.mrb[0].mxu0
        %838 = vmatprep.mubr.bf16.mxu0 0
        %839 = vmatmul.mubr.bf16.gmra.mrb[0].mxu0 %v710
        %v840 = vpop.f32.mrb[0].mxu0
        %v841 = vadd.f32 0.0, %v840
        %v842 = vpop.f32.mrb[0].mxu0
        %v843 = vpop.f32.mrb[0].mxu0
        %v844 = vadd.f32 0.0, %v843
        %v845 = vpop.f32.mrb[0].mxu0
        %846 = vmatprep.mubr.bf16.mxu0 0
        %847 = vmatmul.mubr.bf16.gmra.mrb[0].mxu0 %v713
        %v848 = vpop.f32.mrb[0].mxu0
        %v849 = vadd.f32 0.0, %v848
        %v850 = vpop.f32.mrb[0].mxu0
        %v851 = vpop.f32.mrb[0].mxu0
        %v852 = vadd.f32 0.0, %v851
        %v853 = vpop.f32.mrb[0].mxu0
        %854 = vmatprep.mubr.bf16.mxu0 0
        %855 = vmatmul.mubr.bf16.gmra.mrb[0].mxu0 %v716
        %v856 = vpop.f32.mrb[0].mxu0
        %v857 = vadd.f32 0.0, %v856
        %v858 = vpop.f32.mrb[0].mxu0
        %v859 = vpop.f32.mrb[0].mxu0
        %v860 = vadd.f32 0.0, %v859
        %v861 = vpop.f32.mrb[0].mxu0
        %862 = vmatprep.mubr.bf16.mxu0 0
        %863 = vmatmul.mubr.bf16.gmra.mrb[0].mxu0 %v719
        %v864 = vpop.f32.mrb[0].mxu0
        %v865 = vadd.f32 0.0, %v864
        %v866 = vpop.f32.mrb[0].mxu0
        %v867 = vpop.f32.mrb[0].mxu0
        %v868 = vadd.f32 0.0, %v867
        %v869 = vpop.f32.mrb[0].mxu0
        %870 = vmatprep.mubr.bf16.mxu0 0
        %871 = vmatmul.mubr.bf16.gmra.mrb[0].mxu0 %v722
        %v872 = vpop.f32.mrb[0].mxu0
        %v873 = vadd.f32 0.0, %v872
        %v874 = vpop.f32.mrb[0].mxu0
        %v875 = vpop.f32.mrb[0].mxu0
        %v876 = vadd.f32 0.0, %v875
        %v877 = vpop.f32.mrb[0].mxu0
        %878 = vmatprep.mubr.bf16.mxu0 0
        %879 = vmatmul.mubr.bf16.gmra.mrb[0].mxu0 %v725
        %v880 = vpop.f32.mrb[0].mxu0
        %v881 = vadd.f32 0.0, %v880
        %v882 = vpop.f32.mrb[0].mxu0
        %v883 = vpop.f32.mrb[0].mxu0
        %v884 = vadd.f32 0.0, %v883
        %v885 = vpop.f32.mrb[0].mxu0
        %886 = vmatprep.mubr.bf16.mxu0 0
        %887 = vmatmul.mubr.bf16.gmra.mrb[0].mxu0 %v728
        %v888 = vpop.f32.mrb[0].mxu0
        %v889 = vadd.f32 0.0, %v888
        %v890 = vpop.f32.mrb[0].mxu0
        %v891 = vpop.f32.mrb[0].mxu0
        %v892 = vadd.f32 0.0, %v891
        %v893 = vpop.f32.mrb[0].mxu0
        %894 = vdwg.mxu0
        %v927 = vunpack.c.l.b16 %v198
        %v928 = vunpack.c.l.b16 %v199
        %v929 = vunpack.c.l.b16 %v201
        %v930 = vunpack.c.l.b16 %v202
        %v931 = vunpack.c.l.b16 %v204
        %v932 = vunpack.c.l.b16 %v205
        %v933 = vunpack.c.l.b16 %v207
        %v934 = vunpack.c.l.b16 %v208
        %v935 = vunpack.c.l.b16 %v210
        %v936 = vunpack.c.l.b16 %v211
        %v937 = vunpack.c.l.b16 %v213
        %v938 = vunpack.c.l.b16 %v214
        %v939 = vunpack.c.l.b16 %v216
        %v940 = vunpack.c.l.b16 %v217
        %v941 = vunpack.c.l.b16 %v219
        %v942 = vunpack.c.l.b16 %v220
        %v943 = vunpack.c.l.b16 %v222
        %v944 = vunpack.c.l.b16 %v223
        %v945 = vunpack.c.l.b16 %v225
        %v946 = vunpack.c.l.b16 %v226
        %v947 = vunpack.c.l.b16 %v228
        %v948 = vunpack.c.l.b16 %v229
        %v949 = vunpack.c.l.b16 %v231
        %v950 = vunpack.c.l.b16 %v232
        %v951 = vunpack.c.l.b16 %v234
        %v952 = vunpack.c.l.b16 %v235
        %v953 = vunpack.c.l.b16 %v237
        %v954 = vunpack.c.l.b16 %v238
        %v955 = vunpack.c.l.b16 %v240
        %v956 = vunpack.c.l.b16 %v241
        %v957 = vunpack.c.l.b16 %v243
        %v958 = vunpack.c.l.b16 %v244
        %v959 = vpack.c.b16 %v928, %v927
        %v960 = vpack.c.b16 %v930, %v929
        %v961 = vpack.c.b16 %v932, %v931
        %v962 = vpack.c.b16 %v934, %v933
        %v963 = vpack.c.b16 %v936, %v935
        %v964 = vpack.c.b16 %v938, %v937
        %v965 = vpack.c.b16 %v940, %v939
        %v966 = vpack.c.b16 %v942, %v941
        %v967 = vpack.c.b16 %v944, %v943
        %v968 = vpack.c.b16 %v946, %v945
        %v969 = vpack.c.b16 %v948, %v947
        %v970 = vpack.c.b16 %v950, %v949
        %v971 = vpack.c.b16 %v952, %v951
        %v972 = vpack.c.b16 %v954, %v953
        %v973 = vpack.c.b16 %v956, %v955
        %v974 = vpack.c.b16 %v958, %v957
        %v976 = vsel %vm681, %v959, 0
        %v979 = vsel %vm681, %v960, 0
        %v982 = vsel %vm681, %v961, 0
        %v985 = vsel %vm681, %v962, 0
        %v988 = vsel %vm681, %v963, 0
        %v991 = vsel %vm681, %v964, 0
        %v994 = vsel %vm681, %v965, 0
        %v997 = vsel %vm681, %v966, 0
        %v1000 = vsel %vm681, %v967, 0
        %v1003 = vsel %vm681, %v968, 0
        %v1006 = vsel %vm681, %v969, 0
        %v1009 = vsel %vm681, %v970, 0
        %v1012 = vsel %vm681, %v971, 0
        %v1015 = vsel %vm681, %v972, 0
        %v1018 = vsel %vm681, %v973, 0
        %v1021 = vsel %vm681, %v974, 0
        %v1024 = vsel %vm730, %v186, 0
        %1026 = vmatprep.subr.bf16.mxu0 0
        %1027 = vmatpush1.bf16.msra.mxu0 %v1024
        %1028 = vmatprep.subr.bf16.mxu0 0
        %1029 = vmatpush1.bf16.msra.mxu0 0
        %1030 = vmatprep.subr.bf16.mxu0 0
        %1031 = vmatpush1.bf16.msra.mxu0 0
        %1032 = vmatprep.subr.bf16.mxu0 0
        %1033 = vmatpush1.bf16.msra.mxu0 0
        %1034 = vmatprep.subr.bf16.mxu0 0
        %1035 = vmatpush1.bf16.msra.mxu0 0
        %1036 = vmatprep.subr.bf16.mxu0 0
        %1037 = vmatpush1.bf16.msra.mxu0 0
        %1038 = vmatprep.subr.bf16.mxu0 0
        %1039 = vmatpush1.bf16.msra.mxu0 0
        %1040 = vmatprep.subr.bf16.mxu0 0
        %1041 = vmatpush1.bf16.msra.mxu0 0
        %1042 = vmatprep.subr.bf16.mxu0 0
        %1043 = vmatpush1.bf16.msra.mxu0 0
        %1044 = vmatprep.subr.bf16.mxu0 0
        %1045 = vmatpush1.bf16.msra.mxu0 0
        %1046 = vmatprep.subr.bf16.mxu0 0
        %1047 = vmatpush1.bf16.msra.mxu0 0
        %1048 = vmatprep.subr.bf16.mxu0 0
        %1049 = vmatpush1.bf16.msra.mxu0 0
        %1050 = vmatprep.subr.bf16.mxu0 0
        %1051 = vmatpush1.bf16.msra.mxu0 0
        %1052 = vmatprep.subr.bf16.mxu0 0
        %1053 = vmatpush1.bf16.msra.mxu0 0
        %1054 = vmatprep.subr.bf16.mxu0 0
        %1055 = vmatpush1.bf16.msra.mxu0 0
        %1056 = vmatprep.subr.bf16.mxu0 0
        %1057 = vmatpush1.bf16.msra.mxu0 0
        %1058 = vmatprep.mubr.bf16.mxu0 0
        %1059 = vmatmul.mubr.bf16.gmra.mrb[0].mxu0 %v976
        %v1060 = vpop.f32.mrb[0].mxu0
        %v1061 = vadd.f32 %v769, %v1060
        %v1062 = vpop.f32.mrb[0].mxu0
        %v1063 = vpop.f32.mrb[0].mxu0
        %v1064 = vadd.f32 %v772, %v1063
        %v1065 = vpop.f32.mrb[0].mxu0
        %1066 = vmatprep.mubr.bf16.mxu0 0
        %1067 = vmatmul.mubr.bf16.gmra.mrb[0].mxu0 %v979
        %v1068 = vpop.f32.mrb[0].mxu0
        %v1069 = vadd.f32 %v777, %v1068
        %v1070 = vpop.f32.mrb[0].mxu0
        %v1071 = vpop.f32.mrb[0].mxu0
        %v1072 = vadd.f32 %v780, %v1071
        %v1073 = vpop.f32.mrb[0].mxu0
        %1074 = vmatprep.mubr.bf16.mxu0 0
        %1075 = vmatmul.mubr.bf16.gmra.mrb[0].mxu0 %v982
        %v1076 = vpop.f32.mrb[0].mxu0
        %v1077 = vadd.f32 %v785, %v1076
        %v1078 = vpop.f32.mrb[0].mxu0
        %v1079 = vpop.f32.mrb[0].mxu0
        %v1080 = vadd.f32 %v788, %v1079
        %v1081 = vpop.f32.mrb[0].mxu0
        %1082 = vmatprep.mubr.bf16.mxu0 0
        %1083 = vmatmul.mubr.bf16.gmra.mrb[0].mxu0 %v985
        %v1084 = vpop.f32.mrb[0].mxu0
        %v1085 = vadd.f32 %v793, %v1084
        %v1086 = vpop.f32.mrb[0].mxu0
        %v1087 = vpop.f32.mrb[0].mxu0
        %v1088 = vadd.f32 %v796, %v1087
        %v1089 = vpop.f32.mrb[0].mxu0
        %1090 = vmatprep.mubr.bf16.mxu0 0
        %1091 = vmatmul.mubr.bf16.gmra.mrb[0].mxu0 %v988
        %v1092 = vpop.f32.mrb[0].mxu0
        %v1093 = vadd.f32 %v801, %v1092
        %v1094 = vpop.f32.mrb[0].mxu0
        %v1095 = vpop.f32.mrb[0].mxu0
        %v1096 = vadd.f32 %v804, %v1095
        %v1097 = vpop.f32.mrb[0].mxu0
        %1098 = vmatprep.mubr.bf16.mxu0 0
        %1099 = vmatmul.mubr.bf16.gmra.mrb[0].mxu0 %v991
        %v1100 = vpop.f32.mrb[0].mxu0
        %v1101 = vadd.f32 %v809, %v1100
        %v1102 = vpop.f32.mrb[0].mxu0
        %v1103 = vpop.f32.mrb[0].mxu0
        %v1104 = vadd.f32 %v812, %v1103
        %v1105 = vpop.f32.mrb[0].mxu0
        %1106 = vmatprep.mubr.bf16.mxu0 0
        %1107 = vmatmul.mubr.bf16.gmra.mrb[0].mxu0 %v994
        %v1108 = vpop.f32.mrb[0].mxu0
        %v1109 = vadd.f32 %v817, %v1108
        %v1110 = vpop.f32.mrb[0].mxu0
        %v1111 = vpop.f32.mrb[0].mxu0
        %v1112 = vadd.f32 %v820, %v1111
        %v1113 = vpop.f32.mrb[0].mxu0
        %1114 = vmatprep.mubr.bf16.mxu0 0
        %1115 = vmatmul.mubr.bf16.gmra.mrb[0].mxu0 %v997
        %v1116 = vpop.f32.mrb[0].mxu0
        %v1117 = vadd.f32 %v825, %v1116
        %v1118 = vpop.f32.mrb[0].mxu0
        %v1119 = vpop.f32.mrb[0].mxu0
        %v1120 = vadd.f32 %v828, %v1119
        %v1121 = vpop.f32.mrb[0].mxu0
        %1122 = vmatprep.mubr.bf16.mxu0 0
        %1123 = vmatmul.mubr.bf16.gmra.mrb[0].mxu0 %v1000
        %v1124 = vpop.f32.mrb[0].mxu0
        %v1125 = vadd.f32 %v833, %v1124
        %v1126 = vpop.f32.mrb[0].mxu0
        %v1127 = vpop.f32.mrb[0].mxu0
        %v1128 = vadd.f32 %v836, %v1127
        %v1129 = vpop.f32.mrb[0].mxu0
        %1130 = vmatprep.mubr.bf16.mxu0 0
        %1131 = vmatmul.mubr.bf16.gmra.mrb[0].mxu0 %v1003
        %v1132 = vpop.f32.mrb[0].mxu0
        %v1133 = vadd.f32 %v841, %v1132
        %v1134 = vpop.f32.mrb[0].mxu0
        %v1135 = vpop.f32.mrb[0].mxu0
        %v1136 = vadd.f32 %v844, %v1135
        %v1137 = vpop.f32.mrb[0].mxu0
        %1138 = vmatprep.mubr.bf16.mxu0 0
        %1139 = vmatmul.mubr.bf16.gmra.mrb[0].mxu0 %v1006
        %v1140 = vpop.f32.mrb[0].mxu0
        %v1141 = vadd.f32 %v849, %v1140
        %v1142 = vpop.f32.mrb[0].mxu0
        %v1143 = vpop.f32.mrb[0].mxu0
        %v1144 = vadd.f32 %v852, %v1143
        %v1145 = vpop.f32.mrb[0].mxu0
        %1146 = vmatprep.mubr.bf16.mxu0 0
        %1147 = vmatmul.mubr.bf16.gmra.mrb[0].mxu0 %v1009
        %v1148 = vpop.f32.mrb[0].mxu0
        %v1149 = vadd.f32 %v857, %v1148
        %v1150 = vpop.f32.mrb[0].mxu0
        %v1151 = vpop.f32.mrb[0].mxu0
        %v1152 = vadd.f32 %v860, %v1151
        %v1153 = vpop.f32.mrb[0].mxu0
        %1154 = vmatprep.mubr.bf16.mxu0 0
        %1155 = vmatmul.mubr.bf16.gmra.mrb[0].mxu0 %v1012
        %v1156 = vpop.f32.mrb[0].mxu0
        %v1157 = vadd.f32 %v865, %v1156
        %v1158 = vpop.f32.mrb[0].mxu0
        %v1159 = vpop.f32.mrb[0].mxu0
        %v1160 = vadd.f32 %v868, %v1159
        %v1161 = vpop.f32.mrb[0].mxu0
        %1162 = vmatprep.mubr.bf16.mxu0 0
        %1163 = vmatmul.mubr.bf16.gmra.mrb[0].mxu0 %v1015
        %v1164 = vpop.f32.mrb[0].mxu0
        %v1165 = vadd.f32 %v873, %v1164
        %v1166 = vpop.f32.mrb[0].mxu0
        %v1167 = vpop.f32.mrb[0].mxu0
        %v1168 = vadd.f32 %v876, %v1167
        %v1169 = vpop.f32.mrb[0].mxu0
        %1170 = vmatprep.mubr.bf16.mxu0 0
        %1171 = vmatmul.mubr.bf16.gmra.mrb[0].mxu0 %v1018
        %v1172 = vpop.f32.mrb[0].mxu0
        %v1173 = vadd.f32 %v881, %v1172
        %v1174 = vpop.f32.mrb[0].mxu0
        %v1175 = vpop.f32.mrb[0].mxu0
        %v1176 = vadd.f32 %v884, %v1175
        %v1177 = vpop.f32.mrb[0].mxu0
        %1178 = vmatprep.mubr.bf16.mxu0 0
        %1179 = vmatmul.mubr.bf16.gmra.mrb[0].mxu0 %v1021
        %v1180 = vpop.f32.mrb[0].mxu0
        %v1181 = vadd.f32 %v889, %v1180
        %v1182 = vpop.f32.mrb[0].mxu0
        %v1183 = vpop.f32.mrb[0].mxu0
        %v1184 = vadd.f32 %v892, %v1183
        %v1185 = vpop.f32.mrb[0].mxu0
        %1186 = vdwg.mxu0
        %vm1203 = vcmask 1042432
        %vm1204 = vcmask 1046532
        %vm1205 = vmor %vm1203, %vm1204
        %v1206 = vrot.slane %v198, 5
        %v1207 = vrot.slane %v1206, 4
        %v1208 = vrot.slane %v199, 5
        %v1209 = vsel %vm1205, %v1207, %v1208
        %v1210 = vrot.slane %v1208, 4
        %v1211 = vrot.slane %v200, 5
        %v1212 = vsel %vm1205, %v1210, %v1211
        %v1213 = vrot.slane %v201, 5
        %v1214 = vrot.slane %v1213, 4
        %v1215 = vrot.slane %v202, 5
        %v1216 = vsel %vm1205, %v1214, %v1215
        %v1217 = vrot.slane %v1215, 4
        %v1218 = vrot.slane %v203, 5
        %v1219 = vsel %vm1205, %v1217, %v1218
        %v1220 = vrot.slane %v204, 5
        %v1221 = vrot.slane %v1220, 4
        %v1222 = vrot.slane %v205, 5
        %v1223 = vsel %vm1205, %v1221, %v1222
        %v1224 = vrot.slane %v1222, 4
        %v1225 = vrot.slane %v206, 5
        %v1226 = vsel %vm1205, %v1224, %v1225
        %v1227 = vrot.slane %v207, 5
        %v1228 = vrot.slane %v1227, 4
        %v1229 = vrot.slane %v208, 5
        %v1230 = vsel %vm1205, %v1228, %v1229
        %v1231 = vrot.slane %v1229, 4
        %v1232 = vrot.slane %v209, 5
        %v1233 = vsel %vm1205, %v1231, %v1232
        %v1234 = vrot.slane %v210, 5
        %v1235 = vrot.slane %v1234, 4
        %v1236 = vrot.slane %v211, 5
        %v1237 = vsel %vm1205, %v1235, %v1236
        %v1238 = vrot.slane %v1236, 4
        %v1239 = vrot.slane %v212, 5
        %v1240 = vsel %vm1205, %v1238, %v1239
        %v1241 = vrot.slane %v213, 5
        %v1242 = vrot.slane %v1241, 4
        %v1243 = vrot.slane %v214, 5
        %v1244 = vsel %vm1205, %v1242, %v1243
        %v1245 = vrot.slane %v1243, 4
        %v1246 = vrot.slane %v215, 5
        %v1247 = vsel %vm1205, %v1245, %v1246
        %v1248 = vrot.slane %v216, 5
        %v1249 = vrot.slane %v1248, 4
        %v1250 = vrot.slane %v217, 5
        %v1251 = vsel %vm1205, %v1249, %v1250
        %v1252 = vrot.slane %v1250, 4
        %v1253 = vrot.slane %v218, 5
        %v1254 = vsel %vm1205, %v1252, %v1253
        %v1255 = vrot.slane %v219, 5
        %v1256 = vrot.slane %v1255, 4
        %v1257 = vrot.slane %v220, 5
        %v1258 = vsel %vm1205, %v1256, %v1257
        %v1259 = vrot.slane %v1257, 4
        %v1260 = vrot.slane %v221, 5
        %v1261 = vsel %vm1205, %v1259, %v1260
        %v1262 = vrot.slane %v222, 5
        %v1263 = vrot.slane %v1262, 4
        %v1264 = vrot.slane %v223, 5
        %v1265 = vsel %vm1205, %v1263, %v1264
        %v1266 = vrot.slane %v1264, 4
        %v1267 = vrot.slane %v224, 5
        %v1268 = vsel %vm1205, %v1266, %v1267
        %v1269 = vrot.slane %v225, 5
        %v1270 = vrot.slane %v1269, 4
        %v1271 = vrot.slane %v226, 5
        %v1272 = vsel %vm1205, %v1270, %v1271
        %v1273 = vrot.slane %v1271, 4
        %v1274 = vrot.slane %v227, 5
        %v1275 = vsel %vm1205, %v1273, %v1274
        %v1276 = vrot.slane %v228, 5
        %v1277 = vrot.slane %v1276, 4
        %v1278 = vrot.slane %v229, 5
        %v1279 = vsel %vm1205, %v1277, %v1278
        %v1280 = vrot.slane %v1278, 4
        %v1281 = vrot.slane %v230, 5
        %v1282 = vsel %vm1205, %v1280, %v1281
        %v1283 = vrot.slane %v231, 5
        %v1284 = vrot.slane %v1283, 4
        %v1285 = vrot.slane %v232, 5
        %v1286 = vsel %vm1205, %v1284, %v1285
        %v1287 = vrot.slane %v1285, 4
        %v1288 = vrot.slane %v233, 5
        %v1289 = vsel %vm1205, %v1287, %v1288
        %v1290 = vrot.slane %v234, 5
        %v1291 = vrot.slane %v1290, 4
        %v1292 = vrot.slane %v235, 5
        %v1293 = vsel %vm1205, %v1291, %v1292
        %v1294 = vrot.slane %v1292, 4
        %v1295 = vrot.slane %v236, 5
        %v1296 = vsel %vm1205, %v1294, %v1295
        %v1297 = vrot.slane %v237, 5
        %v1298 = vrot.slane %v1297, 4
        %v1299 = vrot.slane %v238, 5
        %v1300 = vsel %vm1205, %v1298, %v1299
        %v1301 = vrot.slane %v1299, 4
        %v1302 = vrot.slane %v239, 5
        %v1303 = vsel %vm1205, %v1301, %v1302
        %v1304 = vrot.slane %v240, 5
        %v1305 = vrot.slane %v1304, 4
        %v1306 = vrot.slane %v241, 5
        %v1307 = vsel %vm1205, %v1305, %v1306
        %v1308 = vrot.slane %v1306, 4
        %v1309 = vrot.slane %v242, 5
        %v1310 = vsel %vm1205, %v1308, %v1309
        %v1311 = vrot.slane %v243, 5
        %v1312 = vrot.slane %v1311, 4
        %v1313 = vrot.slane %v244, 5
        %v1314 = vsel %vm1205, %v1312, %v1313
        %v1315 = vrot.slane %v1313, 4
        %v1316 = vrot.slane %v245, 5
        %v1317 = vsel %vm1205, %v1315, %v1316
        %v1318 = vunpack.c.l.b16 %v1209
        %v1319 = vunpack.c.l.b16 %v1212
        %v1320 = vunpack.c.l.b16 %v1216
        %v1321 = vunpack.c.l.b16 %v1219
        %v1322 = vunpack.c.l.b16 %v1223
        %v1323 = vunpack.c.l.b16 %v1226
        %v1324 = vunpack.c.l.b16 %v1230
        %v1325 = vunpack.c.l.b16 %v1233
        %v1326 = vunpack.c.l.b16 %v1237
        %v1327 = vunpack.c.l.b16 %v1240
        %v1328 = vunpack.c.l.b16 %v1244
        %v1329 = vunpack.c.l.b16 %v1247
        %v1330 = vunpack.c.l.b16 %v1251
        %v1331 = vunpack.c.l.b16 %v1254
        %v1332 = vunpack.c.l.b16 %v1258
        %v1333 = vunpack.c.l.b16 %v1261
        %v1334 = vunpack.c.l.b16 %v1265
        %v1335 = vunpack.c.l.b16 %v1268
        %v1336 = vunpack.c.l.b16 %v1272
        %v1337 = vunpack.c.l.b16 %v1275
        %v1338 = vunpack.c.l.b16 %v1279
        %v1339 = vunpack.c.l.b16 %v1282
        %v1340 = vunpack.c.l.b16 %v1286
        %v1341 = vunpack.c.l.b16 %v1289
        %v1342 = vunpack.c.l.b16 %v1293
        %v1343 = vunpack.c.l.b16 %v1296
        %v1344 = vunpack.c.l.b16 %v1300
        %v1345 = vunpack.c.l.b16 %v1303
        %v1346 = vunpack.c.l.b16 %v1307
        %v1347 = vunpack.c.l.b16 %v1310
        %v1348 = vunpack.c.l.b16 %v1314
        %v1349 = vunpack.c.l.b16 %v1317
        %v1350 = vpack.c.b16 %v1319, %v1318
        %v1351 = vpack.c.b16 %v1321, %v1320
        %v1352 = vpack.c.b16 %v1323, %v1322
        %v1353 = vpack.c.b16 %v1325, %v1324
        %v1354 = vpack.c.b16 %v1327, %v1326
        %v1355 = vpack.c.b16 %v1329, %v1328
        %v1356 = vpack.c.b16 %v1331, %v1330
        %v1357 = vpack.c.b16 %v1333, %v1332
        %v1358 = vpack.c.b16 %v1335, %v1334
        %v1359 = vpack.c.b16 %v1337, %v1336
        %v1360 = vpack.c.b16 %v1339, %v1338
        %v1361 = vpack.c.b16 %v1341, %v1340
        %v1362 = vpack.c.b16 %v1343, %v1342
        %v1363 = vpack.c.b16 %v1345, %v1344
        %v1364 = vpack.c.b16 %v1347, %v1346
        %v1365 = vpack.c.b16 %v1349, %v1348
        %v1367 = vsel %vm681, %v1350, 0
        %v1370 = vsel %vm681, %v1351, 0
        %v1373 = vsel %vm681, %v1352, 0
        %v1376 = vsel %vm681, %v1353, 0
        %v1379 = vsel %vm681, %v1354, 0
        %v1382 = vsel %vm681, %v1355, 0
        %v1385 = vsel %vm681, %v1356, 0
        %v1388 = vsel %vm681, %v1357, 0
        %v1391 = vsel %vm681, %v1358, 0
        %v1394 = vsel %vm681, %v1359, 0
        %v1397 = vsel %vm681, %v1360, 0
        %v1400 = vsel %vm681, %v1361, 0
        %v1403 = vsel %vm681, %v1362, 0
        %v1406 = vsel %vm681, %v1363, 0
        %v1409 = vsel %vm681, %v1364, 0
        %v1412 = vsel %vm681, %v1365, 0
        %v1415 = vsel %vm730, %v188, 0
        %1417 = vmatprep.subr.bf16.mxu0 0
        %1418 = vmatpush1.bf16.msra.mxu0 %v1415
        %1419 = vmatprep.subr.bf16.mxu0 0
        %1420 = vmatpush1.bf16.msra.mxu0 0
        %1421 = vmatprep.subr.bf16.mxu0 0
        %1422 = vmatpush1.bf16.msra.mxu0 0
        %1423 = vmatprep.subr.bf16.mxu0 0
        %1424 = vmatpush1.bf16.msra.mxu0 0
        %1425 = vmatprep.subr.bf16.mxu0 0
        %1426 = vmatpush1.bf16.msra.mxu0 0
        %1427 = vmatprep.subr.bf16.mxu0 0
        %1428 = vmatpush1.bf16.msra.mxu0 0
        %1429 = vmatprep.subr.bf16.mxu0 0
        %1430 = vmatpush1.bf16.msra.mxu0 0
        %1431 = vmatprep.subr.bf16.mxu0 0
        %1432 = vmatpush1.bf16.msra.mxu0 0
        %1433 = vmatprep.subr.bf16.mxu0 0
        %1434 = vmatpush1.bf16.msra.mxu0 0
        %1435 = vmatprep.subr.bf16.mxu0 0
        %1436 = vmatpush1.bf16.msra.mxu0 0
        %1437 = vmatprep.subr.bf16.mxu0 0
        %1438 = vmatpush1.bf16.msra.mxu0 0
        %1439 = vmatprep.subr.bf16.mxu0 0
        %1440 = vmatpush1.bf16.msra.mxu0 0
        %1441 = vmatprep.subr.bf16.mxu0 0
        %1442 = vmatpush1.bf16.msra.mxu0 0
        %1443 = vmatprep.subr.bf16.mxu0 0
        %1444 = vmatpush1.bf16.msra.mxu0 0
        %1445 = vmatprep.subr.bf16.mxu0 0
        %1446 = vmatpush1.bf16.msra.mxu0 0
        %1447 = vmatprep.subr.bf16.mxu0 0
        %1448 = vmatpush1.bf16.msra.mxu0 0
        %1449 = vmatprep.mubr.bf16.mxu0 0
        %1450 = vmatmul.mubr.bf16.gmra.mrb[0].mxu0 %v1367
        %v1451 = vpop.f32.mrb[0].mxu0
        %v1452 = vadd.f32 0.0, %v1451
        %v1453 = vpop.f32.mrb[0].mxu0
        %v1454 = vpop.f32.mrb[0].mxu0
        %v1455 = vadd.f32 0.0, %v1454
        %v1456 = vpop.f32.mrb[0].mxu0
        %1457 = vmatprep.mubr.bf16.mxu0 0
        %1458 = vmatmul.mubr.bf16.gmra.mrb[0].mxu0 %v1370
        %v1459 = vpop.f32.mrb[0].mxu0
        %v1460 = vadd.f32 0.0, %v1459
        %v1461 = vpop.f32.mrb[0].mxu0
        %v1462 = vpop.f32.mrb[0].mxu0
        %v1463 = vadd.f32 0.0, %v1462
        %v1464 = vpop.f32.mrb[0].mxu0
        %1465 = vmatprep.mubr.bf16.mxu0 0
        %1466 = vmatmul.mubr.bf16.gmra.mrb[0].mxu0 %v1373
        %v1467 = vpop.f32.mrb[0].mxu0
        %v1468 = vadd.f32 0.0, %v1467
        %v1469 = vpop.f32.mrb[0].mxu0
        %v1470 = vpop.f32.mrb[0].mxu0
        %v1471 = vadd.f32 0.0, %v1470
        %v1472 = vpop.f32.mrb[0].mxu0
        %1473 = vmatprep.mubr.bf16.mxu0 0
        %1474 = vmatmul.mubr.bf16.gmra.mrb[0].mxu0 %v1376
        %v1475 = vpop.f32.mrb[0].mxu0
        %v1476 = vadd.f32 0.0, %v1475
        %v1477 = vpop.f32.mrb[0].mxu0
        %v1478 = vpop.f32.mrb[0].mxu0
        %v1479 = vadd.f32 0.0, %v1478
        %v1480 = vpop.f32.mrb[0].mxu0
        %1481 = vmatprep.mubr.bf16.mxu0 0
        %1482 = vmatmul.mubr.bf16.gmra.mrb[0].mxu0 %v1379
        %v1483 = vpop.f32.mrb[0].mxu0
        %v1484 = vadd.f32 0.0, %v1483
        %v1485 = vpop.f32.mrb[0].mxu0
        %v1486 = vpop.f32.mrb[0].mxu0
        %v1487 = vadd.f32 0.0, %v1486
        %v1488 = vpop.f32.mrb[0].mxu0
        %1489 = vmatprep.mubr.bf16.mxu0 0
        %1490 = vmatmul.mubr.bf16.gmra.mrb[0].mxu0 %v1382
        %v1491 = vpop.f32.mrb[0].mxu0
        %v1492 = vadd.f32 0.0, %v1491
        %v1493 = vpop.f32.mrb[0].mxu0
        %v1494 = vpop.f32.mrb[0].mxu0
        %v1495 = vadd.f32 0.0, %v1494
        %v1496 = vpop.f32.mrb[0].mxu0
        %1497 = vmatprep.mubr.bf16.mxu0 0
        %1498 = vmatmul.mubr.bf16.gmra.mrb[0].mxu0 %v1385
        %v1499 = vpop.f32.mrb[0].mxu0
        %v1500 = vadd.f32 0.0, %v1499
        %v1501 = vpop.f32.mrb[0].mxu0
        %v1502 = vpop.f32.mrb[0].mxu0
        %v1503 = vadd.f32 0.0, %v1502
        %v1504 = vpop.f32.mrb[0].mxu0
        %1505 = vmatprep.mubr.bf16.mxu0 0
        %1506 = vmatmul.mubr.bf16.gmra.mrb[0].mxu0 %v1388
        %v1507 = vpop.f32.mrb[0].mxu0
        %v1508 = vadd.f32 0.0, %v1507
        %v1509 = vpop.f32.mrb[0].mxu0
        %v1510 = vpop.f32.mrb[0].mxu0
        %v1511 = vadd.f32 0.0, %v1510
        %v1512 = vpop.f32.mrb[0].mxu0
        %1513 = vmatprep.mubr.bf16.mxu0 0
        %1514 = vmatmul.mubr.bf16.gmra.mrb[0].mxu0 %v1391
        %v1515 = vpop.f32.mrb[0].mxu0
        %v1516 = vadd.f32 0.0, %v1515
        %v1517 = vpop.f32.mrb[0].mxu0
        %v1518 = vpop.f32.mrb[0].mxu0
        %v1519 = vadd.f32 0.0, %v1518
        %v1520 = vpop.f32.mrb[0].mxu0
        %1521 = vmatprep.mubr.bf16.mxu0 0
        %1522 = vmatmul.mubr.bf16.gmra.mrb[0].mxu0 %v1394
        %v1523 = vpop.f32.mrb[0].mxu0
        %v1524 = vadd.f32 0.0, %v1523
        %v1525 = vpop.f32.mrb[0].mxu0
        %v1526 = vpop.f32.mrb[0].mxu0
        %v1527 = vadd.f32 0.0, %v1526
        %v1528 = vpop.f32.mrb[0].mxu0
        %1529 = vmatprep.mubr.bf16.mxu0 0
        %1530 = vmatmul.mubr.bf16.gmra.mrb[0].mxu0 %v1397
        %v1531 = vpop.f32.mrb[0].mxu0
        %v1532 = vadd.f32 0.0, %v1531
        %v1533 = vpop.f32.mrb[0].mxu0
        %v1534 = vpop.f32.mrb[0].mxu0
        %v1535 = vadd.f32 0.0, %v1534
        %v1536 = vpop.f32.mrb[0].mxu0
        %1537 = vmatprep.mubr.bf16.mxu0 0
        %1538 = vmatmul.mubr.bf16.gmra.mrb[0].mxu0 %v1400
        %v1539 = vpop.f32.mrb[0].mxu0
        %v1540 = vadd.f32 0.0, %v1539
        %v1541 = vpop.f32.mrb[0].mxu0
        %v1542 = vpop.f32.mrb[0].mxu0
        %v1543 = vadd.f32 0.0, %v1542
        %v1544 = vpop.f32.mrb[0].mxu0
        %1545 = vmatprep.mubr.bf16.mxu0 0
        %1546 = vmatmul.mubr.bf16.gmra.mrb[0].mxu0 %v1403
        %v1547 = vpop.f32.mrb[0].mxu0
        %v1548 = vadd.f32 0.0, %v1547
        %v1549 = vpop.f32.mrb[0].mxu0
        %v1550 = vpop.f32.mrb[0].mxu0
        %v1551 = vadd.f32 0.0, %v1550
        %v1552 = vpop.f32.mrb[0].mxu0
        %1553 = vmatprep.mubr.bf16.mxu0 0
        %1554 = vmatmul.mubr.bf16.gmra.mrb[0].mxu0 %v1406
        %v1555 = vpop.f32.mrb[0].mxu0
        %v1556 = vadd.f32 0.0, %v1555
        %v1557 = vpop.f32.mrb[0].mxu0
        %v1558 = vpop.f32.mrb[0].mxu0
        %v1559 = vadd.f32 0.0, %v1558
        %v1560 = vpop.f32.mrb[0].mxu0
        %1561 = vmatprep.mubr.bf16.mxu0 0
        %1562 = vmatmul.mubr.bf16.gmra.mrb[0].mxu0 %v1409
        %v1563 = vpop.f32.mrb[0].mxu0
        %v1564 = vadd.f32 0.0, %v1563
        %v1565 = vpop.f32.mrb[0].mxu0
        %v1566 = vpop.f32.mrb[0].mxu0
        %v1567 = vadd.f32 0.0, %v1566
        %v1568 = vpop.f32.mrb[0].mxu0
        %1569 = vmatprep.mubr.bf16.mxu0 0
        %1570 = vmatmul.mubr.bf16.gmra.mrb[0].mxu0 %v1412
        %v1571 = vpop.f32.mrb[0].mxu0
        %v1572 = vadd.f32 0.0, %v1571
        %v1573 = vpop.f32.mrb[0].mxu0
        %v1574 = vpop.f32.mrb[0].mxu0
        %v1575 = vadd.f32 0.0, %v1574
        %v1576 = vpop.f32.mrb[0].mxu0
        %1577 = vdwg.mxu0
        %v1578 = vadd.f32 %v1061, %v1452
        %v1579 = vadd.f32 %v1064, %v1455
        %v1580 = vadd.f32 %v1069, %v1460
        %v1581 = vadd.f32 %v1072, %v1463
        %v1582 = vadd.f32 %v1077, %v1468
        %v1583 = vadd.f32 %v1080, %v1471
        %v1584 = vadd.f32 %v1085, %v1476
        %v1585 = vadd.f32 %v1088, %v1479
        %v1586 = vadd.f32 %v1093, %v1484
        %v1587 = vadd.f32 %v1096, %v1487
        %v1588 = vadd.f32 %v1101, %v1492
        %v1589 = vadd.f32 %v1104, %v1495
        %v1590 = vadd.f32 %v1109, %v1500
        %v1591 = vadd.f32 %v1112, %v1503
        %v1592 = vadd.f32 %v1117, %v1508
        %v1593 = vadd.f32 %v1120, %v1511
        %v1594 = vadd.f32 %v1125, %v1516
        %v1595 = vadd.f32 %v1128, %v1519
        %v1596 = vadd.f32 %v1133, %v1524
        %v1597 = vadd.f32 %v1136, %v1527
        %v1598 = vadd.f32 %v1141, %v1532
        %v1599 = vadd.f32 %v1144, %v1535
        %v1600 = vadd.f32 %v1149, %v1540
        %v1601 = vadd.f32 %v1152, %v1543
        %v1602 = vadd.f32 %v1157, %v1548
        %v1603 = vadd.f32 %v1160, %v1551
        %v1604 = vadd.f32 %v1165, %v1556
        %v1605 = vadd.f32 %v1168, %v1559
        %v1606 = vadd.f32 %v1173, %v1564
        %v1607 = vadd.f32 %v1176, %v1567
        %v1608 = vadd.f32 %v1181, %v1572
        %v1609 = vadd.f32 %v1184, %v1575
        %s1610 = sadd.s32 %s185, 1
        %s1611 = smul.u32 %s1610, 3
        %s1612 = smul.addr %s1611, 4
        %s1613 = scalar_lea.vmem %s182, %s1612
        %v1614 = vld [vmem:[%s1613] sm:$0xf]
        %v1615 = vld [vmem:[%s1613 + $0x4] sm:$0xf]
        %v1616 = vld [vmem:[%s1613 + $0x8] sm:$0x1]
        %v1617 = vld [vmem:[%s1613 + $0xc] sm:$0xf]
        %v1618 = vld [vmem:[%s1613 + $0x10] sm:$0xf]
        %v1619 = vld [vmem:[%s1613 + $0x14] sm:$0x1]
        %v1620 = vld [vmem:[%s1613 + $0x18] sm:$0xf]
        %v1621 = vld [vmem:[%s1613 + $0x1c] sm:$0xf]
        %v1622 = vld [vmem:[%s1613 + $0x20] sm:$0x1]
        %v1623 = vld [vmem:[%s1613 + $0x24] sm:$0xf]
        %v1624 = vld [vmem:[%s1613 + $0x28] sm:$0xf]
        %v1625 = vld [vmem:[%s1613 + $0x2c] sm:$0x1]
        %v1626 = vld [vmem:[%s1613 + $0x30] sm:$0xf]
        %v1627 = vld [vmem:[%s1613 + $0x34] sm:$0xf]
        %v1628 = vld [vmem:[%s1613 + $0x38] sm:$0x1]
        %v1629 = vld [vmem:[%s1613 + $0x3c] sm:$0xf]
        %v1630 = vld [vmem:[%s1613 + $0x40] sm:$0xf]
        %v1631 = vld [vmem:[%s1613 + $0x44] sm:$0x1]
        %v1632 = vld [vmem:[%s1613 + $0x48] sm:$0xf]
        %v1633 = vld [vmem:[%s1613 + $0x4c] sm:$0xf]
        %v1634 = vld [vmem:[%s1613 + $0x50] sm:$0x1]
        %v1635 = vld [vmem:[%s1613 + $0x54] sm:$0xf]
        %v1636 = vld [vmem:[%s1613 + $0x58] sm:$0xf]
        %v1637 = vld [vmem:[%s1613 + $0x5c] sm:$0x1]
        %v1638 = vld [vmem:[%s1613 + $0x60] sm:$0xf]
        %v1639 = vld [vmem:[%s1613 + $0x64] sm:$0xf]
        %v1640 = vld [vmem:[%s1613 + $0x68] sm:$0x1]
        %v1641 = vld [vmem:[%s1613 + $0x6c] sm:$0xf]
        %v1642 = vld [vmem:[%s1613 + $0x70] sm:$0xf]
        %v1643 = vld [vmem:[%s1613 + $0x74] sm:$0x1]
        %v1644 = vld [vmem:[%s1613 + $0x78] sm:$0xf]
        %v1645 = vld [vmem:[%s1613 + $0x7c] sm:$0xf]
        %v1646 = vld [vmem:[%s1613 + $0x80] sm:$0x1]
        %v1647 = vld [vmem:[%s1613 + $0x84] sm:$0xf]
        %v1648 = vld [vmem:[%s1613 + $0x88] sm:$0xf]
        %v1649 = vld [vmem:[%s1613 + $0x8c] sm:$0x1]
        %v1650 = vld [vmem:[%s1613 + $0x90] sm:$0xf]
        %v1651 = vld [vmem:[%s1613 + $0x94] sm:$0xf]
        %v1652 = vld [vmem:[%s1613 + $0x98] sm:$0x1]
        %v1653 = vld [vmem:[%s1613 + $0x9c] sm:$0xf]
        %v1654 = vld [vmem:[%s1613 + $0xa0] sm:$0xf]
        %v1655 = vld [vmem:[%s1613 + $0xa4] sm:$0x1]
        %v1656 = vld [vmem:[%s1613 + $0xa8] sm:$0xf]
        %v1657 = vld [vmem:[%s1613 + $0xac] sm:$0xf]
        %v1658 = vld [vmem:[%s1613 + $0xb0] sm:$0x1]
        %v1659 = vld [vmem:[%s1613 + $0xb4] sm:$0xf]
        %v1660 = vld [vmem:[%s1613 + $0xb8] sm:$0xf]
        %v1661 = vld [vmem:[%s1613 + $0xbc] sm:$0x1]
        %v1694 = vunpack.c.l.b16 %v1614
        %v1695 = vunpack.c.l.b16 %v1615
        %v1696 = vunpack.c.l.b16 %v1617
        %v1697 = vunpack.c.l.b16 %v1618
        %v1698 = vunpack.c.l.b16 %v1620
        %v1699 = vunpack.c.l.b16 %v1621
        %v1700 = vunpack.c.l.b16 %v1623
        %v1701 = vunpack.c.l.b16 %v1624
        %v1702 = vunpack.c.l.b16 %v1626
        %v1703 = vunpack.c.l.b16 %v1627
        %v1704 = vunpack.c.l.b16 %v1629
        %v1705 = vunpack.c.l.b16 %v1630
        %v1706 = vunpack.c.l.b16 %v1632
        %v1707 = vunpack.c.l.b16 %v1633
        %v1708 = vunpack.c.l.b16 %v1635
        %v1709 = vunpack.c.l.b16 %v1636
        %v1710 = vunpack.c.l.b16 %v1638
        %v1711 = vunpack.c.l.b16 %v1639
        %v1712 = vunpack.c.l.b16 %v1641
        %v1713 = vunpack.c.l.b16 %v1642
        %v1714 = vunpack.c.l.b16 %v1644
        %v1715 = vunpack.c.l.b16 %v1645
        %v1716 = vunpack.c.l.b16 %v1647
        %v1717 = vunpack.c.l.b16 %v1648
        %v1718 = vunpack.c.l.b16 %v1650
        %v1719 = vunpack.c.l.b16 %v1651
        %v1720 = vunpack.c.l.b16 %v1653
        %v1721 = vunpack.c.l.b16 %v1654
        %v1722 = vunpack.c.l.b16 %v1656
        %v1723 = vunpack.c.l.b16 %v1657
        %v1724 = vunpack.c.l.b16 %v1659
        %v1725 = vunpack.c.l.b16 %v1660
        %v1726 = vpack.c.b16 %v1695, %v1694
        %v1727 = vpack.c.b16 %v1697, %v1696
        %v1728 = vpack.c.b16 %v1699, %v1698
        %v1729 = vpack.c.b16 %v1701, %v1700
        %v1730 = vpack.c.b16 %v1703, %v1702
        %v1731 = vpack.c.b16 %v1705, %v1704
        %v1732 = vpack.c.b16 %v1707, %v1706
        %v1733 = vpack.c.b16 %v1709, %v1708
        %v1734 = vpack.c.b16 %v1711, %v1710
        %v1735 = vpack.c.b16 %v1713, %v1712
        %v1736 = vpack.c.b16 %v1715, %v1714
        %v1737 = vpack.c.b16 %v1717, %v1716
        %v1738 = vpack.c.b16 %v1719, %v1718
        %v1739 = vpack.c.b16 %v1721, %v1720
        %v1740 = vpack.c.b16 %v1723, %v1722
        %v1741 = vpack.c.b16 %v1725, %v1724
        %v1743 = vsel %vm681, %v1726, 0
        %v1746 = vsel %vm681, %v1727, 0
        %v1749 = vsel %vm681, %v1728, 0
        %v1752 = vsel %vm681, %v1729, 0
        %v1755 = vsel %vm681, %v1730, 0
        %v1758 = vsel %vm681, %v1731, 0
        %v1761 = vsel %vm681, %v1732, 0
        %v1764 = vsel %vm681, %v1733, 0
        %v1767 = vsel %vm681, %v1734, 0
        %v1770 = vsel %vm681, %v1735, 0
        %v1773 = vsel %vm681, %v1736, 0
        %v1776 = vsel %vm681, %v1737, 0
        %v1779 = vsel %vm681, %v1738, 0
        %v1782 = vsel %vm681, %v1739, 0
        %v1785 = vsel %vm681, %v1740, 0
        %v1788 = vsel %vm681, %v1741, 0
        %v1791 = vsel %vm730, %v189, 0
        %1793 = vmatprep.subr.bf16.mxu0 0
        %1794 = vmatpush1.bf16.msra.mxu0 %v1791
        %1795 = vmatprep.subr.bf16.mxu0 0
        %1796 = vmatpush1.bf16.msra.mxu0 0
        %1797 = vmatprep.subr.bf16.mxu0 0
        %1798 = vmatpush1.bf16.msra.mxu0 0
        %1799 = vmatprep.subr.bf16.mxu0 0
        %1800 = vmatpush1.bf16.msra.mxu0 0
        %1801 = vmatprep.subr.bf16.mxu0 0
        %1802 = vmatpush1.bf16.msra.mxu0 0
        %1803 = vmatprep.subr.bf16.mxu0 0
        %1804 = vmatpush1.bf16.msra.mxu0 0
        %1805 = vmatprep.subr.bf16.mxu0 0
        %1806 = vmatpush1.bf16.msra.mxu0 0
        %1807 = vmatprep.subr.bf16.mxu0 0
        %1808 = vmatpush1.bf16.msra.mxu0 0
        %1809 = vmatprep.subr.bf16.mxu0 0
        %1810 = vmatpush1.bf16.msra.mxu0 0
        %1811 = vmatprep.subr.bf16.mxu0 0
        %1812 = vmatpush1.bf16.msra.mxu0 0
        %1813 = vmatprep.subr.bf16.mxu0 0
        %1814 = vmatpush1.bf16.msra.mxu0 0
        %1815 = vmatprep.subr.bf16.mxu0 0
        %1816 = vmatpush1.bf16.msra.mxu0 0
        %1817 = vmatprep.subr.bf16.mxu0 0
        %1818 = vmatpush1.bf16.msra.mxu0 0
        %1819 = vmatprep.subr.bf16.mxu0 0
        %1820 = vmatpush1.bf16.msra.mxu0 0
        %1821 = vmatprep.subr.bf16.mxu0 0
        %1822 = vmatpush1.bf16.msra.mxu0 0
        %1823 = vmatprep.subr.bf16.mxu0 0
        %1824 = vmatpush1.bf16.msra.mxu0 0
        %1825 = vmatprep.mubr.bf16.mxu0 0
        %1826 = vmatmul.mubr.bf16.gmra.mrb[0].mxu0 %v1743
        %v1827 = vpop.f32.mrb[0].mxu0
        %v1828 = vadd.f32 0.0, %v1827
        %v1829 = vpop.f32.mrb[0].mxu0
        %v1830 = vpop.f32.mrb[0].mxu0
        %v1831 = vadd.f32 0.0, %v1830
        %v1832 = vpop.f32.mrb[0].mxu0
        %1833 = vmatprep.mubr.bf16.mxu0 0
        %1834 = vmatmul.mubr.bf16.gmra.mrb[0].mxu0 %v1746
        %v1835 = vpop.f32.mrb[0].mxu0
        %v1836 = vadd.f32 0.0, %v1835
        %v1837 = vpop.f32.mrb[0].mxu0
        %v1838 = vpop.f32.mrb[0].mxu0
        %v1839 = vadd.f32 0.0, %v1838
        %v1840 = vpop.f32.mrb[0].mxu0
        %1841 = vmatprep.mubr.bf16.mxu0 0
        %1842 = vmatmul.mubr.bf16.gmra.mrb[0].mxu0 %v1749
        %v1843 = vpop.f32.mrb[0].mxu0
        %v1844 = vadd.f32 0.0, %v1843
        %v1845 = vpop.f32.mrb[0].mxu0
        %v1846 = vpop.f32.mrb[0].mxu0
        %v1847 = vadd.f32 0.0, %v1846
        %v1848 = vpop.f32.mrb[0].mxu0
        %1849 = vmatprep.mubr.bf16.mxu0 0
        %1850 = vmatmul.mubr.bf16.gmra.mrb[0].mxu0 %v1752
        %v1851 = vpop.f32.mrb[0].mxu0
        %v1852 = vadd.f32 0.0, %v1851
        %v1853 = vpop.f32.mrb[0].mxu0
        %v1854 = vpop.f32.mrb[0].mxu0
        %v1855 = vadd.f32 0.0, %v1854
        %v1856 = vpop.f32.mrb[0].mxu0
        %1857 = vmatprep.mubr.bf16.mxu0 0
        %1858 = vmatmul.mubr.bf16.gmra.mrb[0].mxu0 %v1755
        %v1859 = vpop.f32.mrb[0].mxu0
        %v1860 = vadd.f32 0.0, %v1859
        %v1861 = vpop.f32.mrb[0].mxu0
        %v1862 = vpop.f32.mrb[0].mxu0
        %v1863 = vadd.f32 0.0, %v1862
        %v1864 = vpop.f32.mrb[0].mxu0
        %1865 = vmatprep.mubr.bf16.mxu0 0
        %1866 = vmatmul.mubr.bf16.gmra.mrb[0].mxu0 %v1758
        %v1867 = vpop.f32.mrb[0].mxu0
        %v1868 = vadd.f32 0.0, %v1867
        %v1869 = vpop.f32.mrb[0].mxu0
        %v1870 = vpop.f32.mrb[0].mxu0
        %v1871 = vadd.f32 0.0, %v1870
        %v1872 = vpop.f32.mrb[0].mxu0
        %1873 = vmatprep.mubr.bf16.mxu0 0
        %1874 = vmatmul.mubr.bf16.gmra.mrb[0].mxu0 %v1761
        %v1875 = vpop.f32.mrb[0].mxu0
        %v1876 = vadd.f32 0.0, %v1875
        %v1877 = vpop.f32.mrb[0].mxu0
        %v1878 = vpop.f32.mrb[0].mxu0
        %v1879 = vadd.f32 0.0, %v1878
        %v1880 = vpop.f32.mrb[0].mxu0
        %1881 = vmatprep.mubr.bf16.mxu0 0
        %1882 = vmatmul.mubr.bf16.gmra.mrb[0].mxu0 %v1764
        %v1883 = vpop.f32.mrb[0].mxu0
        %v1884 = vadd.f32 0.0, %v1883
        %v1885 = vpop.f32.mrb[0].mxu0
        %v1886 = vpop.f32.mrb[0].mxu0
        %v1887 = vadd.f32 0.0, %v1886
        %v1888 = vpop.f32.mrb[0].mxu0
        %1889 = vmatprep.mubr.bf16.mxu0 0
        %1890 = vmatmul.mubr.bf16.gmra.mrb[0].mxu0 %v1767
        %v1891 = vpop.f32.mrb[0].mxu0
        %v1892 = vadd.f32 0.0, %v1891
        %v1893 = vpop.f32.mrb[0].mxu0
        %v1894 = vpop.f32.mrb[0].mxu0
        %v1895 = vadd.f32 0.0, %v1894
        %v1896 = vpop.f32.mrb[0].mxu0
        %1897 = vmatprep.mubr.bf16.mxu0 0
        %1898 = vmatmul.mubr.bf16.gmra.mrb[0].mxu0 %v1770
        %v1899 = vpop.f32.mrb[0].mxu0
        %v1900 = vadd.f32 0.0, %v1899
        %v1901 = vpop.f32.mrb[0].mxu0
        %v1902 = vpop.f32.mrb[0].mxu0
        %v1903 = vadd.f32 0.0, %v1902
        %v1904 = vpop.f32.mrb[0].mxu0
        %1905 = vmatprep.mubr.bf16.mxu0 0
        %1906 = vmatmul.mubr.bf16.gmra.mrb[0].mxu0 %v1773
        %v1907 = vpop.f32.mrb[0].mxu0
        %v1908 = vadd.f32 0.0, %v1907
        %v1909 = vpop.f32.mrb[0].mxu0
        %v1910 = vpop.f32.mrb[0].mxu0
        %v1911 = vadd.f32 0.0, %v1910
        %v1912 = vpop.f32.mrb[0].mxu0
        %1913 = vmatprep.mubr.bf16.mxu0 0
        %1914 = vmatmul.mubr.bf16.gmra.mrb[0].mxu0 %v1776
        %v1915 = vpop.f32.mrb[0].mxu0
        %v1916 = vadd.f32 0.0, %v1915
        %v1917 = vpop.f32.mrb[0].mxu0
        %v1918 = vpop.f32.mrb[0].mxu0
        %v1919 = vadd.f32 0.0, %v1918
        %v1920 = vpop.f32.mrb[0].mxu0
        %1921 = vmatprep.mubr.bf16.mxu0 0
        %1922 = vmatmul.mubr.bf16.gmra.mrb[0].mxu0 %v1779
        %v1923 = vpop.f32.mrb[0].mxu0
        %v1924 = vadd.f32 0.0, %v1923
        %v1925 = vpop.f32.mrb[0].mxu0
        %v1926 = vpop.f32.mrb[0].mxu0
        %v1927 = vadd.f32 0.0, %v1926
        %v1928 = vpop.f32.mrb[0].mxu0
        %1929 = vmatprep.mubr.bf16.mxu0 0
        %1930 = vmatmul.mubr.bf16.gmra.mrb[0].mxu0 %v1782
        %v1931 = vpop.f32.mrb[0].mxu0
        %v1932 = vadd.f32 0.0, %v1931
        %v1933 = vpop.f32.mrb[0].mxu0
        %v1934 = vpop.f32.mrb[0].mxu0
        %v1935 = vadd.f32 0.0, %v1934
        %v1936 = vpop.f32.mrb[0].mxu0
        %1937 = vmatprep.mubr.bf16.mxu0 0
        %1938 = vmatmul.mubr.bf16.gmra.mrb[0].mxu0 %v1785
        %v1939 = vpop.f32.mrb[0].mxu0
        %v1940 = vadd.f32 0.0, %v1939
        %v1941 = vpop.f32.mrb[0].mxu0
        %v1942 = vpop.f32.mrb[0].mxu0
        %v1943 = vadd.f32 0.0, %v1942
        %v1944 = vpop.f32.mrb[0].mxu0
        %1945 = vmatprep.mubr.bf16.mxu0 0
        %1946 = vmatmul.mubr.bf16.gmra.mrb[0].mxu0 %v1788
        %v1947 = vpop.f32.mrb[0].mxu0
        %v1948 = vadd.f32 0.0, %v1947
        %v1949 = vpop.f32.mrb[0].mxu0
        %v1950 = vpop.f32.mrb[0].mxu0
        %v1951 = vadd.f32 0.0, %v1950
        %v1952 = vpop.f32.mrb[0].mxu0
        %1953 = vdwg.mxu0
        %v1954 = vadd.f32 %v1578, %v1828
        %v1955 = vadd.f32 %v1579, %v1831
        %v1956 = vadd.f32 %v1580, %v1836
        %v1957 = vadd.f32 %v1581, %v1839
        %v1958 = vadd.f32 %v1582, %v1844
        %v1959 = vadd.f32 %v1583, %v1847
        %v1960 = vadd.f32 %v1584, %v1852
        %v1961 = vadd.f32 %v1585, %v1855
        %v1962 = vadd.f32 %v1586, %v1860
        %v1963 = vadd.f32 %v1587, %v1863
        %v1964 = vadd.f32 %v1588, %v1868
        %v1965 = vadd.f32 %v1589, %v1871
        %v1966 = vadd.f32 %v1590, %v1876
        %v1967 = vadd.f32 %v1591, %v1879
        %v1968 = vadd.f32 %v1592, %v1884
        %v1969 = vadd.f32 %v1593, %v1887
        %v1970 = vadd.f32 %v1594, %v1892
        %v1971 = vadd.f32 %v1595, %v1895
        %v1972 = vadd.f32 %v1596, %v1900
        %v1973 = vadd.f32 %v1597, %v1903
        %v1974 = vadd.f32 %v1598, %v1908
        %v1975 = vadd.f32 %v1599, %v1911
        %v1976 = vadd.f32 %v1600, %v1916
        %v1977 = vadd.f32 %v1601, %v1919
        %v1978 = vadd.f32 %v1602, %v1924
        %v1979 = vadd.f32 %v1603, %v1927
        %v1980 = vadd.f32 %v1604, %v1932
        %v1981 = vadd.f32 %v1605, %v1935
        %v1982 = vadd.f32 %v1606, %v1940
        %v1983 = vadd.f32 %v1607, %v1943
        %v1984 = vadd.f32 %v1608, %v1948
        %v1985 = vadd.f32 %v1609, %v1951
        %v1987 = vshrl.u32 %v1614, 16
        %v1989 = vrot.slane %v1987, 4
        %v1990 = vshll.u32 %v1614, 16
        %v1992 = vrot.slane %v1990, 5
        %v1993 = vor.u32 %v1989, %v1992
        %v1994 = vrot.slane %v1993, 4
        %v1996 = vshll.u32 %v1615, 16
        %v1998 = vrot.slane %v1996, 5
        %v1999 = vsel %vm248, %v1994, %v1998
        %v2000 = vshrl.u32 %v1615, 16
        %v2002 = vrot.slane %v2000, 4
        %v2003 = vor.u32 %v2002, %v1998
        %v2004 = vrot.slane %v2003, 4
        %v2006 = vshll.u32 %v1616, 16
        %v2008 = vrot.slane %v2006, 5
        %v2009 = vsel %vm248, %v2004, %v2008
        %v2011 = vshrl.u32 %v1617, 16
        %v2013 = vrot.slane %v2011, 4
        %v2014 = vshll.u32 %v1617, 16
        %v2016 = vrot.slane %v2014, 5
        %v2017 = vor.u32 %v2013, %v2016
        %v2018 = vrot.slane %v2017, 4
        %v2020 = vshll.u32 %v1618, 16
        %v2022 = vrot.slane %v2020, 5
        %v2023 = vsel %vm248, %v2018, %v2022
        %v2024 = vshrl.u32 %v1618, 16
        %v2026 = vrot.slane %v2024, 4
        %v2027 = vor.u32 %v2026, %v2022
        %v2028 = vrot.slane %v2027, 4
        %v2030 = vshll.u32 %v1619, 16
        %v2032 = vrot.slane %v2030, 5
        %v2033 = vsel %vm248, %v2028, %v2032
        %v2035 = vshrl.u32 %v1620, 16
        %v2037 = vrot.slane %v2035, 4
        %v2038 = vshll.u32 %v1620, 16
        %v2040 = vrot.slane %v2038, 5
        %v2041 = vor.u32 %v2037, %v2040
        %v2042 = vrot.slane %v2041, 4
        %v2044 = vshll.u32 %v1621, 16
        %v2046 = vrot.slane %v2044, 5
        %v2047 = vsel %vm248, %v2042, %v2046
        %v2048 = vshrl.u32 %v1621, 16
        %v2050 = vrot.slane %v2048, 4
        %v2051 = vor.u32 %v2050, %v2046
        %v2052 = vrot.slane %v2051, 4
        %v2054 = vshll.u32 %v1622, 16
        %v2056 = vrot.slane %v2054, 5
        %v2057 = vsel %vm248, %v2052, %v2056
        %v2059 = vshrl.u32 %v1623, 16
        %v2061 = vrot.slane %v2059, 4
        %v2062 = vshll.u32 %v1623, 16
        %v2064 = vrot.slane %v2062, 5
        %v2065 = vor.u32 %v2061, %v2064
        %v2066 = vrot.slane %v2065, 4
        %v2068 = vshll.u32 %v1624, 16
        %v2070 = vrot.slane %v2068, 5
        %v2071 = vsel %vm248, %v2066, %v2070
        %v2072 = vshrl.u32 %v1624, 16
        %v2074 = vrot.slane %v2072, 4
        %v2075 = vor.u32 %v2074, %v2070
        %v2076 = vrot.slane %v2075, 4
        %v2078 = vshll.u32 %v1625, 16
        %v2080 = vrot.slane %v2078, 5
        %v2081 = vsel %vm248, %v2076, %v2080
        %v2083 = vshrl.u32 %v1626, 16
        %v2085 = vrot.slane %v2083, 4
        %v2086 = vshll.u32 %v1626, 16
        %v2088 = vrot.slane %v2086, 5
        %v2089 = vor.u32 %v2085, %v2088
        %v2090 = vrot.slane %v2089, 4
        %v2092 = vshll.u32 %v1627, 16
        %v2094 = vrot.slane %v2092, 5
        %v2095 = vsel %vm248, %v2090, %v2094
        %v2096 = vshrl.u32 %v1627, 16
        %v2098 = vrot.slane %v2096, 4
        %v2099 = vor.u32 %v2098, %v2094
        %v2100 = vrot.slane %v2099, 4
        %v2102 = vshll.u32 %v1628, 16
        %v2104 = vrot.slane %v2102, 5
        %v2105 = vsel %vm248, %v2100, %v2104
        %v2107 = vshrl.u32 %v1629, 16
        %v2109 = vrot.slane %v2107, 4
        %v2110 = vshll.u32 %v1629, 16
        %v2112 = vrot.slane %v2110, 5
        %v2113 = vor.u32 %v2109, %v2112
        %v2114 = vrot.slane %v2113, 4
        %v2116 = vshll.u32 %v1630, 16
        %v2118 = vrot.slane %v2116, 5
        %v2119 = vsel %vm248, %v2114, %v2118
        %v2120 = vshrl.u32 %v1630, 16
        %v2122 = vrot.slane %v2120, 4
        %v2123 = vor.u32 %v2122, %v2118
        %v2124 = vrot.slane %v2123, 4
        %v2126 = vshll.u32 %v1631, 16
        %v2128 = vrot.slane %v2126, 5
        %v2129 = vsel %vm248, %v2124, %v2128
        %v2131 = vshrl.u32 %v1632, 16
        %v2133 = vrot.slane %v2131, 4
        %v2134 = vshll.u32 %v1632, 16
        %v2136 = vrot.slane %v2134, 5
        %v2137 = vor.u32 %v2133, %v2136
        %v2138 = vrot.slane %v2137, 4
        %v2140 = vshll.u32 %v1633, 16
        %v2142 = vrot.slane %v2140, 5
        %v2143 = vsel %vm248, %v2138, %v2142
        %v2144 = vshrl.u32 %v1633, 16
        %v2146 = vrot.slane %v2144, 4
        %v2147 = vor.u32 %v2146, %v2142
        %v2148 = vrot.slane %v2147, 4
        %v2150 = vshll.u32 %v1634, 16
        %v2152 = vrot.slane %v2150, 5
        %v2153 = vsel %vm248, %v2148, %v2152
        %v2155 = vshrl.u32 %v1635, 16
        %v2157 = vrot.slane %v2155, 4
        %v2158 = vshll.u32 %v1635, 16
        %v2160 = vrot.slane %v2158, 5
        %v2161 = vor.u32 %v2157, %v2160
        %v2162 = vrot.slane %v2161, 4
        %v2164 = vshll.u32 %v1636, 16
        %v2166 = vrot.slane %v2164, 5
        %v2167 = vsel %vm248, %v2162, %v2166
        %v2168 = vshrl.u32 %v1636, 16
        %v2170 = vrot.slane %v2168, 4
        %v2171 = vor.u32 %v2170, %v2166
        %v2172 = vrot.slane %v2171, 4
        %v2174 = vshll.u32 %v1637, 16
        %v2176 = vrot.slane %v2174, 5
        %v2177 = vsel %vm248, %v2172, %v2176
        %v2179 = vshrl.u32 %v1638, 16
        %v2181 = vrot.slane %v2179, 4
        %v2182 = vshll.u32 %v1638, 16
        %v2184 = vrot.slane %v2182, 5
        %v2185 = vor.u32 %v2181, %v2184
        %v2186 = vrot.slane %v2185, 4
        %v2188 = vshll.u32 %v1639, 16
        %v2190 = vrot.slane %v2188, 5
        %v2191 = vsel %vm248, %v2186, %v2190
        %v2192 = vshrl.u32 %v1639, 16
        %v2194 = vrot.slane %v2192, 4
        %v2195 = vor.u32 %v2194, %v2190
        %v2196 = vrot.slane %v2195, 4
        %v2198 = vshll.u32 %v1640, 16
        %v2200 = vrot.slane %v2198, 5
        %v2201 = vsel %vm248, %v2196, %v2200
        %v2203 = vshrl.u32 %v1641, 16
        %v2205 = vrot.slane %v2203, 4
        %v2206 = vshll.u32 %v1641, 16
        %v2208 = vrot.slane %v2206, 5
        %v2209 = vor.u32 %v2205, %v2208
        %v2210 = vrot.slane %v2209, 4
        %v2212 = vshll.u32 %v1642, 16
        %v2214 = vrot.slane %v2212, 5
        %v2215 = vsel %vm248, %v2210, %v2214
        %v2216 = vshrl.u32 %v1642, 16
        %v2218 = vrot.slane %v2216, 4
        %v2219 = vor.u32 %v2218, %v2214
        %v2220 = vrot.slane %v2219, 4
        %v2222 = vshll.u32 %v1643, 16
        %v2224 = vrot.slane %v2222, 5
        %v2225 = vsel %vm248, %v2220, %v2224
        %v2227 = vshrl.u32 %v1644, 16
        %v2229 = vrot.slane %v2227, 4
        %v2230 = vshll.u32 %v1644, 16
        %v2232 = vrot.slane %v2230, 5
        %v2233 = vor.u32 %v2229, %v2232
        %v2234 = vrot.slane %v2233, 4
        %v2236 = vshll.u32 %v1645, 16
        %v2238 = vrot.slane %v2236, 5
        %v2239 = vsel %vm248, %v2234, %v2238
        %v2240 = vshrl.u32 %v1645, 16
        %v2242 = vrot.slane %v2240, 4
        %v2243 = vor.u32 %v2242, %v2238
        %v2244 = vrot.slane %v2243, 4
        %v2246 = vshll.u32 %v1646, 16
        %v2248 = vrot.slane %v2246, 5
        %v2249 = vsel %vm248, %v2244, %v2248
        %v2251 = vshrl.u32 %v1647, 16
        %v2253 = vrot.slane %v2251, 4
        %v2254 = vshll.u32 %v1647, 16
        %v2256 = vrot.slane %v2254, 5
        %v2257 = vor.u32 %v2253, %v2256
        %v2258 = vrot.slane %v2257, 4
        %v2260 = vshll.u32 %v1648, 16
        %v2262 = vrot.slane %v2260, 5
        %v2263 = vsel %vm248, %v2258, %v2262
        %v2264 = vshrl.u32 %v1648, 16
        %v2266 = vrot.slane %v2264, 4
        %v2267 = vor.u32 %v2266, %v2262
        %v2268 = vrot.slane %v2267, 4
        %v2270 = vshll.u32 %v1649, 16
        %v2272 = vrot.slane %v2270, 5
        %v2273 = vsel %vm248, %v2268, %v2272
        %v2275 = vshrl.u32 %v1650, 16
        %v2277 = vrot.slane %v2275, 4
        %v2278 = vshll.u32 %v1650, 16
        %v2280 = vrot.slane %v2278, 5
        %v2281 = vor.u32 %v2277, %v2280
        %v2282 = vrot.slane %v2281, 4
        %v2284 = vshll.u32 %v1651, 16
        %v2286 = vrot.slane %v2284, 5
        %v2287 = vsel %vm248, %v2282, %v2286
        %v2288 = vshrl.u32 %v1651, 16
        %v2290 = vrot.slane %v2288, 4
        %v2291 = vor.u32 %v2290, %v2286
        %v2292 = vrot.slane %v2291, 4
        %v2294 = vshll.u32 %v1652, 16
        %v2296 = vrot.slane %v2294, 5
        %v2297 = vsel %vm248, %v2292, %v2296
        %v2299 = vshrl.u32 %v1653, 16
        %v2301 = vrot.slane %v2299, 4
        %v2302 = vshll.u32 %v1653, 16
        %v2304 = vrot.slane %v2302, 5
        %v2305 = vor.u32 %v2301, %v2304
        %v2306 = vrot.slane %v2305, 4
        %v2308 = vshll.u32 %v1654, 16
        %v2310 = vrot.slane %v2308, 5
        %v2311 = vsel %vm248, %v2306, %v2310
        %v2312 = vshrl.u32 %v1654, 16
        %v2314 = vrot.slane %v2312, 4
        %v2315 = vor.u32 %v2314, %v2310
        %v2316 = vrot.slane %v2315, 4
        %v2318 = vshll.u32 %v1655, 16
        %v2320 = vrot.slane %v2318, 5
        %v2321 = vsel %vm248, %v2316, %v2320
        %v2323 = vshrl.u32 %v1656, 16
        %v2325 = vrot.slane %v2323, 4
        %v2326 = vshll.u32 %v1656, 16
        %v2328 = vrot.slane %v2326, 5
        %v2329 = vor.u32 %v2325, %v2328
        %v2330 = vrot.slane %v2329, 4
        %v2332 = vshll.u32 %v1657, 16
        %v2334 = vrot.slane %v2332, 5
        %v2335 = vsel %vm248, %v2330, %v2334
        %v2336 = vshrl.u32 %v1657, 16
        %v2338 = vrot.slane %v2336, 4
        %v2339 = vor.u32 %v2338, %v2334
        %v2340 = vrot.slane %v2339, 4
        %v2342 = vshll.u32 %v1658, 16
        %v2344 = vrot.slane %v2342, 5
        %v2345 = vsel %vm248, %v2340, %v2344
        %v2347 = vshrl.u32 %v1659, 16
        %v2349 = vrot.slane %v2347, 4
        %v2350 = vshll.u32 %v1659, 16
        %v2352 = vrot.slane %v2350, 5
        %v2353 = vor.u32 %v2349, %v2352
        %v2354 = vrot.slane %v2353, 4
        %v2356 = vshll.u32 %v1660, 16
        %v2358 = vrot.slane %v2356, 5
        %v2359 = vsel %vm248, %v2354, %v2358
        %v2360 = vshrl.u32 %v1660, 16
        %v2362 = vrot.slane %v2360, 4
        %v2363 = vor.u32 %v2362, %v2358
        %v2364 = vrot.slane %v2363, 4
        %v2366 = vshll.u32 %v1661, 16
        %v2368 = vrot.slane %v2366, 5
        %v2369 = vsel %vm248, %v2364, %v2368
        %v2370 = vunpack.c.l.b16 %v1999
        %v2371 = vunpack.c.l.b16 %v2009
        %v2372 = vunpack.c.l.b16 %v2023
        %v2373 = vunpack.c.l.b16 %v2033
        %v2374 = vunpack.c.l.b16 %v2047
        %v2375 = vunpack.c.l.b16 %v2057
        %v2376 = vunpack.c.l.b16 %v2071
        %v2377 = vunpack.c.l.b16 %v2081
        %v2378 = vunpack.c.l.b16 %v2095
        %v2379 = vunpack.c.l.b16 %v2105
        %v2380 = vunpack.c.l.b16 %v2119
        %v2381 = vunpack.c.l.b16 %v2129
        %v2382 = vunpack.c.l.b16 %v2143
        %v2383 = vunpack.c.l.b16 %v2153
        %v2384 = vunpack.c.l.b16 %v2167
        %v2385 = vunpack.c.l.b16 %v2177
        %v2386 = vunpack.c.l.b16 %v2191
        %v2387 = vunpack.c.l.b16 %v2201
        %v2388 = vunpack.c.l.b16 %v2215
        %v2389 = vunpack.c.l.b16 %v2225
        %v2390 = vunpack.c.l.b16 %v2239
        %v2391 = vunpack.c.l.b16 %v2249
        %v2392 = vunpack.c.l.b16 %v2263
        %v2393 = vunpack.c.l.b16 %v2273
        %v2394 = vunpack.c.l.b16 %v2287
        %v2395 = vunpack.c.l.b16 %v2297
        %v2396 = vunpack.c.l.b16 %v2311
        %v2397 = vunpack.c.l.b16 %v2321
        %v2398 = vunpack.c.l.b16 %v2335
        %v2399 = vunpack.c.l.b16 %v2345
        %v2400 = vunpack.c.l.b16 %v2359
        %v2401 = vunpack.c.l.b16 %v2369
        %v2402 = vpack.c.b16 %v2371, %v2370
        %v2403 = vpack.c.b16 %v2373, %v2372
        %v2404 = vpack.c.b16 %v2375, %v2374
        %v2405 = vpack.c.b16 %v2377, %v2376
        %v2406 = vpack.c.b16 %v2379, %v2378
        %v2407 = vpack.c.b16 %v2381, %v2380
        %v2408 = vpack.c.b16 %v2383, %v2382
        %v2409 = vpack.c.b16 %v2385, %v2384
        %v2410 = vpack.c.b16 %v2387, %v2386
        %v2411 = vpack.c.b16 %v2389, %v2388
        %v2412 = vpack.c.b16 %v2391, %v2390
        %v2413 = vpack.c.b16 %v2393, %v2392
        %v2414 = vpack.c.b16 %v2395, %v2394
        %v2415 = vpack.c.b16 %v2397, %v2396
        %v2416 = vpack.c.b16 %v2399, %v2398
        %v2417 = vpack.c.b16 %v2401, %v2400
        %v2419 = vsel %vm681, %v2402, 0
        %v2422 = vsel %vm681, %v2403, 0
        %v2425 = vsel %vm681, %v2404, 0
        %v2428 = vsel %vm681, %v2405, 0
        %v2431 = vsel %vm681, %v2406, 0
        %v2434 = vsel %vm681, %v2407, 0
        %v2437 = vsel %vm681, %v2408, 0
        %v2440 = vsel %vm681, %v2409, 0
        %v2443 = vsel %vm681, %v2410, 0
        %v2446 = vsel %vm681, %v2411, 0
        %v2449 = vsel %vm681, %v2412, 0
        %v2452 = vsel %vm681, %v2413, 0
        %v2455 = vsel %vm681, %v2414, 0
        %v2458 = vsel %vm681, %v2415, 0
        %v2461 = vsel %vm681, %v2416, 0
        %v2464 = vsel %vm681, %v2417, 0
        %v2467 = vsel %vm730, %v190, 0
        %2469 = vmatprep.subr.bf16.mxu0 0
        %2470 = vmatpush1.bf16.msra.mxu0 %v2467
        %2471 = vmatprep.subr.bf16.mxu0 0
        %2472 = vmatpush1.bf16.msra.mxu0 0
        %2473 = vmatprep.subr.bf16.mxu0 0
        %2474 = vmatpush1.bf16.msra.mxu0 0
        %2475 = vmatprep.subr.bf16.mxu0 0
        %2476 = vmatpush1.bf16.msra.mxu0 0
        %2477 = vmatprep.subr.bf16.mxu0 0
        %2478 = vmatpush1.bf16.msra.mxu0 0
        %2479 = vmatprep.subr.bf16.mxu0 0
        %2480 = vmatpush1.bf16.msra.mxu0 0
        %2481 = vmatprep.subr.bf16.mxu0 0
        %2482 = vmatpush1.bf16.msra.mxu0 0
        %2483 = vmatprep.subr.bf16.mxu0 0
        %2484 = vmatpush1.bf16.msra.mxu0 0
        %2485 = vmatprep.subr.bf16.mxu0 0
        %2486 = vmatpush1.bf16.msra.mxu0 0
        %2487 = vmatprep.subr.bf16.mxu0 0
        %2488 = vmatpush1.bf16.msra.mxu0 0
        %2489 = vmatprep.subr.bf16.mxu0 0
        %2490 = vmatpush1.bf16.msra.mxu0 0
        %2491 = vmatprep.subr.bf16.mxu0 0
        %2492 = vmatpush1.bf16.msra.mxu0 0
        %2493 = vmatprep.subr.bf16.mxu0 0
        %2494 = vmatpush1.bf16.msra.mxu0 0
        %2495 = vmatprep.subr.bf16.mxu0 0
        %2496 = vmatpush1.bf16.msra.mxu0 0
        %2497 = vmatprep.subr.bf16.mxu0 0
        %2498 = vmatpush1.bf16.msra.mxu0 0
        %2499 = vmatprep.subr.bf16.mxu0 0
        %2500 = vmatpush1.bf16.msra.mxu0 0
        %2501 = vmatprep.mubr.bf16.mxu0 0
        %2502 = vmatmul.mubr.bf16.gmra.mrb[0].mxu0 %v2419
        %v2503 = vpop.f32.mrb[0].mxu0
        %v2504 = vadd.f32 0.0, %v2503
        %v2505 = vpop.f32.mrb[0].mxu0
        %v2506 = vpop.f32.mrb[0].mxu0
        %v2507 = vadd.f32 0.0, %v2506
        %v2508 = vpop.f32.mrb[0].mxu0
        %2509 = vmatprep.mubr.bf16.mxu0 0
        %2510 = vmatmul.mubr.bf16.gmra.mrb[0].mxu0 %v2422
        %v2511 = vpop.f32.mrb[0].mxu0
        %v2512 = vadd.f32 0.0, %v2511
        %v2513 = vpop.f32.mrb[0].mxu0
        %v2514 = vpop.f32.mrb[0].mxu0
        %v2515 = vadd.f32 0.0, %v2514
        %v2516 = vpop.f32.mrb[0].mxu0
        %2517 = vmatprep.mubr.bf16.mxu0 0
        %2518 = vmatmul.mubr.bf16.gmra.mrb[0].mxu0 %v2425
        %v2519 = vpop.f32.mrb[0].mxu0
        %v2520 = vadd.f32 0.0, %v2519
        %v2521 = vpop.f32.mrb[0].mxu0
        %v2522 = vpop.f32.mrb[0].mxu0
        %v2523 = vadd.f32 0.0, %v2522
        %v2524 = vpop.f32.mrb[0].mxu0
        %2525 = vmatprep.mubr.bf16.mxu0 0
        %2526 = vmatmul.mubr.bf16.gmra.mrb[0].mxu0 %v2428
        %v2527 = vpop.f32.mrb[0].mxu0
        %v2528 = vadd.f32 0.0, %v2527
        %v2529 = vpop.f32.mrb[0].mxu0
        %v2530 = vpop.f32.mrb[0].mxu0
        %v2531 = vadd.f32 0.0, %v2530
        %v2532 = vpop.f32.mrb[0].mxu0
        %2533 = vmatprep.mubr.bf16.mxu0 0
        %2534 = vmatmul.mubr.bf16.gmra.mrb[0].mxu0 %v2431
        %v2535 = vpop.f32.mrb[0].mxu0
        %v2536 = vadd.f32 0.0, %v2535
        %v2537 = vpop.f32.mrb[0].mxu0
        %v2538 = vpop.f32.mrb[0].mxu0
        %v2539 = vadd.f32 0.0, %v2538
        %v2540 = vpop.f32.mrb[0].mxu0
        %2541 = vmatprep.mubr.bf16.mxu0 0
        %2542 = vmatmul.mubr.bf16.gmra.mrb[0].mxu0 %v2434
        %v2543 = vpop.f32.mrb[0].mxu0
        %v2544 = vadd.f32 0.0, %v2543
        %v2545 = vpop.f32.mrb[0].mxu0
        %v2546 = vpop.f32.mrb[0].mxu0
        %v2547 = vadd.f32 0.0, %v2546
        %v2548 = vpop.f32.mrb[0].mxu0
        %2549 = vmatprep.mubr.bf16.mxu0 0
        %2550 = vmatmul.mubr.bf16.gmra.mrb[0].mxu0 %v2437
        %v2551 = vpop.f32.mrb[0].mxu0
        %v2552 = vadd.f32 0.0, %v2551
        %v2553 = vpop.f32.mrb[0].mxu0
        %v2554 = vpop.f32.mrb[0].mxu0
        %v2555 = vadd.f32 0.0, %v2554
        %v2556 = vpop.f32.mrb[0].mxu0
        %2557 = vmatprep.mubr.bf16.mxu0 0
        %2558 = vmatmul.mubr.bf16.gmra.mrb[0].mxu0 %v2440
        %v2559 = vpop.f32.mrb[0].mxu0
        %v2560 = vadd.f32 0.0, %v2559
        %v2561 = vpop.f32.mrb[0].mxu0
        %v2562 = vpop.f32.mrb[0].mxu0
        %v2563 = vadd.f32 0.0, %v2562
        %v2564 = vpop.f32.mrb[0].mxu0
        %2565 = vmatprep.mubr.bf16.mxu0 0
        %2566 = vmatmul.mubr.bf16.gmra.mrb[0].mxu0 %v2443
        %v2567 = vpop.f32.mrb[0].mxu0
        %v2568 = vadd.f32 0.0, %v2567
        %v2569 = vpop.f32.mrb[0].mxu0
        %v2570 = vpop.f32.mrb[0].mxu0
        %v2571 = vadd.f32 0.0, %v2570
        %v2572 = vpop.f32.mrb[0].mxu0
        %2573 = vmatprep.mubr.bf16.mxu0 0
        %2574 = vmatmul.mubr.bf16.gmra.mrb[0].mxu0 %v2446
        %v2575 = vpop.f32.mrb[0].mxu0
        %v2576 = vadd.f32 0.0, %v2575
        %v2577 = vpop.f32.mrb[0].mxu0
        %v2578 = vpop.f32.mrb[0].mxu0
        %v2579 = vadd.f32 0.0, %v2578
        %v2580 = vpop.f32.mrb[0].mxu0
        %2581 = vmatprep.mubr.bf16.mxu0 0
        %2582 = vmatmul.mubr.bf16.gmra.mrb[0].mxu0 %v2449
        %v2583 = vpop.f32.mrb[0].mxu0
        %v2584 = vadd.f32 0.0, %v2583
        %v2585 = vpop.f32.mrb[0].mxu0
        %v2586 = vpop.f32.mrb[0].mxu0
        %v2587 = vadd.f32 0.0, %v2586
        %v2588 = vpop.f32.mrb[0].mxu0
        %2589 = vmatprep.mubr.bf16.mxu0 0
        %2590 = vmatmul.mubr.bf16.gmra.mrb[0].mxu0 %v2452
        %v2591 = vpop.f32.mrb[0].mxu0
        %v2592 = vadd.f32 0.0, %v2591
        %v2593 = vpop.f32.mrb[0].mxu0
        %v2594 = vpop.f32.mrb[0].mxu0
        %v2595 = vadd.f32 0.0, %v2594
        %v2596 = vpop.f32.mrb[0].mxu0
        %2597 = vmatprep.mubr.bf16.mxu0 0
        %2598 = vmatmul.mubr.bf16.gmra.mrb[0].mxu0 %v2455
        %v2599 = vpop.f32.mrb[0].mxu0
        %v2600 = vadd.f32 0.0, %v2599
        %v2601 = vpop.f32.mrb[0].mxu0
        %v2602 = vpop.f32.mrb[0].mxu0
        %v2603 = vadd.f32 0.0, %v2602
        %v2604 = vpop.f32.mrb[0].mxu0
        %2605 = vmatprep.mubr.bf16.mxu0 0
        %2606 = vmatmul.mubr.bf16.gmra.mrb[0].mxu0 %v2458
        %v2607 = vpop.f32.mrb[0].mxu0
        %v2608 = vadd.f32 0.0, %v2607
        %v2609 = vpop.f32.mrb[0].mxu0
        %v2610 = vpop.f32.mrb[0].mxu0
        %v2611 = vadd.f32 0.0, %v2610
        %v2612 = vpop.f32.mrb[0].mxu0
        %2613 = vmatprep.mubr.bf16.mxu0 0
        %2614 = vmatmul.mubr.bf16.gmra.mrb[0].mxu0 %v2461
        %v2615 = vpop.f32.mrb[0].mxu0
        %v2616 = vadd.f32 0.0, %v2615
        %v2617 = vpop.f32.mrb[0].mxu0
        %v2618 = vpop.f32.mrb[0].mxu0
        %v2619 = vadd.f32 0.0, %v2618
        %v2620 = vpop.f32.mrb[0].mxu0
        %2621 = vmatprep.mubr.bf16.mxu0 0
        %2622 = vmatmul.mubr.bf16.gmra.mrb[0].mxu0 %v2464
        %v2623 = vpop.f32.mrb[0].mxu0
        %v2624 = vadd.f32 0.0, %v2623
        %v2625 = vpop.f32.mrb[0].mxu0
        %v2626 = vpop.f32.mrb[0].mxu0
        %v2627 = vadd.f32 0.0, %v2626
        %v2628 = vpop.f32.mrb[0].mxu0
        %2629 = vdwg.mxu0
        %v2630 = vadd.f32 %v1954, %v2504
        %v2631 = vadd.f32 %v1955, %v2507
        %v2632 = vadd.f32 %v1956, %v2512
        %v2633 = vadd.f32 %v1957, %v2515
        %v2634 = vadd.f32 %v1958, %v2520
        %v2635 = vadd.f32 %v1959, %v2523
        %v2636 = vadd.f32 %v1960, %v2528
        %v2637 = vadd.f32 %v1961, %v2531
        %v2638 = vadd.f32 %v1962, %v2536
        %v2639 = vadd.f32 %v1963, %v2539
        %v2640 = vadd.f32 %v1964, %v2544
        %v2641 = vadd.f32 %v1965, %v2547
        %v2642 = vadd.f32 %v1966, %v2552
        %v2643 = vadd.f32 %v1967, %v2555
        %v2644 = vadd.f32 %v1968, %v2560
        %v2645 = vadd.f32 %v1969, %v2563
        %v2646 = vadd.f32 %v1970, %v2568
        %v2647 = vadd.f32 %v1971, %v2571
        %v2648 = vadd.f32 %v1972, %v2576
        %v2649 = vadd.f32 %v1973, %v2579
        %v2650 = vadd.f32 %v1974, %v2584
        %v2651 = vadd.f32 %v1975, %v2587
        %v2652 = vadd.f32 %v1976, %v2592
        %v2653 = vadd.f32 %v1977, %v2595
        %v2654 = vadd.f32 %v1978, %v2600
        %v2655 = vadd.f32 %v1979, %v2603
        %v2656 = vadd.f32 %v1980, %v2608
        %v2657 = vadd.f32 %v1981, %v2611
        %v2658 = vadd.f32 %v1982, %v2616
        %v2659 = vadd.f32 %v1983, %v2619
        %v2660 = vadd.f32 %v1984, %v2624
        %v2661 = vadd.f32 %v1985, %v2627
        %v2678 = vrot.slane %v1614, 5
        %v2679 = vrot.slane %v2678, 4
        %v2680 = vrot.slane %v1615, 5
        %v2681 = vsel %vm1205, %v2679, %v2680
        %v2682 = vrot.slane %v2680, 4
        %v2683 = vrot.slane %v1616, 5
        %v2684 = vsel %vm1205, %v2682, %v2683
        %v2685 = vrot.slane %v1617, 5
        %v2686 = vrot.slane %v2685, 4
        %v2687 = vrot.slane %v1618, 5
        %v2688 = vsel %vm1205, %v2686, %v2687
        %v2689 = vrot.slane %v2687, 4
        %v2690 = vrot.slane %v1619, 5
        %v2691 = vsel %vm1205, %v2689, %v2690
        %v2692 = vrot.slane %v1620, 5
        %v2693 = vrot.slane %v2692, 4
        %v2694 = vrot.slane %v1621, 5
        %v2695 = vsel %vm1205, %v2693, %v2694
        %v2696 = vrot.slane %v2694, 4
        %v2697 = vrot.slane %v1622, 5
        %v2698 = vsel %vm1205, %v2696, %v2697
        %v2699 = vrot.slane %v1623, 5
        %v2700 = vrot.slane %v2699, 4
        %v2701 = vrot.slane %v1624, 5
        %v2702 = vsel %vm1205, %v2700, %v2701
        %v2703 = vrot.slane %v2701, 4
        %v2704 = vrot.slane %v1625, 5
        %v2705 = vsel %vm1205, %v2703, %v2704
        %v2706 = vrot.slane %v1626, 5
        %v2707 = vrot.slane %v2706, 4
        %v2708 = vrot.slane %v1627, 5
        %v2709 = vsel %vm1205, %v2707, %v2708
        %v2710 = vrot.slane %v2708, 4
        %v2711 = vrot.slane %v1628, 5
        %v2712 = vsel %vm1205, %v2710, %v2711
        %v2713 = vrot.slane %v1629, 5
        %v2714 = vrot.slane %v2713, 4
        %v2715 = vrot.slane %v1630, 5
        %v2716 = vsel %vm1205, %v2714, %v2715
        %v2717 = vrot.slane %v2715, 4
        %v2718 = vrot.slane %v1631, 5
        %v2719 = vsel %vm1205, %v2717, %v2718
        %v2720 = vrot.slane %v1632, 5
        %v2721 = vrot.slane %v2720, 4
        %v2722 = vrot.slane %v1633, 5
        %v2723 = vsel %vm1205, %v2721, %v2722
        %v2724 = vrot.slane %v2722, 4
        %v2725 = vrot.slane %v1634, 5
        %v2726 = vsel %vm1205, %v2724, %v2725
        %v2727 = vrot.slane %v1635, 5
        %v2728 = vrot.slane %v2727, 4
        %v2729 = vrot.slane %v1636, 5
        %v2730 = vsel %vm1205, %v2728, %v2729
        %v2731 = vrot.slane %v2729, 4
        %v2732 = vrot.slane %v1637, 5
        %v2733 = vsel %vm1205, %v2731, %v2732
        %v2734 = vrot.slane %v1638, 5
        %v2735 = vrot.slane %v2734, 4
        %v2736 = vrot.slane %v1639, 5
        %v2737 = vsel %vm1205, %v2735, %v2736
        %v2738 = vrot.slane %v2736, 4
        %v2739 = vrot.slane %v1640, 5
        %v2740 = vsel %vm1205, %v2738, %v2739
        %v2741 = vrot.slane %v1641, 5
        %v2742 = vrot.slane %v2741, 4
        %v2743 = vrot.slane %v1642, 5
        %v2744 = vsel %vm1205, %v2742, %v2743
        %v2745 = vrot.slane %v2743, 4
        %v2746 = vrot.slane %v1643, 5
        %v2747 = vsel %vm1205, %v2745, %v2746
        %v2748 = vrot.slane %v1644, 5
        %v2749 = vrot.slane %v2748, 4
        %v2750 = vrot.slane %v1645, 5
        %v2751 = vsel %vm1205, %v2749, %v2750
        %v2752 = vrot.slane %v2750, 4
        %v2753 = vrot.slane %v1646, 5
        %v2754 = vsel %vm1205, %v2752, %v2753
        %v2755 = vrot.slane %v1647, 5
        %v2756 = vrot.slane %v2755, 4
        %v2757 = vrot.slane %v1648, 5
        %v2758 = vsel %vm1205, %v2756, %v2757
        %v2759 = vrot.slane %v2757, 4
        %v2760 = vrot.slane %v1649, 5
        %v2761 = vsel %vm1205, %v2759, %v2760
        %v2762 = vrot.slane %v1650, 5
        %v2763 = vrot.slane %v2762, 4
        %v2764 = vrot.slane %v1651, 5
        %v2765 = vsel %vm1205, %v2763, %v2764
        %v2766 = vrot.slane %v2764, 4
        %v2767 = vrot.slane %v1652, 5
        %v2768 = vsel %vm1205, %v2766, %v2767
        %v2769 = vrot.slane %v1653, 5
        %v2770 = vrot.slane %v2769, 4
        %v2771 = vrot.slane %v1654, 5
        %v2772 = vsel %vm1205, %v2770, %v2771
        %v2773 = vrot.slane %v2771, 4
        %v2774 = vrot.slane %v1655, 5
        %v2775 = vsel %vm1205, %v2773, %v2774
        %v2776 = vrot.slane %v1656, 5
        %v2777 = vrot.slane %v2776, 4
        %v2778 = vrot.slane %v1657, 5
        %v2779 = vsel %vm1205, %v2777, %v2778
        %v2780 = vrot.slane %v2778, 4
        %v2781 = vrot.slane %v1658, 5
        %v2782 = vsel %vm1205, %v2780, %v2781
        %v2783 = vrot.slane %v1659, 5
        %v2784 = vrot.slane %v2783, 4
        %v2785 = vrot.slane %v1660, 5
        %v2786 = vsel %vm1205, %v2784, %v2785
        %v2787 = vrot.slane %v2785, 4
        %v2788 = vrot.slane %v1661, 5
        %v2789 = vsel %vm1205, %v2787, %v2788
        %v2790 = vunpack.c.l.b16 %v2681
        %v2791 = vunpack.c.l.b16 %v2684
        %v2792 = vunpack.c.l.b16 %v2688
        %v2793 = vunpack.c.l.b16 %v2691
        %v2794 = vunpack.c.l.b16 %v2695
        %v2795 = vunpack.c.l.b16 %v2698
        %v2796 = vunpack.c.l.b16 %v2702
        %v2797 = vunpack.c.l.b16 %v2705
        %v2798 = vunpack.c.l.b16 %v2709
        %v2799 = vunpack.c.l.b16 %v2712
        %v2800 = vunpack.c.l.b16 %v2716
        %v2801 = vunpack.c.l.b16 %v2719
        %v2802 = vunpack.c.l.b16 %v2723
        %v2803 = vunpack.c.l.b16 %v2726
        %v2804 = vunpack.c.l.b16 %v2730
        %v2805 = vunpack.c.l.b16 %v2733
        %v2806 = vunpack.c.l.b16 %v2737
        %v2807 = vunpack.c.l.b16 %v2740
        %v2808 = vunpack.c.l.b16 %v2744
        %v2809 = vunpack.c.l.b16 %v2747
        %v2810 = vunpack.c.l.b16 %v2751
        %v2811 = vunpack.c.l.b16 %v2754
        %v2812 = vunpack.c.l.b16 %v2758
        %v2813 = vunpack.c.l.b16 %v2761
        %v2814 = vunpack.c.l.b16 %v2765
        %v2815 = vunpack.c.l.b16 %v2768
        %v2816 = vunpack.c.l.b16 %v2772
        %v2817 = vunpack.c.l.b16 %v2775
        %v2818 = vunpack.c.l.b16 %v2779
        %v2819 = vunpack.c.l.b16 %v2782
        %v2820 = vunpack.c.l.b16 %v2786
        %v2821 = vunpack.c.l.b16 %v2789
        %v2822 = vpack.c.b16 %v2791, %v2790
        %v2823 = vpack.c.b16 %v2793, %v2792
        %v2824 = vpack.c.b16 %v2795, %v2794
        %v2825 = vpack.c.b16 %v2797, %v2796
        %v2826 = vpack.c.b16 %v2799, %v2798
        %v2827 = vpack.c.b16 %v2801, %v2800
        %v2828 = vpack.c.b16 %v2803, %v2802
        %v2829 = vpack.c.b16 %v2805, %v2804
        %v2830 = vpack.c.b16 %v2807, %v2806
        %v2831 = vpack.c.b16 %v2809, %v2808
        %v2832 = vpack.c.b16 %v2811, %v2810
        %v2833 = vpack.c.b16 %v2813, %v2812
        %v2834 = vpack.c.b16 %v2815, %v2814
        %v2835 = vpack.c.b16 %v2817, %v2816
        %v2836 = vpack.c.b16 %v2819, %v2818
        %v2837 = vpack.c.b16 %v2821, %v2820
        %v2839 = vsel %vm681, %v2822, 0
        %v2842 = vsel %vm681, %v2823, 0
        %v2845 = vsel %vm681, %v2824, 0
        %v2848 = vsel %vm681, %v2825, 0
        %v2851 = vsel %vm681, %v2826, 0
        %v2854 = vsel %vm681, %v2827, 0
        %v2857 = vsel %vm681, %v2828, 0
        %v2860 = vsel %vm681, %v2829, 0
        %v2863 = vsel %vm681, %v2830, 0
        %v2866 = vsel %vm681, %v2831, 0
        %v2869 = vsel %vm681, %v2832, 0
        %v2872 = vsel %vm681, %v2833, 0
        %v2875 = vsel %vm681, %v2834, 0
        %v2878 = vsel %vm681, %v2835, 0
        %v2881 = vsel %vm681, %v2836, 0
        %v2884 = vsel %vm681, %v2837, 0
        %v2887 = vsel %vm730, %v191, 0
        %2889 = vmatprep.subr.bf16.mxu0 0
        %2890 = vmatpush1.bf16.msra.mxu0 %v2887
        %2891 = vmatprep.subr.bf16.mxu0 0
        %2892 = vmatpush1.bf16.msra.mxu0 0
        %2893 = vmatprep.subr.bf16.mxu0 0
        %2894 = vmatpush1.bf16.msra.mxu0 0
        %2895 = vmatprep.subr.bf16.mxu0 0
        %2896 = vmatpush1.bf16.msra.mxu0 0
        %2897 = vmatprep.subr.bf16.mxu0 0
        %2898 = vmatpush1.bf16.msra.mxu0 0
        %2899 = vmatprep.subr.bf16.mxu0 0
        %2900 = vmatpush1.bf16.msra.mxu0 0
        %2901 = vmatprep.subr.bf16.mxu0 0
        %2902 = vmatpush1.bf16.msra.mxu0 0
        %2903 = vmatprep.subr.bf16.mxu0 0
        %2904 = vmatpush1.bf16.msra.mxu0 0
        %2905 = vmatprep.subr.bf16.mxu0 0
        %2906 = vmatpush1.bf16.msra.mxu0 0
        %2907 = vmatprep.subr.bf16.mxu0 0
        %2908 = vmatpush1.bf16.msra.mxu0 0
        %2909 = vmatprep.subr.bf16.mxu0 0
        %2910 = vmatpush1.bf16.msra.mxu0 0
        %2911 = vmatprep.subr.bf16.mxu0 0
        %2912 = vmatpush1.bf16.msra.mxu0 0
        %2913 = vmatprep.subr.bf16.mxu0 0
        %2914 = vmatpush1.bf16.msra.mxu0 0
        %2915 = vmatprep.subr.bf16.mxu0 0
        %2916 = vmatpush1.bf16.msra.mxu0 0
        %2917 = vmatprep.subr.bf16.mxu0 0
        %2918 = vmatpush1.bf16.msra.mxu0 0
        %2919 = vmatprep.subr.bf16.mxu0 0
        %2920 = vmatpush1.bf16.msra.mxu0 0
        %2921 = vmatprep.mubr.bf16.mxu0 0
        %2922 = vmatmul.mubr.bf16.gmra.mrb[0].mxu0 %v2839
        %v2923 = vpop.f32.mrb[0].mxu0
        %v2924 = vadd.f32 0.0, %v2923
        %v2925 = vpop.f32.mrb[0].mxu0
        %v2926 = vpop.f32.mrb[0].mxu0
        %v2927 = vadd.f32 0.0, %v2926
        %v2928 = vpop.f32.mrb[0].mxu0
        %2929 = vmatprep.mubr.bf16.mxu0 0
        %2930 = vmatmul.mubr.bf16.gmra.mrb[0].mxu0 %v2842
        %v2931 = vpop.f32.mrb[0].mxu0
        %v2932 = vadd.f32 0.0, %v2931
        %v2933 = vpop.f32.mrb[0].mxu0
        %v2934 = vpop.f32.mrb[0].mxu0
        %v2935 = vadd.f32 0.0, %v2934
        %v2936 = vpop.f32.mrb[0].mxu0
        %2937 = vmatprep.mubr.bf16.mxu0 0
        %2938 = vmatmul.mubr.bf16.gmra.mrb[0].mxu0 %v2845
        %v2939 = vpop.f32.mrb[0].mxu0
        %v2940 = vadd.f32 0.0, %v2939
        %v2941 = vpop.f32.mrb[0].mxu0
        %v2942 = vpop.f32.mrb[0].mxu0
        %v2943 = vadd.f32 0.0, %v2942
        %v2944 = vpop.f32.mrb[0].mxu0
        %2945 = vmatprep.mubr.bf16.mxu0 0
        %2946 = vmatmul.mubr.bf16.gmra.mrb[0].mxu0 %v2848
        %v2947 = vpop.f32.mrb[0].mxu0
        %v2948 = vadd.f32 0.0, %v2947
        %v2949 = vpop.f32.mrb[0].mxu0
        %v2950 = vpop.f32.mrb[0].mxu0
        %v2951 = vadd.f32 0.0, %v2950
        %v2952 = vpop.f32.mrb[0].mxu0
        %2953 = vmatprep.mubr.bf16.mxu0 0
        %2954 = vmatmul.mubr.bf16.gmra.mrb[0].mxu0 %v2851
        %v2955 = vpop.f32.mrb[0].mxu0
        %v2956 = vadd.f32 0.0, %v2955
        %v2957 = vpop.f32.mrb[0].mxu0
        %v2958 = vpop.f32.mrb[0].mxu0
        %v2959 = vadd.f32 0.0, %v2958
        %v2960 = vpop.f32.mrb[0].mxu0
        %2961 = vmatprep.mubr.bf16.mxu0 0
        %2962 = vmatmul.mubr.bf16.gmra.mrb[0].mxu0 %v2854
        %v2963 = vpop.f32.mrb[0].mxu0
        %v2964 = vadd.f32 0.0, %v2963
        %v2965 = vpop.f32.mrb[0].mxu0
        %v2966 = vpop.f32.mrb[0].mxu0
        %v2967 = vadd.f32 0.0, %v2966
        %v2968 = vpop.f32.mrb[0].mxu0
        %2969 = vmatprep.mubr.bf16.mxu0 0
        %2970 = vmatmul.mubr.bf16.gmra.mrb[0].mxu0 %v2857
        %v2971 = vpop.f32.mrb[0].mxu0
        %v2972 = vadd.f32 0.0, %v2971
        %v2973 = vpop.f32.mrb[0].mxu0
        %v2974 = vpop.f32.mrb[0].mxu0
        %v2975 = vadd.f32 0.0, %v2974
        %v2976 = vpop.f32.mrb[0].mxu0
        %2977 = vmatprep.mubr.bf16.mxu0 0
        %2978 = vmatmul.mubr.bf16.gmra.mrb[0].mxu0 %v2860
        %v2979 = vpop.f32.mrb[0].mxu0
        %v2980 = vadd.f32 0.0, %v2979
        %v2981 = vpop.f32.mrb[0].mxu0
        %v2982 = vpop.f32.mrb[0].mxu0
        %v2983 = vadd.f32 0.0, %v2982
        %v2984 = vpop.f32.mrb[0].mxu0
        %2985 = vmatprep.mubr.bf16.mxu0 0
        %2986 = vmatmul.mubr.bf16.gmra.mrb[0].mxu0 %v2863
        %v2987 = vpop.f32.mrb[0].mxu0
        %v2988 = vadd.f32 0.0, %v2987
        %v2989 = vpop.f32.mrb[0].mxu0
        %v2990 = vpop.f32.mrb[0].mxu0
        %v2991 = vadd.f32 0.0, %v2990
        %v2992 = vpop.f32.mrb[0].mxu0
        %2993 = vmatprep.mubr.bf16.mxu0 0
        %2994 = vmatmul.mubr.bf16.gmra.mrb[0].mxu0 %v2866
        %v2995 = vpop.f32.mrb[0].mxu0
        %v2996 = vadd.f32 0.0, %v2995
        %v2997 = vpop.f32.mrb[0].mxu0
        %v2998 = vpop.f32.mrb[0].mxu0
        %v2999 = vadd.f32 0.0, %v2998
        %v3000 = vpop.f32.mrb[0].mxu0
        %3001 = vmatprep.mubr.bf16.mxu0 0
        %3002 = vmatmul.mubr.bf16.gmra.mrb[0].mxu0 %v2869
        %v3003 = vpop.f32.mrb[0].mxu0
        %v3004 = vadd.f32 0.0, %v3003
        %v3005 = vpop.f32.mrb[0].mxu0
        %v3006 = vpop.f32.mrb[0].mxu0
        %v3007 = vadd.f32 0.0, %v3006
        %v3008 = vpop.f32.mrb[0].mxu0
        %3009 = vmatprep.mubr.bf16.mxu0 0
        %3010 = vmatmul.mubr.bf16.gmra.mrb[0].mxu0 %v2872
        %v3011 = vpop.f32.mrb[0].mxu0
        %v3012 = vadd.f32 0.0, %v3011
        %v3013 = vpop.f32.mrb[0].mxu0
        %v3014 = vpop.f32.mrb[0].mxu0
        %v3015 = vadd.f32 0.0, %v3014
        %v3016 = vpop.f32.mrb[0].mxu0
        %3017 = vmatprep.mubr.bf16.mxu0 0
        %3018 = vmatmul.mubr.bf16.gmra.mrb[0].mxu0 %v2875
        %v3019 = vpop.f32.mrb[0].mxu0
        %v3020 = vadd.f32 0.0, %v3019
        %v3021 = vpop.f32.mrb[0].mxu0
        %v3022 = vpop.f32.mrb[0].mxu0
        %v3023 = vadd.f32 0.0, %v3022
        %v3024 = vpop.f32.mrb[0].mxu0
        %3025 = vmatprep.mubr.bf16.mxu0 0
        %3026 = vmatmul.mubr.bf16.gmra.mrb[0].mxu0 %v2878
        %v3027 = vpop.f32.mrb[0].mxu0
        %v3028 = vadd.f32 0.0, %v3027
        %v3029 = vpop.f32.mrb[0].mxu0
        %v3030 = vpop.f32.mrb[0].mxu0
        %v3031 = vadd.f32 0.0, %v3030
        %v3032 = vpop.f32.mrb[0].mxu0
        %3033 = vmatprep.mubr.bf16.mxu0 0
        %3034 = vmatmul.mubr.bf16.gmra.mrb[0].mxu0 %v2881
        %v3035 = vpop.f32.mrb[0].mxu0
        %v3036 = vadd.f32 0.0, %v3035
        %v3037 = vpop.f32.mrb[0].mxu0
        %v3038 = vpop.f32.mrb[0].mxu0
        %v3039 = vadd.f32 0.0, %v3038
        %v3040 = vpop.f32.mrb[0].mxu0
        %3041 = vmatprep.mubr.bf16.mxu0 0
        %3042 = vmatmul.mubr.bf16.gmra.mrb[0].mxu0 %v2884
        %v3043 = vpop.f32.mrb[0].mxu0
        %v3044 = vadd.f32 0.0, %v3043
        %v3045 = vpop.f32.mrb[0].mxu0
        %v3046 = vpop.f32.mrb[0].mxu0
        %v3047 = vadd.f32 0.0, %v3046
        %v3048 = vpop.f32.mrb[0].mxu0
        %3049 = vdwg.mxu0
        %v3050 = vadd.f32 %v2630, %v2924
        %v3051 = vadd.f32 %v2631, %v2927
        %v3052 = vadd.f32 %v2632, %v2932
        %v3053 = vadd.f32 %v2633, %v2935
        %v3054 = vadd.f32 %v2634, %v2940
        %v3055 = vadd.f32 %v2635, %v2943
        %v3056 = vadd.f32 %v2636, %v2948
        %v3057 = vadd.f32 %v2637, %v2951
        %v3058 = vadd.f32 %v2638, %v2956
        %v3059 = vadd.f32 %v2639, %v2959
        %v3060 = vadd.f32 %v2640, %v2964
        %v3061 = vadd.f32 %v2641, %v2967
        %v3062 = vadd.f32 %v2642, %v2972
        %v3063 = vadd.f32 %v2643, %v2975
        %v3064 = vadd.f32 %v2644, %v2980
        %v3065 = vadd.f32 %v2645, %v2983
        %v3066 = vadd.f32 %v2646, %v2988
        %v3067 = vadd.f32 %v2647, %v2991
        %v3068 = vadd.f32 %v2648, %v2996
        %v3069 = vadd.f32 %v2649, %v2999
        %v3070 = vadd.f32 %v2650, %v3004
        %v3071 = vadd.f32 %v2651, %v3007
        %v3072 = vadd.f32 %v2652, %v3012
        %v3073 = vadd.f32 %v2653, %v3015
        %v3074 = vadd.f32 %v2654, %v3020
        %v3075 = vadd.f32 %v2655, %v3023
        %v3076 = vadd.f32 %v2656, %v3028
        %v3077 = vadd.f32 %v2657, %v3031
        %v3078 = vadd.f32 %v2658, %v3036
        %v3079 = vadd.f32 %v2659, %v3039
        %v3080 = vadd.f32 %v2660, %v3044
        %v3081 = vadd.f32 %v2661, %v3047
        %s3082 = sadd.s32 %s185, 2
        %s3083 = smul.u32 %s3082, 3
        %s3084 = smul.addr %s3083, 4
        %s3085 = scalar_lea.vmem %s182, %s3084
        %v3086 = vld [vmem:[%s3085] sm:$0xf]
        %v3087 = vld [vmem:[%s3085 + $0x4] sm:$0xf]
        %v3088 = vld [vmem:[%s3085 + $0x8] sm:$0x1]
        %v3089 = vld [vmem:[%s3085 + $0xc] sm:$0xf]
        %v3090 = vld [vmem:[%s3085 + $0x10] sm:$0xf]
        %v3091 = vld [vmem:[%s3085 + $0x14] sm:$0x1]
        %v3092 = vld [vmem:[%s3085 + $0x18] sm:$0xf]
        %v3093 = vld [vmem:[%s3085 + $0x1c] sm:$0xf]
        %v3094 = vld [vmem:[%s3085 + $0x20] sm:$0x1]
        %v3095 = vld [vmem:[%s3085 + $0x24] sm:$0xf]
        %v3096 = vld [vmem:[%s3085 + $0x28] sm:$0xf]
        %v3097 = vld [vmem:[%s3085 + $0x2c] sm:$0x1]
        %v3098 = vld [vmem:[%s3085 + $0x30] sm:$0xf]
        %v3099 = vld [vmem:[%s3085 + $0x34] sm:$0xf]
        %v3100 = vld [vmem:[%s3085 + $0x38] sm:$0x1]
        %v3101 = vld [vmem:[%s3085 + $0x3c] sm:$0xf]
        %v3102 = vld [vmem:[%s3085 + $0x40] sm:$0xf]
        %v3103 = vld [vmem:[%s3085 + $0x44] sm:$0x1]
        %v3104 = vld [vmem:[%s3085 + $0x48] sm:$0xf]
        %v3105 = vld [vmem:[%s3085 + $0x4c] sm:$0xf]
        %v3106 = vld [vmem:[%s3085 + $0x50] sm:$0x1]
        %v3107 = vld [vmem:[%s3085 + $0x54] sm:$0xf]
        %v3108 = vld [vmem:[%s3085 + $0x58] sm:$0xf]
        %v3109 = vld [vmem:[%s3085 + $0x5c] sm:$0x1]
        %v3110 = vld [vmem:[%s3085 + $0x60] sm:$0xf]
        %v3111 = vld [vmem:[%s3085 + $0x64] sm:$0xf]
        %v3112 = vld [vmem:[%s3085 + $0x68] sm:$0x1]
        %v3113 = vld [vmem:[%s3085 + $0x6c] sm:$0xf]
        %v3114 = vld [vmem:[%s3085 + $0x70] sm:$0xf]
        %v3115 = vld [vmem:[%s3085 + $0x74] sm:$0x1]
        %v3116 = vld [vmem:[%s3085 + $0x78] sm:$0xf]
        %v3117 = vld [vmem:[%s3085 + $0x7c] sm:$0xf]
        %v3118 = vld [vmem:[%s3085 + $0x80] sm:$0x1]
        %v3119 = vld [vmem:[%s3085 + $0x84] sm:$0xf]
        %v3120 = vld [vmem:[%s3085 + $0x88] sm:$0xf]
        %v3121 = vld [vmem:[%s3085 + $0x8c] sm:$0x1]
        %v3122 = vld [vmem:[%s3085 + $0x90] sm:$0xf]
        %v3123 = vld [vmem:[%s3085 + $0x94] sm:$0xf]
        %v3124 = vld [vmem:[%s3085 + $0x98] sm:$0x1]
        %v3125 = vld [vmem:[%s3085 + $0x9c] sm:$0xf]
        %v3126 = vld [vmem:[%s3085 + $0xa0] sm:$0xf]
        %v3127 = vld [vmem:[%s3085 + $0xa4] sm:$0x1]
        %v3128 = vld [vmem:[%s3085 + $0xa8] sm:$0xf]
        %v3129 = vld [vmem:[%s3085 + $0xac] sm:$0xf]
        %v3130 = vld [vmem:[%s3085 + $0xb0] sm:$0x1]
        %v3131 = vld [vmem:[%s3085 + $0xb4] sm:$0xf]
        %v3132 = vld [vmem:[%s3085 + $0xb8] sm:$0xf]
        %v3133 = vld [vmem:[%s3085 + $0xbc] sm:$0x1]
        %v3166 = vunpack.c.l.b16 %v3086
        %v3167 = vunpack.c.l.b16 %v3087
        %v3168 = vunpack.c.l.b16 %v3089
        %v3169 = vunpack.c.l.b16 %v3090
        %v3170 = vunpack.c.l.b16 %v3092
        %v3171 = vunpack.c.l.b16 %v3093
        %v3172 = vunpack.c.l.b16 %v3095
        %v3173 = vunpack.c.l.b16 %v3096
        %v3174 = vunpack.c.l.b16 %v3098
        %v3175 = vunpack.c.l.b16 %v3099
        %v3176 = vunpack.c.l.b16 %v3101
        %v3177 = vunpack.c.l.b16 %v3102
        %v3178 = vunpack.c.l.b16 %v3104
        %v3179 = vunpack.c.l.b16 %v3105
        %v3180 = vunpack.c.l.b16 %v3107
        %v3181 = vunpack.c.l.b16 %v3108
        %v3182 = vunpack.c.l.b16 %v3110
        %v3183 = vunpack.c.l.b16 %v3111
        %v3184 = vunpack.c.l.b16 %v3113
        %v3185 = vunpack.c.l.b16 %v3114
        %v3186 = vunpack.c.l.b16 %v3116
        %v3187 = vunpack.c.l.b16 %v3117
        %v3188 = vunpack.c.l.b16 %v3119
        %v3189 = vunpack.c.l.b16 %v3120
        %v3190 = vunpack.c.l.b16 %v3122
        %v3191 = vunpack.c.l.b16 %v3123
        %v3192 = vunpack.c.l.b16 %v3125
        %v3193 = vunpack.c.l.b16 %v3126
        %v3194 = vunpack.c.l.b16 %v3128
        %v3195 = vunpack.c.l.b16 %v3129
        %v3196 = vunpack.c.l.b16 %v3131
        %v3197 = vunpack.c.l.b16 %v3132
        %v3198 = vpack.c.b16 %v3167, %v3166
        %v3199 = vpack.c.b16 %v3169, %v3168
        %v3200 = vpack.c.b16 %v3171, %v3170
        %v3201 = vpack.c.b16 %v3173, %v3172
        %v3202 = vpack.c.b16 %v3175, %v3174
        %v3203 = vpack.c.b16 %v3177, %v3176
        %v3204 = vpack.c.b16 %v3179, %v3178
        %v3205 = vpack.c.b16 %v3181, %v3180
        %v3206 = vpack.c.b16 %v3183, %v3182
        %v3207 = vpack.c.b16 %v3185, %v3184
        %v3208 = vpack.c.b16 %v3187, %v3186
        %v3209 = vpack.c.b16 %v3189, %v3188
        %v3210 = vpack.c.b16 %v3191, %v3190
        %v3211 = vpack.c.b16 %v3193, %v3192
        %v3212 = vpack.c.b16 %v3195, %v3194
        %v3213 = vpack.c.b16 %v3197, %v3196
        %v3215 = vsel %vm681, %v3198, 0
        %v3218 = vsel %vm681, %v3199, 0
        %v3221 = vsel %vm681, %v3200, 0
        %v3224 = vsel %vm681, %v3201, 0
        %v3227 = vsel %vm681, %v3202, 0
        %v3230 = vsel %vm681, %v3203, 0
        %v3233 = vsel %vm681, %v3204, 0
        %v3236 = vsel %vm681, %v3205, 0
        %v3239 = vsel %vm681, %v3206, 0
        %v3242 = vsel %vm681, %v3207, 0
        %v3245 = vsel %vm681, %v3208, 0
        %v3248 = vsel %vm681, %v3209, 0
        %v3251 = vsel %vm681, %v3210, 0
        %v3254 = vsel %vm681, %v3211, 0
        %v3257 = vsel %vm681, %v3212, 0
        %v3260 = vsel %vm681, %v3213, 0
        %v3263 = vsel %vm730, %v192, 0
        %3265 = vmatprep.subr.bf16.mxu0 0
        %3266 = vmatpush1.bf16.msra.mxu0 %v3263
        %3267 = vmatprep.subr.bf16.mxu0 0
        %3268 = vmatpush1.bf16.msra.mxu0 0
        %3269 = vmatprep.subr.bf16.mxu0 0
        %3270 = vmatpush1.bf16.msra.mxu0 0
        %3271 = vmatprep.subr.bf16.mxu0 0
        %3272 = vmatpush1.bf16.msra.mxu0 0
        %3273 = vmatprep.subr.bf16.mxu0 0
        %3274 = vmatpush1.bf16.msra.mxu0 0
        %3275 = vmatprep.subr.bf16.mxu0 0
        %3276 = vmatpush1.bf16.msra.mxu0 0
        %3277 = vmatprep.subr.bf16.mxu0 0
        %3278 = vmatpush1.bf16.msra.mxu0 0
        %3279 = vmatprep.subr.bf16.mxu0 0
        %3280 = vmatpush1.bf16.msra.mxu0 0
        %3281 = vmatprep.subr.bf16.mxu0 0
        %3282 = vmatpush1.bf16.msra.mxu0 0
        %3283 = vmatprep.subr.bf16.mxu0 0
        %3284 = vmatpush1.bf16.msra.mxu0 0
        %3285 = vmatprep.subr.bf16.mxu0 0
        %3286 = vmatpush1.bf16.msra.mxu0 0
        %3287 = vmatprep.subr.bf16.mxu0 0
        %3288 = vmatpush1.bf16.msra.mxu0 0
        %3289 = vmatprep.subr.bf16.mxu0 0
        %3290 = vmatpush1.bf16.msra.mxu0 0
        %3291 = vmatprep.subr.bf16.mxu0 0
        %3292 = vmatpush1.bf16.msra.mxu0 0
        %3293 = vmatprep.subr.bf16.mxu0 0
        %3294 = vmatpush1.bf16.msra.mxu0 0
        %3295 = vmatprep.subr.bf16.mxu0 0
        %3296 = vmatpush1.bf16.msra.mxu0 0
        %3297 = vmatprep.mubr.bf16.mxu0 0
        %3298 = vmatmul.mubr.bf16.gmra.mrb[0].mxu0 %v3215
        %v3299 = vpop.f32.mrb[0].mxu0
        %v3300 = vadd.f32 0.0, %v3299
        %v3301 = vpop.f32.mrb[0].mxu0
        %v3302 = vpop.f32.mrb[0].mxu0
        %v3303 = vadd.f32 0.0, %v3302
        %v3304 = vpop.f32.mrb[0].mxu0
        %3305 = vmatprep.mubr.bf16.mxu0 0
        %3306 = vmatmul.mubr.bf16.gmra.mrb[0].mxu0 %v3218
        %v3307 = vpop.f32.mrb[0].mxu0
        %v3308 = vadd.f32 0.0, %v3307
        %v3309 = vpop.f32.mrb[0].mxu0
        %v3310 = vpop.f32.mrb[0].mxu0
        %v3311 = vadd.f32 0.0, %v3310
        %v3312 = vpop.f32.mrb[0].mxu0
        %3313 = vmatprep.mubr.bf16.mxu0 0
        %3314 = vmatmul.mubr.bf16.gmra.mrb[0].mxu0 %v3221
        %v3315 = vpop.f32.mrb[0].mxu0
        %v3316 = vadd.f32 0.0, %v3315
        %v3317 = vpop.f32.mrb[0].mxu0
        %v3318 = vpop.f32.mrb[0].mxu0
        %v3319 = vadd.f32 0.0, %v3318
        %v3320 = vpop.f32.mrb[0].mxu0
        %3321 = vmatprep.mubr.bf16.mxu0 0
        %3322 = vmatmul.mubr.bf16.gmra.mrb[0].mxu0 %v3224
        %v3323 = vpop.f32.mrb[0].mxu0
        %v3324 = vadd.f32 0.0, %v3323
        %v3325 = vpop.f32.mrb[0].mxu0
        %v3326 = vpop.f32.mrb[0].mxu0
        %v3327 = vadd.f32 0.0, %v3326
        %v3328 = vpop.f32.mrb[0].mxu0
        %3329 = vmatprep.mubr.bf16.mxu0 0
        %3330 = vmatmul.mubr.bf16.gmra.mrb[0].mxu0 %v3227
        %v3331 = vpop.f32.mrb[0].mxu0
        %v3332 = vadd.f32 0.0, %v3331
        %v3333 = vpop.f32.mrb[0].mxu0
        %v3334 = vpop.f32.mrb[0].mxu0
        %v3335 = vadd.f32 0.0, %v3334
        %v3336 = vpop.f32.mrb[0].mxu0
        %3337 = vmatprep.mubr.bf16.mxu0 0
        %3338 = vmatmul.mubr.bf16.gmra.mrb[0].mxu0 %v3230
        %v3339 = vpop.f32.mrb[0].mxu0
        %v3340 = vadd.f32 0.0, %v3339
        %v3341 = vpop.f32.mrb[0].mxu0
        %v3342 = vpop.f32.mrb[0].mxu0
        %v3343 = vadd.f32 0.0, %v3342
        %v3344 = vpop.f32.mrb[0].mxu0
        %3345 = vmatprep.mubr.bf16.mxu0 0
        %3346 = vmatmul.mubr.bf16.gmra.mrb[0].mxu0 %v3233
        %v3347 = vpop.f32.mrb[0].mxu0
        %v3348 = vadd.f32 0.0, %v3347
        %v3349 = vpop.f32.mrb[0].mxu0
        %v3350 = vpop.f32.mrb[0].mxu0
        %v3351 = vadd.f32 0.0, %v3350
        %v3352 = vpop.f32.mrb[0].mxu0
        %3353 = vmatprep.mubr.bf16.mxu0 0
        %3354 = vmatmul.mubr.bf16.gmra.mrb[0].mxu0 %v3236
        %v3355 = vpop.f32.mrb[0].mxu0
        %v3356 = vadd.f32 0.0, %v3355
        %v3357 = vpop.f32.mrb[0].mxu0
        %v3358 = vpop.f32.mrb[0].mxu0
        %v3359 = vadd.f32 0.0, %v3358
        %v3360 = vpop.f32.mrb[0].mxu0
        %3361 = vmatprep.mubr.bf16.mxu0 0
        %3362 = vmatmul.mubr.bf16.gmra.mrb[0].mxu0 %v3239
        %v3363 = vpop.f32.mrb[0].mxu0
        %v3364 = vadd.f32 0.0, %v3363
        %v3365 = vpop.f32.mrb[0].mxu0
        %v3366 = vpop.f32.mrb[0].mxu0
        %v3367 = vadd.f32 0.0, %v3366
        %v3368 = vpop.f32.mrb[0].mxu0
        %3369 = vmatprep.mubr.bf16.mxu0 0
        %3370 = vmatmul.mubr.bf16.gmra.mrb[0].mxu0 %v3242
        %v3371 = vpop.f32.mrb[0].mxu0
        %v3372 = vadd.f32 0.0, %v3371
        %v3373 = vpop.f32.mrb[0].mxu0
        %v3374 = vpop.f32.mrb[0].mxu0
        %v3375 = vadd.f32 0.0, %v3374
        %v3376 = vpop.f32.mrb[0].mxu0
        %3377 = vmatprep.mubr.bf16.mxu0 0
        %3378 = vmatmul.mubr.bf16.gmra.mrb[0].mxu0 %v3245
        %v3379 = vpop.f32.mrb[0].mxu0
        %v3380 = vadd.f32 0.0, %v3379
        %v3381 = vpop.f32.mrb[0].mxu0
        %v3382 = vpop.f32.mrb[0].mxu0
        %v3383 = vadd.f32 0.0, %v3382
        %v3384 = vpop.f32.mrb[0].mxu0
        %3385 = vmatprep.mubr.bf16.mxu0 0
        %3386 = vmatmul.mubr.bf16.gmra.mrb[0].mxu0 %v3248
        %v3387 = vpop.f32.mrb[0].mxu0
        %v3388 = vadd.f32 0.0, %v3387
        %v3389 = vpop.f32.mrb[0].mxu0
        %v3390 = vpop.f32.mrb[0].mxu0
        %v3391 = vadd.f32 0.0, %v3390
        %v3392 = vpop.f32.mrb[0].mxu0
        %3393 = vmatprep.mubr.bf16.mxu0 0
        %3394 = vmatmul.mubr.bf16.gmra.mrb[0].mxu0 %v3251
        %v3395 = vpop.f32.mrb[0].mxu0
        %v3396 = vadd.f32 0.0, %v3395
        %v3397 = vpop.f32.mrb[0].mxu0
        %v3398 = vpop.f32.mrb[0].mxu0
        %v3399 = vadd.f32 0.0, %v3398
        %v3400 = vpop.f32.mrb[0].mxu0
        %3401 = vmatprep.mubr.bf16.mxu0 0
        %3402 = vmatmul.mubr.bf16.gmra.mrb[0].mxu0 %v3254
        %v3403 = vpop.f32.mrb[0].mxu0
        %v3404 = vadd.f32 0.0, %v3403
        %v3405 = vpop.f32.mrb[0].mxu0
        %v3406 = vpop.f32.mrb[0].mxu0
        %v3407 = vadd.f32 0.0, %v3406
        %v3408 = vpop.f32.mrb[0].mxu0
        %3409 = vmatprep.mubr.bf16.mxu0 0
        %3410 = vmatmul.mubr.bf16.gmra.mrb[0].mxu0 %v3257
        %v3411 = vpop.f32.mrb[0].mxu0
        %v3412 = vadd.f32 0.0, %v3411
        %v3413 = vpop.f32.mrb[0].mxu0
        %v3414 = vpop.f32.mrb[0].mxu0
        %v3415 = vadd.f32 0.0, %v3414
        %v3416 = vpop.f32.mrb[0].mxu0
        %3417 = vmatprep.mubr.bf16.mxu0 0
        %3418 = vmatmul.mubr.bf16.gmra.mrb[0].mxu0 %v3260
        %v3419 = vpop.f32.mrb[0].mxu0
        %v3420 = vadd.f32 0.0, %v3419
        %v3421 = vpop.f32.mrb[0].mxu0
        %v3422 = vpop.f32.mrb[0].mxu0
        %v3423 = vadd.f32 0.0, %v3422
        %v3424 = vpop.f32.mrb[0].mxu0
        %3425 = vdwg.mxu0
        %v3426 = vadd.f32 %v3050, %v3300
        %v3427 = vadd.f32 %v3051, %v3303
        %v3428 = vadd.f32 %v3052, %v3308
        %v3429 = vadd.f32 %v3053, %v3311
        %v3430 = vadd.f32 %v3054, %v3316
        %v3431 = vadd.f32 %v3055, %v3319
        %v3432 = vadd.f32 %v3056, %v3324
        %v3433 = vadd.f32 %v3057, %v3327
        %v3434 = vadd.f32 %v3058, %v3332
        %v3435 = vadd.f32 %v3059, %v3335
        %v3436 = vadd.f32 %v3060, %v3340
        %v3437 = vadd.f32 %v3061, %v3343
        %v3438 = vadd.f32 %v3062, %v3348
        %v3439 = vadd.f32 %v3063, %v3351
        %v3440 = vadd.f32 %v3064, %v3356
        %v3441 = vadd.f32 %v3065, %v3359
        %v3442 = vadd.f32 %v3066, %v3364
        %v3443 = vadd.f32 %v3067, %v3367
        %v3444 = vadd.f32 %v3068, %v3372
        %v3445 = vadd.f32 %v3069, %v3375
        %v3446 = vadd.f32 %v3070, %v3380
        %v3447 = vadd.f32 %v3071, %v3383
        %v3448 = vadd.f32 %v3072, %v3388
        %v3449 = vadd.f32 %v3073, %v3391
        %v3450 = vadd.f32 %v3074, %v3396
        %v3451 = vadd.f32 %v3075, %v3399
        %v3452 = vadd.f32 %v3076, %v3404
        %v3453 = vadd.f32 %v3077, %v3407
        %v3454 = vadd.f32 %v3078, %v3412
        %v3455 = vadd.f32 %v3079, %v3415
        %v3456 = vadd.f32 %v3080, %v3420
        %v3457 = vadd.f32 %v3081, %v3423
        %v3459 = vshrl.u32 %v3086, 16
        %v3461 = vrot.slane %v3459, 4
        %v3462 = vshll.u32 %v3086, 16
        %v3464 = vrot.slane %v3462, 5
        %v3465 = vor.u32 %v3461, %v3464
        %v3466 = vrot.slane %v3465, 4
        %v3468 = vshll.u32 %v3087, 16
        %v3470 = vrot.slane %v3468, 5
        %v3471 = vsel %vm248, %v3466, %v3470
        %v3472 = vshrl.u32 %v3087, 16
        %v3474 = vrot.slane %v3472, 4
        %v3475 = vor.u32 %v3474, %v3470
        %v3476 = vrot.slane %v3475, 4
        %v3478 = vshll.u32 %v3088, 16
        %v3480 = vrot.slane %v3478, 5
        %v3481 = vsel %vm248, %v3476, %v3480
        %v3483 = vshrl.u32 %v3089, 16
        %v3485 = vrot.slane %v3483, 4
        %v3486 = vshll.u32 %v3089, 16
        %v3488 = vrot.slane %v3486, 5
        %v3489 = vor.u32 %v3485, %v3488
        %v3490 = vrot.slane %v3489, 4
        %v3492 = vshll.u32 %v3090, 16
        %v3494 = vrot.slane %v3492, 5
        %v3495 = vsel %vm248, %v3490, %v3494
        %v3496 = vshrl.u32 %v3090, 16
        %v3498 = vrot.slane %v3496, 4
        %v3499 = vor.u32 %v3498, %v3494
        %v3500 = vrot.slane %v3499, 4
        %v3502 = vshll.u32 %v3091, 16
        %v3504 = vrot.slane %v3502, 5
        %v3505 = vsel %vm248, %v3500, %v3504
        %v3507 = vshrl.u32 %v3092, 16
        %v3509 = vrot.slane %v3507, 4
        %v3510 = vshll.u32 %v3092, 16
        %v3512 = vrot.slane %v3510, 5
        %v3513 = vor.u32 %v3509, %v3512
        %v3514 = vrot.slane %v3513, 4
        %v3516 = vshll.u32 %v3093, 16
        %v3518 = vrot.slane %v3516, 5
        %v3519 = vsel %vm248, %v3514, %v3518
        %v3520 = vshrl.u32 %v3093, 16
        %v3522 = vrot.slane %v3520, 4
        %v3523 = vor.u32 %v3522, %v3518
        %v3524 = vrot.slane %v3523, 4
        %v3526 = vshll.u32 %v3094, 16
        %v3528 = vrot.slane %v3526, 5
        %v3529 = vsel %vm248, %v3524, %v3528
        %v3531 = vshrl.u32 %v3095, 16
        %v3533 = vrot.slane %v3531, 4
        %v3534 = vshll.u32 %v3095, 16
        %v3536 = vrot.slane %v3534, 5
        %v3537 = vor.u32 %v3533, %v3536
        %v3538 = vrot.slane %v3537, 4
        %v3540 = vshll.u32 %v3096, 16
        %v3542 = vrot.slane %v3540, 5
        %v3543 = vsel %vm248, %v3538, %v3542
        %v3544 = vshrl.u32 %v3096, 16
        %v3546 = vrot.slane %v3544, 4
        %v3547 = vor.u32 %v3546, %v3542
        %v3548 = vrot.slane %v3547, 4
        %v3550 = vshll.u32 %v3097, 16
        %v3552 = vrot.slane %v3550, 5
        %v3553 = vsel %vm248, %v3548, %v3552
        %v3555 = vshrl.u32 %v3098, 16
        %v3557 = vrot.slane %v3555, 4
        %v3558 = vshll.u32 %v3098, 16
        %v3560 = vrot.slane %v3558, 5
        %v3561 = vor.u32 %v3557, %v3560
        %v3562 = vrot.slane %v3561, 4
        %v3564 = vshll.u32 %v3099, 16
        %v3566 = vrot.slane %v3564, 5
        %v3567 = vsel %vm248, %v3562, %v3566
        %v3568 = vshrl.u32 %v3099, 16
        %v3570 = vrot.slane %v3568, 4
        %v3571 = vor.u32 %v3570, %v3566
        %v3572 = vrot.slane %v3571, 4
        %v3574 = vshll.u32 %v3100, 16
        %v3576 = vrot.slane %v3574, 5
        %v3577 = vsel %vm248, %v3572, %v3576
        %v3579 = vshrl.u32 %v3101, 16
        %v3581 = vrot.slane %v3579, 4
        %v3582 = vshll.u32 %v3101, 16
        %v3584 = vrot.slane %v3582, 5
        %v3585 = vor.u32 %v3581, %v3584
        %v3586 = vrot.slane %v3585, 4
        %v3588 = vshll.u32 %v3102, 16
        %v3590 = vrot.slane %v3588, 5
        %v3591 = vsel %vm248, %v3586, %v3590
        %v3592 = vshrl.u32 %v3102, 16
        %v3594 = vrot.slane %v3592, 4
        %v3595 = vor.u32 %v3594, %v3590
        %v3596 = vrot.slane %v3595, 4
        %v3598 = vshll.u32 %v3103, 16
        %v3600 = vrot.slane %v3598, 5
        %v3601 = vsel %vm248, %v3596, %v3600
        %v3603 = vshrl.u32 %v3104, 16
        %v3605 = vrot.slane %v3603, 4
        %v3606 = vshll.u32 %v3104, 16
        %v3608 = vrot.slane %v3606, 5
        %v3609 = vor.u32 %v3605, %v3608
        %v3610 = vrot.slane %v3609, 4
        %v3612 = vshll.u32 %v3105, 16
        %v3614 = vrot.slane %v3612, 5
        %v3615 = vsel %vm248, %v3610, %v3614
        %v3616 = vshrl.u32 %v3105, 16
        %v3618 = vrot.slane %v3616, 4
        %v3619 = vor.u32 %v3618, %v3614
        %v3620 = vrot.slane %v3619, 4
        %v3622 = vshll.u32 %v3106, 16
        %v3624 = vrot.slane %v3622, 5
        %v3625 = vsel %vm248, %v3620, %v3624
        %v3627 = vshrl.u32 %v3107, 16
        %v3629 = vrot.slane %v3627, 4
        %v3630 = vshll.u32 %v3107, 16
        %v3632 = vrot.slane %v3630, 5
        %v3633 = vor.u32 %v3629, %v3632
        %v3634 = vrot.slane %v3633, 4
        %v3636 = vshll.u32 %v3108, 16
        %v3638 = vrot.slane %v3636, 5
        %v3639 = vsel %vm248, %v3634, %v3638
        %v3640 = vshrl.u32 %v3108, 16
        %v3642 = vrot.slane %v3640, 4
        %v3643 = vor.u32 %v3642, %v3638
        %v3644 = vrot.slane %v3643, 4
        %v3646 = vshll.u32 %v3109, 16
        %v3648 = vrot.slane %v3646, 5
        %v3649 = vsel %vm248, %v3644, %v3648
        %v3651 = vshrl.u32 %v3110, 16
        %v3653 = vrot.slane %v3651, 4
        %v3654 = vshll.u32 %v3110, 16
        %v3656 = vrot.slane %v3654, 5
        %v3657 = vor.u32 %v3653, %v3656
        %v3658 = vrot.slane %v3657, 4
        %v3660 = vshll.u32 %v3111, 16
        %v3662 = vrot.slane %v3660, 5
        %v3663 = vsel %vm248, %v3658, %v3662
        %v3664 = vshrl.u32 %v3111, 16
        %v3666 = vrot.slane %v3664, 4
        %v3667 = vor.u32 %v3666, %v3662
        %v3668 = vrot.slane %v3667, 4
        %v3670 = vshll.u32 %v3112, 16
        %v3672 = vrot.slane %v3670, 5
        %v3673 = vsel %vm248, %v3668, %v3672
        %v3675 = vshrl.u32 %v3113, 16
        %v3677 = vrot.slane %v3675, 4
        %v3678 = vshll.u32 %v3113, 16
        %v3680 = vrot.slane %v3678, 5
        %v3681 = vor.u32 %v3677, %v3680
        %v3682 = vrot.slane %v3681, 4
        %v3684 = vshll.u32 %v3114, 16
        %v3686 = vrot.slane %v3684, 5
        %v3687 = vsel %vm248, %v3682, %v3686
        %v3688 = vshrl.u32 %v3114, 16
        %v3690 = vrot.slane %v3688, 4
        %v3691 = vor.u32 %v3690, %v3686
        %v3692 = vrot.slane %v3691, 4
        %v3694 = vshll.u32 %v3115, 16
        %v3696 = vrot.slane %v3694, 5
        %v3697 = vsel %vm248, %v3692, %v3696
        %v3699 = vshrl.u32 %v3116, 16
        %v3701 = vrot.slane %v3699, 4
        %v3702 = vshll.u32 %v3116, 16
        %v3704 = vrot.slane %v3702, 5
        %v3705 = vor.u32 %v3701, %v3704
        %v3706 = vrot.slane %v3705, 4
        %v3708 = vshll.u32 %v3117, 16
        %v3710 = vrot.slane %v3708, 5
        %v3711 = vsel %vm248, %v3706, %v3710
        %v3712 = vshrl.u32 %v3117, 16
        %v3714 = vrot.slane %v3712, 4
        %v3715 = vor.u32 %v3714, %v3710
        %v3716 = vrot.slane %v3715, 4
        %v3718 = vshll.u32 %v3118, 16
        %v3720 = vrot.slane %v3718, 5
        %v3721 = vsel %vm248, %v3716, %v3720
        %v3723 = vshrl.u32 %v3119, 16
        %v3725 = vrot.slane %v3723, 4
        %v3726 = vshll.u32 %v3119, 16
        %v3728 = vrot.slane %v3726, 5
        %v3729 = vor.u32 %v3725, %v3728
        %v3730 = vrot.slane %v3729, 4
        %v3732 = vshll.u32 %v3120, 16
        %v3734 = vrot.slane %v3732, 5
        %v3735 = vsel %vm248, %v3730, %v3734
        %v3736 = vshrl.u32 %v3120, 16
        %v3738 = vrot.slane %v3736, 4
        %v3739 = vor.u32 %v3738, %v3734
        %v3740 = vrot.slane %v3739, 4
        %v3742 = vshll.u32 %v3121, 16
        %v3744 = vrot.slane %v3742, 5
        %v3745 = vsel %vm248, %v3740, %v3744
        %v3747 = vshrl.u32 %v3122, 16
        %v3749 = vrot.slane %v3747, 4
        %v3750 = vshll.u32 %v3122, 16
        %v3752 = vrot.slane %v3750, 5
        %v3753 = vor.u32 %v3749, %v3752
        %v3754 = vrot.slane %v3753, 4
        %v3756 = vshll.u32 %v3123, 16
        %v3758 = vrot.slane %v3756, 5
        %v3759 = vsel %vm248, %v3754, %v3758
        %v3760 = vshrl.u32 %v3123, 16
        %v3762 = vrot.slane %v3760, 4
        %v3763 = vor.u32 %v3762, %v3758
        %v3764 = vrot.slane %v3763, 4
        %v3766 = vshll.u32 %v3124, 16
        %v3768 = vrot.slane %v3766, 5
        %v3769 = vsel %vm248, %v3764, %v3768
        %v3771 = vshrl.u32 %v3125, 16
        %v3773 = vrot.slane %v3771, 4
        %v3774 = vshll.u32 %v3125, 16
        %v3776 = vrot.slane %v3774, 5
        %v3777 = vor.u32 %v3773, %v3776
        %v3778 = vrot.slane %v3777, 4
        %v3780 = vshll.u32 %v3126, 16
        %v3782 = vrot.slane %v3780, 5
        %v3783 = vsel %vm248, %v3778, %v3782
        %v3784 = vshrl.u32 %v3126, 16
        %v3786 = vrot.slane %v3784, 4
        %v3787 = vor.u32 %v3786, %v3782
        %v3788 = vrot.slane %v3787, 4
        %v3790 = vshll.u32 %v3127, 16
        %v3792 = vrot.slane %v3790, 5
        %v3793 = vsel %vm248, %v3788, %v3792
        %v3795 = vshrl.u32 %v3128, 16
        %v3797 = vrot.slane %v3795, 4
        %v3798 = vshll.u32 %v3128, 16
        %v3800 = vrot.slane %v3798, 5
        %v3801 = vor.u32 %v3797, %v3800
        %v3802 = vrot.slane %v3801, 4
        %v3804 = vshll.u32 %v3129, 16
        %v3806 = vrot.slane %v3804, 5
        %v3807 = vsel %vm248, %v3802, %v3806
        %v3808 = vshrl.u32 %v3129, 16
        %v3810 = vrot.slane %v3808, 4
        %v3811 = vor.u32 %v3810, %v3806
        %v3812 = vrot.slane %v3811, 4
        %v3814 = vshll.u32 %v3130, 16
        %v3816 = vrot.slane %v3814, 5
        %v3817 = vsel %vm248, %v3812, %v3816
        %v3819 = vshrl.u32 %v3131, 16
        %v3821 = vrot.slane %v3819, 4
        %v3822 = vshll.u32 %v3131, 16
        %v3824 = vrot.slane %v3822, 5
        %v3825 = vor.u32 %v3821, %v3824
        %v3826 = vrot.slane %v3825, 4
        %v3828 = vshll.u32 %v3132, 16
        %v3830 = vrot.slane %v3828, 5
        %v3831 = vsel %vm248, %v3826, %v3830
        %v3832 = vshrl.u32 %v3132, 16
        %v3834 = vrot.slane %v3832, 4
        %v3835 = vor.u32 %v3834, %v3830
        %v3836 = vrot.slane %v3835, 4
        %v3838 = vshll.u32 %v3133, 16
        %v3840 = vrot.slane %v3838, 5
        %v3841 = vsel %vm248, %v3836, %v3840
        %v3842 = vunpack.c.l.b16 %v3471
        %v3843 = vunpack.c.l.b16 %v3481
        %v3844 = vunpack.c.l.b16 %v3495
        %v3845 = vunpack.c.l.b16 %v3505
        %v3846 = vunpack.c.l.b16 %v3519
        %v3847 = vunpack.c.l.b16 %v3529
        %v3848 = vunpack.c.l.b16 %v3543
        %v3849 = vunpack.c.l.b16 %v3553
        %v3850 = vunpack.c.l.b16 %v3567
        %v3851 = vunpack.c.l.b16 %v3577
        %v3852 = vunpack.c.l.b16 %v3591
        %v3853 = vunpack.c.l.b16 %v3601
        %v3854 = vunpack.c.l.b16 %v3615
        %v3855 = vunpack.c.l.b16 %v3625
        %v3856 = vunpack.c.l.b16 %v3639
        %v3857 = vunpack.c.l.b16 %v3649
        %v3858 = vunpack.c.l.b16 %v3663
        %v3859 = vunpack.c.l.b16 %v3673
        %v3860 = vunpack.c.l.b16 %v3687
        %v3861 = vunpack.c.l.b16 %v3697
        %v3862 = vunpack.c.l.b16 %v3711
        %v3863 = vunpack.c.l.b16 %v3721
        %v3864 = vunpack.c.l.b16 %v3735
        %v3865 = vunpack.c.l.b16 %v3745
        %v3866 = vunpack.c.l.b16 %v3759
        %v3867 = vunpack.c.l.b16 %v3769
        %v3868 = vunpack.c.l.b16 %v3783
        %v3869 = vunpack.c.l.b16 %v3793
        %v3870 = vunpack.c.l.b16 %v3807
        %v3871 = vunpack.c.l.b16 %v3817
        %v3872 = vunpack.c.l.b16 %v3831
        %v3873 = vunpack.c.l.b16 %v3841
        %v3874 = vpack.c.b16 %v3843, %v3842
        %v3875 = vpack.c.b16 %v3845, %v3844
        %v3876 = vpack.c.b16 %v3847, %v3846
        %v3877 = vpack.c.b16 %v3849, %v3848
        %v3878 = vpack.c.b16 %v3851, %v3850
        %v3879 = vpack.c.b16 %v3853, %v3852
        %v3880 = vpack.c.b16 %v3855, %v3854
        %v3881 = vpack.c.b16 %v3857, %v3856
        %v3882 = vpack.c.b16 %v3859, %v3858
        %v3883 = vpack.c.b16 %v3861, %v3860
        %v3884 = vpack.c.b16 %v3863, %v3862
        %v3885 = vpack.c.b16 %v3865, %v3864
        %v3886 = vpack.c.b16 %v3867, %v3866
        %v3887 = vpack.c.b16 %v3869, %v3868
        %v3888 = vpack.c.b16 %v3871, %v3870
        %v3889 = vpack.c.b16 %v3873, %v3872
        %v3891 = vsel %vm681, %v3874, 0
        %v3894 = vsel %vm681, %v3875, 0
        %v3897 = vsel %vm681, %v3876, 0
        %v3900 = vsel %vm681, %v3877, 0
        %v3903 = vsel %vm681, %v3878, 0
        %v3906 = vsel %vm681, %v3879, 0
        %v3909 = vsel %vm681, %v3880, 0
        %v3912 = vsel %vm681, %v3881, 0
        %v3915 = vsel %vm681, %v3882, 0
        %v3918 = vsel %vm681, %v3883, 0
        %v3921 = vsel %vm681, %v3884, 0
        %v3924 = vsel %vm681, %v3885, 0
        %v3927 = vsel %vm681, %v3886, 0
        %v3930 = vsel %vm681, %v3887, 0
        %v3933 = vsel %vm681, %v3888, 0
        %v3936 = vsel %vm681, %v3889, 0
        %v3939 = vsel %vm730, %v193, 0
        %3941 = vmatprep.subr.bf16.mxu0 0
        %3942 = vmatpush1.bf16.msra.mxu0 %v3939
        %3943 = vmatprep.subr.bf16.mxu0 0
        %3944 = vmatpush1.bf16.msra.mxu0 0
        %3945 = vmatprep.subr.bf16.mxu0 0
        %3946 = vmatpush1.bf16.msra.mxu0 0
        %3947 = vmatprep.subr.bf16.mxu0 0
        %3948 = vmatpush1.bf16.msra.mxu0 0
        %3949 = vmatprep.subr.bf16.mxu0 0
        %3950 = vmatpush1.bf16.msra.mxu0 0
        %3951 = vmatprep.subr.bf16.mxu0 0
        %3952 = vmatpush1.bf16.msra.mxu0 0
        %3953 = vmatprep.subr.bf16.mxu0 0
        %3954 = vmatpush1.bf16.msra.mxu0 0
        %3955 = vmatprep.subr.bf16.mxu0 0
        %3956 = vmatpush1.bf16.msra.mxu0 0
        %3957 = vmatprep.subr.bf16.mxu0 0
        %3958 = vmatpush1.bf16.msra.mxu0 0
        %3959 = vmatprep.subr.bf16.mxu0 0
        %3960 = vmatpush1.bf16.msra.mxu0 0
        %3961 = vmatprep.subr.bf16.mxu0 0
        %3962 = vmatpush1.bf16.msra.mxu0 0
        %3963 = vmatprep.subr.bf16.mxu0 0
        %3964 = vmatpush1.bf16.msra.mxu0 0
        %3965 = vmatprep.subr.bf16.mxu0 0
        %3966 = vmatpush1.bf16.msra.mxu0 0
        %3967 = vmatprep.subr.bf16.mxu0 0
        %3968 = vmatpush1.bf16.msra.mxu0 0
        %3969 = vmatprep.subr.bf16.mxu0 0
        %3970 = vmatpush1.bf16.msra.mxu0 0
        %3971 = vmatprep.subr.bf16.mxu0 0
        %3972 = vmatpush1.bf16.msra.mxu0 0
        %3973 = vmatprep.mubr.bf16.mxu0 0
        %3974 = vmatmul.mubr.bf16.gmra.mrb[0].mxu0 %v3891
        %v3975 = vpop.f32.mrb[0].mxu0
        %v3976 = vadd.f32 0.0, %v3975
        %v3977 = vpop.f32.mrb[0].mxu0
        %v3978 = vpop.f32.mrb[0].mxu0
        %v3979 = vadd.f32 0.0, %v3978
        %v3980 = vpop.f32.mrb[0].mxu0
        %3981 = vmatprep.mubr.bf16.mxu0 0
        %3982 = vmatmul.mubr.bf16.gmra.mrb[0].mxu0 %v3894
        %v3983 = vpop.f32.mrb[0].mxu0
        %v3984 = vadd.f32 0.0, %v3983
        %v3985 = vpop.f32.mrb[0].mxu0
        %v3986 = vpop.f32.mrb[0].mxu0
        %v3987 = vadd.f32 0.0, %v3986
        %v3988 = vpop.f32.mrb[0].mxu0
        %3989 = vmatprep.mubr.bf16.mxu0 0
        %3990 = vmatmul.mubr.bf16.gmra.mrb[0].mxu0 %v3897
        %v3991 = vpop.f32.mrb[0].mxu0
        %v3992 = vadd.f32 0.0, %v3991
        %v3993 = vpop.f32.mrb[0].mxu0
        %v3994 = vpop.f32.mrb[0].mxu0
        %v3995 = vadd.f32 0.0, %v3994
        %v3996 = vpop.f32.mrb[0].mxu0
        %3997 = vmatprep.mubr.bf16.mxu0 0
        %3998 = vmatmul.mubr.bf16.gmra.mrb[0].mxu0 %v3900
        %v3999 = vpop.f32.mrb[0].mxu0
        %v4000 = vadd.f32 0.0, %v3999
        %v4001 = vpop.f32.mrb[0].mxu0
        %v4002 = vpop.f32.mrb[0].mxu0
        %v4003 = vadd.f32 0.0, %v4002
        %v4004 = vpop.f32.mrb[0].mxu0
        %4005 = vmatprep.mubr.bf16.mxu0 0
        %4006 = vmatmul.mubr.bf16.gmra.mrb[0].mxu0 %v3903
        %v4007 = vpop.f32.mrb[0].mxu0
        %v4008 = vadd.f32 0.0, %v4007
        %v4009 = vpop.f32.mrb[0].mxu0
        %v4010 = vpop.f32.mrb[0].mxu0
        %v4011 = vadd.f32 0.0, %v4010
        %v4012 = vpop.f32.mrb[0].mxu0
        %4013 = vmatprep.mubr.bf16.mxu0 0
        %4014 = vmatmul.mubr.bf16.gmra.mrb[0].mxu0 %v3906
        %v4015 = vpop.f32.mrb[0].mxu0
        %v4016 = vadd.f32 0.0, %v4015
        %v4017 = vpop.f32.mrb[0].mxu0
        %v4018 = vpop.f32.mrb[0].mxu0
        %v4019 = vadd.f32 0.0, %v4018
        %v4020 = vpop.f32.mrb[0].mxu0
        %4021 = vmatprep.mubr.bf16.mxu0 0
        %4022 = vmatmul.mubr.bf16.gmra.mrb[0].mxu0 %v3909
        %v4023 = vpop.f32.mrb[0].mxu0
        %v4024 = vadd.f32 0.0, %v4023
        %v4025 = vpop.f32.mrb[0].mxu0
        %v4026 = vpop.f32.mrb[0].mxu0
        %v4027 = vadd.f32 0.0, %v4026
        %v4028 = vpop.f32.mrb[0].mxu0
        %4029 = vmatprep.mubr.bf16.mxu0 0
        %4030 = vmatmul.mubr.bf16.gmra.mrb[0].mxu0 %v3912
        %v4031 = vpop.f32.mrb[0].mxu0
        %v4032 = vadd.f32 0.0, %v4031
        %v4033 = vpop.f32.mrb[0].mxu0
        %v4034 = vpop.f32.mrb[0].mxu0
        %v4035 = vadd.f32 0.0, %v4034
        %v4036 = vpop.f32.mrb[0].mxu0
        %4037 = vmatprep.mubr.bf16.mxu0 0
        %4038 = vmatmul.mubr.bf16.gmra.mrb[0].mxu0 %v3915
        %v4039 = vpop.f32.mrb[0].mxu0
        %v4040 = vadd.f32 0.0, %v4039
        %v4041 = vpop.f32.mrb[0].mxu0
        %v4042 = vpop.f32.mrb[0].mxu0
        %v4043 = vadd.f32 0.0, %v4042
        %v4044 = vpop.f32.mrb[0].mxu0
        %4045 = vmatprep.mubr.bf16.mxu0 0
        %4046 = vmatmul.mubr.bf16.gmra.mrb[0].mxu0 %v3918
        %v4047 = vpop.f32.mrb[0].mxu0
        %v4048 = vadd.f32 0.0, %v4047
        %v4049 = vpop.f32.mrb[0].mxu0
        %v4050 = vpop.f32.mrb[0].mxu0
        %v4051 = vadd.f32 0.0, %v4050
        %v4052 = vpop.f32.mrb[0].mxu0
        %4053 = vmatprep.mubr.bf16.mxu0 0
        %4054 = vmatmul.mubr.bf16.gmra.mrb[0].mxu0 %v3921
        %v4055 = vpop.f32.mrb[0].mxu0
        %v4056 = vadd.f32 0.0, %v4055
        %v4057 = vpop.f32.mrb[0].mxu0
        %v4058 = vpop.f32.mrb[0].mxu0
        %v4059 = vadd.f32 0.0, %v4058
        %v4060 = vpop.f32.mrb[0].mxu0
        %4061 = vmatprep.mubr.bf16.mxu0 0
        %4062 = vmatmul.mubr.bf16.gmra.mrb[0].mxu0 %v3924
        %v4063 = vpop.f32.mrb[0].mxu0
        %v4064 = vadd.f32 0.0, %v4063
        %v4065 = vpop.f32.mrb[0].mxu0
        %v4066 = vpop.f32.mrb[0].mxu0
        %v4067 = vadd.f32 0.0, %v4066
        %v4068 = vpop.f32.mrb[0].mxu0
        %4069 = vmatprep.mubr.bf16.mxu0 0
        %4070 = vmatmul.mubr.bf16.gmra.mrb[0].mxu0 %v3927
        %v4071 = vpop.f32.mrb[0].mxu0
        %v4072 = vadd.f32 0.0, %v4071
        %v4073 = vpop.f32.mrb[0].mxu0
        %v4074 = vpop.f32.mrb[0].mxu0
        %v4075 = vadd.f32 0.0, %v4074
        %v4076 = vpop.f32.mrb[0].mxu0
        %4077 = vmatprep.mubr.bf16.mxu0 0
        %4078 = vmatmul.mubr.bf16.gmra.mrb[0].mxu0 %v3930
        %v4079 = vpop.f32.mrb[0].mxu0
        %v4080 = vadd.f32 0.0, %v4079
        %v4081 = vpop.f32.mrb[0].mxu0
        %v4082 = vpop.f32.mrb[0].mxu0
        %v4083 = vadd.f32 0.0, %v4082
        %v4084 = vpop.f32.mrb[0].mxu0
        %4085 = vmatprep.mubr.bf16.mxu0 0
        %4086 = vmatmul.mubr.bf16.gmra.mrb[0].mxu0 %v3933
        %v4087 = vpop.f32.mrb[0].mxu0
        %v4088 = vadd.f32 0.0, %v4087
        %v4089 = vpop.f32.mrb[0].mxu0
        %v4090 = vpop.f32.mrb[0].mxu0
        %v4091 = vadd.f32 0.0, %v4090
        %v4092 = vpop.f32.mrb[0].mxu0
        %4093 = vmatprep.mubr.bf16.mxu0 0
        %4094 = vmatmul.mubr.bf16.gmra.mrb[0].mxu0 %v3936
        %v4095 = vpop.f32.mrb[0].mxu0
        %v4096 = vadd.f32 0.0, %v4095
        %v4097 = vpop.f32.mrb[0].mxu0
        %v4098 = vpop.f32.mrb[0].mxu0
        %v4099 = vadd.f32 0.0, %v4098
        %v4100 = vpop.f32.mrb[0].mxu0
        %4101 = vdwg.mxu0
        %v4102 = vadd.f32 %v3426, %v3976
        %v4103 = vadd.f32 %v3427, %v3979
        %v4104 = vadd.f32 %v3428, %v3984
        %v4105 = vadd.f32 %v3429, %v3987
        %v4106 = vadd.f32 %v3430, %v3992
        %v4107 = vadd.f32 %v3431, %v3995
        %v4108 = vadd.f32 %v3432, %v4000
        %v4109 = vadd.f32 %v3433, %v4003
        %v4110 = vadd.f32 %v3434, %v4008
        %v4111 = vadd.f32 %v3435, %v4011
        %v4112 = vadd.f32 %v3436, %v4016
        %v4113 = vadd.f32 %v3437, %v4019
        %v4114 = vadd.f32 %v3438, %v4024
        %v4115 = vadd.f32 %v3439, %v4027
        %v4116 = vadd.f32 %v3440, %v4032
        %v4117 = vadd.f32 %v3441, %v4035
        %v4118 = vadd.f32 %v3442, %v4040
        %v4119 = vadd.f32 %v3443, %v4043
        %v4120 = vadd.f32 %v3444, %v4048
        %v4121 = vadd.f32 %v3445, %v4051
        %v4122 = vadd.f32 %v3446, %v4056
        %v4123 = vadd.f32 %v3447, %v4059
        %v4124 = vadd.f32 %v3448, %v4064
        %v4125 = vadd.f32 %v3449, %v4067
        %v4126 = vadd.f32 %v3450, %v4072
        %v4127 = vadd.f32 %v3451, %v4075
        %v4128 = vadd.f32 %v3452, %v4080
        %v4129 = vadd.f32 %v3453, %v4083
        %v4130 = vadd.f32 %v3454, %v4088
        %v4131 = vadd.f32 %v3455, %v4091
        %v4132 = vadd.f32 %v3456, %v4096
        %v4133 = vadd.f32 %v3457, %v4099
        %v4150 = vrot.slane %v3086, 5
        %v4151 = vrot.slane %v4150, 4
        %v4152 = vrot.slane %v3087, 5
        %v4153 = vsel %vm1205, %v4151, %v4152
        %v4154 = vrot.slane %v4152, 4
        %v4155 = vrot.slane %v3088, 5
        %v4156 = vsel %vm1205, %v4154, %v4155
        %v4157 = vrot.slane %v3089, 5
        %v4158 = vrot.slane %v4157, 4
        %v4159 = vrot.slane %v3090, 5
        %v4160 = vsel %vm1205, %v4158, %v4159
        %v4161 = vrot.slane %v4159, 4
        %v4162 = vrot.slane %v3091, 5
        %v4163 = vsel %vm1205, %v4161, %v4162
        %v4164 = vrot.slane %v3092, 5
        %v4165 = vrot.slane %v4164, 4
        %v4166 = vrot.slane %v3093, 5
        %v4167 = vsel %vm1205, %v4165, %v4166
        %v4168 = vrot.slane %v4166, 4
        %v4169 = vrot.slane %v3094, 5
        %v4170 = vsel %vm1205, %v4168, %v4169
        %v4171 = vrot.slane %v3095, 5
        %v4172 = vrot.slane %v4171, 4
        %v4173 = vrot.slane %v3096, 5
        %v4174 = vsel %vm1205, %v4172, %v4173
        %v4175 = vrot.slane %v4173, 4
        %v4176 = vrot.slane %v3097, 5
        %v4177 = vsel %vm1205, %v4175, %v4176
        %v4178 = vrot.slane %v3098, 5
        %v4179 = vrot.slane %v4178, 4
        %v4180 = vrot.slane %v3099, 5
        %v4181 = vsel %vm1205, %v4179, %v4180
        %v4182 = vrot.slane %v4180, 4
        %v4183 = vrot.slane %v3100, 5
        %v4184 = vsel %vm1205, %v4182, %v4183
        %v4185 = vrot.slane %v3101, 5
        %v4186 = vrot.slane %v4185, 4
        %v4187 = vrot.slane %v3102, 5
        %v4188 = vsel %vm1205, %v4186, %v4187
        %v4189 = vrot.slane %v4187, 4
        %v4190 = vrot.slane %v3103, 5
        %v4191 = vsel %vm1205, %v4189, %v4190
        %v4192 = vrot.slane %v3104, 5
        %v4193 = vrot.slane %v4192, 4
        %v4194 = vrot.slane %v3105, 5
        %v4195 = vsel %vm1205, %v4193, %v4194
        %v4196 = vrot.slane %v4194, 4
        %v4197 = vrot.slane %v3106, 5
        %v4198 = vsel %vm1205, %v4196, %v4197
        %v4199 = vrot.slane %v3107, 5
        %v4200 = vrot.slane %v4199, 4
        %v4201 = vrot.slane %v3108, 5
        %v4202 = vsel %vm1205, %v4200, %v4201
        %v4203 = vrot.slane %v4201, 4
        %v4204 = vrot.slane %v3109, 5
        %v4205 = vsel %vm1205, %v4203, %v4204
        %v4206 = vrot.slane %v3110, 5
        %v4207 = vrot.slane %v4206, 4
        %v4208 = vrot.slane %v3111, 5
        %v4209 = vsel %vm1205, %v4207, %v4208
        %v4210 = vrot.slane %v4208, 4
        %v4211 = vrot.slane %v3112, 5
        %v4212 = vsel %vm1205, %v4210, %v4211
        %v4213 = vrot.slane %v3113, 5
        %v4214 = vrot.slane %v4213, 4
        %v4215 = vrot.slane %v3114, 5
        %v4216 = vsel %vm1205, %v4214, %v4215
        %v4217 = vrot.slane %v4215, 4
        %v4218 = vrot.slane %v3115, 5
        %v4219 = vsel %vm1205, %v4217, %v4218
        %v4220 = vrot.slane %v3116, 5
        %v4221 = vrot.slane %v4220, 4
        %v4222 = vrot.slane %v3117, 5
        %v4223 = vsel %vm1205, %v4221, %v4222
        %v4224 = vrot.slane %v4222, 4
        %v4225 = vrot.slane %v3118, 5
        %v4226 = vsel %vm1205, %v4224, %v4225
        %v4227 = vrot.slane %v3119, 5
        %v4228 = vrot.slane %v4227, 4
        %v4229 = vrot.slane %v3120, 5
        %v4230 = vsel %vm1205, %v4228, %v4229
        %v4231 = vrot.slane %v4229, 4
        %v4232 = vrot.slane %v3121, 5
        %v4233 = vsel %vm1205, %v4231, %v4232
        %v4234 = vrot.slane %v3122, 5
        %v4235 = vrot.slane %v4234, 4
        %v4236 = vrot.slane %v3123, 5
        %v4237 = vsel %vm1205, %v4235, %v4236
        %v4238 = vrot.slane %v4236, 4
        %v4239 = vrot.slane %v3124, 5
        %v4240 = vsel %vm1205, %v4238, %v4239
        %v4241 = vrot.slane %v3125, 5
        %v4242 = vrot.slane %v4241, 4
        %v4243 = vrot.slane %v3126, 5
        %v4244 = vsel %vm1205, %v4242, %v4243
        %v4245 = vrot.slane %v4243, 4
        %v4246 = vrot.slane %v3127, 5
        %v4247 = vsel %vm1205, %v4245, %v4246
        %v4248 = vrot.slane %v3128, 5
        %v4249 = vrot.slane %v4248, 4
        %v4250 = vrot.slane %v3129, 5
        %v4251 = vsel %vm1205, %v4249, %v4250
        %v4252 = vrot.slane %v4250, 4
        %v4253 = vrot.slane %v3130, 5
        %v4254 = vsel %vm1205, %v4252, %v4253
        %v4255 = vrot.slane %v3131, 5
        %v4256 = vrot.slane %v4255, 4
        %v4257 = vrot.slane %v3132, 5
        %v4258 = vsel %vm1205, %v4256, %v4257
        %v4259 = vrot.slane %v4257, 4
        %v4260 = vrot.slane %v3133, 5
        %v4261 = vsel %vm1205, %v4259, %v4260
        %v4262 = vunpack.c.l.b16 %v4153
        %v4263 = vunpack.c.l.b16 %v4156
        %v4264 = vunpack.c.l.b16 %v4160
        %v4265 = vunpack.c.l.b16 %v4163
        %v4266 = vunpack.c.l.b16 %v4167
        %v4267 = vunpack.c.l.b16 %v4170
        %v4268 = vunpack.c.l.b16 %v4174
        %v4269 = vunpack.c.l.b16 %v4177
        %v4270 = vunpack.c.l.b16 %v4181
        %v4271 = vunpack.c.l.b16 %v4184
        %v4272 = vunpack.c.l.b16 %v4188
        %v4273 = vunpack.c.l.b16 %v4191
        %v4274 = vunpack.c.l.b16 %v4195
        %v4275 = vunpack.c.l.b16 %v4198
        %v4276 = vunpack.c.l.b16 %v4202
        %v4277 = vunpack.c.l.b16 %v4205
        %v4278 = vunpack.c.l.b16 %v4209
        %v4279 = vunpack.c.l.b16 %v4212
        %v4280 = vunpack.c.l.b16 %v4216
        %v4281 = vunpack.c.l.b16 %v4219
        %v4282 = vunpack.c.l.b16 %v4223
        %v4283 = vunpack.c.l.b16 %v4226
        %v4284 = vunpack.c.l.b16 %v4230
        %v4285 = vunpack.c.l.b16 %v4233
        %v4286 = vunpack.c.l.b16 %v4237
        %v4287 = vunpack.c.l.b16 %v4240
        %v4288 = vunpack.c.l.b16 %v4244
        %v4289 = vunpack.c.l.b16 %v4247
        %v4290 = vunpack.c.l.b16 %v4251
        %v4291 = vunpack.c.l.b16 %v4254
        %v4292 = vunpack.c.l.b16 %v4258
        %v4293 = vunpack.c.l.b16 %v4261
        %v4294 = vpack.c.b16 %v4263, %v4262
        %v4295 = vpack.c.b16 %v4265, %v4264
        %v4296 = vpack.c.b16 %v4267, %v4266
        %v4297 = vpack.c.b16 %v4269, %v4268
        %v4298 = vpack.c.b16 %v4271, %v4270
        %v4299 = vpack.c.b16 %v4273, %v4272
        %v4300 = vpack.c.b16 %v4275, %v4274
        %v4301 = vpack.c.b16 %v4277, %v4276
        %v4302 = vpack.c.b16 %v4279, %v4278
        %v4303 = vpack.c.b16 %v4281, %v4280
        %v4304 = vpack.c.b16 %v4283, %v4282
        %v4305 = vpack.c.b16 %v4285, %v4284
        %v4306 = vpack.c.b16 %v4287, %v4286
        %v4307 = vpack.c.b16 %v4289, %v4288
        %v4308 = vpack.c.b16 %v4291, %v4290
        %v4309 = vpack.c.b16 %v4293, %v4292
        %v4311 = vsel %vm681, %v4294, 0
        %v4314 = vsel %vm681, %v4295, 0
        %v4317 = vsel %vm681, %v4296, 0
        %v4320 = vsel %vm681, %v4297, 0
        %v4323 = vsel %vm681, %v4298, 0
        %v4326 = vsel %vm681, %v4299, 0
        %v4329 = vsel %vm681, %v4300, 0
        %v4332 = vsel %vm681, %v4301, 0
        %v4335 = vsel %vm681, %v4302, 0
        %v4338 = vsel %vm681, %v4303, 0
        %v4341 = vsel %vm681, %v4304, 0
        %v4344 = vsel %vm681, %v4305, 0
        %v4347 = vsel %vm681, %v4306, 0
        %v4350 = vsel %vm681, %v4307, 0
        %v4353 = vsel %vm681, %v4308, 0
        %v4356 = vsel %vm681, %v4309, 0
        %v4359 = vsel %vm730, %v194, 0
        %4361 = vmatprep.subr.bf16.mxu0 0
        %4362 = vmatpush1.bf16.msra.mxu0 %v4359
        %4363 = vmatprep.subr.bf16.mxu0 0
        %4364 = vmatpush1.bf16.msra.mxu0 0
        %4365 = vmatprep.subr.bf16.mxu0 0
        %4366 = vmatpush1.bf16.msra.mxu0 0
        %4367 = vmatprep.subr.bf16.mxu0 0
        %4368 = vmatpush1.bf16.msra.mxu0 0
        %4369 = vmatprep.subr.bf16.mxu0 0
        %4370 = vmatpush1.bf16.msra.mxu0 0
        %4371 = vmatprep.subr.bf16.mxu0 0
        %4372 = vmatpush1.bf16.msra.mxu0 0
        %4373 = vmatprep.subr.bf16.mxu0 0
        %4374 = vmatpush1.bf16.msra.mxu0 0
        %4375 = vmatprep.subr.bf16.mxu0 0
        %4376 = vmatpush1.bf16.msra.mxu0 0
        %4377 = vmatprep.subr.bf16.mxu0 0
        %4378 = vmatpush1.bf16.msra.mxu0 0
        %4379 = vmatprep.subr.bf16.mxu0 0
        %4380 = vmatpush1.bf16.msra.mxu0 0
        %4381 = vmatprep.subr.bf16.mxu0 0
        %4382 = vmatpush1.bf16.msra.mxu0 0
        %4383 = vmatprep.subr.bf16.mxu0 0
        %4384 = vmatpush1.bf16.msra.mxu0 0
        %4385 = vmatprep.subr.bf16.mxu0 0
        %4386 = vmatpush1.bf16.msra.mxu0 0
        %4387 = vmatprep.subr.bf16.mxu0 0
        %4388 = vmatpush1.bf16.msra.mxu0 0
        %4389 = vmatprep.subr.bf16.mxu0 0
        %4390 = vmatpush1.bf16.msra.mxu0 0
        %4391 = vmatprep.subr.bf16.mxu0 0
        %4392 = vmatpush1.bf16.msra.mxu0 0
        %4393 = vmatprep.mubr.bf16.mxu0 0
        %4394 = vmatmul.mubr.bf16.gmra.mrb[0].mxu0 %v4311
        %v4395 = vpop.f32.mrb[0].mxu0
        %v4396 = vadd.f32 0.0, %v4395
        %v4397 = vpop.f32.mrb[0].mxu0
        %v4398 = vpop.f32.mrb[0].mxu0
        %v4399 = vadd.f32 0.0, %v4398
        %v4400 = vpop.f32.mrb[0].mxu0
        %4401 = vmatprep.mubr.bf16.mxu0 0
        %4402 = vmatmul.mubr.bf16.gmra.mrb[0].mxu0 %v4314
        %v4403 = vpop.f32.mrb[0].mxu0
        %v4404 = vadd.f32 0.0, %v4403
        %v4405 = vpop.f32.mrb[0].mxu0
        %v4406 = vpop.f32.mrb[0].mxu0
        %v4407 = vadd.f32 0.0, %v4406
        %v4408 = vpop.f32.mrb[0].mxu0
        %4409 = vmatprep.mubr.bf16.mxu0 0
        %4410 = vmatmul.mubr.bf16.gmra.mrb[0].mxu0 %v4317
        %v4411 = vpop.f32.mrb[0].mxu0
        %v4412 = vadd.f32 0.0, %v4411
        %v4413 = vpop.f32.mrb[0].mxu0
        %v4414 = vpop.f32.mrb[0].mxu0
        %v4415 = vadd.f32 0.0, %v4414
        %v4416 = vpop.f32.mrb[0].mxu0
        %4417 = vmatprep.mubr.bf16.mxu0 0
        %4418 = vmatmul.mubr.bf16.gmra.mrb[0].mxu0 %v4320
        %v4419 = vpop.f32.mrb[0].mxu0
        %v4420 = vadd.f32 0.0, %v4419
        %v4421 = vpop.f32.mrb[0].mxu0
        %v4422 = vpop.f32.mrb[0].mxu0
        %v4423 = vadd.f32 0.0, %v4422
        %v4424 = vpop.f32.mrb[0].mxu0
        %4425 = vmatprep.mubr.bf16.mxu0 0
        %4426 = vmatmul.mubr.bf16.gmra.mrb[0].mxu0 %v4323
        %v4427 = vpop.f32.mrb[0].mxu0
        %v4428 = vadd.f32 0.0, %v4427
        %v4429 = vpop.f32.mrb[0].mxu0
        %v4430 = vpop.f32.mrb[0].mxu0
        %v4431 = vadd.f32 0.0, %v4430
        %v4432 = vpop.f32.mrb[0].mxu0
        %4433 = vmatprep.mubr.bf16.mxu0 0
        %4434 = vmatmul.mubr.bf16.gmra.mrb[0].mxu0 %v4326
        %v4435 = vpop.f32.mrb[0].mxu0
        %v4436 = vadd.f32 0.0, %v4435
        %v4437 = vpop.f32.mrb[0].mxu0
        %v4438 = vpop.f32.mrb[0].mxu0
        %v4439 = vadd.f32 0.0, %v4438
        %v4440 = vpop.f32.mrb[0].mxu0
        %4441 = vmatprep.mubr.bf16.mxu0 0
        %4442 = vmatmul.mubr.bf16.gmra.mrb[0].mxu0 %v4329
        %v4443 = vpop.f32.mrb[0].mxu0
        %v4444 = vadd.f32 0.0, %v4443
        %v4445 = vpop.f32.mrb[0].mxu0
        %v4446 = vpop.f32.mrb[0].mxu0
        %v4447 = vadd.f32 0.0, %v4446
        %v4448 = vpop.f32.mrb[0].mxu0
        %4449 = vmatprep.mubr.bf16.mxu0 0
        %4450 = vmatmul.mubr.bf16.gmra.mrb[0].mxu0 %v4332
        %v4451 = vpop.f32.mrb[0].mxu0
        %v4452 = vadd.f32 0.0, %v4451
        %v4453 = vpop.f32.mrb[0].mxu0
        %v4454 = vpop.f32.mrb[0].mxu0
        %v4455 = vadd.f32 0.0, %v4454
        %v4456 = vpop.f32.mrb[0].mxu0
        %4457 = vmatprep.mubr.bf16.mxu0 0
        %4458 = vmatmul.mubr.bf16.gmra.mrb[0].mxu0 %v4335
        %v4459 = vpop.f32.mrb[0].mxu0
        %v4460 = vadd.f32 0.0, %v4459
        %v4461 = vpop.f32.mrb[0].mxu0
        %v4462 = vpop.f32.mrb[0].mxu0
        %v4463 = vadd.f32 0.0, %v4462
        %v4464 = vpop.f32.mrb[0].mxu0
        %4465 = vmatprep.mubr.bf16.mxu0 0
        %4466 = vmatmul.mubr.bf16.gmra.mrb[0].mxu0 %v4338
        %v4467 = vpop.f32.mrb[0].mxu0
        %v4468 = vadd.f32 0.0, %v4467
        %v4469 = vpop.f32.mrb[0].mxu0
        %v4470 = vpop.f32.mrb[0].mxu0
        %v4471 = vadd.f32 0.0, %v4470
        %v4472 = vpop.f32.mrb[0].mxu0
        %4473 = vmatprep.mubr.bf16.mxu0 0
        %4474 = vmatmul.mubr.bf16.gmra.mrb[0].mxu0 %v4341
        %v4475 = vpop.f32.mrb[0].mxu0
        %v4476 = vadd.f32 0.0, %v4475
        %v4477 = vpop.f32.mrb[0].mxu0
        %v4478 = vpop.f32.mrb[0].mxu0
        %v4479 = vadd.f32 0.0, %v4478
        %v4480 = vpop.f32.mrb[0].mxu0
        %4481 = vmatprep.mubr.bf16.mxu0 0
        %4482 = vmatmul.mubr.bf16.gmra.mrb[0].mxu0 %v4344
        %v4483 = vpop.f32.mrb[0].mxu0
        %v4484 = vadd.f32 0.0, %v4483
        %v4485 = vpop.f32.mrb[0].mxu0
        %v4486 = vpop.f32.mrb[0].mxu0
        %v4487 = vadd.f32 0.0, %v4486
        %v4488 = vpop.f32.mrb[0].mxu0
        %4489 = vmatprep.mubr.bf16.mxu0 0
        %4490 = vmatmul.mubr.bf16.gmra.mrb[0].mxu0 %v4347
        %v4491 = vpop.f32.mrb[0].mxu0
        %v4492 = vadd.f32 0.0, %v4491
        %v4493 = vpop.f32.mrb[0].mxu0
        %v4494 = vpop.f32.mrb[0].mxu0
        %v4495 = vadd.f32 0.0, %v4494
        %v4496 = vpop.f32.mrb[0].mxu0
        %4497 = vmatprep.mubr.bf16.mxu0 0
        %4498 = vmatmul.mubr.bf16.gmra.mrb[0].mxu0 %v4350
        %v4499 = vpop.f32.mrb[0].mxu0
        %v4500 = vadd.f32 0.0, %v4499
        %v4501 = vpop.f32.mrb[0].mxu0
        %v4502 = vpop.f32.mrb[0].mxu0
        %v4503 = vadd.f32 0.0, %v4502
        %v4504 = vpop.f32.mrb[0].mxu0
        %4505 = vmatprep.mubr.bf16.mxu0 0
        %4506 = vmatmul.mubr.bf16.gmra.mrb[0].mxu0 %v4353
        %v4507 = vpop.f32.mrb[0].mxu0
        %v4508 = vadd.f32 0.0, %v4507
        %v4509 = vpop.f32.mrb[0].mxu0
        %v4510 = vpop.f32.mrb[0].mxu0
        %v4511 = vadd.f32 0.0, %v4510
        %v4512 = vpop.f32.mrb[0].mxu0
        %4513 = vmatprep.mubr.bf16.mxu0 0
        %4514 = vmatmul.mubr.bf16.gmra.mrb[0].mxu0 %v4356
        %v4515 = vpop.f32.mrb[0].mxu0
        %v4516 = vadd.f32 0.0, %v4515
        %v4517 = vpop.f32.mrb[0].mxu0
        %v4518 = vpop.f32.mrb[0].mxu0
        %v4519 = vadd.f32 0.0, %v4518
        %v4520 = vpop.f32.mrb[0].mxu0
        %4521 = vdwg.mxu0
        %v4522 = vadd.f32 %v4102, %v4396
        %v4523 = vadd.f32 %v4103, %v4399
        %v4524 = vadd.f32 %v4104, %v4404
        %v4525 = vadd.f32 %v4105, %v4407
        %v4526 = vadd.f32 %v4106, %v4412
        %v4527 = vadd.f32 %v4107, %v4415
        %v4528 = vadd.f32 %v4108, %v4420
        %v4529 = vadd.f32 %v4109, %v4423
        %v4530 = vadd.f32 %v4110, %v4428
        %v4531 = vadd.f32 %v4111, %v4431
        %v4532 = vadd.f32 %v4112, %v4436
        %v4533 = vadd.f32 %v4113, %v4439
        %v4534 = vadd.f32 %v4114, %v4444
        %v4535 = vadd.f32 %v4115, %v4447
        %v4536 = vadd.f32 %v4116, %v4452
        %v4537 = vadd.f32 %v4117, %v4455
        %v4538 = vadd.f32 %v4118, %v4460
        %v4539 = vadd.f32 %v4119, %v4463
        %v4540 = vadd.f32 %v4120, %v4468
        %v4541 = vadd.f32 %v4121, %v4471
        %v4542 = vadd.f32 %v4122, %v4476
        %v4543 = vadd.f32 %v4123, %v4479
        %v4544 = vadd.f32 %v4124, %v4484
        %v4545 = vadd.f32 %v4125, %v4487
        %v4546 = vadd.f32 %v4126, %v4492
        %v4547 = vadd.f32 %v4127, %v4495
        %v4548 = vadd.f32 %v4128, %v4500
        %v4549 = vadd.f32 %v4129, %v4503
        %v4550 = vadd.f32 %v4130, %v4508
        %v4551 = vadd.f32 %v4131, %v4511
        %v4552 = vadd.f32 %v4132, %v4516
        %v4553 = vadd.f32 %v4133, %v4519
        %v4554 = vld [vmem:[%s2] sm:$0x1]
        %v4556 = vlaneseq
        %v4557 = vshrl.u32 %v4556, 7
        %v4558 = vsub.s32 0, %v4557
        %v4559 = vrot.slane %v4554, %v4558
        %v4561 = vadd.f32 %v4522, %v4559
        %v4562 = vadd.f32 %v4523, %v4559
        %v4563 = vadd.f32 %v4524, %v4559
        %v4564 = vadd.f32 %v4525, %v4559
        %v4565 = vadd.f32 %v4526, %v4559
        %v4566 = vadd.f32 %v4527, %v4559
        %v4567 = vadd.f32 %v4528, %v4559
        %v4568 = vadd.f32 %v4529, %v4559
        %v4569 = vadd.f32 %v4530, %v4559
        %v4570 = vadd.f32 %v4531, %v4559
        %v4571 = vadd.f32 %v4532, %v4559
        %v4572 = vadd.f32 %v4533, %v4559
        %v4573 = vadd.f32 %v4534, %v4559
        %v4574 = vadd.f32 %v4535, %v4559
        %v4575 = vadd.f32 %v4536, %v4559
        %v4576 = vadd.f32 %v4537, %v4559
        %v4577 = vadd.f32 %v4538, %v4559
        %v4578 = vadd.f32 %v4539, %v4559
        %v4579 = vadd.f32 %v4540, %v4559
        %v4580 = vadd.f32 %v4541, %v4559
        %v4581 = vadd.f32 %v4542, %v4559
        %v4582 = vadd.f32 %v4543, %v4559
        %v4583 = vadd.f32 %v4544, %v4559
        %v4584 = vadd.f32 %v4545, %v4559
        %v4585 = vadd.f32 %v4546, %v4559
        %v4586 = vadd.f32 %v4547, %v4559
        %v4587 = vadd.f32 %v4548, %v4559
        %v4588 = vadd.f32 %v4549, %v4559
        %v4589 = vadd.f32 %v4550, %v4559
        %v4590 = vadd.f32 %v4551, %v4559
        %v4591 = vadd.f32 %v4552, %v4559
        %v4592 = vadd.f32 %v4553, %v4559
        %4593 = vxpose.xlu0.b32.start [1/16] %v4561, 128
        %4594 = vxpose.xlu0.b32.cont [2/16] %v4562, 128
        %4595 = vxpose.xlu0.b32.cont [3/16] %v4563, 128
        %4596 = vxpose.xlu0.b32.cont [4/16] %v4564, 128
        %4597 = vxpose.xlu0.b32.cont [5/16] %v4565, 128
        %4598 = vxpose.xlu0.b32.cont [6/16] %v4566, 128
        %4599 = vxpose.xlu0.b32.cont [7/16] %v4567, 128
        %4600 = vxpose.xlu0.b32.cont [8/16] %v4568, 128
        %4601 = vxpose.xlu0.b32.cont [9/16] %v4569, 128
        %4602 = vxpose.xlu0.b32.cont [10/16] %v4570, 128
        %4603 = vxpose.xlu0.b32.cont [11/16] %v4571, 128
        %4604 = vxpose.xlu0.b32.cont [12/16] %v4572, 128
        %4605 = vxpose.xlu0.b32.cont [13/16] %v4573, 128
        %4606 = vxpose.xlu0.b32.cont [14/16] %v4574, 128
        %4607 = vxpose.xlu0.b32.cont [15/16] %v4575, 128
        %4608 = vxpose.xlu0.b32.end [16/16] %v4576, 128
        %v4609 = vpop.trf.xlu0
        %v4610 = vpop.trf.xlu0
        %v4611 = vpop.trf.xlu0
        %v4612 = vpop.trf.xlu0
        %v4613 = vpop.trf.xlu0
        %v4614 = vpop.trf.xlu0
        %v4615 = vpop.trf.xlu0
        %v4616 = vpop.trf.xlu0
        %v4617 = vpop.trf.xlu0
        %v4618 = vpop.trf.xlu0
        %v4619 = vpop.trf.xlu0
        %v4620 = vpop.trf.xlu0
        %v4621 = vpop.trf.xlu0
        %v4622 = vpop.trf.xlu0
        %v4623 = vpop.trf.xlu0
        %v4624 = vpop.trf.xlu0
        %4625 = vxpose.xlu0.b32.start [1/16] %v4577, 128
        %4626 = vxpose.xlu0.b32.cont [2/16] %v4578, 128
        %4627 = vxpose.xlu0.b32.cont [3/16] %v4579, 128
        %4628 = vxpose.xlu0.b32.cont [4/16] %v4580, 128
        %4629 = vxpose.xlu0.b32.cont [5/16] %v4581, 128
        %4630 = vxpose.xlu0.b32.cont [6/16] %v4582, 128
        %4631 = vxpose.xlu0.b32.cont [7/16] %v4583, 128
        %4632 = vxpose.xlu0.b32.cont [8/16] %v4584, 128
        %4633 = vxpose.xlu0.b32.cont [9/16] %v4585, 128
        %4634 = vxpose.xlu0.b32.cont [10/16] %v4586, 128
        %4635 = vxpose.xlu0.b32.cont [11/16] %v4587, 128
        %4636 = vxpose.xlu0.b32.cont [12/16] %v4588, 128
        %4637 = vxpose.xlu0.b32.cont [13/16] %v4589, 128
        %4638 = vxpose.xlu0.b32.cont [14/16] %v4590, 128
        %4639 = vxpose.xlu0.b32.cont [15/16] %v4591, 128
        %4640 = vxpose.xlu0.b32.end [16/16] %v4592, 128
        %v4641 = vpop.trf.xlu0
        %v4642 = vpop.trf.xlu0
        %v4643 = vpop.trf.xlu0
        %v4644 = vpop.trf.xlu0
        %v4645 = vpop.trf.xlu0
        %v4646 = vpop.trf.xlu0
        %v4647 = vpop.trf.xlu0
        %v4648 = vpop.trf.xlu0
        %v4649 = vpop.trf.xlu0
        %v4650 = vpop.trf.xlu0
        %v4651 = vpop.trf.xlu0
        %v4652 = vpop.trf.xlu0
        %v4653 = vpop.trf.xlu0
        %v4654 = vpop.trf.xlu0
        %v4655 = vpop.trf.xlu0
        %v4656 = vpop.trf.xlu0
        %4657 = vst [vmem:[%s177] sm:$0xff] %v4609
        %4658 = vst [vmem:[%s177 + $0x8] sm:$0xff] %v4641
        %s4659 = sand.u32 %s107, 1
        %s4660 = scalar_lea.sflag [#allocation3], %s4659
        %s4661 = sand.u32 %s107, 1
        %s4662 = smul.addr %s4661, 16
        %s4663 = scalar_lea.vmem [#allocation2], %s4662
        // Predicated region
        $region33: #{tpu_custom_call.1} parent=31 // pred_check
          %p4664 = pneg %p117
        $region34: #{tpu_custom_call.1} parent=31 // pred_check_branch
          %4666 = sbr.rel (%p4664) target = $region36
        $region35: #{tpu_custom_call.1} parent=31 // pred_region
          %s4667 = smul.u32 2, %s22
          %s4669 = ssub.s32 256, 256
          %4670 = vsyncadd %s4660, %s4669
          %s4671 = smul.addr %s21, 2
          %s4672 = sadd.s32 %s4667, %s4671
          %s4673 = smul.addr %s4672, 128
          %s4674 = scalar_lea.hbm %s3, %s4673
          %s4676 = sshll.u32 %s4663, 4
          %s4677 = int_to_ptr.vmem [resolvable:$true] %s4676
          %4679 = dma.vmem_to_hbm [thread:$0]  %s4677, 256, %s4674, %s4660
        $region36: #{tpu_custom_call.1} parent=31 // pred_fallthru
          _
      $region32: #{tpu_custom_call.1} parent=5 // pred_fallthru
        _
      %p4680 = scmp.le.s32.totalorder 2, %s12
      // Predicated region
      $region37: #{tpu_custom_call.1} parent=5 // pred_check
        %p4681 = pneg %p4680
      $region38: #{tpu_custom_call.1} parent=5 // pred_check_branch
        %4683 = sbr.rel (%p4681) target = $region40
      $region39: #{tpu_custom_call.1} parent=5 // pred_region
        %s4684 = ssub.s32 %s12, 2
        // Predicated region
        $region41: #{tpu_custom_call.1} parent=39 // pred_check
          %p4685 = pneg %p123
        $region42: #{tpu_custom_call.1} parent=39 // pred_check_branch
          %4687 = sbr.rel (%p4685) target = $region44
        $region43: #{tpu_custom_call.1} parent=39 // pred_region
          %s4688 = sand.u32 %s108, 1
          %s4689 = scalar_lea.sflag [#allocation3], %s4688
          %s4690 = sand.u32 %s108, 1
          %s4691 = smul.addr %s4690, 16
          %s4692 = scalar_lea.vmem [#allocation2], %s4691
          %4693 = dma.done %s4689, 256
        $region44: #{tpu_custom_call.1} parent=39 // pred_fallthru
          _
      $region40: #{tpu_custom_call.1} parent=5 // pred_fallthru
        _
    $region6: #{tpu_custom_call.1} parent=1 // loop_footer
      %s16 = sadd.s32 1, %s12
    $region7: #{tpu_custom_call.1} parent=1 // loop_footer_branch
      %11 = sbr.rel target = $region3
    $region8: #{tpu_custom_call.1} parent=1 // loop_exit
      _
    %4694 = vsyncpa [#allocation3], 1
    %s4695 = scalar_lea.sflag [#allocation3], 1
    %4696 = vsyncpa %s4695, 1

// kernel: tpu_custom_call.1
$region0: #{tpu_custom_call.1}
  #allocation0 [shape = 'u32[]', space=smem, size = 0x4, offset = 0x4, fixed_abs, tag = 'smem constant byte address 0x4 - core index']
  #allocation1 [shape = 'u32[144,128]{1,0:T(1,128)}', space=vmem, size = 0x12000, scoped, tag = 'internal scratch']
  %s0 = inlined_call_operand.vmem [shape: bf16[2,18,18,4], index: 0, kind: input, shape index: {}]
  %s1 = inlined_call_operand.vmem [shape: bf16[3,3,4,8], index: 1, kind: input, shape index: {}]
  %s2 = inlined_call_operand.vmem [shape: f32[1,8], index: 2, kind: input, shape index: {}]
  %s3 = inlined_call_operand.hbm [shape: f32[2,8,256], index: 3, kind: output, shape index: {}]
  %s4 = sld [smem:[#allocation0]]
  $region45: #{tpu_custom_call.1} parent=0
    _
  %s6 = ssub.s32 1, %s4
  %s7 = scalar_select 0, %s6, %s4
  $region1: #{tpu_custom_call.1} parent=0
    #allocation2 [shape = 'u8[16384]{0}', space=vmem, size = 0x4000, scoped, tag = 'output window, operand 0']
    #allocation3 [shape = 's32[2]{0}', space=sflag, size = 0x8, scoped, tag = 'scoped memory for tpu_custom_call.1']
    %8 = vsyncpa [#allocation3], 0
    %s9 = scalar_lea.sflag [#allocation3], 1
    %10 = vsyncpa %s9, 0
    loop: start=0, step=1, limit=4
    $region2: #{tpu_custom_call.1} parent=1 // loop_pre_header
      _
    $region3: #{tpu_custom_call.1} parent=1 // loop_header
      %s12 = sphi 0, %s16
      %p13 = scmp.ge.s32.totalorder %s12, 4
      %s19 = sphi 0, %s31
      %s20 = sphi 0, %s27
      %s21 = sphi 0, %s19
      %s22 = sphi 0, %s20
      %s23 = sphi 0, %s21
      %s24 = sphi 0, %s22
      %s34 = sphi 0, %s36
      %s37 = sphi 0, %s34
      %s38 = sphi 0, %s37
      %s54 = sphi 0, %s38
      %s58 = sphi 0, %s58
      %s60 = sphi 0, %s58
      %s61 = sphi 0, %s60
      %s75 = sphi 0, %s61
      %s79 = sphi 0, %s79
      %s81 = sphi 0, %s79
      %s82 = sphi 0, %s81
      %s96 = sphi 0, %s82
      %s104 = sphi 0, %s106
      %s107 = sphi 0, %s104
      %s108 = sphi 0, %s107
      %s124 = sphi 0, %s108
    $region4: #{tpu_custom_call.1} parent=1 // loop_header_branch
      %15 = sbr.rel (%p13) target = $region8
    $region5: #{tpu_custom_call.1} parent=1 // loop_body
      %s17 = ssub.s32 %s12, 1
      %s18 = ssub.s32 %s12, 2
      %s25 = sadd.s32 1, %s20
      %p26 = scmp.ge.s32.totalorder %s25, 1
      %s27 = scalar_select %p26, 0, %s25
      %s28 = sadd.s32 1, %s19
      %s29 = scalar_select %p26, %s28, %s19
      %p30 = scmp.ge.s32.totalorder %s29, 2
      %s31 = scalar_select %p30, 0, %s29
      %s32 = ssub.s32 %s19, %s31
      %p33 = scmp.eq.s32.totalorder %s32, 0
      %s35 = sadd.s32 %s34, 1
      %s36 = scalar_select %p33, %s34, %s35
      %p39 = pneg %p33
      %p40 = scmp.eq.s32.totalorder %s12, 1
      %p41 = por %p39, %p40
      %p42 = scmp.ne.s32.totalorder %s34, %s37
      %p43 = scmp.eq.s32.totalorder %s12, 0
      %p44 = por %p42, %p43
      %p45 = scmp.ne.s32.totalorder %s34, %s37
      %p46 = scmp.eq.s32.totalorder %s17, 1
      %p47 = por %p45, %p46
      %p48 = scmp.ne.s32.totalorder %s37, %s38
      %p49 = scmp.eq.s32.totalorder %s17, 0
      %p50 = por %p48, %p49
      %p51 = scmp.ne.s32.totalorder %s37, %s38
      %p52 = scmp.eq.s32.totalorder %s18, 1
      %p53 = por %p51, %p52
      %p55 = scmp.ne.s32.totalorder %s38, %s54
      %p56 = scmp.eq.s32.totalorder %s18, 0
      %p57 = por %p55, %p56
      %s59 = sadd.s32 %s58, 1
      %p62 = scmp.eq.s32.totalorder %s12, 1
      %p63 = scmp.ne.s32.totalorder %s58, %s60
      %p64 = scmp.eq.s32.totalorder %s12, 0
      %p65 = por %p63, %p64
      %p66 = scmp.ne.s32.totalorder %s58, %s60
      %p67 = scmp.eq.s32.totalorder %s17, 1
      %p68 = por %p66, %p67
      %p69 = scmp.ne.s32.totalorder %s60, %s61
      %p70 = scmp.eq.s32.totalorder %s17, 0
      %p71 = por %p69, %p70
      %p72 = scmp.ne.s32.totalorder %s60, %s61
      %p73 = scmp.eq.s32.totalorder %s18, 1
      %p74 = por %p72, %p73
      %p76 = scmp.ne.s32.totalorder %s61, %s75
      %p77 = scmp.eq.s32.totalorder %s18, 0
      %p78 = por %p76, %p77
      %s80 = sadd.s32 %s79, 1
      %p83 = scmp.eq.s32.totalorder %s12, 1
      %p84 = scmp.ne.s32.totalorder %s79, %s81
      %p85 = scmp.eq.s32.totalorder %s12, 0
      %p86 = por %p84, %p85
      %p87 = scmp.ne.s32.totalorder %s79, %s81
      %p88 = scmp.eq.s32.totalorder %s17, 1
      %p89 = por %p87, %p88
      %p90 = scmp.ne.s32.totalorder %s81, %s82
      %p91 = scmp.eq.s32.totalorder %s17, 0
      %p92 = por %p90, %p91
      %p93 = scmp.ne.s32.totalorder %s81, %s82
      %p94 = scmp.eq.s32.totalorder %s18, 1
      %p95 = por %p93, %p94
      %p97 = scmp.ne.s32.totalorder %s82, %s96
      %p98 = scmp.eq.s32.totalorder %s18, 0
      %p99 = por %p97, %p98
      %s100 = ssub.s32 %s19, %s31
      %s101 = ssub.s32 %s20, %s27
      %s102 = sor.u32 %s100, %s101
      %p103 = scmp.eq.s32.totalorder %s102, 0
      %s105 = sadd.s32 %s104, 1
      %s106 = scalar_select %p103, %s104, %s105
      %p109 = pneg %p103
      %p110 = scmp.eq.s32.totalorder %s12, 1
      %p111 = por %p109, %p110
      %p112 = scmp.ne.s32.totalorder %s104, %s107
      %p113 = scmp.eq.s32.totalorder %s12, 0
      %p114 = por %p112, %p113
      %p115 = scmp.ne.s32.totalorder %s104, %s107
      %p116 = scmp.eq.s32.totalorder %s17, 1
      %p117 = por %p115, %p116
      %p118 = scmp.ne.s32.totalorder %s107, %s108
      %p119 = scmp.eq.s32.totalorder %s17, 0
      %p120 = por %p118, %p119
      %p121 = scmp.ne.s32.totalorder %s107, %s108
      %p122 = scmp.eq.s32.totalorder %s18, 1
      %p123 = por %p121, %p122
      %p125 = scmp.ne.s32.totalorder %s108, %s124
      %p126 = scmp.eq.s32.totalorder %s18, 0
      %p127 = por %p125, %p126
      %p128 = scmp.le.s32.totalorder 1, %s12
      %p129 = scmp.lt.s32.totalorder %s12, 3
      %p130 = pnand %p128, %p129
      %p131 = pneg %p130
      // Predicated region
      $region9: #{tpu_custom_call.1} parent=5 // pred_check
        _
      $region10: #{tpu_custom_call.1} parent=5 // pred_check_branch
        %133 = sbr.rel (%p130) target = $region12
      $region11: #{tpu_custom_call.1} parent=5 // pred_region
        %s134 = ssub.s32 %s12, 1
        // Predicated region
        $region13: #{tpu_custom_call.1} parent=11 // pred_check
          %p135 = pneg %p71
        $region14: #{tpu_custom_call.1} parent=11 // pred_check_branch
          %137 = sbr.rel (%p135) target = $region16
        $region15: #{tpu_custom_call.1} parent=11 // pred_region
          _
        $region16: #{tpu_custom_call.1} parent=11 // pred_fallthru
          _
        // Predicated region
        $region17: #{tpu_custom_call.1} parent=11 // pred_check
          %p138 = pneg %p92
        $region18: #{tpu_custom_call.1} parent=11 // pred_check_branch
          %140 = sbr.rel (%p138) target = $region20
        $region19: #{tpu_custom_call.1} parent=11 // pred_region
          _
        $region20: #{tpu_custom_call.1} parent=11 // pred_fallthru
          _
      $region12: #{tpu_custom_call.1} parent=5 // pred_fallthru
        _
      %p141 = scmp.lt.s32.totalorder %s12, 2
      // Predicated region
      $region21: #{tpu_custom_call.1} parent=5 // pred_check
        %p142 = pneg %p141
      $region22: #{tpu_custom_call.1} parent=5 // pred_check_branch
        %144 = sbr.rel (%p142) target = $region24
      $region23: #{tpu_custom_call.1} parent=5 // pred_region
        // Predicated region
        $region25: #{tpu_custom_call.1} parent=23 // pred_check
          %p145 = pneg %p44
        $region26: #{tpu_custom_call.1} parent=23 // pred_check_branch
          %147 = sbr.rel (%p145) target = $region28
        $region27: #{tpu_custom_call.1} parent=23 // pred_region
          %p148 = scmp.lt.s32.totalorder %s19, 1
          %s149 = scalar_select %p148, %s19, 1
          %s150 = smul.addr %s149, 54
          %s151 = smul.addr %s150, 4
          %s152 = scalar_lea.vmem %s0, %s151
        $region28: #{tpu_custom_call.1} parent=23 // pred_fallthru
          _
      $region24: #{tpu_custom_call.1} parent=5 // pred_fallthru
        _
      %p153 = scmp.le.s32.totalorder 1, %s12
      %p154 = scmp.lt.s32.totalorder %s12, 3
      %p155 = pnand %p153, %p154
      %p156 = pneg %p155
      // Predicated region
      $region29: #{tpu_custom_call.1} parent=5 // pred_check
        _
      $region30: #{tpu_custom_call.1} parent=5 // pred_check_branch
        %158 = sbr.rel (%p155) target = $region32
      $region31: #{tpu_custom_call.1} parent=5 // pred_region
        %s159 = ssub.s32 %s12, 1
        %p160 = scmp.lt.s32.totalorder %s21, 1
        %s161 = scalar_select %p160, %s21, 1
        %s162 = smul.addr %s161, 54
        %s163 = smul.addr %s162, 4
        %s164 = scalar_lea.vmem %s0, %s163
        %p165 = pneg %p50
        %p166 = pneg %p47
        %p167 = pneg %p71
        %p168 = pneg %p68
        %p169 = pneg %p92
        %p170 = pneg %p89
        %p171 = pneg %p120
        %p172 = pneg %p117
        %s173 = sand.u32 %s107, 1
        %s174 = scalar_lea.sflag [#allocation3], %s173
        %s175 = sand.u32 %s107, 1
        %s176 = smul.addr %s175, 16
        %s177 = scalar_lea.vmem [#allocation2], %s176
        %p178 = scmp.lt.s32.totalorder %s21, 1
        %s179 = scalar_select %p178, %s21, 1
        %s180 = smul.addr %s179, 54
        %s181 = smul.addr %s180, 4
        %s182 = scalar_lea.vmem %s0, %s181
        %s183 = smul.u32 2, %s22
        %s185 = smul.u32 %s22, 16
        %v186 = vld [vmem:[%s1] sm:$0x3]
        %v187 = vld [vmem:[%s1 + $0x2] sm:$0x3]
        %v188 = vld [vmem:[%s1 + $0x4] sm:$0x3]
        %v189 = vld [vmem:[%s1 + $0x6] sm:$0x3]
        %v190 = vld [vmem:[%s1 + $0x8] sm:$0x3]
        %v191 = vld [vmem:[%s1 + $0xa] sm:$0x3]
        %v192 = vld [vmem:[%s1 + $0xc] sm:$0x3]
        %v193 = vld [vmem:[%s1 + $0xe] sm:$0x3]
        %v194 = vld [vmem:[%s1 + $0x10] sm:$0x3]
        %s195 = smul.u32 %s185, 3
        %s196 = smul.addr %s195, 4
        %s197 = scalar_lea.vmem %s182, %s196
        %v198 = vld [vmem:[%s197] sm:$0xf]
        %v199 = vld [vmem:[%s197 + $0x4] sm:$0xf]
        %v200 = vld [vmem:[%s197 + $0x8] sm:$0x1]
        %v201 = vld [vmem:[%s197 + $0xc] sm:$0xf]
        %v202 = vld [vmem:[%s197 + $0x10] sm:$0xf]
        %v203 = vld [vmem:[%s197 + $0x14] sm:$0x1]
        %v204 = vld [vmem:[%s197 + $0x18] sm:$0xf]
        %v205 = vld [vmem:[%s197 + $0x1c] sm:$0xf]
        %v206 = vld [vmem:[%s197 + $0x20] sm:$0x1]
        %v207 = vld [vmem:[%s197 + $0x24] sm:$0xf]
        %v208 = vld [vmem:[%s197 + $0x28] sm:$0xf]
        %v209 = vld [vmem:[%s197 + $0x2c] sm:$0x1]
        %v210 = vld [vmem:[%s197 + $0x30] sm:$0xf]
        %v211 = vld [vmem:[%s197 + $0x34] sm:$0xf]
        %v212 = vld [vmem:[%s197 + $0x38] sm:$0x1]
        %v213 = vld [vmem:[%s197 + $0x3c] sm:$0xf]
        %v214 = vld [vmem:[%s197 + $0x40] sm:$0xf]
        %v215 = vld [vmem:[%s197 + $0x44] sm:$0x1]
        %v216 = vld [vmem:[%s197 + $0x48] sm:$0xf]
        %v217 = vld [vmem:[%s197 + $0x4c] sm:$0xf]
        %v218 = vld [vmem:[%s197 + $0x50] sm:$0x1]
        %v219 = vld [vmem:[%s197 + $0x54] sm:$0xf]
        %v220 = vld [vmem:[%s197 + $0x58] sm:$0xf]
        %v221 = vld [vmem:[%s197 + $0x5c] sm:$0x1]
        %v222 = vld [vmem:[%s197 + $0x60] sm:$0xf]
        %v223 = vld [vmem:[%s197 + $0x64] sm:$0xf]
        %v224 = vld [vmem:[%s197 + $0x68] sm:$0x1]
        %v225 = vld [vmem:[%s197 + $0x6c] sm:$0xf]
        %v226 = vld [vmem:[%s197 + $0x70] sm:$0xf]
        %v227 = vld [vmem:[%s197 + $0x74] sm:$0x1]
        %v228 = vld [vmem:[%s197 + $0x78] sm:$0xf]
        %v229 = vld [vmem:[%s197 + $0x7c] sm:$0xf]
        %v230 = vld [vmem:[%s197 + $0x80] sm:$0x1]
        %v231 = vld [vmem:[%s197 + $0x84] sm:$0xf]
        %v232 = vld [vmem:[%s197 + $0x88] sm:$0xf]
        %v233 = vld [vmem:[%s197 + $0x8c] sm:$0x1]
        %v234 = vld [vmem:[%s197 + $0x90] sm:$0xf]
        %v235 = vld [vmem:[%s197 + $0x94] sm:$0xf]
        %v236 = vld [vmem:[%s197 + $0x98] sm:$0x1]
        %v237 = vld [vmem:[%s197 + $0x9c] sm:$0xf]
        %v238 = vld [vmem:[%s197 + $0xa0] sm:$0xf]
        %v239 = vld [vmem:[%s197 + $0xa4] sm:$0x1]
        %v240 = vld [vmem:[%s197 + $0xa8] sm:$0xf]
        %v241 = vld [vmem:[%s197 + $0xac] sm:$0xf]
        %v242 = vld [vmem:[%s197 + $0xb0] sm:$0x1]
        %v243 = vld [vmem:[%s197 + $0xb4] sm:$0xf]
        %v244 = vld [vmem:[%s197 + $0xb8] sm:$0xf]
        %v245 = vld [vmem:[%s197 + $0xbc] sm:$0x1]
        %vm246 = vsmask.f32 3328
        %vm247 = vsmask.f32 7440
        %vm248 = vmor %vm246, %vm247
        %v250 = vshrl.u32 %v198, 16
        %v252 = vrot.slane %v250, 4
        %v253 = vshll.u32 %v198, 16
        %v255 = vrot.slane %v253, 5
        %v256 = vor.u32 %v252, %v255
        %v257 = vrot.slane %v256, 4
        %v259 = vshll.u32 %v199, 16
        %v261 = vrot.slane %v259, 5
        %v262 = vsel %vm248, %v257, %v261
        %v263 = vshrl.u32 %v199, 16
        %v265 = vrot.slane %v263, 4
        %v266 = vor.u32 %v265, %v261
        %v267 = vrot.slane %v266, 4
        %v269 = vshll.u32 %v200, 16
        %v271 = vrot.slane %v269, 5
        %v272 = vsel %vm248, %v267, %v271
        %v274 = vshrl.u32 %v201, 16
        %v276 = vrot.slane %v274, 4
        %v277 = vshll.u32 %v201, 16
        %v279 = vrot.slane %v277, 5
        %v280 = vor.u32 %v276, %v279
        %v281 = vrot.slane %v280, 4
        %v283 = vshll.u32 %v202, 16
        %v285 = vrot.slane %v283, 5
        %v286 = vsel %vm248, %v281, %v285
        %v287 = vshrl.u32 %v202, 16
        %v289 = vrot.slane %v287, 4
        %v290 = vor.u32 %v289, %v285
        %v291 = vrot.slane %v290, 4
        %v293 = vshll.u32 %v203, 16
        %v295 = vrot.slane %v293, 5
        %v296 = vsel %vm248, %v291, %v295
        %v298 = vshrl.u32 %v204, 16
        %v300 = vrot.slane %v298, 4
        %v301 = vshll.u32 %v204, 16
        %v303 = vrot.slane %v301, 5
        %v304 = vor.u32 %v300, %v303
        %v305 = vrot.slane %v304, 4
        %v307 = vshll.u32 %v205, 16
        %v309 = vrot.slane %v307, 5
        %v310 = vsel %vm248, %v305, %v309
        %v311 = vshrl.u32 %v205, 16
        %v313 = vrot.slane %v311, 4
        %v314 = vor.u32 %v313, %v309
        %v315 = vrot.slane %v314, 4
        %v317 = vshll.u32 %v206, 16
        %v319 = vrot.slane %v317, 5
        %v320 = vsel %vm248, %v315, %v319
        %v322 = vshrl.u32 %v207, 16
        %v324 = vrot.slane %v322, 4
        %v325 = vshll.u32 %v207, 16
        %v327 = vrot.slane %v325, 5
        %v328 = vor.u32 %v324, %v327
        %v329 = vrot.slane %v328, 4
        %v331 = vshll.u32 %v208, 16
        %v333 = vrot.slane %v331, 5
        %v334 = vsel %vm248, %v329, %v333
        %v335 = vshrl.u32 %v208, 16
        %v337 = vrot.slane %v335, 4
        %v338 = vor.u32 %v337, %v333
        %v339 = vrot.slane %v338, 4
        %v341 = vshll.u32 %v209, 16
        %v343 = vrot.slane %v341, 5
        %v344 = vsel %vm248, %v339, %v343
        %v346 = vshrl.u32 %v210, 16
        %v348 = vrot.slane %v346, 4
        %v349 = vshll.u32 %v210, 16
        %v351 = vrot.slane %v349, 5
        %v352 = vor.u32 %v348, %v351
        %v353 = vrot.slane %v352, 4
        %v355 = vshll.u32 %v211, 16
        %v357 = vrot.slane %v355, 5
        %v358 = vsel %vm248, %v353, %v357
        %v359 = vshrl.u32 %v211, 16
        %v361 = vrot.slane %v359, 4
        %v362 = vor.u32 %v361, %v357
        %v363 = vrot.slane %v362, 4
        %v365 = vshll.u32 %v212, 16
        %v367 = vrot.slane %v365, 5
        %v368 = vsel %vm248, %v363, %v367
        %v370 = vshrl.u32 %v213, 16
        %v372 = vrot.slane %v370, 4
        %v373 = vshll.u32 %v213, 16
        %v375 = vrot.slane %v373, 5
        %v376 = vor.u32 %v372, %v375
        %v377 = vrot.slane %v376, 4
        %v379 = vshll.u32 %v214, 16
        %v381 = vrot.slane %v379, 5
        %v382 = vsel %vm248, %v377, %v381
        %v383 = vshrl.u32 %v214, 16
        %v385 = vrot.slane %v383, 4
        %v386 = vor.u32 %v385, %v381
        %v387 = vrot.slane %v386, 4
        %v389 = vshll.u32 %v215, 16
        %v391 = vrot.slane %v389, 5
        %v392 = vsel %vm248, %v387, %v391
        %v394 = vshrl.u32 %v216, 16
        %v396 = vrot.slane %v394, 4
        %v397 = vshll.u32 %v216, 16
        %v399 = vrot.slane %v397, 5
        %v400 = vor.u32 %v396, %v399
        %v401 = vrot.slane %v400, 4
        %v403 = vshll.u32 %v217, 16
        %v405 = vrot.slane %v403, 5
        %v406 = vsel %vm248, %v401, %v405
        %v407 = vshrl.u32 %v217, 16
        %v409 = vrot.slane %v407, 4
        %v410 = vor.u32 %v409, %v405
        %v411 = vrot.slane %v410, 4
        %v413 = vshll.u32 %v218, 16
        %v415 = vrot.slane %v413, 5
        %v416 = vsel %vm248, %v411, %v415
        %v418 = vshrl.u32 %v219, 16
        %v420 = vrot.slane %v418, 4
        %v421 = vshll.u32 %v219, 16
        %v423 = vrot.slane %v421, 5
        %v424 = vor.u32 %v420, %v423
        %v425 = vrot.slane %v424, 4
        %v427 = vshll.u32 %v220, 16
        %v429 = vrot.slane %v427, 5
        %v430 = vsel %vm248, %v425, %v429
        %v431 = vshrl.u32 %v220, 16
        %v433 = vrot.slane %v431, 4
        %v434 = vor.u32 %v433, %v429
        %v435 = vrot.slane %v434, 4
        %v437 = vshll.u32 %v221, 16
        %v439 = vrot.slane %v437, 5
        %v440 = vsel %vm248, %v435, %v439
        %v442 = vshrl.u32 %v222, 16
        %v444 = vrot.slane %v442, 4
        %v445 = vshll.u32 %v222, 16
        %v447 = vrot.slane %v445, 5
        %v448 = vor.u32 %v444, %v447
        %v449 = vrot.slane %v448, 4
        %v451 = vshll.u32 %v223, 16
        %v453 = vrot.slane %v451, 5
        %v454 = vsel %vm248, %v449, %v453
        %v455 = vshrl.u32 %v223, 16
        %v457 = vrot.slane %v455, 4
        %v458 = vor.u32 %v457, %v453
        %v459 = vrot.slane %v458, 4
        %v461 = vshll.u32 %v224, 16
        %v463 = vrot.slane %v461, 5
        %v464 = vsel %vm248, %v459, %v463
        %v466 = vshrl.u32 %v225, 16
        %v468 = vrot.slane %v466, 4
        %v469 = vshll.u32 %v225, 16
        %v471 = vrot.slane %v469, 5
        %v472 = vor.u32 %v468, %v471
        %v473 = vrot.slane %v472, 4
        %v475 = vshll.u32 %v226, 16
        %v477 = vrot.slane %v475, 5
        %v478 = vsel %vm248, %v473, %v477
        %v479 = vshrl.u32 %v226, 16
        %v481 = vrot.slane %v479, 4
        %v482 = vor.u32 %v481, %v477
        %v483 = vrot.slane %v482, 4
        %v485 = vshll.u32 %v227, 16
        %v487 = vrot.slane %v485, 5
        %v488 = vsel %vm248, %v483, %v487
        %v490 = vshrl.u32 %v228, 16
        %v492 = vrot.slane %v490, 4
        %v493 = vshll.u32 %v228, 16
        %v495 = vrot.slane %v493, 5
        %v496 = vor.u32 %v492, %v495
        %v497 = vrot.slane %v496, 4
        %v499 = vshll.u32 %v229, 16
        %v501 = vrot.slane %v499, 5
        %v502 = vsel %vm248, %v497, %v501
        %v503 = vshrl.u32 %v229, 16
        %v505 = vrot.slane %v503, 4
        %v506 = vor.u32 %v505, %v501
        %v507 = vrot.slane %v506, 4
        %v509 = vshll.u32 %v230, 16
        %v511 = vrot.slane %v509, 5
        %v512 = vsel %vm248, %v507, %v511
        %v514 = vshrl.u32 %v231, 16
        %v516 = vrot.slane %v514, 4
        %v517 = vshll.u32 %v231, 16
        %v519 = vrot.slane %v517, 5
        %v520 = vor.u32 %v516, %v519
        %v521 = vrot.slane %v520, 4
        %v523 = vshll.u32 %v232, 16
        %v525 = vrot.slane %v523, 5
        %v526 = vsel %vm248, %v521, %v525
        %v527 = vshrl.u32 %v232, 16
        %v529 = vrot.slane %v527, 4
        %v530 = vor.u32 %v529, %v525
        %v531 = vrot.slane %v530, 4
        %v533 = vshll.u32 %v233, 16
        %v535 = vrot.slane %v533, 5
        %v536 = vsel %vm248, %v531, %v535
        %v538 = vshrl.u32 %v234, 16
        %v540 = vrot.slane %v538, 4
        %v541 = vshll.u32 %v234, 16
        %v543 = vrot.slane %v541, 5
        %v544 = vor.u32 %v540, %v543
        %v545 = vrot.slane %v544, 4
        %v547 = vshll.u32 %v235, 16
        %v549 = vrot.slane %v547, 5
        %v550 = vsel %vm248, %v545, %v549
        %v551 = vshrl.u32 %v235, 16
        %v553 = vrot.slane %v551, 4
        %v554 = vor.u32 %v553, %v549
        %v555 = vrot.slane %v554, 4
        %v557 = vshll.u32 %v236, 16
        %v559 = vrot.slane %v557, 5
        %v560 = vsel %vm248, %v555, %v559
        %v562 = vshrl.u32 %v237, 16
        %v564 = vrot.slane %v562, 4
        %v565 = vshll.u32 %v237, 16
        %v567 = vrot.slane %v565, 5
        %v568 = vor.u32 %v564, %v567
        %v569 = vrot.slane %v568, 4
        %v571 = vshll.u32 %v238, 16
        %v573 = vrot.slane %v571, 5
        %v574 = vsel %vm248, %v569, %v573
        %v575 = vshrl.u32 %v238, 16
        %v577 = vrot.slane %v575, 4
        %v578 = vor.u32 %v577, %v573
        %v579 = vrot.slane %v578, 4
        %v581 = vshll.u32 %v239, 16
        %v583 = vrot.slane %v581, 5
        %v584 = vsel %vm248, %v579, %v583
        %v586 = vshrl.u32 %v240, 16
        %v588 = vrot.slane %v586, 4
        %v589 = vshll.u32 %v240, 16
        %v591 = vrot.slane %v589, 5
        %v592 = vor.u32 %v588, %v591
        %v593 = vrot.slane %v592, 4
        %v595 = vshll.u32 %v241, 16
        %v597 = vrot.slane %v595, 5
        %v598 = vsel %vm248, %v593, %v597
        %v599 = vshrl.u32 %v241, 16
        %v601 = vrot.slane %v599, 4
        %v602 = vor.u32 %v601, %v597
        %v603 = vrot.slane %v602, 4
        %v605 = vshll.u32 %v242, 16
        %v607 = vrot.slane %v605, 5
        %v608 = vsel %vm248, %v603, %v607
        %v610 = vshrl.u32 %v243, 16
        %v612 = vrot.slane %v610, 4
        %v613 = vshll.u32 %v243, 16
        %v615 = vrot.slane %v613, 5
        %v616 = vor.u32 %v612, %v615
        %v617 = vrot.slane %v616, 4
        %v619 = vshll.u32 %v244, 16
        %v621 = vrot.slane %v619, 5
        %v622 = vsel %vm248, %v617, %v621
        %v623 = vshrl.u32 %v244, 16
        %v625 = vrot.slane %v623, 4
        %v626 = vor.u32 %v625, %v621
        %v627 = vrot.slane %v626, 4
        %v629 = vshll.u32 %v245, 16
        %v631 = vrot.slane %v629, 5
        %v632 = vsel %vm248, %v627, %v631
        %v633 = vunpack.c.l.b16 %v262
        %v634 = vunpack.c.l.b16 %v272
        %v635 = vunpack.c.l.b16 %v286
        %v636 = vunpack.c.l.b16 %v296
        %v637 = vunpack.c.l.b16 %v310
        %v638 = vunpack.c.l.b16 %v320
        %v639 = vunpack.c.l.b16 %v334
        %v640 = vunpack.c.l.b16 %v344
        %v641 = vunpack.c.l.b16 %v358
        %v642 = vunpack.c.l.b16 %v368
        %v643 = vunpack.c.l.b16 %v382
        %v644 = vunpack.c.l.b16 %v392
        %v645 = vunpack.c.l.b16 %v406
        %v646 = vunpack.c.l.b16 %v416
        %v647 = vunpack.c.l.b16 %v430
        %v648 = vunpack.c.l.b16 %v440
        %v649 = vunpack.c.l.b16 %v454
        %v650 = vunpack.c.l.b16 %v464
        %v651 = vunpack.c.l.b16 %v478
        %v652 = vunpack.c.l.b16 %v488
        %v653 = vunpack.c.l.b16 %v502
        %v654 = vunpack.c.l.b16 %v512
        %v655 = vunpack.c.l.b16 %v526
        %v656 = vunpack.c.l.b16 %v536
        %v657 = vunpack.c.l.b16 %v550
        %v658 = vunpack.c.l.b16 %v560
        %v659 = vunpack.c.l.b16 %v574
        %v660 = vunpack.c.l.b16 %v584
        %v661 = vunpack.c.l.b16 %v598
        %v662 = vunpack.c.l.b16 %v608
        %v663 = vunpack.c.l.b16 %v622
        %v664 = vunpack.c.l.b16 %v632
        %v665 = vpack.c.b16 %v634, %v633
        %v666 = vpack.c.b16 %v636, %v635
        %v667 = vpack.c.b16 %v638, %v637
        %v668 = vpack.c.b16 %v640, %v639
        %v669 = vpack.c.b16 %v642, %v641
        %v670 = vpack.c.b16 %v644, %v643
        %v671 = vpack.c.b16 %v646, %v645
        %v672 = vpack.c.b16 %v648, %v647
        %v673 = vpack.c.b16 %v650, %v649
        %v674 = vpack.c.b16 %v652, %v651
        %v675 = vpack.c.b16 %v654, %v653
        %v676 = vpack.c.b16 %v656, %v655
        %v677 = vpack.c.b16 %v658, %v657
        %v678 = vpack.c.b16 %v660, %v659
        %v679 = vpack.c.b16 %v662, %v661
        %v680 = vpack.c.b16 %v664, %v663
        %vm681 = vcmask 31744
        %v683 = vsel %vm681, %v665, 0
        %v686 = vsel %vm681, %v666, 0
        %v689 = vsel %vm681, %v667, 0
        %v692 = vsel %vm681, %v668, 0
        %v695 = vsel %vm681, %v669, 0
        %v698 = vsel %vm681, %v670, 0
        %v701 = vsel %vm681, %v671, 0
        %v704 = vsel %vm681, %v672, 0
        %v707 = vsel %vm681, %v673, 0
        %v710 = vsel %vm681, %v674, 0
        %v713 = vsel %vm681, %v675, 0
        %v716 = vsel %vm681, %v676, 0
        %v719 = vsel %vm681, %v677, 0
        %v722 = vsel %vm681, %v678, 0
        %v725 = vsel %vm681, %v679, 0
        %v728 = vsel %vm681, %v680, 0
        %vm730 = vcmask 1041408
        %v732 = vsel %vm730, %v187, 0
        %734 = vmatprep.subr.bf16.mxu0 0
        %735 = vmatpush1.bf16.msra.mxu0 %v732
        %736 = vmatprep.subr.bf16.mxu0 0
        %737 = vmatpush1.bf16.msra.mxu0 0
        %738 = vmatprep.subr.bf16.mxu0 0
        %739 = vmatpush1.bf16.msra.mxu0 0
        %740 = vmatprep.subr.bf16.mxu0 0
        %741 = vmatpush1.bf16.msra.mxu0 0
        %742 = vmatprep.subr.bf16.mxu0 0
        %743 = vmatpush1.bf16.msra.mxu0 0
        %744 = vmatprep.subr.bf16.mxu0 0
        %745 = vmatpush1.bf16.msra.mxu0 0
        %746 = vmatprep.subr.bf16.mxu0 0
        %747 = vmatpush1.bf16.msra.mxu0 0
        %748 = vmatprep.subr.bf16.mxu0 0
        %749 = vmatpush1.bf16.msra.mxu0 0
        %750 = vmatprep.subr.bf16.mxu0 0
        %751 = vmatpush1.bf16.msra.mxu0 0
        %752 = vmatprep.subr.bf16.mxu0 0
        %753 = vmatpush1.bf16.msra.mxu0 0
        %754 = vmatprep.subr.bf16.mxu0 0
        %755 = vmatpush1.bf16.msra.mxu0 0
        %756 = vmatprep.subr.bf16.mxu0 0
        %757 = vmatpush1.bf16.msra.mxu0 0
        %758 = vmatprep.subr.bf16.mxu0 0
        %759 = vmatpush1.bf16.msra.mxu0 0
        %760 = vmatprep.subr.bf16.mxu0 0
        %761 = vmatpush1.bf16.msra.mxu0 0
        %762 = vmatprep.subr.bf16.mxu0 0
        %763 = vmatpush1.bf16.msra.mxu0 0
        %764 = vmatprep.subr.bf16.mxu0 0
        %765 = vmatpush1.bf16.msra.mxu0 0
        %766 = vmatprep.mubr.bf16.mxu0 0
        %767 = vmatmul.mubr.bf16.gmra.mrb[0].mxu0 %v683
        %v768 = vpop.f32.mrb[0].mxu0
        %v769 = vadd.f32 0.0, %v768
        %v770 = vpop.f32.mrb[0].mxu0
        %v771 = vpop.f32.mrb[0].mxu0
        %v772 = vadd.f32 0.0, %v771
        %v773 = vpop.f32.mrb[0].mxu0
        %774 = vmatprep.mubr.bf16.mxu0 0
        %775 = vmatmul.mubr.bf16.gmra.mrb[0].mxu0 %v686
        %v776 = vpop.f32.mrb[0].mxu0
        %v777 = vadd.f32 0.0, %v776
        %v778 = vpop.f32.mrb[0].mxu0
        %v779 = vpop.f32.mrb[0].mxu0
        %v780 = vadd.f32 0.0, %v779
        %v781 = vpop.f32.mrb[0].mxu0
        %782 = vmatprep.mubr.bf16.mxu0 0
        %783 = vmatmul.mubr.bf16.gmra.mrb[0].mxu0 %v689
        %v784 = vpop.f32.mrb[0].mxu0
        %v785 = vadd.f32 0.0, %v784
        %v786 = vpop.f32.mrb[0].mxu0
        %v787 = vpop.f32.mrb[0].mxu0
        %v788 = vadd.f32 0.0, %v787
        %v789 = vpop.f32.mrb[0].mxu0
        %790 = vmatprep.mubr.bf16.mxu0 0
        %791 = vmatmul.mubr.bf16.gmra.mrb[0].mxu0 %v692
        %v792 = vpop.f32.mrb[0].mxu0
        %v793 = vadd.f32 0.0, %v792
        %v794 = vpop.f32.mrb[0].mxu0
        %v795 = vpop.f32.mrb[0].mxu0
        %v796 = vadd.f32 0.0, %v795
        %v797 = vpop.f32.mrb[0].mxu0
        %798 = vmatprep.mubr.bf16.mxu0 0
        %799 = vmatmul.mubr.bf16.gmra.mrb[0].mxu0 %v695
        %v800 = vpop.f32.mrb[0].mxu0
        %v801 = vadd.f32 0.0, %v800
        %v802 = vpop.f32.mrb[0].mxu0
        %v803 = vpop.f32.mrb[0].mxu0
        %v804 = vadd.f32 0.0, %v803
        %v805 = vpop.f32.mrb[0].mxu0
        %806 = vmatprep.mubr.bf16.mxu0 0
        %807 = vmatmul.mubr.bf16.gmra.mrb[0].mxu0 %v698
        %v808 = vpop.f32.mrb[0].mxu0
        %v809 = vadd.f32 0.0, %v808
        %v810 = vpop.f32.mrb[0].mxu0
        %v811 = vpop.f32.mrb[0].mxu0
        %v812 = vadd.f32 0.0, %v811
        %v813 = vpop.f32.mrb[0].mxu0
        %814 = vmatprep.mubr.bf16.mxu0 0
        %815 = vmatmul.mubr.bf16.gmra.mrb[0].mxu0 %v701
        %v816 = vpop.f32.mrb[0].mxu0
        %v817 = vadd.f32 0.0, %v816
        %v818 = vpop.f32.mrb[0].mxu0
        %v819 = vpop.f32.mrb[0].mxu0
        %v820 = vadd.f32 0.0, %v819
        %v821 = vpop.f32.mrb[0].mxu0
        %822 = vmatprep.mubr.bf16.mxu0 0
        %823 = vmatmul.mubr.bf16.gmra.mrb[0].mxu0 %v704
        %v824 = vpop.f32.mrb[0].mxu0
        %v825 = vadd.f32 0.0, %v824
        %v826 = vpop.f32.mrb[0].mxu0
        %v827 = vpop.f32.mrb[0].mxu0
        %v828 = vadd.f32 0.0, %v827
        %v829 = vpop.f32.mrb[0].mxu0
        %830 = vmatprep.mubr.bf16.mxu0 0
        %831 = vmatmul.mubr.bf16.gmra.mrb[0].mxu0 %v707
        %v832 = vpop.f32.mrb[0].mxu0
        %v833 = vadd.f32 0.0, %v832
        %v834 = vpop.f32.mrb[0].mxu0
        %v835 = vpop.f32.mrb[0].mxu0
        %v836 = vadd.f32 0.0, %v835
        %v837 = vpop.f32.mrb[0].mxu0
        %838 = vmatprep.mubr.bf16.mxu0 0
        %839 = vmatmul.mubr.bf16.gmra.mrb[0].mxu0 %v710
        %v840 = vpop.f32.mrb[0].mxu0
        %v841 = vadd.f32 0.0, %v840
        %v842 = vpop.f32.mrb[0].mxu0
        %v843 = vpop.f32.mrb[0].mxu0
        %v844 = vadd.f32 0.0, %v843
        %v845 = vpop.f32.mrb[0].mxu0
        %846 = vmatprep.mubr.bf16.mxu0 0
        %847 = vmatmul.mubr.bf16.gmra.mrb[0].mxu0 %v713
        %v848 = vpop.f32.mrb[0].mxu0
        %v849 = vadd.f32 0.0, %v848
        %v850 = vpop.f32.mrb[0].mxu0
        %v851 = vpop.f32.mrb[0].mxu0
        %v852 = vadd.f32 0.0, %v851
        %v853 = vpop.f32.mrb[0].mxu0
        %854 = vmatprep.mubr.bf16.mxu0 0
        %855 = vmatmul.mubr.bf16.gmra.mrb[0].mxu0 %v716
        %v856 = vpop.f32.mrb[0].mxu0
        %v857 = vadd.f32 0.0, %v856
        %v858 = vpop.f32.mrb[0].mxu0
        %v859 = vpop.f32.mrb[0].mxu0
        %v860 = vadd.f32 0.0, %v859
        %v861 = vpop.f32.mrb[0].mxu0
        %862 = vmatprep.mubr.bf16.mxu0 0
        %863 = vmatmul.mubr.bf16.gmra.mrb[0].mxu0 %v719
        %v864 = vpop.f32.mrb[0].mxu0
        %v865 = vadd.f32 0.0, %v864
        %v866 = vpop.f32.mrb[0].mxu0
        %v867 = vpop.f32.mrb[0].mxu0
        %v868 = vadd.f32 0.0, %v867
        %v869 = vpop.f32.mrb[0].mxu0
        %870 = vmatprep.mubr.bf16.mxu0 0
        %871 = vmatmul.mubr.bf16.gmra.mrb[0].mxu0 %v722
        %v872 = vpop.f32.mrb[0].mxu0
        %v873 = vadd.f32 0.0, %v872
        %v874 = vpop.f32.mrb[0].mxu0
        %v875 = vpop.f32.mrb[0].mxu0
        %v876 = vadd.f32 0.0, %v875
        %v877 = vpop.f32.mrb[0].mxu0
        %878 = vmatprep.mubr.bf16.mxu0 0
        %879 = vmatmul.mubr.bf16.gmra.mrb[0].mxu0 %v725
        %v880 = vpop.f32.mrb[0].mxu0
        %v881 = vadd.f32 0.0, %v880
        %v882 = vpop.f32.mrb[0].mxu0
        %v883 = vpop.f32.mrb[0].mxu0
        %v884 = vadd.f32 0.0, %v883
        %v885 = vpop.f32.mrb[0].mxu0
        %886 = vmatprep.mubr.bf16.mxu0 0
        %887 = vmatmul.mubr.bf16.gmra.mrb[0].mxu0 %v728
        %v888 = vpop.f32.mrb[0].mxu0
        %v889 = vadd.f32 0.0, %v888
        %v890 = vpop.f32.mrb[0].mxu0
        %v891 = vpop.f32.mrb[0].mxu0
        %v892 = vadd.f32 0.0, %v891
        %v893 = vpop.f32.mrb[0].mxu0
        %894 = vdwg.mxu0
        %v927 = vunpack.c.l.b16 %v198
        %v928 = vunpack.c.l.b16 %v199
        %v929 = vunpack.c.l.b16 %v201
        %v930 = vunpack.c.l.b16 %v202
        %v931 = vunpack.c.l.b16 %v204
        %v932 = vunpack.c.l.b16 %v205
        %v933 = vunpack.c.l.b16 %v207
        %v934 = vunpack.c.l.b16 %v208
        %v935 = vunpack.c.l.b16 %v210
        %v936 = vunpack.c.l.b16 %v211
        %v937 = vunpack.c.l.b16 %v213
        %v938 = vunpack.c.l.b16 %v214
        %v939 = vunpack.c.l.b16 %v216
        %v940 = vunpack.c.l.b16 %v217
        %v941 = vunpack.c.l.b16 %v219
        %v942 = vunpack.c.l.b16 %v220
        %v943 = vunpack.c.l.b16 %v222
        %v944 = vunpack.c.l.b16 %v223
        %v945 = vunpack.c.l.b16 %v225
        %v946 = vunpack.c.l.b16 %v226
        %v947 = vunpack.c.l.b16 %v228
        %v948 = vunpack.c.l.b16 %v229
        %v949 = vunpack.c.l.b16 %v231
        %v950 = vunpack.c.l.b16 %v232
        %v951 = vunpack.c.l.b16 %v234
        %v952 = vunpack.c.l.b16 %v235
        %v953 = vunpack.c.l.b16 %v237
        %v954 = vunpack.c.l.b16 %v238
        %v955 = vunpack.c.l.b16 %v240
        %v956 = vunpack.c.l.b16 %v241
        %v957 = vunpack.c.l.b16 %v243
        %v958 = vunpack.c.l.b16 %v244
        %v959 = vpack.c.b16 %v928, %v927
        %v960 = vpack.c.b16 %v930, %v929
        %v961 = vpack.c.b16 %v932, %v931
        %v962 = vpack.c.b16 %v934, %v933
        %v963 = vpack.c.b16 %v936, %v935
        %v964 = vpack.c.b16 %v938, %v937
        %v965 = vpack.c.b16 %v940, %v939
        %v966 = vpack.c.b16 %v942, %v941
        %v967 = vpack.c.b16 %v944, %v943
        %v968 = vpack.c.b16 %v946, %v945
        %v969 = vpack.c.b16 %v948, %v947
        %v970 = vpack.c.b16 %v950, %v949
        %v971 = vpack.c.b16 %v952, %v951
        %v972 = vpack.c.b16 %v954, %v953
        %v973 = vpack.c.b16 %v956, %v955
        %v974 = vpack.c.b16 %v958, %v957
        %v976 = vsel %vm681, %v959, 0
        %v979 = vsel %vm681, %v960, 0
        %v982 = vsel %vm681, %v961, 0
        %v985 = vsel %vm681, %v962, 0
        %v988 = vsel %vm681, %v963, 0
        %v991 = vsel %vm681, %v964, 0
        %v994 = vsel %vm681, %v965, 0
        %v997 = vsel %vm681, %v966, 0
        %v1000 = vsel %vm681, %v967, 0
        %v1003 = vsel %vm681, %v968, 0
        %v1006 = vsel %vm681, %v969, 0
        %v1009 = vsel %vm681, %v970, 0
        %v1012 = vsel %vm681, %v971, 0
        %v1015 = vsel %vm681, %v972, 0
        %v1018 = vsel %vm681, %v973, 0
        %v1021 = vsel %vm681, %v974, 0
        %v1024 = vsel %vm730, %v186, 0
        %1026 = vmatprep.subr.bf16.mxu0 0
        %1027 = vmatpush1.bf16.msra.mxu0 %v1024
        %1028 = vmatprep.subr.bf16.mxu0 0
        %1029 = vmatpush1.bf16.msra.mxu0 0
        %1030 = vmatprep.subr.bf16.mxu0 0
        %1031 = vmatpush1.bf16.msra.mxu0 0
        %1032 = vmatprep.subr.bf16.mxu0 0
        %1033 = vmatpush1.bf16.msra.mxu0 0
        %1034 = vmatprep.subr.bf16.mxu0 0
        %1035 = vmatpush1.bf16.msra.mxu0 0
        %1036 = vmatprep.subr.bf16.mxu0 0
        %1037 = vmatpush1.bf16.msra.mxu0 0
        %1038 = vmatprep.subr.bf16.mxu0 0
        %1039 = vmatpush1.bf16.msra.mxu0 0
        %1040 = vmatprep.subr.bf16.mxu0 0
        %1041 = vmatpush1.bf16.msra.mxu0 0
        %1042 = vmatprep.subr.bf16.mxu0 0
        %1043 = vmatpush1.bf16.msra.mxu0 0
        %1044 = vmatprep.subr.bf16.mxu0 0
        %1045 = vmatpush1.bf16.msra.mxu0 0
        %1046 = vmatprep.subr.bf16.mxu0 0
        %1047 = vmatpush1.bf16.msra.mxu0 0
        %1048 = vmatprep.subr.bf16.mxu0 0
        %1049 = vmatpush1.bf16.msra.mxu0 0
        %1050 = vmatprep.subr.bf16.mxu0 0
        %1051 = vmatpush1.bf16.msra.mxu0 0
        %1052 = vmatprep.subr.bf16.mxu0 0
        %1053 = vmatpush1.bf16.msra.mxu0 0
        %1054 = vmatprep.subr.bf16.mxu0 0
        %1055 = vmatpush1.bf16.msra.mxu0 0
        %1056 = vmatprep.subr.bf16.mxu0 0
        %1057 = vmatpush1.bf16.msra.mxu0 0
        %1058 = vmatprep.mubr.bf16.mxu0 0
        %1059 = vmatmul.mubr.bf16.gmra.mrb[0].mxu0 %v976
        %v1060 = vpop.f32.mrb[0].mxu0
        %v1061 = vadd.f32 %v769, %v1060
        %v1062 = vpop.f32.mrb[0].mxu0
        %v1063 = vpop.f32.mrb[0].mxu0
        %v1064 = vadd.f32 %v772, %v1063
        %v1065 = vpop.f32.mrb[0].mxu0
        %1066 = vmatprep.mubr.bf16.mxu0 0
        %1067 = vmatmul.mubr.bf16.gmra.mrb[0].mxu0 %v979
        %v1068 = vpop.f32.mrb[0].mxu0
        %v1069 = vadd.f32 %v777, %v1068
        %v1070 = vpop.f32.mrb[0].mxu0
        %v1071 = vpop.f32.mrb[0].mxu0
        %v1072 = vadd.f32 %v780, %v1071
        %v1073 = vpop.f32.mrb[0].mxu0
        %1074 = vmatprep.mubr.bf16.mxu0 0
        %1075 = vmatmul.mubr.bf16.gmra.mrb[0].mxu0 %v982
        %v1076 = vpop.f32.mrb[0].mxu0
        %v1077 = vadd.f32 %v785, %v1076
        %v1078 = vpop.f32.mrb[0].mxu0
        %v1079 = vpop.f32.mrb[0].mxu0
        %v1080 = vadd.f32 %v788, %v1079
        %v1081 = vpop.f32.mrb[0].mxu0
        %1082 = vmatprep.mubr.bf16.mxu0 0
        %1083 = vmatmul.mubr.bf16.gmra.mrb[0].mxu0 %v985
        %v1084 = vpop.f32.mrb[0].mxu0
        %v1085 = vadd.f32 %v793, %v1084
        %v1086 = vpop.f32.mrb[0].mxu0
        %v1087 = vpop.f32.mrb[0].mxu0
        %v1088 = vadd.f32 %v796, %v1087
        %v1089 = vpop.f32.mrb[0].mxu0
        %1090 = vmatprep.mubr.bf16.mxu0 0
        %1091 = vmatmul.mubr.bf16.gmra.mrb[0].mxu0 %v988
        %v1092 = vpop.f32.mrb[0].mxu0
        %v1093 = vadd.f32 %v801, %v1092
        %v1094 = vpop.f32.mrb[0].mxu0
        %v1095 = vpop.f32.mrb[0].mxu0
        %v1096 = vadd.f32 %v804, %v1095
        %v1097 = vpop.f32.mrb[0].mxu0
        %1098 = vmatprep.mubr.bf16.mxu0 0
        %1099 = vmatmul.mubr.bf16.gmra.mrb[0].mxu0 %v991
        %v1100 = vpop.f32.mrb[0].mxu0
        %v1101 = vadd.f32 %v809, %v1100
        %v1102 = vpop.f32.mrb[0].mxu0
        %v1103 = vpop.f32.mrb[0].mxu0
        %v1104 = vadd.f32 %v812, %v1103
        %v1105 = vpop.f32.mrb[0].mxu0
        %1106 = vmatprep.mubr.bf16.mxu0 0
        %1107 = vmatmul.mubr.bf16.gmra.mrb[0].mxu0 %v994
        %v1108 = vpop.f32.mrb[0].mxu0
        %v1109 = vadd.f32 %v817, %v1108
        %v1110 = vpop.f32.mrb[0].mxu0
        %v1111 = vpop.f32.mrb[0].mxu0
        %v1112 = vadd.f32 %v820, %v1111
        %v1113 = vpop.f32.mrb[0].mxu0
        %1114 = vmatprep.mubr.bf16.mxu0 0
        %1115 = vmatmul.mubr.bf16.gmra.mrb[0].mxu0 %v997
        %v1116 = vpop.f32.mrb[0].mxu0
        %v1117 = vadd.f32 %v825, %v1116
        %v1118 = vpop.f32.mrb[0].mxu0
        %v1119 = vpop.f32.mrb[0].mxu0
        %v1120 = vadd.f32 %v828, %v1119
        %v1121 = vpop.f32.mrb[0].mxu0
        %1122 = vmatprep.mubr.bf16.mxu0 0
        %1123 = vmatmul.mubr.bf16.gmra.mrb[0].mxu0 %v1000
        %v1124 = vpop.f32.mrb[0].mxu0
        %v1125 = vadd.f32 %v833, %v1124
        %v1126 = vpop.f32.mrb[0].mxu0
        %v1127 = vpop.f32.mrb[0].mxu0
        %v1128 = vadd.f32 %v836, %v1127
        %v1129 = vpop.f32.mrb[0].mxu0
        %1130 = vmatprep.mubr.bf16.mxu0 0
        %1131 = vmatmul.mubr.bf16.gmra.mrb[0].mxu0 %v1003
        %v1132 = vpop.f32.mrb[0].mxu0
        %v1133 = vadd.f32 %v841, %v1132
        %v1134 = vpop.f32.mrb[0].mxu0
        %v1135 = vpop.f32.mrb[0].mxu0
        %v1136 = vadd.f32 %v844, %v1135
        %v1137 = vpop.f32.mrb[0].mxu0
        %1138 = vmatprep.mubr.bf16.mxu0 0
        %1139 = vmatmul.mubr.bf16.gmra.mrb[0].mxu0 %v1006
        %v1140 = vpop.f32.mrb[0].mxu0
        %v1141 = vadd.f32 %v849, %v1140
        %v1142 = vpop.f32.mrb[0].mxu0
        %v1143 = vpop.f32.mrb[0].mxu0
        %v1144 = vadd.f32 %v852, %v1143
        %v1145 = vpop.f32.mrb[0].mxu0
        %1146 = vmatprep.mubr.bf16.mxu0 0
        %1147 = vmatmul.mubr.bf16.gmra.mrb[0].mxu0 %v1009
        %v1148 = vpop.f32.mrb[0].mxu0
        %v1149 = vadd.f32 %v857, %v1148
        %v1150 = vpop.f32.mrb[0].mxu0
        %v1151 = vpop.f32.mrb[0].mxu0
        %v1152 = vadd.f32 %v860, %v1151
        %v1153 = vpop.f32.mrb[0].mxu0
        %1154 = vmatprep.mubr.bf16.mxu0 0
        %1155 = vmatmul.mubr.bf16.gmra.mrb[0].mxu0 %v1012
        %v1156 = vpop.f32.mrb[0].mxu0
        %v1157 = vadd.f32 %v865, %v1156
        %v1158 = vpop.f32.mrb[0].mxu0
        %v1159 = vpop.f32.mrb[0].mxu0
        %v1160 = vadd.f32 %v868, %v1159
        %v1161 = vpop.f32.mrb[0].mxu0
        %1162 = vmatprep.mubr.bf16.mxu0 0
        %1163 = vmatmul.mubr.bf16.gmra.mrb[0].mxu0 %v1015
        %v1164 = vpop.f32.mrb[0].mxu0
        %v1165 = vadd.f32 %v873, %v1164
        %v1166 = vpop.f32.mrb[0].mxu0
        %v1167 = vpop.f32.mrb[0].mxu0
        %v1168 = vadd.f32 %v876, %v1167
        %v1169 = vpop.f32.mrb[0].mxu0
        %1170 = vmatprep.mubr.bf16.mxu0 0
        %1171 = vmatmul.mubr.bf16.gmra.mrb[0].mxu0 %v1018
        %v1172 = vpop.f32.mrb[0].mxu0
        %v1173 = vadd.f32 %v881, %v1172
        %v1174 = vpop.f32.mrb[0].mxu0
        %v1175 = vpop.f32.mrb[0].mxu0
        %v1176 = vadd.f32 %v884, %v1175
        %v1177 = vpop.f32.mrb[0].mxu0
        %1178 = vmatprep.mubr.bf16.mxu0 0
        %1179 = vmatmul.mubr.bf16.gmra.mrb[0].mxu0 %v1021
        %v1180 = vpop.f32.mrb[0].mxu0
        %v1181 = vadd.f32 %v889, %v1180
        %v1182 = vpop.f32.mrb[0].mxu0
        %v1183 = vpop.f32.mrb[0].mxu0
        %v1184 = vadd.f32 %v892, %v1183
        %v1185 = vpop.f32.mrb[0].mxu0
        %1186 = vdwg.mxu0
        %vm1203 = vcmask 1042432
        %vm1204 = vcmask 1046532
        %vm1205 = vmor %vm1203, %vm1204
        %v1206 = vrot.slane %v198, 5
        %v1207 = vrot.slane %v1206, 4
        %v1208 = vrot.slane %v199, 5
        %v1209 = vsel %vm1205, %v1207, %v1208
        %v1210 = vrot.slane %v1208, 4
        %v1211 = vrot.slane %v200, 5
        %v1212 = vsel %vm1205, %v1210, %v1211
        %v1213 = vrot.slane %v201, 5
        %v1214 = vrot.slane %v1213, 4
        %v1215 = vrot.slane %v202, 5
        %v1216 = vsel %vm1205, %v1214, %v1215
        %v1217 = vrot.slane %v1215, 4
        %v1218 = vrot.slane %v203, 5
        %v1219 = vsel %vm1205, %v1217, %v1218
        %v1220 = vrot.slane %v204, 5
        %v1221 = vrot.slane %v1220, 4
        %v1222 = vrot.slane %v205, 5
        %v1223 = vsel %vm1205, %v1221, %v1222
        %v1224 = vrot.slane %v1222, 4
        %v1225 = vrot.slane %v206, 5
        %v1226 = vsel %vm1205, %v1224, %v1225
        %v1227 = vrot.slane %v207, 5
        %v1228 = vrot.slane %v1227, 4
        %v1229 = vrot.slane %v208, 5
        %v1230 = vsel %vm1205, %v1228, %v1229
        %v1231 = vrot.slane %v1229, 4
        %v1232 = vrot.slane %v209, 5
        %v1233 = vsel %vm1205, %v1231, %v1232
        %v1234 = vrot.slane %v210, 5
        %v1235 = vrot.slane %v1234, 4
        %v1236 = vrot.slane %v211, 5
        %v1237 = vsel %vm1205, %v1235, %v1236
        %v1238 = vrot.slane %v1236, 4
        %v1239 = vrot.slane %v212, 5
        %v1240 = vsel %vm1205, %v1238, %v1239
        %v1241 = vrot.slane %v213, 5
        %v1242 = vrot.slane %v1241, 4
        %v1243 = vrot.slane %v214, 5
        %v1244 = vsel %vm1205, %v1242, %v1243
        %v1245 = vrot.slane %v1243, 4
        %v1246 = vrot.slane %v215, 5
        %v1247 = vsel %vm1205, %v1245, %v1246
        %v1248 = vrot.slane %v216, 5
        %v1249 = vrot.slane %v1248, 4
        %v1250 = vrot.slane %v217, 5
        %v1251 = vsel %vm1205, %v1249, %v1250
        %v1252 = vrot.slane %v1250, 4
        %v1253 = vrot.slane %v218, 5
        %v1254 = vsel %vm1205, %v1252, %v1253
        %v1255 = vrot.slane %v219, 5
        %v1256 = vrot.slane %v1255, 4
        %v1257 = vrot.slane %v220, 5
        %v1258 = vsel %vm1205, %v1256, %v1257
        %v1259 = vrot.slane %v1257, 4
        %v1260 = vrot.slane %v221, 5
        %v1261 = vsel %vm1205, %v1259, %v1260
        %v1262 = vrot.slane %v222, 5
        %v1263 = vrot.slane %v1262, 4
        %v1264 = vrot.slane %v223, 5
        %v1265 = vsel %vm1205, %v1263, %v1264
        %v1266 = vrot.slane %v1264, 4
        %v1267 = vrot.slane %v224, 5
        %v1268 = vsel %vm1205, %v1266, %v1267
        %v1269 = vrot.slane %v225, 5
        %v1270 = vrot.slane %v1269, 4
        %v1271 = vrot.slane %v226, 5
        %v1272 = vsel %vm1205, %v1270, %v1271
        %v1273 = vrot.slane %v1271, 4
        %v1274 = vrot.slane %v227, 5
        %v1275 = vsel %vm1205, %v1273, %v1274
        %v1276 = vrot.slane %v228, 5
        %v1277 = vrot.slane %v1276, 4
        %v1278 = vrot.slane %v229, 5
        %v1279 = vsel %vm1205, %v1277, %v1278
        %v1280 = vrot.slane %v1278, 4
        %v1281 = vrot.slane %v230, 5
        %v1282 = vsel %vm1205, %v1280, %v1281
        %v1283 = vrot.slane %v231, 5
        %v1284 = vrot.slane %v1283, 4
        %v1285 = vrot.slane %v232, 5
        %v1286 = vsel %vm1205, %v1284, %v1285
        %v1287 = vrot.slane %v1285, 4
        %v1288 = vrot.slane %v233, 5
        %v1289 = vsel %vm1205, %v1287, %v1288
        %v1290 = vrot.slane %v234, 5
        %v1291 = vrot.slane %v1290, 4
        %v1292 = vrot.slane %v235, 5
        %v1293 = vsel %vm1205, %v1291, %v1292
        %v1294 = vrot.slane %v1292, 4
        %v1295 = vrot.slane %v236, 5
        %v1296 = vsel %vm1205, %v1294, %v1295
        %v1297 = vrot.slane %v237, 5
        %v1298 = vrot.slane %v1297, 4
        %v1299 = vrot.slane %v238, 5
        %v1300 = vsel %vm1205, %v1298, %v1299
        %v1301 = vrot.slane %v1299, 4
        %v1302 = vrot.slane %v239, 5
        %v1303 = vsel %vm1205, %v1301, %v1302
        %v1304 = vrot.slane %v240, 5
        %v1305 = vrot.slane %v1304, 4
        %v1306 = vrot.slane %v241, 5
        %v1307 = vsel %vm1205, %v1305, %v1306
        %v1308 = vrot.slane %v1306, 4
        %v1309 = vrot.slane %v242, 5
        %v1310 = vsel %vm1205, %v1308, %v1309
        %v1311 = vrot.slane %v243, 5
        %v1312 = vrot.slane %v1311, 4
        %v1313 = vrot.slane %v244, 5
        %v1314 = vsel %vm1205, %v1312, %v1313
        %v1315 = vrot.slane %v1313, 4
        %v1316 = vrot.slane %v245, 5
        %v1317 = vsel %vm1205, %v1315, %v1316
        %v1318 = vunpack.c.l.b16 %v1209
        %v1319 = vunpack.c.l.b16 %v1212
        %v1320 = vunpack.c.l.b16 %v1216
        %v1321 = vunpack.c.l.b16 %v1219
        %v1322 = vunpack.c.l.b16 %v1223
        %v1323 = vunpack.c.l.b16 %v1226
        %v1324 = vunpack.c.l.b16 %v1230
        %v1325 = vunpack.c.l.b16 %v1233
        %v1326 = vunpack.c.l.b16 %v1237
        %v1327 = vunpack.c.l.b16 %v1240
        %v1328 = vunpack.c.l.b16 %v1244
        %v1329 = vunpack.c.l.b16 %v1247
        %v1330 = vunpack.c.l.b16 %v1251
        %v1331 = vunpack.c.l.b16 %v1254
        %v1332 = vunpack.c.l.b16 %v1258
        %v1333 = vunpack.c.l.b16 %v1261
        %v1334 = vunpack.c.l.b16 %v1265
        %v1335 = vunpack.c.l.b16 %v1268
        %v1336 = vunpack.c.l.b16 %v1272
        %v1337 = vunpack.c.l.b16 %v1275
        %v1338 = vunpack.c.l.b16 %v1279
        %v1339 = vunpack.c.l.b16 %v1282
        %v1340 = vunpack.c.l.b16 %v1286
        %v1341 = vunpack.c.l.b16 %v1289
        %v1342 = vunpack.c.l.b16 %v1293
        %v1343 = vunpack.c.l.b16 %v1296
        %v1344 = vunpack.c.l.b16 %v1300
        %v1345 = vunpack.c.l.b16 %v1303
        %v1346 = vunpack.c.l.b16 %v1307
        %v1347 = vunpack.c.l.b16 %v1310
        %v1348 = vunpack.c.l.b16 %v1314
        %v1349 = vunpack.c.l.b16 %v1317
        %v1350 = vpack.c.b16 %v1319, %v1318
        %v1351 = vpack.c.b16 %v1321, %v1320
        %v1352 = vpack.c.b16 %v1323, %v1322
        %v1353 = vpack.c.b16 %v1325, %v1324
        %v1354 = vpack.c.b16 %v1327, %v1326
        %v1355 = vpack.c.b16 %v1329, %v1328
        %v1356 = vpack.c.b16 %v1331, %v1330
        %v1357 = vpack.c.b16 %v1333, %v1332
        %v1358 = vpack.c.b16 %v1335, %v1334
        %v1359 = vpack.c.b16 %v1337, %v1336
        %v1360 = vpack.c.b16 %v1339, %v1338
        %v1361 = vpack.c.b16 %v1341, %v1340
        %v1362 = vpack.c.b16 %v1343, %v1342
        %v1363 = vpack.c.b16 %v1345, %v1344
        %v1364 = vpack.c.b16 %v1347, %v1346
        %v1365 = vpack.c.b16 %v1349, %v1348
        %v1367 = vsel %vm681, %v1350, 0
        %v1370 = vsel %vm681, %v1351, 0
        %v1373 = vsel %vm681, %v1352, 0
        %v1376 = vsel %vm681, %v1353, 0
        %v1379 = vsel %vm681, %v1354, 0
        %v1382 = vsel %vm681, %v1355, 0
        %v1385 = vsel %vm681, %v1356, 0
        %v1388 = vsel %vm681, %v1357, 0
        %v1391 = vsel %vm681, %v1358, 0
        %v1394 = vsel %vm681, %v1359, 0
        %v1397 = vsel %vm681, %v1360, 0
        %v1400 = vsel %vm681, %v1361, 0
        %v1403 = vsel %vm681, %v1362, 0
        %v1406 = vsel %vm681, %v1363, 0
        %v1409 = vsel %vm681, %v1364, 0
        %v1412 = vsel %vm681, %v1365, 0
        %v1415 = vsel %vm730, %v188, 0
        %1417 = vmatprep.subr.bf16.mxu0 0
        %1418 = vmatpush1.bf16.msra.mxu0 %v1415
        %1419 = vmatprep.subr.bf16.mxu0 0
        %1420 = vmatpush1.bf16.msra.mxu0 0
        %1421 = vmatprep.subr.bf16.mxu0 0
        %1422 = vmatpush1.bf16.msra.mxu0 0
        %1423 = vmatprep.subr.bf16.mxu0 0
        %1424 = vmatpush1.bf16.msra.mxu0 0
        %1425 = vmatprep.subr.bf16.mxu0 0
        %1426 = vmatpush1.bf16.msra.mxu0 0
        %1427 = vmatprep.subr.bf16.mxu0 0
        %1428 = vmatpush1.bf16.msra.mxu0 0
        %1429 = vmatprep.subr.bf16.mxu0 0
        %1430 = vmatpush1.bf16.msra.mxu0 0
        %1431 = vmatprep.subr.bf16.mxu0 0
        %1432 = vmatpush1.bf16.msra.mxu0 0
        %1433 = vmatprep.subr.bf16.mxu0 0
        %1434 = vmatpush1.bf16.msra.mxu0 0
        %1435 = vmatprep.subr.bf16.mxu0 0
        %1436 = vmatpush1.bf16.msra.mxu0 0
        %1437 = vmatprep.subr.bf16.mxu0 0
        %1438 = vmatpush1.bf16.msra.mxu0 0
        %1439 = vmatprep.subr.bf16.mxu0 0
        %1440 = vmatpush1.bf16.msra.mxu0 0
        %1441 = vmatprep.subr.bf16.mxu0 0
        %1442 = vmatpush1.bf16.msra.mxu0 0
        %1443 = vmatprep.subr.bf16.mxu0 0
        %1444 = vmatpush1.bf16.msra.mxu0 0
        %1445 = vmatprep.subr.bf16.mxu0 0
        %1446 = vmatpush1.bf16.msra.mxu0 0
        %1447 = vmatprep.subr.bf16.mxu0 0
        %1448 = vmatpush1.bf16.msra.mxu0 0
        %1449 = vmatprep.mubr.bf16.mxu0 0
        %1450 = vmatmul.mubr.bf16.gmra.mrb[0].mxu0 %v1367
        %v1451 = vpop.f32.mrb[0].mxu0
        %v1452 = vadd.f32 0.0, %v1451
        %v1453 = vpop.f32.mrb[0].mxu0
        %v1454 = vpop.f32.mrb[0].mxu0
        %v1455 = vadd.f32 0.0, %v1454
        %v1456 = vpop.f32.mrb[0].mxu0
        %1457 = vmatprep.mubr.bf16.mxu0 0
        %1458 = vmatmul.mubr.bf16.gmra.mrb[0].mxu0 %v1370
        %v1459 = vpop.f32.mrb[0].mxu0
        %v1460 = vadd.f32 0.0, %v1459
        %v1461 = vpop.f32.mrb[0].mxu0
        %v1462 = vpop.f32.mrb[0].mxu0
        %v1463 = vadd.f32 0.0, %v1462
        %v1464 = vpop.f32.mrb[0].mxu0
        %1465 = vmatprep.mubr.bf16.mxu0 0
        %1466 = vmatmul.mubr.bf16.gmra.mrb[0].mxu0 %v1373
        %v1467 = vpop.f32.mrb[0].mxu0
        %v1468 = vadd.f32 0.0, %v1467
        %v1469 = vpop.f32.mrb[0].mxu0
        %v1470 = vpop.f32.mrb[0].mxu0
        %v1471 = vadd.f32 0.0, %v1470
        %v1472 = vpop.f32.mrb[0].mxu0
        %1473 = vmatprep.mubr.bf16.mxu0 0
        %1474 = vmatmul.mubr.bf16.gmra.mrb[0].mxu0 %v1376
        %v1475 = vpop.f32.mrb[0].mxu0
        %v1476 = vadd.f32 0.0, %v1475
        %v1477 = vpop.f32.mrb[0].mxu0
        %v1478 = vpop.f32.mrb[0].mxu0
        %v1479 = vadd.f32 0.0, %v1478
        %v1480 = vpop.f32.mrb[0].mxu0
        %1481 = vmatprep.mubr.bf16.mxu0 0
        %1482 = vmatmul.mubr.bf16.gmra.mrb[0].mxu0 %v1379
        %v1483 = vpop.f32.mrb[0].mxu0
        %v1484 = vadd.f32 0.0, %v1483
        %v1485 = vpop.f32.mrb[0].mxu0
        %v1486 = vpop.f32.mrb[0].mxu0
        %v1487 = vadd.f32 0.0, %v1486
        %v1488 = vpop.f32.mrb[0].mxu0
        %1489 = vmatprep.mubr.bf16.mxu0 0
        %1490 = vmatmul.mubr.bf16.gmra.mrb[0].mxu0 %v1382
        %v1491 = vpop.f32.mrb[0].mxu0
        %v1492 = vadd.f32 0.0, %v1491
        %v1493 = vpop.f32.mrb[0].mxu0
        %v1494 = vpop.f32.mrb[0].mxu0
        %v1495 = vadd.f32 0.0, %v1494
        %v1496 = vpop.f32.mrb[0].mxu0
        %1497 = vmatprep.mubr.bf16.mxu0 0
        %1498 = vmatmul.mubr.bf16.gmra.mrb[0].mxu0 %v1385
        %v1499 = vpop.f32.mrb[0].mxu0
        %v1500 = vadd.f32 0.0, %v1499
        %v1501 = vpop.f32.mrb[0].mxu0
        %v1502 = vpop.f32.mrb[0].mxu0
        %v1503 = vadd.f32 0.0, %v1502
        %v1504 = vpop.f32.mrb[0].mxu0
        %1505 = vmatprep.mubr.bf16.mxu0 0
        %1506 = vmatmul.mubr.bf16.gmra.mrb[0].mxu0 %v1388
        %v1507 = vpop.f32.mrb[0].mxu0
        %v1508 = vadd.f32 0.0, %v1507
        %v1509 = vpop.f32.mrb[0].mxu0
        %v1510 = vpop.f32.mrb[0].mxu0
        %v1511 = vadd.f32 0.0, %v1510
        %v1512 = vpop.f32.mrb[0].mxu0
        %1513 = vmatprep.mubr.bf16.mxu0 0
        %1514 = vmatmul.mubr.bf16.gmra.mrb[0].mxu0 %v1391
        %v1515 = vpop.f32.mrb[0].mxu0
        %v1516 = vadd.f32 0.0, %v1515
        %v1517 = vpop.f32.mrb[0].mxu0
        %v1518 = vpop.f32.mrb[0].mxu0
        %v1519 = vadd.f32 0.0, %v1518
        %v1520 = vpop.f32.mrb[0].mxu0
        %1521 = vmatprep.mubr.bf16.mxu0 0
        %1522 = vmatmul.mubr.bf16.gmra.mrb[0].mxu0 %v1394
        %v1523 = vpop.f32.mrb[0].mxu0
        %v1524 = vadd.f32 0.0, %v1523
        %v1525 = vpop.f32.mrb[0].mxu0
        %v1526 = vpop.f32.mrb[0].mxu0
        %v1527 = vadd.f32 0.0, %v1526
        %v1528 = vpop.f32.mrb[0].mxu0
        %1529 = vmatprep.mubr.bf16.mxu0 0
        %1530 = vmatmul.mubr.bf16.gmra.mrb[0].mxu0 %v1397
        %v1531 = vpop.f32.mrb[0].mxu0
        %v1532 = vadd.f32 0.0, %v1531
        %v1533 = vpop.f32.mrb[0].mxu0
        %v1534 = vpop.f32.mrb[0].mxu0
        %v1535 = vadd.f32 0.0, %v1534
        %v1536 = vpop.f32.mrb[0].mxu0
        %1537 = vmatprep.mubr.bf16.mxu0 0
        %1538 = vmatmul.mubr.bf16.gmra.mrb[0].mxu0 %v1400
        %v1539 = vpop.f32.mrb[0].mxu0
        %v1540 = vadd.f32 0.0, %v1539
        %v1541 = vpop.f32.mrb[0].mxu0
        %v1542 = vpop.f32.mrb[0].mxu0
        %v1543 = vadd.f32 0.0, %v1542
        %v1544 = vpop.f32.mrb[0].mxu0
        %1545 = vmatprep.mubr.bf16.mxu0 0
        %1546 = vmatmul.mubr.bf16.gmra.mrb[0].mxu0 %v1403
        %v1547 = vpop.f32.mrb[0].mxu0
        %v1548 = vadd.f32 0.0, %v1547
        %v1549 = vpop.f32.mrb[0].mxu0
        %v1550 = vpop.f32.mrb[0].mxu0
        %v1551 = vadd.f32 0.0, %v1550
        %v1552 = vpop.f32.mrb[0].mxu0
        %1553 = vmatprep.mubr.bf16.mxu0 0
        %1554 = vmatmul.mubr.bf16.gmra.mrb[0].mxu0 %v1406
        %v1555 = vpop.f32.mrb[0].mxu0
        %v1556 = vadd.f32 0.0, %v1555
        %v1557 = vpop.f32.mrb[0].mxu0
        %v1558 = vpop.f32.mrb[0].mxu0
        %v1559 = vadd.f32 0.0, %v1558
        %v1560 = vpop.f32.mrb[0].mxu0
        %1561 = vmatprep.mubr.bf16.mxu0 0
        %1562 = vmatmul.mubr.bf16.gmra.mrb[0].mxu0 %v1409
        %v1563 = vpop.f32.mrb[0].mxu0
        %v1564 = vadd.f32 0.0, %v1563
        %v1565 = vpop.f32.mrb[0].mxu0
        %v1566 = vpop.f32.mrb[0].mxu0
        %v1567 = vadd.f32 0.0, %v1566
        %v1568 = vpop.f32.mrb[0].mxu0
        %1569 = vmatprep.mubr.bf16.mxu0 0
        %1570 = vmatmul.mubr.bf16.gmra.mrb[0].mxu0 %v1412
        %v1571 = vpop.f32.mrb[0].mxu0
        %v1572 = vadd.f32 0.0, %v1571
        %v1573 = vpop.f32.mrb[0].mxu0
        %v1574 = vpop.f32.mrb[0].mxu0
        %v1575 = vadd.f32 0.0, %v1574
        %v1576 = vpop.f32.mrb[0].mxu0
        %1577 = vdwg.mxu0
        %v1578 = vadd.f32 %v1061, %v1452
        %v1579 = vadd.f32 %v1064, %v1455
        %v1580 = vadd.f32 %v1069, %v1460
        %v1581 = vadd.f32 %v1072, %v1463
        %v1582 = vadd.f32 %v1077, %v1468
        %v1583 = vadd.f32 %v1080, %v1471
        %v1584 = vadd.f32 %v1085, %v1476
        %v1585 = vadd.f32 %v1088, %v1479
        %v1586 = vadd.f32 %v1093, %v1484
        %v1587 = vadd.f32 %v1096, %v1487
        %v1588 = vadd.f32 %v1101, %v1492
        %v1589 = vadd.f32 %v1104, %v1495
        %v1590 = vadd.f32 %v1109, %v1500
        %v1591 = vadd.f32 %v1112, %v1503
        %v1592 = vadd.f32 %v1117, %v1508
        %v1593 = vadd.f32 %v1120, %v1511
        %v1594 = vadd.f32 %v1125, %v1516
        %v1595 = vadd.f32 %v1128, %v1519
        %v1596 = vadd.f32 %v1133, %v1524
        %v1597 = vadd.f32 %v1136, %v1527
        %v1598 = vadd.f32 %v1141, %v1532
        %v1599 = vadd.f32 %v1144, %v1535
        %v1600 = vadd.f32 %v1149, %v1540
        %v1601 = vadd.f32 %v1152, %v1543
        %v1602 = vadd.f32 %v1157, %v1548
        %v1603 = vadd.f32 %v1160, %v1551
        %v1604 = vadd.f32 %v1165, %v1556
        %v1605 = vadd.f32 %v1168, %v1559
        %v1606 = vadd.f32 %v1173, %v1564
        %v1607 = vadd.f32 %v1176, %v1567
        %v1608 = vadd.f32 %v1181, %v1572
        %v1609 = vadd.f32 %v1184, %v1575
        %s1610 = sadd.s32 %s185, 1
        %s1611 = smul.u32 %s1610, 3
        %s1612 = smul.addr %s1611, 4
        %s1613 = scalar_lea.vmem %s182, %s1612
        %v1614 = vld [vmem:[%s1613] sm:$0xf]
        %v1615 = vld [vmem:[%s1613 + $0x4] sm:$0xf]
        %v1616 = vld [vmem:[%s1613 + $0x8] sm:$0x1]
        %v1617 = vld [vmem:[%s1613 + $0xc] sm:$0xf]
        %v1618 = vld [vmem:[%s1613 + $0x10] sm:$0xf]
        %v1619 = vld [vmem:[%s1613 + $0x14] sm:$0x1]
        %v1620 = vld [vmem:[%s1613 + $0x18] sm:$0xf]
        %v1621 = vld [vmem:[%s1613 + $0x1c] sm:$0xf]
        %v1622 = vld [vmem:[%s1613 + $0x20] sm:$0x1]
        %v1623 = vld [vmem:[%s1613 + $0x24] sm:$0xf]
        %v1624 = vld [vmem:[%s1613 + $0x28] sm:$0xf]
        %v1625 = vld [vmem:[%s1613 + $0x2c] sm:$0x1]
        %v1626 = vld [vmem:[%s1613 + $0x30] sm:$0xf]
        %v1627 = vld [vmem:[%s1613 + $0x34] sm:$0xf]
        %v1628 = vld [vmem:[%s1613 + $0x38] sm:$0x1]
        %v1629 = vld [vmem:[%s1613 + $0x3c] sm:$0xf]
        %v1630 = vld [vmem:[%s1613 + $0x40] sm:$0xf]
        %v1631 = vld [vmem:[%s1613 + $0x44] sm:$0x1]
        %v1632 = vld [vmem:[%s1613 + $0x48] sm:$0xf]
        %v1633 = vld [vmem:[%s1613 + $0x4c] sm:$0xf]
        %v1634 = vld [vmem:[%s1613 + $0x50] sm:$0x1]
        %v1635 = vld [vmem:[%s1613 + $0x54] sm:$0xf]
        %v1636 = vld [vmem:[%s1613 + $0x58] sm:$0xf]
        %v1637 = vld [vmem:[%s1613 + $0x5c] sm:$0x1]
        %v1638 = vld [vmem:[%s1613 + $0x60] sm:$0xf]
        %v1639 = vld [vmem:[%s1613 + $0x64] sm:$0xf]
        %v1640 = vld [vmem:[%s1613 + $0x68] sm:$0x1]
        %v1641 = vld [vmem:[%s1613 + $0x6c] sm:$0xf]
        %v1642 = vld [vmem:[%s1613 + $0x70] sm:$0xf]
        %v1643 = vld [vmem:[%s1613 + $0x74] sm:$0x1]
        %v1644 = vld [vmem:[%s1613 + $0x78] sm:$0xf]
        %v1645 = vld [vmem:[%s1613 + $0x7c] sm:$0xf]
        %v1646 = vld [vmem:[%s1613 + $0x80] sm:$0x1]
        %v1647 = vld [vmem:[%s1613 + $0x84] sm:$0xf]
        %v1648 = vld [vmem:[%s1613 + $0x88] sm:$0xf]
        %v1649 = vld [vmem:[%s1613 + $0x8c] sm:$0x1]
        %v1650 = vld [vmem:[%s1613 + $0x90] sm:$0xf]
        %v1651 = vld [vmem:[%s1613 + $0x94] sm:$0xf]
        %v1652 = vld [vmem:[%s1613 + $0x98] sm:$0x1]
        %v1653 = vld [vmem:[%s1613 + $0x9c] sm:$0xf]
        %v1654 = vld [vmem:[%s1613 + $0xa0] sm:$0xf]
        %v1655 = vld [vmem:[%s1613 + $0xa4] sm:$0x1]
        %v1656 = vld [vmem:[%s1613 + $0xa8] sm:$0xf]
        %v1657 = vld [vmem:[%s1613 + $0xac] sm:$0xf]
        %v1658 = vld [vmem:[%s1613 + $0xb0] sm:$0x1]
        %v1659 = vld [vmem:[%s1613 + $0xb4] sm:$0xf]
        %v1660 = vld [vmem:[%s1613 + $0xb8] sm:$0xf]
        %v1661 = vld [vmem:[%s1613 + $0xbc] sm:$0x1]
        %v1694 = vunpack.c.l.b16 %v1614
        %v1695 = vunpack.c.l.b16 %v1615
        %v1696 = vunpack.c.l.b16 %v1617
        %v1697 = vunpack.c.l.b16 %v1618
        %v1698 = vunpack.c.l.b16 %v1620
        %v1699 = vunpack.c.l.b16 %v1621
        %v1700 = vunpack.c.l.b16 %v1623
        %v1701 = vunpack.c.l.b16 %v1624
        %v1702 = vunpack.c.l.b16 %v1626
        %v1703 = vunpack.c.l.b16 %v1627
        %v1704 = vunpack.c.l.b16 %v1629
        %v1705 = vunpack.c.l.b16 %v1630
        %v1706 = vunpack.c.l.b16 %v1632
        %v1707 = vunpack.c.l.b16 %v1633
        %v1708 = vunpack.c.l.b16 %v1635
        %v1709 = vunpack.c.l.b16 %v1636
        %v1710 = vunpack.c.l.b16 %v1638
        %v1711 = vunpack.c.l.b16 %v1639
        %v1712 = vunpack.c.l.b16 %v1641
        %v1713 = vunpack.c.l.b16 %v1642
        %v1714 = vunpack.c.l.b16 %v1644
        %v1715 = vunpack.c.l.b16 %v1645
        %v1716 = vunpack.c.l.b16 %v1647
        %v1717 = vunpack.c.l.b16 %v1648
        %v1718 = vunpack.c.l.b16 %v1650
        %v1719 = vunpack.c.l.b16 %v1651
        %v1720 = vunpack.c.l.b16 %v1653
        %v1721 = vunpack.c.l.b16 %v1654
        %v1722 = vunpack.c.l.b16 %v1656
        %v1723 = vunpack.c.l.b16 %v1657
        %v1724 = vunpack.c.l.b16 %v1659
        %v1725 = vunpack.c.l.b16 %v1660
        %v1726 = vpack.c.b16 %v1695, %v1694
        %v1727 = vpack.c.b16 %v1697, %v1696
        %v1728 = vpack.c.b16 %v1699, %v1698
        %v1729 = vpack.c.b16 %v1701, %v1700
        %v1730 = vpack.c.b16 %v1703, %v1702
        %v1731 = vpack.c.b16 %v1705, %v1704
        %v1732 = vpack.c.b16 %v1707, %v1706
        %v1733 = vpack.c.b16 %v1709, %v1708
        %v1734 = vpack.c.b16 %v1711, %v1710
        %v1735 = vpack.c.b16 %v1713, %v1712
        %v1736 = vpack.c.b16 %v1715, %v1714
        %v1737 = vpack.c.b16 %v1717, %v1716
        %v1738 = vpack.c.b16 %v1719, %v1718
        %v1739 = vpack.c.b16 %v1721, %v1720
        %v1740 = vpack.c.b16 %v1723, %v1722
        %v1741 = vpack.c.b16 %v1725, %v1724
        %v1743 = vsel %vm681, %v1726, 0
        %v1746 = vsel %vm681, %v1727, 0
        %v1749 = vsel %vm681, %v1728, 0
        %v1752 = vsel %vm681, %v1729, 0
        %v1755 = vsel %vm681, %v1730, 0
        %v1758 = vsel %vm681, %v1731, 0
        %v1761 = vsel %vm681, %v1732, 0
        %v1764 = vsel %vm681, %v1733, 0
        %v1767 = vsel %vm681, %v1734, 0
        %v1770 = vsel %vm681, %v1735, 0
        %v1773 = vsel %vm681, %v1736, 0
        %v1776 = vsel %vm681, %v1737, 0
        %v1779 = vsel %vm681, %v1738, 0
        %v1782 = vsel %vm681, %v1739, 0
        %v1785 = vsel %vm681, %v1740, 0
        %v1788 = vsel %vm681, %v1741, 0
        %v1791 = vsel %vm730, %v189, 0
        %1793 = vmatprep.subr.bf16.mxu0 0
        %1794 = vmatpush1.bf16.msra.mxu0 %v1791
        %1795 = vmatprep.subr.bf16.mxu0 0
        %1796 = vmatpush1.bf16.msra.mxu0 0
        %1797 = vmatprep.subr.bf16.mxu0 0
        %1798 = vmatpush1.bf16.msra.mxu0 0
        %1799 = vmatprep.subr.bf16.mxu0 0
        %1800 = vmatpush1.bf16.msra.mxu0 0
        %1801 = vmatprep.subr.bf16.mxu0 0
        %1802 = vmatpush1.bf16.msra.mxu0 0
        %1803 = vmatprep.subr.bf16.mxu0 0
        %1804 = vmatpush1.bf16.msra.mxu0 0
        %1805 = vmatprep.subr.bf16.mxu0 0
        %1806 = vmatpush1.bf16.msra.mxu0 0
        %1807 = vmatprep.subr.bf16.mxu0 0
        %1808 = vmatpush1.bf16.msra.mxu0 0
        %1809 = vmatprep.subr.bf16.mxu0 0
        %1810 = vmatpush1.bf16.msra.mxu0 0
        %1811 = vmatprep.subr.bf16.mxu0 0
        %1812 = vmatpush1.bf16.msra.mxu0 0
        %1813 = vmatprep.subr.bf16.mxu0 0
        %1814 = vmatpush1.bf16.msra.mxu0 0
        %1815 = vmatprep.subr.bf16.mxu0 0
        %1816 = vmatpush1.bf16.msra.mxu0 0
        %1817 = vmatprep.subr.bf16.mxu0 0
        %1818 = vmatpush1.bf16.msra.mxu0 0
        %1819 = vmatprep.subr.bf16.mxu0 0
        %1820 = vmatpush1.bf16.msra.mxu0 0
        %1821 = vmatprep.subr.bf16.mxu0 0
        %1822 = vmatpush1.bf16.msra.mxu0 0
        %1823 = vmatprep.subr.bf16.mxu0 0
        %1824 = vmatpush1.bf16.msra.mxu0 0
        %1825 = vmatprep.mubr.bf16.mxu0 0
        %1826 = vmatmul.mubr.bf16.gmra.mrb[0].mxu0 %v1743
        %v1827 = vpop.f32.mrb[0].mxu0
        %v1828 = vadd.f32 0.0, %v1827
        %v1829 = vpop.f32.mrb[0].mxu0
        %v1830 = vpop.f32.mrb[0].mxu0
        %v1831 = vadd.f32 0.0, %v1830
        %v1832 = vpop.f32.mrb[0].mxu0
        %1833 = vmatprep.mubr.bf16.mxu0 0
        %1834 = vmatmul.mubr.bf16.gmra.mrb[0].mxu0 %v1746
        %v1835 = vpop.f32.mrb[0].mxu0
        %v1836 = vadd.f32 0.0, %v1835
        %v1837 = vpop.f32.mrb[0].mxu0
        %v1838 = vpop.f32.mrb[0].mxu0
        %v1839 = vadd.f32 0.0, %v1838
        %v1840 = vpop.f32.mrb[0].mxu0
        %1841 = vmatprep.mubr.bf16.mxu0 0
        %1842 = vmatmul.mubr.bf16.gmra.mrb[0].mxu0 %v1749
        %v1843 = vpop.f32.mrb[0].mxu0
        %v1844 = vadd.f32 0.0, %v1843
        %v1845 = vpop.f32.mrb[0].mxu0
        %v1846 = vpop.f32.mrb[0].mxu0
        %v1847 = vadd.f32 0.0, %v1846
        %v1848 = vpop.f32.mrb[0].mxu0
        %1849 = vmatprep.mubr.bf16.mxu0 0
        %1850 = vmatmul.mubr.bf16.gmra.mrb[0].mxu0 %v1752
        %v1851 = vpop.f32.mrb[0].mxu0
        %v1852 = vadd.f32 0.0, %v1851
        %v1853 = vpop.f32.mrb[0].mxu0
        %v1854 = vpop.f32.mrb[0].mxu0
        %v1855 = vadd.f32 0.0, %v1854
        %v1856 = vpop.f32.mrb[0].mxu0
        %1857 = vmatprep.mubr.bf16.mxu0 0
        %1858 = vmatmul.mubr.bf16.gmra.mrb[0].mxu0 %v1755
        %v1859 = vpop.f32.mrb[0].mxu0
        %v1860 = vadd.f32 0.0, %v1859
        %v1861 = vpop.f32.mrb[0].mxu0
        %v1862 = vpop.f32.mrb[0].mxu0
        %v1863 = vadd.f32 0.0, %v1862
        %v1864 = vpop.f32.mrb[0].mxu0
        %1865 = vmatprep.mubr.bf16.mxu0 0
        %1866 = vmatmul.mubr.bf16.gmra.mrb[0].mxu0 %v1758
        %v1867 = vpop.f32.mrb[0].mxu0
        %v1868 = vadd.f32 0.0, %v1867
        %v1869 = vpop.f32.mrb[0].mxu0
        %v1870 = vpop.f32.mrb[0].mxu0
        %v1871 = vadd.f32 0.0, %v1870
        %v1872 = vpop.f32.mrb[0].mxu0
        %1873 = vmatprep.mubr.bf16.mxu0 0
        %1874 = vmatmul.mubr.bf16.gmra.mrb[0].mxu0 %v1761
        %v1875 = vpop.f32.mrb[0].mxu0
        %v1876 = vadd.f32 0.0, %v1875
        %v1877 = vpop.f32.mrb[0].mxu0
        %v1878 = vpop.f32.mrb[0].mxu0
        %v1879 = vadd.f32 0.0, %v1878
        %v1880 = vpop.f32.mrb[0].mxu0
        %1881 = vmatprep.mubr.bf16.mxu0 0
        %1882 = vmatmul.mubr.bf16.gmra.mrb[0].mxu0 %v1764
        %v1883 = vpop.f32.mrb[0].mxu0
        %v1884 = vadd.f32 0.0, %v1883
        %v1885 = vpop.f32.mrb[0].mxu0
        %v1886 = vpop.f32.mrb[0].mxu0
        %v1887 = vadd.f32 0.0, %v1886
        %v1888 = vpop.f32.mrb[0].mxu0
        %1889 = vmatprep.mubr.bf16.mxu0 0
        %1890 = vmatmul.mubr.bf16.gmra.mrb[0].mxu0 %v1767
        %v1891 = vpop.f32.mrb[0].mxu0
        %v1892 = vadd.f32 0.0, %v1891
        %v1893 = vpop.f32.mrb[0].mxu0
        %v1894 = vpop.f32.mrb[0].mxu0
        %v1895 = vadd.f32 0.0, %v1894
        %v1896 = vpop.f32.mrb[0].mxu0
        %1897 = vmatprep.mubr.bf16.mxu0 0
        %1898 = vmatmul.mubr.bf16.gmra.mrb[0].mxu0 %v1770
        %v1899 = vpop.f32.mrb[0].mxu0
        %v1900 = vadd.f32 0.0, %v1899
        %v1901 = vpop.f32.mrb[0].mxu0
        %v1902 = vpop.f32.mrb[0].mxu0
        %v1903 = vadd.f32 0.0, %v1902
        %v1904 = vpop.f32.mrb[0].mxu0
        %1905 = vmatprep.mubr.bf16.mxu0 0
        %1906 = vmatmul.mubr.bf16.gmra.mrb[0].mxu0 %v1773
        %v1907 = vpop.f32.mrb[0].mxu0
        %v1908 = vadd.f32 0.0, %v1907
        %v1909 = vpop.f32.mrb[0].mxu0
        %v1910 = vpop.f32.mrb[0].mxu0
        %v1911 = vadd.f32 0.0, %v1910
        %v1912 = vpop.f32.mrb[0].mxu0
        %1913 = vmatprep.mubr.bf16.mxu0 0
        %1914 = vmatmul.mubr.bf16.gmra.mrb[0].mxu0 %v1776
        %v1915 = vpop.f32.mrb[0].mxu0
        %v1916 = vadd.f32 0.0, %v1915
        %v1917 = vpop.f32.mrb[0].mxu0
        %v1918 = vpop.f32.mrb[0].mxu0
        %v1919 = vadd.f32 0.0, %v1918
        %v1920 = vpop.f32.mrb[0].mxu0
        %1921 = vmatprep.mubr.bf16.mxu0 0
        %1922 = vmatmul.mubr.bf16.gmra.mrb[0].mxu0 %v1779
        %v1923 = vpop.f32.mrb[0].mxu0
        %v1924 = vadd.f32 0.0, %v1923
        %v1925 = vpop.f32.mrb[0].mxu0
        %v1926 = vpop.f32.mrb[0].mxu0
        %v1927 = vadd.f32 0.0, %v1926
        %v1928 = vpop.f32.mrb[0].mxu0
        %1929 = vmatprep.mubr.bf16.mxu0 0
        %1930 = vmatmul.mubr.bf16.gmra.mrb[0].mxu0 %v1782
        %v1931 = vpop.f32.mrb[0].mxu0
        %v1932 = vadd.f32 0.0, %v1931
        %v1933 = vpop.f32.mrb[0].mxu0
        %v1934 = vpop.f32.mrb[0].mxu0
        %v1935 = vadd.f32 0.0, %v1934
        %v1936 = vpop.f32.mrb[0].mxu0
        %1937 = vmatprep.mubr.bf16.mxu0 0
        %1938 = vmatmul.mubr.bf16.gmra.mrb[0].mxu0 %v1785
        %v1939 = vpop.f32.mrb[0].mxu0
        %v1940 = vadd.f32 0.0, %v1939
        %v1941 = vpop.f32.mrb[0].mxu0
        %v1942 = vpop.f32.mrb[0].mxu0
        %v1943 = vadd.f32 0.0, %v1942
        %v1944 = vpop.f32.mrb[0].mxu0
        %1945 = vmatprep.mubr.bf16.mxu0 0
        %1946 = vmatmul.mubr.bf16.gmra.mrb[0].mxu0 %v1788
        %v1947 = vpop.f32.mrb[0].mxu0
        %v1948 = vadd.f32 0.0, %v1947
        %v1949 = vpop.f32.mrb[0].mxu0
        %v1950 = vpop.f32.mrb[0].mxu0
        %v1951 = vadd.f32 0.0, %v1950
        %v1952 = vpop.f32.mrb[0].mxu0
        %1953 = vdwg.mxu0
        %v1954 = vadd.f32 %v1578, %v1828
        %v1955 = vadd.f32 %v1579, %v1831
        %v1956 = vadd.f32 %v1580, %v1836
        %v1957 = vadd.f32 %v1581, %v1839
        %v1958 = vadd.f32 %v1582, %v1844
        %v1959 = vadd.f32 %v1583, %v1847
        %v1960 = vadd.f32 %v1584, %v1852
        %v1961 = vadd.f32 %v1585, %v1855
        %v1962 = vadd.f32 %v1586, %v1860
        %v1963 = vadd.f32 %v1587, %v1863
        %v1964 = vadd.f32 %v1588, %v1868
        %v1965 = vadd.f32 %v1589, %v1871
        %v1966 = vadd.f32 %v1590, %v1876
        %v1967 = vadd.f32 %v1591, %v1879
        %v1968 = vadd.f32 %v1592, %v1884
        %v1969 = vadd.f32 %v1593, %v1887
        %v1970 = vadd.f32 %v1594, %v1892
        %v1971 = vadd.f32 %v1595, %v1895
        %v1972 = vadd.f32 %v1596, %v1900
        %v1973 = vadd.f32 %v1597, %v1903
        %v1974 = vadd.f32 %v1598, %v1908
        %v1975 = vadd.f32 %v1599, %v1911
        %v1976 = vadd.f32 %v1600, %v1916
        %v1977 = vadd.f32 %v1601, %v1919
        %v1978 = vadd.f32 %v1602, %v1924
        %v1979 = vadd.f32 %v1603, %v1927
        %v1980 = vadd.f32 %v1604, %v1932
        %v1981 = vadd.f32 %v1605, %v1935
        %v1982 = vadd.f32 %v1606, %v1940
        %v1983 = vadd.f32 %v1607, %v1943
        %v1984 = vadd.f32 %v1608, %v1948
        %v1985 = vadd.f32 %v1609, %v1951
        %v1987 = vshrl.u32 %v1614, 16
        %v1989 = vrot.slane %v1987, 4
        %v1990 = vshll.u32 %v1614, 16
        %v1992 = vrot.slane %v1990, 5
        %v1993 = vor.u32 %v1989, %v1992
        %v1994 = vrot.slane %v1993, 4
        %v1996 = vshll.u32 %v1615, 16
        %v1998 = vrot.slane %v1996, 5
        %v1999 = vsel %vm248, %v1994, %v1998
        %v2000 = vshrl.u32 %v1615, 16
        %v2002 = vrot.slane %v2000, 4
        %v2003 = vor.u32 %v2002, %v1998
        %v2004 = vrot.slane %v2003, 4
        %v2006 = vshll.u32 %v1616, 16
        %v2008 = vrot.slane %v2006, 5
        %v2009 = vsel %vm248, %v2004, %v2008
        %v2011 = vshrl.u32 %v1617, 16
        %v2013 = vrot.slane %v2011, 4
        %v2014 = vshll.u32 %v1617, 16
        %v2016 = vrot.slane %v2014, 5
        %v2017 = vor.u32 %v2013, %v2016
        %v2018 = vrot.slane %v2017, 4
        %v2020 = vshll.u32 %v1618, 16
        %v2022 = vrot.slane %v2020, 5
        %v2023 = vsel %vm248, %v2018, %v2022
        %v2024 = vshrl.u32 %v1618, 16
        %v2026 = vrot.slane %v2024, 4
        %v2027 = vor.u32 %v2026, %v2022
        %v2028 = vrot.slane %v2027, 4
        %v2030 = vshll.u32 %v1619, 16
        %v2032 = vrot.slane %v2030, 5
        %v2033 = vsel %vm248, %v2028, %v2032
        %v2035 = vshrl.u32 %v1620, 16
        %v2037 = vrot.slane %v2035, 4
        %v2038 = vshll.u32 %v1620, 16
        %v2040 = vrot.slane %v2038, 5
        %v2041 = vor.u32 %v2037, %v2040
        %v2042 = vrot.slane %v2041, 4
        %v2044 = vshll.u32 %v1621, 16
        %v2046 = vrot.slane %v2044, 5
        %v2047 = vsel %vm248, %v2042, %v2046
        %v2048 = vshrl.u32 %v1621, 16
        %v2050 = vrot.slane %v2048, 4
        %v2051 = vor.u32 %v2050, %v2046
        %v2052 = vrot.slane %v2051, 4
        %v2054 = vshll.u32 %v1622, 16
        %v2056 = vrot.slane %v2054, 5
        %v2057 = vsel %vm248, %v2052, %v2056
        %v2059 = vshrl.u32 %v1623, 16
        %v2061 = vrot.slane %v2059, 4
        %v2062 = vshll.u32 %v1623, 16
        %v2064 = vrot.slane %v2062, 5
        %v2065 = vor.u32 %v2061, %v2064
        %v2066 = vrot.slane %v2065, 4
        %v2068 = vshll.u32 %v1624, 16
        %v2070 = vrot.slane %v2068, 5
        %v2071 = vsel %vm248, %v2066, %v2070
        %v2072 = vshrl.u32 %v1624, 16
        %v2074 = vrot.slane %v2072, 4
        %v2075 = vor.u32 %v2074, %v2070
        %v2076 = vrot.slane %v2075, 4
        %v2078 = vshll.u32 %v1625, 16
        %v2080 = vrot.slane %v2078, 5
        %v2081 = vsel %vm248, %v2076, %v2080
        %v2083 = vshrl.u32 %v1626, 16
        %v2085 = vrot.slane %v2083, 4
        %v2086 = vshll.u32 %v1626, 16
        %v2088 = vrot.slane %v2086, 5
        %v2089 = vor.u32 %v2085, %v2088
        %v2090 = vrot.slane %v2089, 4
        %v2092 = vshll.u32 %v1627, 16
        %v2094 = vrot.slane %v2092, 5
        %v2095 = vsel %vm248, %v2090, %v2094
        %v2096 = vshrl.u32 %v1627, 16
        %v2098 = vrot.slane %v2096, 4
        %v2099 = vor.u32 %v2098, %v2094
        %v2100 = vrot.slane %v2099, 4
        %v2102 = vshll.u32 %v1628, 16
        %v2104 = vrot.slane %v2102, 5
        %v2105 = vsel %vm248, %v2100, %v2104
        %v2107 = vshrl.u32 %v1629, 16
        %v2109 = vrot.slane %v2107, 4
        %v2110 = vshll.u32 %v1629, 16
        %v2112 = vrot.slane %v2110, 5
        %v2113 = vor.u32 %v2109, %v2112
        %v2114 = vrot.slane %v2113, 4
        %v2116 = vshll.u32 %v1630, 16
        %v2118 = vrot.slane %v2116, 5
        %v2119 = vsel %vm248, %v2114, %v2118
        %v2120 = vshrl.u32 %v1630, 16
        %v2122 = vrot.slane %v2120, 4
        %v2123 = vor.u32 %v2122, %v2118
        %v2124 = vrot.slane %v2123, 4
        %v2126 = vshll.u32 %v1631, 16
        %v2128 = vrot.slane %v2126, 5
        %v2129 = vsel %vm248, %v2124, %v2128
        %v2131 = vshrl.u32 %v1632, 16
        %v2133 = vrot.slane %v2131, 4
        %v2134 = vshll.u32 %v1632, 16
        %v2136 = vrot.slane %v2134, 5
        %v2137 = vor.u32 %v2133, %v2136
        %v2138 = vrot.slane %v2137, 4
        %v2140 = vshll.u32 %v1633, 16
        %v2142 = vrot.slane %v2140, 5
        %v2143 = vsel %vm248, %v2138, %v2142
        %v2144 = vshrl.u32 %v1633, 16
        %v2146 = vrot.slane %v2144, 4
        %v2147 = vor.u32 %v2146, %v2142
        %v2148 = vrot.slane %v2147, 4
        %v2150 = vshll.u32 %v1634, 16
        %v2152 = vrot.slane %v2150, 5
        %v2153 = vsel %vm248, %v2148, %v2152
        %v2155 = vshrl.u32 %v1635, 16
        %v2157 = vrot.slane %v2155, 4
        %v2158 = vshll.u32 %v1635, 16
        %v2160 = vrot.slane %v2158, 5
        %v2161 = vor.u32 %v2157, %v2160
        %v2162 = vrot.slane %v2161, 4
        %v2164 = vshll.u32 %v1636, 16
        %v2166 = vrot.slane %v2164, 5
        %v2167 = vsel %vm248, %v2162, %v2166
        %v2168 = vshrl.u32 %v1636, 16
        %v2170 = vrot.slane %v2168, 4
        %v2171 = vor.u32 %v2170, %v2166
        %v2172 = vrot.slane %v2171, 4
        %v2174 = vshll.u32 %v1637, 16
        %v2176 = vrot.slane %v2174, 5
        %v2177 = vsel %vm248, %v2172, %v2176
        %v2179 = vshrl.u32 %v1638, 16
        %v2181 = vrot.slane %v2179, 4
        %v2182 = vshll.u32 %v1638, 16
        %v2184 = vrot.slane %v2182, 5
        %v2185 = vor.u32 %v2181, %v2184
        %v2186 = vrot.slane %v2185, 4
        %v2188 = vshll.u32 %v1639, 16
        %v2190 = vrot.slane %v2188, 5
        %v2191 = vsel %vm248, %v2186, %v2190
        %v2192 = vshrl.u32 %v1639, 16
        %v2194 = vrot.slane %v2192, 4
        %v2195 = vor.u32 %v2194, %v2190
        %v2196 = vrot.slane %v2195, 4
        %v2198 = vshll.u32 %v1640, 16
        %v2200 = vrot.slane %v2198, 5
        %v2201 = vsel %vm248, %v2196, %v2200
        %v2203 = vshrl.u32 %v1641, 16
        %v2205 = vrot.slane %v2203, 4
        %v2206 = vshll.u32 %v1641, 16
        %v2208 = vrot.slane %v2206, 5
        %v2209 = vor.u32 %v2205, %v2208
        %v2210 = vrot.slane %v2209, 4
        %v2212 = vshll.u32 %v1642, 16
        %v2214 = vrot.slane %v2212, 5
        %v2215 = vsel %vm248, %v2210, %v2214
        %v2216 = vshrl.u32 %v1642, 16
        %v2218 = vrot.slane %v2216, 4
        %v2219 = vor.u32 %v2218, %v2214
        %v2220 = vrot.slane %v2219, 4
        %v2222 = vshll.u32 %v1643, 16
        %v2224 = vrot.slane %v2222, 5
        %v2225 = vsel %vm248, %v2220, %v2224
        %v2227 = vshrl.u32 %v1644, 16
        %v2229 = vrot.slane %v2227, 4
        %v2230 = vshll.u32 %v1644, 16
        %v2232 = vrot.slane %v2230, 5
        %v2233 = vor.u32 %v2229, %v2232
        %v2234 = vrot.slane %v2233, 4
        %v2236 = vshll.u32 %v1645, 16
        %v2238 = vrot.slane %v2236, 5
        %v2239 = vsel %vm248, %v2234, %v2238
        %v2240 = vshrl.u32 %v1645, 16
        %v2242 = vrot.slane %v2240, 4
        %v2243 = vor.u32 %v2242, %v2238
        %v2244 = vrot.slane %v2243, 4
        %v2246 = vshll.u32 %v1646, 16
        %v2248 = vrot.slane %v2246, 5
        %v2249 = vsel %vm248, %v2244, %v2248
        %v2251 = vshrl.u32 %v1647, 16
        %v2253 = vrot.slane %v2251, 4
        %v2254 = vshll.u32 %v1647, 16
        %v2256 = vrot.slane %v2254, 5
        %v2257 = vor.u32 %v2253, %v2256
        %v2258 = vrot.slane %v2257, 4
        %v2260 = vshll.u32 %v1648, 16
        %v2262 = vrot.slane %v2260, 5
        %v2263 = vsel %vm248, %v2258, %v2262
        %v2264 = vshrl.u32 %v1648, 16
        %v2266 = vrot.slane %v2264, 4
        %v2267 = vor.u32 %v2266, %v2262
        %v2268 = vrot.slane %v2267, 4
        %v2270 = vshll.u32 %v1649, 16
        %v2272 = vrot.slane %v2270, 5
        %v2273 = vsel %vm248, %v2268, %v2272
        %v2275 = vshrl.u32 %v1650, 16
        %v2277 = vrot.slane %v2275, 4
        %v2278 = vshll.u32 %v1650, 16
        %v2280 = vrot.slane %v2278, 5
        %v2281 = vor.u32 %v2277, %v2280
        %v2282 = vrot.slane %v2281, 4
        %v2284 = vshll.u32 %v1651, 16
        %v2286 = vrot.slane %v2284, 5
        %v2287 = vsel %vm248, %v2282, %v2286
        %v2288 = vshrl.u32 %v1651, 16
        %v2290 = vrot.slane %v2288, 4
        %v2291 = vor.u32 %v2290, %v2286
        %v2292 = vrot.slane %v2291, 4
        %v2294 = vshll.u32 %v1652, 16
        %v2296 = vrot.slane %v2294, 5
        %v2297 = vsel %vm248, %v2292, %v2296
        %v2299 = vshrl.u32 %v1653, 16
        %v2301 = vrot.slane %v2299, 4
        %v2302 = vshll.u32 %v1653, 16
        %v2304 = vrot.slane %v2302, 5
        %v2305 = vor.u32 %v2301, %v2304
        %v2306 = vrot.slane %v2305, 4
        %v2308 = vshll.u32 %v1654, 16
        %v2310 = vrot.slane %v2308, 5
        %v2311 = vsel %vm248, %v2306, %v2310
        %v2312 = vshrl.u32 %v1654, 16
        %v2314 = vrot.slane %v2312, 4
        %v2315 = vor.u32 %v2314, %v2310
        %v2316 = vrot.slane %v2315, 4
        %v2318 = vshll.u32 %v1655, 16
        %v2320 = vrot.slane %v2318, 5
        %v2321 = vsel %vm248, %v2316, %v2320
        %v2323 = vshrl.u32 %v1656, 16
        %v2325 = vrot.slane %v2323, 4
        %v2326 = vshll.u32 %v1656, 16
        %v2328 = vrot.slane %v2326, 5
        %v2329 = vor.u32 %v2325, %v2328
        %v2330 = vrot.slane %v2329, 4
        %v2332 = vshll.u32 %v1657, 16
        %v2334 = vrot.slane %v2332, 5
        %v2335 = vsel %vm248, %v2330, %v2334
        %v2336 = vshrl.u32 %v1657, 16
        %v2338 = vrot.slane %v2336, 4
        %v2339 = vor.u32 %v2338, %v2334
        %v2340 = vrot.slane %v2339, 4
        %v2342 = vshll.u32 %v1658, 16
        %v2344 = vrot.slane %v2342, 5
        %v2345 = vsel %vm248, %v2340, %v2344
        %v2347 = vshrl.u32 %v1659, 16
        %v2349 = vrot.slane %v2347, 4
        %v2350 = vshll.u32 %v1659, 16
        %v2352 = vrot.slane %v2350, 5
        %v2353 = vor.u32 %v2349, %v2352
        %v2354 = vrot.slane %v2353, 4
        %v2356 = vshll.u32 %v1660, 16
        %v2358 = vrot.slane %v2356, 5
        %v2359 = vsel %vm248, %v2354, %v2358
        %v2360 = vshrl.u32 %v1660, 16
        %v2362 = vrot.slane %v2360, 4
        %v2363 = vor.u32 %v2362, %v2358
        %v2364 = vrot.slane %v2363, 4
        %v2366 = vshll.u32 %v1661, 16
        %v2368 = vrot.slane %v2366, 5
        %v2369 = vsel %vm248, %v2364, %v2368
        %v2370 = vunpack.c.l.b16 %v1999
        %v2371 = vunpack.c.l.b16 %v2009
        %v2372 = vunpack.c.l.b16 %v2023
        %v2373 = vunpack.c.l.b16 %v2033
        %v2374 = vunpack.c.l.b16 %v2047
        %v2375 = vunpack.c.l.b16 %v2057
        %v2376 = vunpack.c.l.b16 %v2071
        %v2377 = vunpack.c.l.b16 %v2081
        %v2378 = vunpack.c.l.b16 %v2095
        %v2379 = vunpack.c.l.b16 %v2105
        %v2380 = vunpack.c.l.b16 %v2119
        %v2381 = vunpack.c.l.b16 %v2129
        %v2382 = vunpack.c.l.b16 %v2143
        %v2383 = vunpack.c.l.b16 %v2153
        %v2384 = vunpack.c.l.b16 %v2167
        %v2385 = vunpack.c.l.b16 %v2177
        %v2386 = vunpack.c.l.b16 %v2191
        %v2387 = vunpack.c.l.b16 %v2201
        %v2388 = vunpack.c.l.b16 %v2215
        %v2389 = vunpack.c.l.b16 %v2225
        %v2390 = vunpack.c.l.b16 %v2239
        %v2391 = vunpack.c.l.b16 %v2249
        %v2392 = vunpack.c.l.b16 %v2263
        %v2393 = vunpack.c.l.b16 %v2273
        %v2394 = vunpack.c.l.b16 %v2287
        %v2395 = vunpack.c.l.b16 %v2297
        %v2396 = vunpack.c.l.b16 %v2311
        %v2397 = vunpack.c.l.b16 %v2321
        %v2398 = vunpack.c.l.b16 %v2335
        %v2399 = vunpack.c.l.b16 %v2345
        %v2400 = vunpack.c.l.b16 %v2359
        %v2401 = vunpack.c.l.b16 %v2369
        %v2402 = vpack.c.b16 %v2371, %v2370
        %v2403 = vpack.c.b16 %v2373, %v2372
        %v2404 = vpack.c.b16 %v2375, %v2374
        %v2405 = vpack.c.b16 %v2377, %v2376
        %v2406 = vpack.c.b16 %v2379, %v2378
        %v2407 = vpack.c.b16 %v2381, %v2380
        %v2408 = vpack.c.b16 %v2383, %v2382
        %v2409 = vpack.c.b16 %v2385, %v2384
        %v2410 = vpack.c.b16 %v2387, %v2386
        %v2411 = vpack.c.b16 %v2389, %v2388
        %v2412 = vpack.c.b16 %v2391, %v2390
        %v2413 = vpack.c.b16 %v2393, %v2392
        %v2414 = vpack.c.b16 %v2395, %v2394
        %v2415 = vpack.c.b16 %v2397, %v2396
        %v2416 = vpack.c.b16 %v2399, %v2398
        %v2417 = vpack.c.b16 %v2401, %v2400
        %v2419 = vsel %vm681, %v2402, 0
        %v2422 = vsel %vm681, %v2403, 0
        %v2425 = vsel %vm681, %v2404, 0
        %v2428 = vsel %vm681, %v2405, 0
        %v2431 = vsel %vm681, %v2406, 0
        %v2434 = vsel %vm681, %v2407, 0
        %v2437 = vsel %vm681, %v2408, 0
        %v2440 = vsel %vm681, %v2409, 0
        %v2443 = vsel %vm681, %v2410, 0
        %v2446 = vsel %vm681, %v2411, 0
        %v2449 = vsel %vm681, %v2412, 0
        %v2452 = vsel %vm681, %v2413, 0
        %v2455 = vsel %vm681, %v2414, 0
        %v2458 = vsel %vm681, %v2415, 0
        %v2461 = vsel %vm681, %v2416, 0
        %v2464 = vsel %vm681, %v2417, 0
        %v2467 = vsel %vm730, %v190, 0
        %2469 = vmatprep.subr.bf16.mxu0 0
        %2470 = vmatpush1.bf16.msra.mxu0 %v2467
        %2471 = vmatprep.subr.bf16.mxu0 0
        %2472 = vmatpush1.bf16.msra.mxu0 0
        %2473 = vmatprep.subr.bf16.mxu0 0
        %2474 = vmatpush1.bf16.msra.mxu0 0
        %2475 = vmatprep.subr.bf16.mxu0 0
        %2476 = vmatpush1.bf16.msra.mxu0 0
        %2477 = vmatprep.subr.bf16.mxu0 0
        %2478 = vmatpush1.bf16.msra.mxu0 0
        %2479 = vmatprep.subr.bf16.mxu0 0
        %2480 = vmatpush1.bf16.msra.mxu0 0
        %2481 = vmatprep.subr.bf16.mxu0 0
        %2482 = vmatpush1.bf16.msra.mxu0 0
        %2483 = vmatprep.subr.bf16.mxu0 0
        %2484 = vmatpush1.bf16.msra.mxu0 0
        %2485 = vmatprep.subr.bf16.mxu0 0
        %2486 = vmatpush1.bf16.msra.mxu0 0
        %2487 = vmatprep.subr.bf16.mxu0 0
        %2488 = vmatpush1.bf16.msra.mxu0 0
        %2489 = vmatprep.subr.bf16.mxu0 0
        %2490 = vmatpush1.bf16.msra.mxu0 0
        %2491 = vmatprep.subr.bf16.mxu0 0
        %2492 = vmatpush1.bf16.msra.mxu0 0
        %2493 = vmatprep.subr.bf16.mxu0 0
        %2494 = vmatpush1.bf16.msra.mxu0 0
        %2495 = vmatprep.subr.bf16.mxu0 0
        %2496 = vmatpush1.bf16.msra.mxu0 0
        %2497 = vmatprep.subr.bf16.mxu0 0
        %2498 = vmatpush1.bf16.msra.mxu0 0
        %2499 = vmatprep.subr.bf16.mxu0 0
        %2500 = vmatpush1.bf16.msra.mxu0 0
        %2501 = vmatprep.mubr.bf16.mxu0 0
        %2502 = vmatmul.mubr.bf16.gmra.mrb[0].mxu0 %v2419
        %v2503 = vpop.f32.mrb[0].mxu0
        %v2504 = vadd.f32 0.0, %v2503
        %v2505 = vpop.f32.mrb[0].mxu0
        %v2506 = vpop.f32.mrb[0].mxu0
        %v2507 = vadd.f32 0.0, %v2506
        %v2508 = vpop.f32.mrb[0].mxu0
        %2509 = vmatprep.mubr.bf16.mxu0 0
        %2510 = vmatmul.mubr.bf16.gmra.mrb[0].mxu0 %v2422
        %v2511 = vpop.f32.mrb[0].mxu0
        %v2512 = vadd.f32 0.0, %v2511
        %v2513 = vpop.f32.mrb[0].mxu0
        %v2514 = vpop.f32.mrb[0].mxu0
        %v2515 = vadd.f32 0.0, %v2514
        %v2516 = vpop.f32.mrb[0].mxu0
        %2517 = vmatprep.mubr.bf16.mxu0 0
        %2518 = vmatmul.mubr.bf16.gmra.mrb[0].mxu0 %v2425
        %v2519 = vpop.f32.mrb[0].mxu0
        %v2520 = vadd.f32 0.0, %v2519
        %v2521 = vpop.f32.mrb[0].mxu0
        %v2522 = vpop.f32.mrb[0].mxu0
        %v2523 = vadd.f32 0.0, %v2522
        %v2524 = vpop.f32.mrb[0].mxu0
        %2525 = vmatprep.mubr.bf16.mxu0 0
        %2526 = vmatmul.mubr.bf16.gmra.mrb[0].mxu0 %v2428
        %v2527 = vpop.f32.mrb[0].mxu0
        %v2528 = vadd.f32 0.0, %v2527
        %v2529 = vpop.f32.mrb[0].mxu0
        %v2530 = vpop.f32.mrb[0].mxu0
        %v2531 = vadd.f32 0.0, %v2530
        %v2532 = vpop.f32.mrb[0].mxu0
        %2533 = vmatprep.mubr.bf16.mxu0 0
        %2534 = vmatmul.mubr.bf16.gmra.mrb[0].mxu0 %v2431
        %v2535 = vpop.f32.mrb[0].mxu0
        %v2536 = vadd.f32 0.0, %v2535
        %v2537 = vpop.f32.mrb[0].mxu0
        %v2538 = vpop.f32.mrb[0].mxu0
        %v2539 = vadd.f32 0.0, %v2538
        %v2540 = vpop.f32.mrb[0].mxu0
        %2541 = vmatprep.mubr.bf16.mxu0 0
        %2542 = vmatmul.mubr.bf16.gmra.mrb[0].mxu0 %v2434
        %v2543 = vpop.f32.mrb[0].mxu0
        %v2544 = vadd.f32 0.0, %v2543
        %v2545 = vpop.f32.mrb[0].mxu0
        %v2546 = vpop.f32.mrb[0].mxu0
        %v2547 = vadd.f32 0.0, %v2546
        %v2548 = vpop.f32.mrb[0].mxu0
        %2549 = vmatprep.mubr.bf16.mxu0 0
        %2550 = vmatmul.mubr.bf16.gmra.mrb[0].mxu0 %v2437
        %v2551 = vpop.f32.mrb[0].mxu0
        %v2552 = vadd.f32 0.0, %v2551
        %v2553 = vpop.f32.mrb[0].mxu0
        %v2554 = vpop.f32.mrb[0].mxu0
        %v2555 = vadd.f32 0.0, %v2554
        %v2556 = vpop.f32.mrb[0].mxu0
        %2557 = vmatprep.mubr.bf16.mxu0 0
        %2558 = vmatmul.mubr.bf16.gmra.mrb[0].mxu0 %v2440
        %v2559 = vpop.f32.mrb[0].mxu0
        %v2560 = vadd.f32 0.0, %v2559
        %v2561 = vpop.f32.mrb[0].mxu0
        %v2562 = vpop.f32.mrb[0].mxu0
        %v2563 = vadd.f32 0.0, %v2562
        %v2564 = vpop.f32.mrb[0].mxu0
        %2565 = vmatprep.mubr.bf16.mxu0 0
        %2566 = vmatmul.mubr.bf16.gmra.mrb[0].mxu0 %v2443
        %v2567 = vpop.f32.mrb[0].mxu0
        %v2568 = vadd.f32 0.0, %v2567
        %v2569 = vpop.f32.mrb[0].mxu0
        %v2570 = vpop.f32.mrb[0].mxu0
        %v2571 = vadd.f32 0.0, %v2570
        %v2572 = vpop.f32.mrb[0].mxu0
        %2573 = vmatprep.mubr.bf16.mxu0 0
        %2574 = vmatmul.mubr.bf16.gmra.mrb[0].mxu0 %v2446
        %v2575 = vpop.f32.mrb[0].mxu0
        %v2576 = vadd.f32 0.0, %v2575
        %v2577 = vpop.f32.mrb[0].mxu0
        %v2578 = vpop.f32.mrb[0].mxu0
        %v2579 = vadd.f32 0.0, %v2578
        %v2580 = vpop.f32.mrb[0].mxu0
        %2581 = vmatprep.mubr.bf16.mxu0 0
        %2582 = vmatmul.mubr.bf16.gmra.mrb[0].mxu0 %v2449
        %v2583 = vpop.f32.mrb[0].mxu0
        %v2584 = vadd.f32 0.0, %v2583
        %v2585 = vpop.f32.mrb[0].mxu0
        %v2586 = vpop.f32.mrb[0].mxu0
        %v2587 = vadd.f32 0.0, %v2586
        %v2588 = vpop.f32.mrb[0].mxu0
        %2589 = vmatprep.mubr.bf16.mxu0 0
        %2590 = vmatmul.mubr.bf16.gmra.mrb[0].mxu0 %v2452
        %v2591 = vpop.f32.mrb[0].mxu0
        %v2592 = vadd.f32 0.0, %v2591
        %v2593 = vpop.f32.mrb[0].mxu0
        %v2594 = vpop.f32.mrb[0].mxu0
        %v2595 = vadd.f32 0.0, %v2594
        %v2596 = vpop.f32.mrb[0].mxu0
        %2597 = vmatprep.mubr.bf16.mxu0 0
        %2598 = vmatmul.mubr.bf16.gmra.mrb[0].mxu0 %v2455
        %v2599 = vpop.f32.mrb[0].mxu0
        %v2600 = vadd.f32 0.0, %v2599
        %v2601 = vpop.f32.mrb[0].mxu0
        %v2602 = vpop.f32.mrb[0].mxu0
        %v2603 = vadd.f32 0.0, %v2602
        %v2604 = vpop.f32.mrb[0].mxu0
        %2605 = vmatprep.mubr.bf16.mxu0 0
        %2606 = vmatmul.mubr.bf16.gmra.mrb[0].mxu0 %v2458
        %v2607 = vpop.f32.mrb[0].mxu0
        %v2608 = vadd.f32 0.0, %v2607
        %v2609 = vpop.f32.mrb[0].mxu0
        %v2610 = vpop.f32.mrb[0].mxu0
        %v2611 = vadd.f32 0.0, %v2610
        %v2612 = vpop.f32.mrb[0].mxu0
        %2613 = vmatprep.mubr.bf16.mxu0 0
        %2614 = vmatmul.mubr.bf16.gmra.mrb[0].mxu0 %v2461
        %v2615 = vpop.f32.mrb[0].mxu0
        %v2616 = vadd.f32 0.0, %v2615
        %v2617 = vpop.f32.mrb[0].mxu0
        %v2618 = vpop.f32.mrb[0].mxu0
        %v2619 = vadd.f32 0.0, %v2618
        %v2620 = vpop.f32.mrb[0].mxu0
        %2621 = vmatprep.mubr.bf16.mxu0 0
        %2622 = vmatmul.mubr.bf16.gmra.mrb[0].mxu0 %v2464
        %v2623 = vpop.f32.mrb[0].mxu0
        %v2624 = vadd.f32 0.0, %v2623
        %v2625 = vpop.f32.mrb[0].mxu0
        %v2626 = vpop.f32.mrb[0].mxu0
        %v2627 = vadd.f32 0.0, %v2626
        %v2628 = vpop.f32.mrb[0].mxu0
        %2629 = vdwg.mxu0
        %v2630 = vadd.f32 %v1954, %v2504
        %v2631 = vadd.f32 %v1955, %v2507
        %v2632 = vadd.f32 %v1956, %v2512
        %v2633 = vadd.f32 %v1957, %v2515
        %v2634 = vadd.f32 %v1958, %v2520
        %v2635 = vadd.f32 %v1959, %v2523
        %v2636 = vadd.f32 %v1960, %v2528
        %v2637 = vadd.f32 %v1961, %v2531
        %v2638 = vadd.f32 %v1962, %v2536
        %v2639 = vadd.f32 %v1963, %v2539
        %v2640 = vadd.f32 %v1964, %v2544
        %v2641 = vadd.f32 %v1965, %v2547
        %v2642 = vadd.f32 %v1966, %v2552
        %v2643 = vadd.f32 %v1967, %v2555
        %v2644 = vadd.f32 %v1968, %v2560
        %v2645 = vadd.f32 %v1969, %v2563
        %v2646 = vadd.f32 %v1970, %v2568
        %v2647 = vadd.f32 %v1971, %v2571
        %v2648 = vadd.f32 %v1972, %v2576
        %v2649 = vadd.f32 %v1973, %v2579
        %v2650 = vadd.f32 %v1974, %v2584
        %v2651 = vadd.f32 %v1975, %v2587
        %v2652 = vadd.f32 %v1976, %v2592
        %v2653 = vadd.f32 %v1977, %v2595
        %v2654 = vadd.f32 %v1978, %v2600
        %v2655 = vadd.f32 %v1979, %v2603
        %v2656 = vadd.f32 %v1980, %v2608
        %v2657 = vadd.f32 %v1981, %v2611
        %v2658 = vadd.f32 %v1982, %v2616
        %v2659 = vadd.f32 %v1983, %v2619
        %v2660 = vadd.f32 %v1984, %v2624
        %v2661 = vadd.f32 %v1985, %v2627
        %v2678 = vrot.slane %v1614, 5
        %v2679 = vrot.slane %v2678, 4
        %v2680 = vrot.slane %v1615, 5
        %v2681 = vsel %vm1205, %v2679, %v2680
        %v2682 = vrot.slane %v2680, 4
        %v2683 = vrot.slane %v1616, 5
        %v2684 = vsel %vm1205, %v2682, %v2683
        %v2685 = vrot.slane %v1617, 5
        %v2686 = vrot.slane %v2685, 4
        %v2687 = vrot.slane %v1618, 5
        %v2688 = vsel %vm1205, %v2686, %v2687
        %v2689 = vrot.slane %v2687, 4
        %v2690 = vrot.slane %v1619, 5
        %v2691 = vsel %vm1205, %v2689, %v2690
        %v2692 = vrot.slane %v1620, 5
        %v2693 = vrot.slane %v2692, 4
        %v2694 = vrot.slane %v1621, 5
        %v2695 = vsel %vm1205, %v2693, %v2694
        %v2696 = vrot.slane %v2694, 4
        %v2697 = vrot.slane %v1622, 5
        %v2698 = vsel %vm1205, %v2696, %v2697
        %v2699 = vrot.slane %v1623, 5
        %v2700 = vrot.slane %v2699, 4
        %v2701 = vrot.slane %v1624, 5
        %v2702 = vsel %vm1205, %v2700, %v2701
        %v2703 = vrot.slane %v2701, 4
        %v2704 = vrot.slane %v1625, 5
        %v2705 = vsel %vm1205, %v2703, %v2704
        %v2706 = vrot.slane %v1626, 5
        %v2707 = vrot.slane %v2706, 4
        %v2708 = vrot.slane %v1627, 5
        %v2709 = vsel %vm1205, %v2707, %v2708
        %v2710 = vrot.slane %v2708, 4
        %v2711 = vrot.slane %v1628, 5
        %v2712 = vsel %vm1205, %v2710, %v2711
        %v2713 = vrot.slane %v1629, 5
        %v2714 = vrot.slane %v2713, 4
        %v2715 = vrot.slane %v1630, 5
        %v2716 = vsel %vm1205, %v2714, %v2715
        %v2717 = vrot.slane %v2715, 4
        %v2718 = vrot.slane %v1631, 5
        %v2719 = vsel %vm1205, %v2717, %v2718
        %v2720 = vrot.slane %v1632, 5
        %v2721 = vrot.slane %v2720, 4
        %v2722 = vrot.slane %v1633, 5
        %v2723 = vsel %vm1205, %v2721, %v2722
        %v2724 = vrot.slane %v2722, 4
        %v2725 = vrot.slane %v1634, 5
        %v2726 = vsel %vm1205, %v2724, %v2725
        %v2727 = vrot.slane %v1635, 5
        %v2728 = vrot.slane %v2727, 4
        %v2729 = vrot.slane %v1636, 5
        %v2730 = vsel %vm1205, %v2728, %v2729
        %v2731 = vrot.slane %v2729, 4
        %v2732 = vrot.slane %v1637, 5
        %v2733 = vsel %vm1205, %v2731, %v2732
        %v2734 = vrot.slane %v1638, 5
        %v2735 = vrot.slane %v2734, 4
        %v2736 = vrot.slane %v1639, 5
        %v2737 = vsel %vm1205, %v2735, %v2736
        %v2738 = vrot.slane %v2736, 4
        %v2739 = vrot.slane %v1640, 5
        %v2740 = vsel %vm1205, %v2738, %v2739
        %v2741 = vrot.slane %v1641, 5
        %v2742 = vrot.slane %v2741, 4
        %v2743 = vrot.slane %v1642, 5
        %v2744 = vsel %vm1205, %v2742, %v2743
        %v2745 = vrot.slane %v2743, 4
        %v2746 = vrot.slane %v1643, 5
        %v2747 = vsel %vm1205, %v2745, %v2746
        %v2748 = vrot.slane %v1644, 5
        %v2749 = vrot.slane %v2748, 4
        %v2750 = vrot.slane %v1645, 5
        %v2751 = vsel %vm1205, %v2749, %v2750
        %v2752 = vrot.slane %v2750, 4
        %v2753 = vrot.slane %v1646, 5
        %v2754 = vsel %vm1205, %v2752, %v2753
        %v2755 = vrot.slane %v1647, 5
        %v2756 = vrot.slane %v2755, 4
        %v2757 = vrot.slane %v1648, 5
        %v2758 = vsel %vm1205, %v2756, %v2757
        %v2759 = vrot.slane %v2757, 4
        %v2760 = vrot.slane %v1649, 5
        %v2761 = vsel %vm1205, %v2759, %v2760
        %v2762 = vrot.slane %v1650, 5
        %v2763 = vrot.slane %v2762, 4
        %v2764 = vrot.slane %v1651, 5
        %v2765 = vsel %vm1205, %v2763, %v2764
        %v2766 = vrot.slane %v2764, 4
        %v2767 = vrot.slane %v1652, 5
        %v2768 = vsel %vm1205, %v2766, %v2767
        %v2769 = vrot.slane %v1653, 5
        %v2770 = vrot.slane %v2769, 4
        %v2771 = vrot.slane %v1654, 5
        %v2772 = vsel %vm1205, %v2770, %v2771
        %v2773 = vrot.slane %v2771, 4
        %v2774 = vrot.slane %v1655, 5
        %v2775 = vsel %vm1205, %v2773, %v2774
        %v2776 = vrot.slane %v1656, 5
        %v2777 = vrot.slane %v2776, 4
        %v2778 = vrot.slane %v1657, 5
        %v2779 = vsel %vm1205, %v2777, %v2778
        %v2780 = vrot.slane %v2778, 4
        %v2781 = vrot.slane %v1658, 5
        %v2782 = vsel %vm1205, %v2780, %v2781
        %v2783 = vrot.slane %v1659, 5
        %v2784 = vrot.slane %v2783, 4
        %v2785 = vrot.slane %v1660, 5
        %v2786 = vsel %vm1205, %v2784, %v2785
        %v2787 = vrot.slane %v2785, 4
        %v2788 = vrot.slane %v1661, 5
        %v2789 = vsel %vm1205, %v2787, %v2788
        %v2790 = vunpack.c.l.b16 %v2681
        %v2791 = vunpack.c.l.b16 %v2684
        %v2792 = vunpack.c.l.b16 %v2688
        %v2793 = vunpack.c.l.b16 %v2691
        %v2794 = vunpack.c.l.b16 %v2695
        %v2795 = vunpack.c.l.b16 %v2698
        %v2796 = vunpack.c.l.b16 %v2702
        %v2797 = vunpack.c.l.b16 %v2705
        %v2798 = vunpack.c.l.b16 %v2709
        %v2799 = vunpack.c.l.b16 %v2712
        %v2800 = vunpack.c.l.b16 %v2716
        %v2801 = vunpack.c.l.b16 %v2719
        %v2802 = vunpack.c.l.b16 %v2723
        %v2803 = vunpack.c.l.b16 %v2726
        %v2804 = vunpack.c.l.b16 %v2730
        %v2805 = vunpack.c.l.b16 %v2733
        %v2806 = vunpack.c.l.b16 %v2737
        %v2807 = vunpack.c.l.b16 %v2740
        %v2808 = vunpack.c.l.b16 %v2744
        %v2809 = vunpack.c.l.b16 %v2747
        %v2810 = vunpack.c.l.b16 %v2751
        %v2811 = vunpack.c.l.b16 %v2754
        %v2812 = vunpack.c.l.b16 %v2758
        %v2813 = vunpack.c.l.b16 %v2761
        %v2814 = vunpack.c.l.b16 %v2765
        %v2815 = vunpack.c.l.b16 %v2768
        %v2816 = vunpack.c.l.b16 %v2772
        %v2817 = vunpack.c.l.b16 %v2775
        %v2818 = vunpack.c.l.b16 %v2779
        %v2819 = vunpack.c.l.b16 %v2782
        %v2820 = vunpack.c.l.b16 %v2786
        %v2821 = vunpack.c.l.b16 %v2789
        %v2822 = vpack.c.b16 %v2791, %v2790
        %v2823 = vpack.c.b16 %v2793, %v2792
        %v2824 = vpack.c.b16 %v2795, %v2794
        %v2825 = vpack.c.b16 %v2797, %v2796
        %v2826 = vpack.c.b16 %v2799, %v2798
        %v2827 = vpack.c.b16 %v2801, %v2800
        %v2828 = vpack.c.b16 %v2803, %v2802
        %v2829 = vpack.c.b16 %v2805, %v2804
        %v2830 = vpack.c.b16 %v2807, %v2806
        %v2831 = vpack.c.b16 %v2809, %v2808
        %v2832 = vpack.c.b16 %v2811, %v2810
        %v2833 = vpack.c.b16 %v2813, %v2812
        %v2834 = vpack.c.b16 %v2815, %v2814
        %v2835 = vpack.c.b16 %v2817, %v2816
        %v2836 = vpack.c.b16 %v2819, %v2818
        %v2837 = vpack.c.b16 %v2821, %v2820
        %v2839 = vsel %vm681, %v2822, 0
        %v2842 = vsel %vm681, %v2823, 0
        %v2845 = vsel %vm681, %v2824, 0
        %v2848 = vsel %vm681, %v2825, 0
        %v2851 = vsel %vm681, %v2826, 0
        %v2854 = vsel %vm681, %v2827, 0
        %v2857 = vsel %vm681, %v2828, 0
        %v2860 = vsel %vm681, %v2829, 0
        %v2863 = vsel %vm681, %v2830, 0
        %v2866 = vsel %vm681, %v2831, 0
        %v2869 = vsel %vm681, %v2832, 0
        %v2872 = vsel %vm681, %v2833, 0
        %v2875 = vsel %vm681, %v2834, 0
        %v2878 = vsel %vm681, %v2835, 0
        %v2881 = vsel %vm681, %v2836, 0
        %v2884 = vsel %vm681, %v2837, 0
        %v2887 = vsel %vm730, %v191, 0
        %2889 = vmatprep.subr.bf16.mxu0 0
        %2890 = vmatpush1.bf16.msra.mxu0 %v2887
        %2891 = vmatprep.subr.bf16.mxu0 0
        %2892 = vmatpush1.bf16.msra.mxu0 0
        %2893 = vmatprep.subr.bf16.mxu0 0
        %2894 = vmatpush1.bf16.msra.mxu0 0
        %2895 = vmatprep.subr.bf16.mxu0 0
        %2896 = vmatpush1.bf16.msra.mxu0 0
        %2897 = vmatprep.subr.bf16.mxu0 0
        %2898 = vmatpush1.bf16.msra.mxu0 0
        %2899 = vmatprep.subr.bf16.mxu0 0
        %2900 = vmatpush1.bf16.msra.mxu0 0
        %2901 = vmatprep.subr.bf16.mxu0 0
        %2902 = vmatpush1.bf16.msra.mxu0 0
        %2903 = vmatprep.subr.bf16.mxu0 0
        %2904 = vmatpush1.bf16.msra.mxu0 0
        %2905 = vmatprep.subr.bf16.mxu0 0
        %2906 = vmatpush1.bf16.msra.mxu0 0
        %2907 = vmatprep.subr.bf16.mxu0 0
        %2908 = vmatpush1.bf16.msra.mxu0 0
        %2909 = vmatprep.subr.bf16.mxu0 0
        %2910 = vmatpush1.bf16.msra.mxu0 0
        %2911 = vmatprep.subr.bf16.mxu0 0
        %2912 = vmatpush1.bf16.msra.mxu0 0
        %2913 = vmatprep.subr.bf16.mxu0 0
        %2914 = vmatpush1.bf16.msra.mxu0 0
        %2915 = vmatprep.subr.bf16.mxu0 0
        %2916 = vmatpush1.bf16.msra.mxu0 0
        %2917 = vmatprep.subr.bf16.mxu0 0
        %2918 = vmatpush1.bf16.msra.mxu0 0
        %2919 = vmatprep.subr.bf16.mxu0 0
        %2920 = vmatpush1.bf16.msra.mxu0 0
        %2921 = vmatprep.mubr.bf16.mxu0 0
        %2922 = vmatmul.mubr.bf16.gmra.mrb[0].mxu0 %v2839
        %v2923 = vpop.f32.mrb[0].mxu0
        %v2924 = vadd.f32 0.0, %v2923
        %v2925 = vpop.f32.mrb[0].mxu0
        %v2926 = vpop.f32.mrb[0].mxu0
        %v2927 = vadd.f32 0.0, %v2926
        %v2928 = vpop.f32.mrb[0].mxu0
        %2929 = vmatprep.mubr.bf16.mxu0 0
        %2930 = vmatmul.mubr.bf16.gmra.mrb[0].mxu0 %v2842
        %v2931 = vpop.f32.mrb[0].mxu0
        %v2932 = vadd.f32 0.0, %v2931
        %v2933 = vpop.f32.mrb[0].mxu0
        %v2934 = vpop.f32.mrb[0].mxu0
        %v2935 = vadd.f32 0.0, %v2934
        %v2936 = vpop.f32.mrb[0].mxu0
        %2937 = vmatprep.mubr.bf16.mxu0 0
        %2938 = vmatmul.mubr.bf16.gmra.mrb[0].mxu0 %v2845
        %v2939 = vpop.f32.mrb[0].mxu0
        %v2940 = vadd.f32 0.0, %v2939
        %v2941 = vpop.f32.mrb[0].mxu0
        %v2942 = vpop.f32.mrb[0].mxu0
        %v2943 = vadd.f32 0.0, %v2942
        %v2944 = vpop.f32.mrb[0].mxu0
        %2945 = vmatprep.mubr.bf16.mxu0 0
        %2946 = vmatmul.mubr.bf16.gmra.mrb[0].mxu0 %v2848
        %v2947 = vpop.f32.mrb[0].mxu0
        %v2948 = vadd.f32 0.0, %v2947
        %v2949 = vpop.f32.mrb[0].mxu0
        %v2950 = vpop.f32.mrb[0].mxu0
        %v2951 = vadd.f32 0.0, %v2950
        %v2952 = vpop.f32.mrb[0].mxu0
        %2953 = vmatprep.mubr.bf16.mxu0 0
        %2954 = vmatmul.mubr.bf16.gmra.mrb[0].mxu0 %v2851
        %v2955 = vpop.f32.mrb[0].mxu0
        %v2956 = vadd.f32 0.0, %v2955
        %v2957 = vpop.f32.mrb[0].mxu0
        %v2958 = vpop.f32.mrb[0].mxu0
        %v2959 = vadd.f32 0.0, %v2958
        %v2960 = vpop.f32.mrb[0].mxu0
        %2961 = vmatprep.mubr.bf16.mxu0 0
        %2962 = vmatmul.mubr.bf16.gmra.mrb[0].mxu0 %v2854
        %v2963 = vpop.f32.mrb[0].mxu0
        %v2964 = vadd.f32 0.0, %v2963
        %v2965 = vpop.f32.mrb[0].mxu0
        %v2966 = vpop.f32.mrb[0].mxu0
        %v2967 = vadd.f32 0.0, %v2966
        %v2968 = vpop.f32.mrb[0].mxu0
        %2969 = vmatprep.mubr.bf16.mxu0 0
        %2970 = vmatmul.mubr.bf16.gmra.mrb[0].mxu0 %v2857
        %v2971 = vpop.f32.mrb[0].mxu0
        %v2972 = vadd.f32 0.0, %v2971
        %v2973 = vpop.f32.mrb[0].mxu0
        %v2974 = vpop.f32.mrb[0].mxu0
        %v2975 = vadd.f32 0.0, %v2974
        %v2976 = vpop.f32.mrb[0].mxu0
        %2977 = vmatprep.mubr.bf16.mxu0 0
        %2978 = vmatmul.mubr.bf16.gmra.mrb[0].mxu0 %v2860
        %v2979 = vpop.f32.mrb[0].mxu0
        %v2980 = vadd.f32 0.0, %v2979
        %v2981 = vpop.f32.mrb[0].mxu0
        %v2982 = vpop.f32.mrb[0].mxu0
        %v2983 = vadd.f32 0.0, %v2982
        %v2984 = vpop.f32.mrb[0].mxu0
        %2985 = vmatprep.mubr.bf16.mxu0 0
        %2986 = vmatmul.mubr.bf16.gmra.mrb[0].mxu0 %v2863
        %v2987 = vpop.f32.mrb[0].mxu0
        %v2988 = vadd.f32 0.0, %v2987
        %v2989 = vpop.f32.mrb[0].mxu0
        %v2990 = vpop.f32.mrb[0].mxu0
        %v2991 = vadd.f32 0.0, %v2990
        %v2992 = vpop.f32.mrb[0].mxu0
        %2993 = vmatprep.mubr.bf16.mxu0 0
        %2994 = vmatmul.mubr.bf16.gmra.mrb[0].mxu0 %v2866
        %v2995 = vpop.f32.mrb[0].mxu0
        %v2996 = vadd.f32 0.0, %v2995
        %v2997 = vpop.f32.mrb[0].mxu0
        %v2998 = vpop.f32.mrb[0].mxu0
        %v2999 = vadd.f32 0.0, %v2998
        %v3000 = vpop.f32.mrb[0].mxu0
        %3001 = vmatprep.mubr.bf16.mxu0 0
        %3002 = vmatmul.mubr.bf16.gmra.mrb[0].mxu0 %v2869
        %v3003 = vpop.f32.mrb[0].mxu0
        %v3004 = vadd.f32 0.0, %v3003
        %v3005 = vpop.f32.mrb[0].mxu0
        %v3006 = vpop.f32.mrb[0].mxu0
        %v3007 = vadd.f32 0.0, %v3006
        %v3008 = vpop.f32.mrb[0].mxu0
        %3009 = vmatprep.mubr.bf16.mxu0 0
        %3010 = vmatmul.mubr.bf16.gmra.mrb[0].mxu0 %v2872
        %v3011 = vpop.f32.mrb[0].mxu0
        %v3012 = vadd.f32 0.0, %v3011
        %v3013 = vpop.f32.mrb[0].mxu0
        %v3014 = vpop.f32.mrb[0].mxu0
        %v3015 = vadd.f32 0.0, %v3014
        %v3016 = vpop.f32.mrb[0].mxu0
        %3017 = vmatprep.mubr.bf16.mxu0 0
        %3018 = vmatmul.mubr.bf16.gmra.mrb[0].mxu0 %v2875
        %v3019 = vpop.f32.mrb[0].mxu0
        %v3020 = vadd.f32 0.0, %v3019
        %v3021 = vpop.f32.mrb[0].mxu0
        %v3022 = vpop.f32.mrb[0].mxu0
        %v3023 = vadd.f32 0.0, %v3022
        %v3024 = vpop.f32.mrb[0].mxu0
        %3025 = vmatprep.mubr.bf16.mxu0 0
        %3026 = vmatmul.mubr.bf16.gmra.mrb[0].mxu0 %v2878
        %v3027 = vpop.f32.mrb[0].mxu0
        %v3028 = vadd.f32 0.0, %v3027
        %v3029 = vpop.f32.mrb[0].mxu0
        %v3030 = vpop.f32.mrb[0].mxu0
        %v3031 = vadd.f32 0.0, %v3030
        %v3032 = vpop.f32.mrb[0].mxu0
        %3033 = vmatprep.mubr.bf16.mxu0 0
        %3034 = vmatmul.mubr.bf16.gmra.mrb[0].mxu0 %v2881
        %v3035 = vpop.f32.mrb[0].mxu0
        %v3036 = vadd.f32 0.0, %v3035
        %v3037 = vpop.f32.mrb[0].mxu0
        %v3038 = vpop.f32.mrb[0].mxu0
        %v3039 = vadd.f32 0.0, %v3038
        %v3040 = vpop.f32.mrb[0].mxu0
        %3041 = vmatprep.mubr.bf16.mxu0 0
        %3042 = vmatmul.mubr.bf16.gmra.mrb[0].mxu0 %v2884
        %v3043 = vpop.f32.mrb[0].mxu0
        %v3044 = vadd.f32 0.0, %v3043
        %v3045 = vpop.f32.mrb[0].mxu0
        %v3046 = vpop.f32.mrb[0].mxu0
        %v3047 = vadd.f32 0.0, %v3046
        %v3048 = vpop.f32.mrb[0].mxu0
        %3049 = vdwg.mxu0
        %v3050 = vadd.f32 %v2630, %v2924
        %v3051 = vadd.f32 %v2631, %v2927
        %v3052 = vadd.f32 %v2632, %v2932
        %v3053 = vadd.f32 %v2633, %v2935
        %v3054 = vadd.f32 %v2634, %v2940
        %v3055 = vadd.f32 %v2635, %v2943
        %v3056 = vadd.f32 %v2636, %v2948
        %v3057 = vadd.f32 %v2637, %v2951
        %v3058 = vadd.f32 %v2638, %v2956
        %v3059 = vadd.f32 %v2639, %v2959
        %v3060 = vadd.f32 %v2640, %v2964
        %v3061 = vadd.f32 %v2641, %v2967
        %v3062 = vadd.f32 %v2642, %v2972
        %v3063 = vadd.f32 %v2643, %v2975
        %v3064 = vadd.f32 %v2644, %v2980
        %v3065 = vadd.f32 %v2645, %v2983
        %v3066 = vadd.f32 %v2646, %v2988
        %v3067 = vadd.f32 %v2647, %v2991
        %v3068 = vadd.f32 %v2648, %v2996
        %v3069 = vadd.f32 %v2649, %v2999
        %v3070 = vadd.f32 %v2650, %v3004
        %v3071 = vadd.f32 %v2651, %v3007
        %v3072 = vadd.f32 %v2652, %v3012
        %v3073 = vadd.f32 %v2653, %v3015
        %v3074 = vadd.f32 %v2654, %v3020
        %v3075 = vadd.f32 %v2655, %v3023
        %v3076 = vadd.f32 %v2656, %v3028
        %v3077 = vadd.f32 %v2657, %v3031
        %v3078 = vadd.f32 %v2658, %v3036
        %v3079 = vadd.f32 %v2659, %v3039
        %v3080 = vadd.f32 %v2660, %v3044
        %v3081 = vadd.f32 %v2661, %v3047
        %s3082 = sadd.s32 %s185, 2
        %s3083 = smul.u32 %s3082, 3
        %s3084 = smul.addr %s3083, 4
        %s3085 = scalar_lea.vmem %s182, %s3084
        %v3086 = vld [vmem:[%s3085] sm:$0xf]
        %v3087 = vld [vmem:[%s3085 + $0x4] sm:$0xf]
        %v3088 = vld [vmem:[%s3085 + $0x8] sm:$0x1]
        %v3089 = vld [vmem:[%s3085 + $0xc] sm:$0xf]
        %v3090 = vld [vmem:[%s3085 + $0x10] sm:$0xf]
        %v3091 = vld [vmem:[%s3085 + $0x14] sm:$0x1]
        %v3092 = vld [vmem:[%s3085 + $0x18] sm:$0xf]
        %v3093 = vld [vmem:[%s3085 + $0x1c] sm:$0xf]
        %v3094 = vld [vmem:[%s3085 + $0x20] sm:$0x1]
        %v3095 = vld [vmem:[%s3085 + $0x24] sm:$0xf]
        %v3096 = vld [vmem:[%s3085 + $0x28] sm:$0xf]
        %v3097 = vld [vmem:[%s3085 + $0x2c] sm:$0x1]
        %v3098 = vld [vmem:[%s3085 + $0x30] sm:$0xf]
        %v3099 = vld [vmem:[%s3085 + $0x34] sm:$0xf]
        %v3100 = vld [vmem:[%s3085 + $0x38] sm:$0x1]
        %v3101 = vld [vmem:[%s3085 + $0x3c] sm:$0xf]
        %v3102 = vld [vmem:[%s3085 + $0x40] sm:$0xf]
        %v3103 = vld [vmem:[%s3085 + $0x44] sm:$0x1]
        %v3104 = vld [vmem:[%s3085 + $0x48] sm:$0xf]
        %v3105 = vld [vmem:[%s3085 + $0x4c] sm:$0xf]
        %v3106 = vld [vmem:[%s3085 + $0x50] sm:$0x1]
        %v3107 = vld [vmem:[%s3085 + $0x54] sm:$0xf]
        %v3108 = vld [vmem:[%s3085 + $0x58] sm:$0xf]
        %v3109 = vld [vmem:[%s3085 + $0x5c] sm:$0x1]
        %v3110 = vld [vmem:[%s3085 + $0x60] sm:$0xf]
        %v3111 = vld [vmem:[%s3085 + $0x64] sm:$0xf]
        %v3112 = vld [vmem:[%s3085 + $0x68] sm:$0x1]
        %v3113 = vld [vmem:[%s3085 + $0x6c] sm:$0xf]
        %v3114 = vld [vmem:[%s3085 + $0x70] sm:$0xf]
        %v3115 = vld [vmem:[%s3085 + $0x74] sm:$0x1]
        %v3116 = vld [vmem:[%s3085 + $0x78] sm:$0xf]
        %v3117 = vld [vmem:[%s3085 + $0x7c] sm:$0xf]
        %v3118 = vld [vmem:[%s3085 + $0x80] sm:$0x1]
        %v3119 = vld [vmem:[%s3085 + $0x84] sm:$0xf]
        %v3120 = vld [vmem:[%s3085 + $0x88] sm:$0xf]
        %v3121 = vld [vmem:[%s3085 + $0x8c] sm:$0x1]
        %v3122 = vld [vmem:[%s3085 + $0x90] sm:$0xf]
        %v3123 = vld [vmem:[%s3085 + $0x94] sm:$0xf]
        %v3124 = vld [vmem:[%s3085 + $0x98] sm:$0x1]
        %v3125 = vld [vmem:[%s3085 + $0x9c] sm:$0xf]
        %v3126 = vld [vmem:[%s3085 + $0xa0] sm:$0xf]
        %v3127 = vld [vmem:[%s3085 + $0xa4] sm:$0x1]
        %v3128 = vld [vmem:[%s3085 + $0xa8] sm:$0xf]
        %v3129 = vld [vmem:[%s3085 + $0xac] sm:$0xf]
        %v3130 = vld [vmem:[%s3085 + $0xb0] sm:$0x1]
        %v3131 = vld [vmem:[%s3085 + $0xb4] sm:$0xf]
        %v3132 = vld [vmem:[%s3085 + $0xb8] sm:$0xf]
        %v3133 = vld [vmem:[%s3085 + $0xbc] sm:$0x1]
        %v3166 = vunpack.c.l.b16 %v3086
        %v3167 = vunpack.c.l.b16 %v3087
        %v3168 = vunpack.c.l.b16 %v3089
        %v3169 = vunpack.c.l.b16 %v3090
        %v3170 = vunpack.c.l.b16 %v3092
        %v3171 = vunpack.c.l.b16 %v3093
        %v3172 = vunpack.c.l.b16 %v3095
        %v3173 = vunpack.c.l.b16 %v3096
        %v3174 = vunpack.c.l.b16 %v3098
        %v3175 = vunpack.c.l.b16 %v3099
        %v3176 = vunpack.c.l.b16 %v3101
        %v3177 = vunpack.c.l.b16 %v3102
        %v3178 = vunpack.c.l.b16 %v3104
        %v3179 = vunpack.c.l.b16 %v3105
        %v3180 = vunpack.c.l.b16 %v3107
        %v3181 = vunpack.c.l.b16 %v3108
        %v3182 = vunpack.c.l.b16 %v3110
        %v3183 = vunpack.c.l.b16 %v3111
        %v3184 = vunpack.c.l.b16 %v3113
        %v3185 = vunpack.c.l.b16 %v3114
        %v3186 = vunpack.c.l.b16 %v3116
        %v3187 = vunpack.c.l.b16 %v3117
        %v3188 = vunpack.c.l.b16 %v3119
        %v3189 = vunpack.c.l.b16 %v3120
        %v3190 = vunpack.c.l.b16 %v3122
        %v3191 = vunpack.c.l.b16 %v3123
        %v3192 = vunpack.c.l.b16 %v3125
        %v3193 = vunpack.c.l.b16 %v3126
        %v3194 = vunpack.c.l.b16 %v3128
        %v3195 = vunpack.c.l.b16 %v3129
        %v3196 = vunpack.c.l.b16 %v3131
        %v3197 = vunpack.c.l.b16 %v3132
        %v3198 = vpack.c.b16 %v3167, %v3166
        %v3199 = vpack.c.b16 %v3169, %v3168
        %v3200 = vpack.c.b16 %v3171, %v3170
        %v3201 = vpack.c.b16 %v3173, %v3172
        %v3202 = vpack.c.b16 %v3175, %v3174
        %v3203 = vpack.c.b16 %v3177, %v3176
        %v3204 = vpack.c.b16 %v3179, %v3178
        %v3205 = vpack.c.b16 %v3181, %v3180
        %v3206 = vpack.c.b16 %v3183, %v3182
        %v3207 = vpack.c.b16 %v3185, %v3184
        %v3208 = vpack.c.b16 %v3187, %v3186
        %v3209 = vpack.c.b16 %v3189, %v3188
        %v3210 = vpack.c.b16 %v3191, %v3190
        %v3211 = vpack.c.b16 %v3193, %v3192
        %v3212 = vpack.c.b16 %v3195, %v3194
        %v3213 = vpack.c.b16 %v3197, %v3196
        %v3215 = vsel %vm681, %v3198, 0
        %v3218 = vsel %vm681, %v3199, 0
        %v3221 = vsel %vm681, %v3200, 0
        %v3224 = vsel %vm681, %v3201, 0
        %v3227 = vsel %vm681, %v3202, 0
        %v3230 = vsel %vm681, %v3203, 0
        %v3233 = vsel %vm681, %v3204, 0
        %v3236 = vsel %vm681, %v3205, 0
        %v3239 = vsel %vm681, %v3206, 0
        %v3242 = vsel %vm681, %v3207, 0
        %v3245 = vsel %vm681, %v3208, 0
        %v3248 = vsel %vm681, %v3209, 0
        %v3251 = vsel %vm681, %v3210, 0
        %v3254 = vsel %vm681, %v3211, 0
        %v3257 = vsel %vm681, %v3212, 0
        %v3260 = vsel %vm681, %v3213, 0
        %v3263 = vsel %vm730, %v192, 0
        %3265 = vmatprep.subr.bf16.mxu0 0
        %3266 = vmatpush1.bf16.msra.mxu0 %v3263
        %3267 = vmatprep.subr.bf16.mxu0 0
        %3268 = vmatpush1.bf16.msra.mxu0 0
        %3269 = vmatprep.subr.bf16.mxu0 0
        %3270 = vmatpush1.bf16.msra.mxu0 0
        %3271 = vmatprep.subr.bf16.mxu0 0
        %3272 = vmatpush1.bf16.msra.mxu0 0
        %3273 = vmatprep.subr.bf16.mxu0 0
        %3274 = vmatpush1.bf16.msra.mxu0 0
        %3275 = vmatprep.subr.bf16.mxu0 0
        %3276 = vmatpush1.bf16.msra.mxu0 0
        %3277 = vmatprep.subr.bf16.mxu0 0
        %3278 = vmatpush1.bf16.msra.mxu0 0
        %3279 = vmatprep.subr.bf16.mxu0 0
        %3280 = vmatpush1.bf16.msra.mxu0 0
        %3281 = vmatprep.subr.bf16.mxu0 0
        %3282 = vmatpush1.bf16.msra.mxu0 0
        %3283 = vmatprep.subr.bf16.mxu0 0
        %3284 = vmatpush1.bf16.msra.mxu0 0
        %3285 = vmatprep.subr.bf16.mxu0 0
        %3286 = vmatpush1.bf16.msra.mxu0 0
        %3287 = vmatprep.subr.bf16.mxu0 0
        %3288 = vmatpush1.bf16.msra.mxu0 0
        %3289 = vmatprep.subr.bf16.mxu0 0
        %3290 = vmatpush1.bf16.msra.mxu0 0
        %3291 = vmatprep.subr.bf16.mxu0 0
        %3292 = vmatpush1.bf16.msra.mxu0 0
        %3293 = vmatprep.subr.bf16.mxu0 0
        %3294 = vmatpush1.bf16.msra.mxu0 0
        %3295 = vmatprep.subr.bf16.mxu0 0
        %3296 = vmatpush1.bf16.msra.mxu0 0
        %3297 = vmatprep.mubr.bf16.mxu0 0
        %3298 = vmatmul.mubr.bf16.gmra.mrb[0].mxu0 %v3215
        %v3299 = vpop.f32.mrb[0].mxu0
        %v3300 = vadd.f32 0.0, %v3299
        %v3301 = vpop.f32.mrb[0].mxu0
        %v3302 = vpop.f32.mrb[0].mxu0
        %v3303 = vadd.f32 0.0, %v3302
        %v3304 = vpop.f32.mrb[0].mxu0
        %3305 = vmatprep.mubr.bf16.mxu0 0
        %3306 = vmatmul.mubr.bf16.gmra.mrb[0].mxu0 %v3218
        %v3307 = vpop.f32.mrb[0].mxu0
        %v3308 = vadd.f32 0.0, %v3307
        %v3309 = vpop.f32.mrb[0].mxu0
        %v3310 = vpop.f32.mrb[0].mxu0
        %v3311 = vadd.f32 0.0, %v3310
        %v3312 = vpop.f32.mrb[0].mxu0
        %3313 = vmatprep.mubr.bf16.mxu0 0
        %3314 = vmatmul.mubr.bf16.gmra.mrb[0].mxu0 %v3221
        %v3315 = vpop.f32.mrb[0].mxu0
        %v3316 = vadd.f32 0.0, %v3315
        %v3317 = vpop.f32.mrb[0].mxu0
        %v3318 = vpop.f32.mrb[0].mxu0
        %v3319 = vadd.f32 0.0, %v3318
        %v3320 = vpop.f32.mrb[0].mxu0
        %3321 = vmatprep.mubr.bf16.mxu0 0
        %3322 = vmatmul.mubr.bf16.gmra.mrb[0].mxu0 %v3224
        %v3323 = vpop.f32.mrb[0].mxu0
        %v3324 = vadd.f32 0.0, %v3323
        %v3325 = vpop.f32.mrb[0].mxu0
        %v3326 = vpop.f32.mrb[0].mxu0
        %v3327 = vadd.f32 0.0, %v3326
        %v3328 = vpop.f32.mrb[0].mxu0
        %3329 = vmatprep.mubr.bf16.mxu0 0
        %3330 = vmatmul.mubr.bf16.gmra.mrb[0].mxu0 %v3227
        %v3331 = vpop.f32.mrb[0].mxu0
        %v3332 = vadd.f32 0.0, %v3331
        %v3333 = vpop.f32.mrb[0].mxu0
        %v3334 = vpop.f32.mrb[0].mxu0
        %v3335 = vadd.f32 0.0, %v3334
        %v3336 = vpop.f32.mrb[0].mxu0
        %3337 = vmatprep.mubr.bf16.mxu0 0
        %3338 = vmatmul.mubr.bf16.gmra.mrb[0].mxu0 %v3230
        %v3339 = vpop.f32.mrb[0].mxu0
        %v3340 = vadd.f32 0.0, %v3339
        %v3341 = vpop.f32.mrb[0].mxu0
        %v3342 = vpop.f32.mrb[0].mxu0
        %v3343 = vadd.f32 0.0, %v3342
        %v3344 = vpop.f32.mrb[0].mxu0
        %3345 = vmatprep.mubr.bf16.mxu0 0
        %3346 = vmatmul.mubr.bf16.gmra.mrb[0].mxu0 %v3233
        %v3347 = vpop.f32.mrb[0].mxu0
        %v3348 = vadd.f32 0.0, %v3347
        %v3349 = vpop.f32.mrb[0].mxu0
        %v3350 = vpop.f32.mrb[0].mxu0
        %v3351 = vadd.f32 0.0, %v3350
        %v3352 = vpop.f32.mrb[0].mxu0
        %3353 = vmatprep.mubr.bf16.mxu0 0
        %3354 = vmatmul.mubr.bf16.gmra.mrb[0].mxu0 %v3236
        %v3355 = vpop.f32.mrb[0].mxu0
        %v3356 = vadd.f32 0.0, %v3355
        %v3357 = vpop.f32.mrb[0].mxu0
        %v3358 = vpop.f32.mrb[0].mxu0
        %v3359 = vadd.f32 0.0, %v3358
        %v3360 = vpop.f32.mrb[0].mxu0
        %3361 = vmatprep.mubr.bf16.mxu0 0
        %3362 = vmatmul.mubr.bf16.gmra.mrb[0].mxu0 %v3239
        %v3363 = vpop.f32.mrb[0].mxu0
        %v3364 = vadd.f32 0.0, %v3363
        %v3365 = vpop.f32.mrb[0].mxu0
        %v3366 = vpop.f32.mrb[0].mxu0
        %v3367 = vadd.f32 0.0, %v3366
        %v3368 = vpop.f32.mrb[0].mxu0
        %3369 = vmatprep.mubr.bf16.mxu0 0
        %3370 = vmatmul.mubr.bf16.gmra.mrb[0].mxu0 %v3242
        %v3371 = vpop.f32.mrb[0].mxu0
        %v3372 = vadd.f32 0.0, %v3371
        %v3373 = vpop.f32.mrb[0].mxu0
        %v3374 = vpop.f32.mrb[0].mxu0
        %v3375 = vadd.f32 0.0, %v3374
        %v3376 = vpop.f32.mrb[0].mxu0
        %3377 = vmatprep.mubr.bf16.mxu0 0
        %3378 = vmatmul.mubr.bf16.gmra.mrb[0].mxu0 %v3245
        %v3379 = vpop.f32.mrb[0].mxu0
        %v3380 = vadd.f32 0.0, %v3379
        %v3381 = vpop.f32.mrb[0].mxu0
        %v3382 = vpop.f32.mrb[0].mxu0
        %v3383 = vadd.f32 0.0, %v3382
        %v3384 = vpop.f32.mrb[0].mxu0
        %3385 = vmatprep.mubr.bf16.mxu0 0
        %3386 = vmatmul.mubr.bf16.gmra.mrb[0].mxu0 %v3248
        %v3387 = vpop.f32.mrb[0].mxu0
        %v3388 = vadd.f32 0.0, %v3387
        %v3389 = vpop.f32.mrb[0].mxu0
        %v3390 = vpop.f32.mrb[0].mxu0
        %v3391 = vadd.f32 0.0, %v3390
        %v3392 = vpop.f32.mrb[0].mxu0
        %3393 = vmatprep.mubr.bf16.mxu0 0
        %3394 = vmatmul.mubr.bf16.gmra.mrb[0].mxu0 %v3251
        %v3395 = vpop.f32.mrb[0].mxu0
        %v3396 = vadd.f32 0.0, %v3395
        %v3397 = vpop.f32.mrb[0].mxu0
        %v3398 = vpop.f32.mrb[0].mxu0
        %v3399 = vadd.f32 0.0, %v3398
        %v3400 = vpop.f32.mrb[0].mxu0
        %3401 = vmatprep.mubr.bf16.mxu0 0
        %3402 = vmatmul.mubr.bf16.gmra.mrb[0].mxu0 %v3254
        %v3403 = vpop.f32.mrb[0].mxu0
        %v3404 = vadd.f32 0.0, %v3403
        %v3405 = vpop.f32.mrb[0].mxu0
        %v3406 = vpop.f32.mrb[0].mxu0
        %v3407 = vadd.f32 0.0, %v3406
        %v3408 = vpop.f32.mrb[0].mxu0
        %3409 = vmatprep.mubr.bf16.mxu0 0
        %3410 = vmatmul.mubr.bf16.gmra.mrb[0].mxu0 %v3257
        %v3411 = vpop.f32.mrb[0].mxu0
        %v3412 = vadd.f32 0.0, %v3411
        %v3413 = vpop.f32.mrb[0].mxu0
        %v3414 = vpop.f32.mrb[0].mxu0
        %v3415 = vadd.f32 0.0, %v3414
        %v3416 = vpop.f32.mrb[0].mxu0
        %3417 = vmatprep.mubr.bf16.mxu0 0
        %3418 = vmatmul.mubr.bf16.gmra.mrb[0].mxu0 %v3260
        %v3419 = vpop.f32.mrb[0].mxu0
        %v3420 = vadd.f32 0.0, %v3419
        %v3421 = vpop.f32.mrb[0].mxu0
        %v3422 = vpop.f32.mrb[0].mxu0
        %v3423 = vadd.f32 0.0, %v3422
        %v3424 = vpop.f32.mrb[0].mxu0
        %3425 = vdwg.mxu0
        %v3426 = vadd.f32 %v3050, %v3300
        %v3427 = vadd.f32 %v3051, %v3303
        %v3428 = vadd.f32 %v3052, %v3308
        %v3429 = vadd.f32 %v3053, %v3311
        %v3430 = vadd.f32 %v3054, %v3316
        %v3431 = vadd.f32 %v3055, %v3319
        %v3432 = vadd.f32 %v3056, %v3324
        %v3433 = vadd.f32 %v3057, %v3327
        %v3434 = vadd.f32 %v3058, %v3332
        %v3435 = vadd.f32 %v3059, %v3335
        %v3436 = vadd.f32 %v3060, %v3340
        %v3437 = vadd.f32 %v3061, %v3343
        %v3438 = vadd.f32 %v3062, %v3348
        %v3439 = vadd.f32 %v3063, %v3351
        %v3440 = vadd.f32 %v3064, %v3356
        %v3441 = vadd.f32 %v3065, %v3359
        %v3442 = vadd.f32 %v3066, %v3364
        %v3443 = vadd.f32 %v3067, %v3367
        %v3444 = vadd.f32 %v3068, %v3372
        %v3445 = vadd.f32 %v3069, %v3375
        %v3446 = vadd.f32 %v3070, %v3380
        %v3447 = vadd.f32 %v3071, %v3383
        %v3448 = vadd.f32 %v3072, %v3388
        %v3449 = vadd.f32 %v3073, %v3391
        %v3450 = vadd.f32 %v3074, %v3396
        %v3451 = vadd.f32 %v3075, %v3399
        %v3452 = vadd.f32 %v3076, %v3404
        %v3453 = vadd.f32 %v3077, %v3407
        %v3454 = vadd.f32 %v3078, %v3412
        %v3455 = vadd.f32 %v3079, %v3415
        %v3456 = vadd.f32 %v3080, %v3420
        %v3457 = vadd.f32 %v3081, %v3423
        %v3459 = vshrl.u32 %v3086, 16
        %v3461 = vrot.slane %v3459, 4
        %v3462 = vshll.u32 %v3086, 16
        %v3464 = vrot.slane %v3462, 5
        %v3465 = vor.u32 %v3461, %v3464
        %v3466 = vrot.slane %v3465, 4
        %v3468 = vshll.u32 %v3087, 16
        %v3470 = vrot.slane %v3468, 5
        %v3471 = vsel %vm248, %v3466, %v3470
        %v3472 = vshrl.u32 %v3087, 16
        %v3474 = vrot.slane %v3472, 4
        %v3475 = vor.u32 %v3474, %v3470
        %v3476 = vrot.slane %v3475, 4
        %v3478 = vshll.u32 %v3088, 16
        %v3480 = vrot.slane %v3478, 5
        %v3481 = vsel %vm248, %v3476, %v3480
        %v3483 = vshrl.u32 %v3089, 16
        %v3485 = vrot.slane %v3483, 4
        %v3486 = vshll.u32 %v3089, 16
        %v3488 = vrot.slane %v3486, 5
        %v3489 = vor.u32 %v3485, %v3488
        %v3490 = vrot.slane %v3489, 4
        %v3492 = vshll.u32 %v3090, 16
        %v3494 = vrot.slane %v3492, 5
        %v3495 = vsel %vm248, %v3490, %v3494
        %v3496 = vshrl.u32 %v3090, 16
        %v3498 = vrot.slane %v3496, 4
        %v3499 = vor.u32 %v3498, %v3494
        %v3500 = vrot.slane %v3499, 4
        %v3502 = vshll.u32 %v3091, 16
        %v3504 = vrot.slane %v3502, 5
        %v3505 = vsel %vm248, %v3500, %v3504
        %v3507 = vshrl.u32 %v3092, 16
        %v3509 = vrot.slane %v3507, 4
        %v3510 = vshll.u32 %v3092, 16
        %v3512 = vrot.slane %v3510, 5
        %v3513 = vor.u32 %v3509, %v3512
        %v3514 = vrot.slane %v3513, 4
        %v3516 = vshll.u32 %v3093, 16
        %v3518 = vrot.slane %v3516, 5
        %v3519 = vsel %vm248, %v3514, %v3518
        %v3520 = vshrl.u32 %v3093, 16
        %v3522 = vrot.slane %v3520, 4
        %v3523 = vor.u32 %v3522, %v3518
        %v3524 = vrot.slane %v3523, 4
        %v3526 = vshll.u32 %v3094, 16
        %v3528 = vrot.slane %v3526, 5
        %v3529 = vsel %vm248, %v3524, %v3528
        %v3531 = vshrl.u32 %v3095, 16
        %v3533 = vrot.slane %v3531, 4
        %v3534 = vshll.u32 %v3095, 16
        %v3536 = vrot.slane %v3534, 5
        %v3537 = vor.u32 %v3533, %v3536
        %v3538 = vrot.slane %v3537, 4
        %v3540 = vshll.u32 %v3096, 16
        %v3542 = vrot.slane %v3540, 5
        %v3543 = vsel %vm248, %v3538, %v3542
        %v3544 = vshrl.u32 %v3096, 16
        %v3546 = vrot.slane %v3544, 4
        %v3547 = vor.u32 %v3546, %v3542
        %v3548 = vrot.slane %v3547, 4
        %v3550 = vshll.u32 %v3097, 16
        %v3552 = vrot.slane %v3550, 5
        %v3553 = vsel %vm248, %v3548, %v3552
        %v3555 = vshrl.u32 %v3098, 16
        %v3557 = vrot.slane %v3555, 4
        %v3558 = vshll.u32 %v3098, 16
        %v3560 = vrot.slane %v3558, 5
        %v3561 = vor.u32 %v3557, %v3560
        %v3562 = vrot.slane %v3561, 4
        %v3564 = vshll.u32 %v3099, 16
        %v3566 = vrot.slane %v3564, 5
        %v3567 = vsel %vm248, %v3562, %v3566
        %v3568 = vshrl.u32 %v3099, 16
        %v3570 = vrot.slane %v3568, 4
        %v3571 = vor.u32 %v3570, %v3566
        %v3572 = vrot.slane %v3571, 4
        %v3574 = vshll.u32 %v3100, 16
        %v3576 = vrot.slane %v3574, 5
        %v3577 = vsel %vm248, %v3572, %v3576
        %v3579 = vshrl.u32 %v3101, 16
        %v3581 = vrot.slane %v3579, 4
        %v3582 = vshll.u32 %v3101, 16
        %v3584 = vrot.slane %v3582, 5
        %v3585 = vor.u32 %v3581, %v3584
        %v3586 = vrot.slane %v3585, 4
        %v3588 = vshll.u32 %v3102, 16
        %v3590 = vrot.slane %v3588, 5
        %v3591 = vsel %vm248, %v3586, %v3590
        %v3592 = vshrl.u32 %v3102, 16
        %v3594 = vrot.slane %v3592, 4
        %v3595 = vor.u32 %v3594, %v3590
        %v3596 = vrot.slane %v3595, 4
        %v3598 = vshll.u32 %v3103, 16
        %v3600 = vrot.slane %v3598, 5
        %v3601 = vsel %vm248, %v3596, %v3600
        %v3603 = vshrl.u32 %v3104, 16
        %v3605 = vrot.slane %v3603, 4
        %v3606 = vshll.u32 %v3104, 16
        %v3608 = vrot.slane %v3606, 5
        %v3609 = vor.u32 %v3605, %v3608
        %v3610 = vrot.slane %v3609, 4
        %v3612 = vshll.u32 %v3105, 16
        %v3614 = vrot.slane %v3612, 5
        %v3615 = vsel %vm248, %v3610, %v3614
        %v3616 = vshrl.u32 %v3105, 16
        %v3618 = vrot.slane %v3616, 4
        %v3619 = vor.u32 %v3618, %v3614
        %v3620 = vrot.slane %v3619, 4
        %v3622 = vshll.u32 %v3106, 16
        %v3624 = vrot.slane %v3622, 5
        %v3625 = vsel %vm248, %v3620, %v3624
        %v3627 = vshrl.u32 %v3107, 16
        %v3629 = vrot.slane %v3627, 4
        %v3630 = vshll.u32 %v3107, 16
        %v3632 = vrot.slane %v3630, 5
        %v3633 = vor.u32 %v3629, %v3632
        %v3634 = vrot.slane %v3633, 4
        %v3636 = vshll.u32 %v3108, 16
        %v3638 = vrot.slane %v3636, 5
        %v3639 = vsel %vm248, %v3634, %v3638
        %v3640 = vshrl.u32 %v3108, 16
        %v3642 = vrot.slane %v3640, 4
        %v3643 = vor.u32 %v3642, %v3638
        %v3644 = vrot.slane %v3643, 4
        %v3646 = vshll.u32 %v3109, 16
        %v3648 = vrot.slane %v3646, 5
        %v3649 = vsel %vm248, %v3644, %v3648
        %v3651 = vshrl.u32 %v3110, 16
        %v3653 = vrot.slane %v3651, 4
        %v3654 = vshll.u32 %v3110, 16
        %v3656 = vrot.slane %v3654, 5
        %v3657 = vor.u32 %v3653, %v3656
        %v3658 = vrot.slane %v3657, 4
        %v3660 = vshll.u32 %v3111, 16
        %v3662 = vrot.slane %v3660, 5
        %v3663 = vsel %vm248, %v3658, %v3662
        %v3664 = vshrl.u32 %v3111, 16
        %v3666 = vrot.slane %v3664, 4
        %v3667 = vor.u32 %v3666, %v3662
        %v3668 = vrot.slane %v3667, 4
        %v3670 = vshll.u32 %v3112, 16
        %v3672 = vrot.slane %v3670, 5
        %v3673 = vsel %vm248, %v3668, %v3672
        %v3675 = vshrl.u32 %v3113, 16
        %v3677 = vrot.slane %v3675, 4
        %v3678 = vshll.u32 %v3113, 16
        %v3680 = vrot.slane %v3678, 5
        %v3681 = vor.u32 %v3677, %v3680
        %v3682 = vrot.slane %v3681, 4
        %v3684 = vshll.u32 %v3114, 16
        %v3686 = vrot.slane %v3684, 5
        %v3687 = vsel %vm248, %v3682, %v3686
        %v3688 = vshrl.u32 %v3114, 16
        %v3690 = vrot.slane %v3688, 4
        %v3691 = vor.u32 %v3690, %v3686
        %v3692 = vrot.slane %v3691, 4
        %v3694 = vshll.u32 %v3115, 16
        %v3696 = vrot.slane %v3694, 5
        %v3697 = vsel %vm248, %v3692, %v3696
        %v3699 = vshrl.u32 %v3116, 16
        %v3701 = vrot.slane %v3699, 4
        %v3702 = vshll.u32 %v3116, 16
        %v3704 = vrot.slane %v3702, 5
        %v3705 = vor.u32 %v3701, %v3704
        %v3706 = vrot.slane %v3705, 4
        %v3708 = vshll.u32 %v3117, 16
        %v3710 = vrot.slane %v3708, 5
        %v3711 = vsel %vm248, %v3706, %v3710
        %v3712 = vshrl.u32 %v3117, 16
        %v3714 = vrot.slane %v3712, 4
        %v3715 = vor.u32 %v3714, %v3710
        %v3716 = vrot.slane %v3715, 4
        %v3718 = vshll.u32 %v3118, 16
        %v3720 = vrot.slane %v3718, 5
        %v3721 = vsel %vm248, %v3716, %v3720
        %v3723 = vshrl.u32 %v3119, 16
        %v3725 = vrot.slane %v3723, 4
        %v3726 = vshll.u32 %v3119, 16
        %v3728 = vrot.slane %v3726, 5
        %v3729 = vor.u32 %v3725, %v3728
        %v3730 = vrot.slane %v3729, 4
        %v3732 = vshll.u32 %v3120, 16
        %v3734 = vrot.slane %v3732, 5
        %v3735 = vsel %vm248, %v3730, %v3734
        %v3736 = vshrl.u32 %v3120, 16
        %v3738 = vrot.slane %v3736, 4
        %v3739 = vor.u32 %v3738, %v3734
        %v3740 = vrot.slane %v3739, 4
        %v3742 = vshll.u32 %v3121, 16
        %v3744 = vrot.slane %v3742, 5
        %v3745 = vsel %vm248, %v3740, %v3744
        %v3747 = vshrl.u32 %v3122, 16
        %v3749 = vrot.slane %v3747, 4
        %v3750 = vshll.u32 %v3122, 16
        %v3752 = vrot.slane %v3750, 5
        %v3753 = vor.u32 %v3749, %v3752
        %v3754 = vrot.slane %v3753, 4
        %v3756 = vshll.u32 %v3123, 16
        %v3758 = vrot.slane %v3756, 5
        %v3759 = vsel %vm248, %v3754, %v3758
        %v3760 = vshrl.u32 %v3123, 16
        %v3762 = vrot.slane %v3760, 4
        %v3763 = vor.u32 %v3762, %v3758
        %v3764 = vrot.slane %v3763, 4
        %v3766 = vshll.u32 %v3124, 16
        %v3768 = vrot.slane %v3766, 5
        %v3769 = vsel %vm248, %v3764, %v3768
        %v3771 = vshrl.u32 %v3125, 16
        %v3773 = vrot.slane %v3771, 4
        %v3774 = vshll.u32 %v3125, 16
        %v3776 = vrot.slane %v3774, 5
        %v3777 = vor.u32 %v3773, %v3776
        %v3778 = vrot.slane %v3777, 4
        %v3780 = vshll.u32 %v3126, 16
        %v3782 = vrot.slane %v3780, 5
        %v3783 = vsel %vm248, %v3778, %v3782
        %v3784 = vshrl.u32 %v3126, 16
        %v3786 = vrot.slane %v3784, 4
        %v3787 = vor.u32 %v3786, %v3782
        %v3788 = vrot.slane %v3787, 4
        %v3790 = vshll.u32 %v3127, 16
        %v3792 = vrot.slane %v3790, 5
        %v3793 = vsel %vm248, %v3788, %v3792
        %v3795 = vshrl.u32 %v3128, 16
        %v3797 = vrot.slane %v3795, 4
        %v3798 = vshll.u32 %v3128, 16
        %v3800 = vrot.slane %v3798, 5
        %v3801 = vor.u32 %v3797, %v3800
        %v3802 = vrot.slane %v3801, 4
        %v3804 = vshll.u32 %v3129, 16
        %v3806 = vrot.slane %v3804, 5
        %v3807 = vsel %vm248, %v3802, %v3806
        %v3808 = vshrl.u32 %v3129, 16
        %v3810 = vrot.slane %v3808, 4
        %v3811 = vor.u32 %v3810, %v3806
        %v3812 = vrot.slane %v3811, 4
        %v3814 = vshll.u32 %v3130, 16
        %v3816 = vrot.slane %v3814, 5
        %v3817 = vsel %vm248, %v3812, %v3816
        %v3819 = vshrl.u32 %v3131, 16
        %v3821 = vrot.slane %v3819, 4
        %v3822 = vshll.u32 %v3131, 16
        %v3824 = vrot.slane %v3822, 5
        %v3825 = vor.u32 %v3821, %v3824
        %v3826 = vrot.slane %v3825, 4
        %v3828 = vshll.u32 %v3132, 16
        %v3830 = vrot.slane %v3828, 5
        %v3831 = vsel %vm248, %v3826, %v3830
        %v3832 = vshrl.u32 %v3132, 16
        %v3834 = vrot.slane %v3832, 4
        %v3835 = vor.u32 %v3834, %v3830
        %v3836 = vrot.slane %v3835, 4
        %v3838 = vshll.u32 %v3133, 16
        %v3840 = vrot.slane %v3838, 5
        %v3841 = vsel %vm248, %v3836, %v3840
        %v3842 = vunpack.c.l.b16 %v3471
        %v3843 = vunpack.c.l.b16 %v3481
        %v3844 = vunpack.c.l.b16 %v3495
        %v3845 = vunpack.c.l.b16 %v3505
        %v3846 = vunpack.c.l.b16 %v3519
        %v3847 = vunpack.c.l.b16 %v3529
        %v3848 = vunpack.c.l.b16 %v3543
        %v3849 = vunpack.c.l.b16 %v3553
        %v3850 = vunpack.c.l.b16 %v3567
        %v3851 = vunpack.c.l.b16 %v3577
        %v3852 = vunpack.c.l.b16 %v3591
        %v3853 = vunpack.c.l.b16 %v3601
        %v3854 = vunpack.c.l.b16 %v3615
        %v3855 = vunpack.c.l.b16 %v3625
        %v3856 = vunpack.c.l.b16 %v3639
        %v3857 = vunpack.c.l.b16 %v3649
        %v3858 = vunpack.c.l.b16 %v3663
        %v3859 = vunpack.c.l.b16 %v3673
        %v3860 = vunpack.c.l.b16 %v3687
        %v3861 = vunpack.c.l.b16 %v3697
        %v3862 = vunpack.c.l.b16 %v3711
        %v3863 = vunpack.c.l.b16 %v3721
        %v3864 = vunpack.c.l.b16 %v3735
        %v3865 = vunpack.c.l.b16 %v3745
        %v3866 = vunpack.c.l.b16 %v3759
        %v3867 = vunpack.c.l.b16 %v3769
        %v3868 = vunpack.c.l.b16 %v3783
        %v3869 = vunpack.c.l.b16 %v3793
        %v3870 = vunpack.c.l.b16 %v3807
        %v3871 = vunpack.c.l.b16 %v3817
        %v3872 = vunpack.c.l.b16 %v3831
        %v3873 = vunpack.c.l.b16 %v3841
        %v3874 = vpack.c.b16 %v3843, %v3842
        %v3875 = vpack.c.b16 %v3845, %v3844
        %v3876 = vpack.c.b16 %v3847, %v3846
        %v3877 = vpack.c.b16 %v3849, %v3848
        %v3878 = vpack.c.b16 %v3851, %v3850
        %v3879 = vpack.c.b16 %v3853, %v3852
        %v3880 = vpack.c.b16 %v3855, %v3854
        %v3881 = vpack.c.b16 %v3857, %v3856
        %v3882 = vpack.c.b16 %v3859, %v3858
        %v3883 = vpack.c.b16 %v3861, %v3860
        %v3884 = vpack.c.b16 %v3863, %v3862
        %v3885 = vpack.c.b16 %v3865, %v3864
        %v3886 = vpack.c.b16 %v3867, %v3866
        %v3887 = vpack.c.b16 %v3869, %v3868
        %v3888 = vpack.c.b16 %v3871, %v3870
        %v3889 = vpack.c.b16 %v3873, %v3872
        %v3891 = vsel %vm681, %v3874, 0
        %v3894 = vsel %vm681, %v3875, 0
        %v3897 = vsel %vm681, %v3876, 0
        %v3900 = vsel %vm681, %v3877, 0
        %v3903 = vsel %vm681, %v3878, 0
        %v3906 = vsel %vm681, %v3879, 0
        %v3909 = vsel %vm681, %v3880, 0
        %v3912 = vsel %vm681, %v3881, 0
        %v3915 = vsel %vm681, %v3882, 0
        %v3918 = vsel %vm681, %v3883, 0
        %v3921 = vsel %vm681, %v3884, 0
        %v3924 = vsel %vm681, %v3885, 0
        %v3927 = vsel %vm681, %v3886, 0
        %v3930 = vsel %vm681, %v3887, 0
        %v3933 = vsel %vm681, %v3888, 0
        %v3936 = vsel %vm681, %v3889, 0
        %v3939 = vsel %vm730, %v193, 0
        %3941 = vmatprep.subr.bf16.mxu0 0
        %3942 = vmatpush1.bf16.msra.mxu0 %v3939
        %3943 = vmatprep.subr.bf16.mxu0 0
        %3944 = vmatpush1.bf16.msra.mxu0 0
        %3945 = vmatprep.subr.bf16.mxu0 0
        %3946 = vmatpush1.bf16.msra.mxu0 0
        %3947 = vmatprep.subr.bf16.mxu0 0
        %3948 = vmatpush1.bf16.msra.mxu0 0
        %3949 = vmatprep.subr.bf16.mxu0 0
        %3950 = vmatpush1.bf16.msra.mxu0 0
        %3951 = vmatprep.subr.bf16.mxu0 0
        %3952 = vmatpush1.bf16.msra.mxu0 0
        %3953 = vmatprep.subr.bf16.mxu0 0
        %3954 = vmatpush1.bf16.msra.mxu0 0
        %3955 = vmatprep.subr.bf16.mxu0 0
        %3956 = vmatpush1.bf16.msra.mxu0 0
        %3957 = vmatprep.subr.bf16.mxu0 0
        %3958 = vmatpush1.bf16.msra.mxu0 0
        %3959 = vmatprep.subr.bf16.mxu0 0
        %3960 = vmatpush1.bf16.msra.mxu0 0
        %3961 = vmatprep.subr.bf16.mxu0 0
        %3962 = vmatpush1.bf16.msra.mxu0 0
        %3963 = vmatprep.subr.bf16.mxu0 0
        %3964 = vmatpush1.bf16.msra.mxu0 0
        %3965 = vmatprep.subr.bf16.mxu0 0
        %3966 = vmatpush1.bf16.msra.mxu0 0
        %3967 = vmatprep.subr.bf16.mxu0 0
        %3968 = vmatpush1.bf16.msra.mxu0 0
        %3969 = vmatprep.subr.bf16.mxu0 0
        %3970 = vmatpush1.bf16.msra.mxu0 0
        %3971 = vmatprep.subr.bf16.mxu0 0
        %3972 = vmatpush1.bf16.msra.mxu0 0
        %3973 = vmatprep.mubr.bf16.mxu0 0
        %3974 = vmatmul.mubr.bf16.gmra.mrb[0].mxu0 %v3891
        %v3975 = vpop.f32.mrb[0].mxu0
        %v3976 = vadd.f32 0.0, %v3975
        %v3977 = vpop.f32.mrb[0].mxu0
        %v3978 = vpop.f32.mrb[0].mxu0
        %v3979 = vadd.f32 0.0, %v3978
        %v3980 = vpop.f32.mrb[0].mxu0
        %3981 = vmatprep.mubr.bf16.mxu0 0
        %3982 = vmatmul.mubr.bf16.gmra.mrb[0].mxu0 %v3894
        %v3983 = vpop.f32.mrb[0].mxu0
        %v3984 = vadd.f32 0.0, %v3983
        %v3985 = vpop.f32.mrb[0].mxu0
        %v3986 = vpop.f32.mrb[0].mxu0
        %v3987 = vadd.f32 0.0, %v3986
        %v3988 = vpop.f32.mrb[0].mxu0
        %3989 = vmatprep.mubr.bf16.mxu0 0
        %3990 = vmatmul.mubr.bf16.gmra.mrb[0].mxu0 %v3897
        %v3991 = vpop.f32.mrb[0].mxu0
        %v3992 = vadd.f32 0.0, %v3991
        %v3993 = vpop.f32.mrb[0].mxu0
        %v3994 = vpop.f32.mrb[0].mxu0
        %v3995 = vadd.f32 0.0, %v3994
        %v3996 = vpop.f32.mrb[0].mxu0
        %3997 = vmatprep.mubr.bf16.mxu0 0
        %3998 = vmatmul.mubr.bf16.gmra.mrb[0].mxu0 %v3900
        %v3999 = vpop.f32.mrb[0].mxu0
        %v4000 = vadd.f32 0.0, %v3999
        %v4001 = vpop.f32.mrb[0].mxu0
        %v4002 = vpop.f32.mrb[0].mxu0
        %v4003 = vadd.f32 0.0, %v4002
        %v4004 = vpop.f32.mrb[0].mxu0
        %4005 = vmatprep.mubr.bf16.mxu0 0
        %4006 = vmatmul.mubr.bf16.gmra.mrb[0].mxu0 %v3903
        %v4007 = vpop.f32.mrb[0].mxu0
        %v4008 = vadd.f32 0.0, %v4007
        %v4009 = vpop.f32.mrb[0].mxu0
        %v4010 = vpop.f32.mrb[0].mxu0
        %v4011 = vadd.f32 0.0, %v4010
        %v4012 = vpop.f32.mrb[0].mxu0
        %4013 = vmatprep.mubr.bf16.mxu0 0
        %4014 = vmatmul.mubr.bf16.gmra.mrb[0].mxu0 %v3906
        %v4015 = vpop.f32.mrb[0].mxu0
        %v4016 = vadd.f32 0.0, %v4015
        %v4017 = vpop.f32.mrb[0].mxu0
        %v4018 = vpop.f32.mrb[0].mxu0
        %v4019 = vadd.f32 0.0, %v4018
        %v4020 = vpop.f32.mrb[0].mxu0
        %4021 = vmatprep.mubr.bf16.mxu0 0
        %4022 = vmatmul.mubr.bf16.gmra.mrb[0].mxu0 %v3909
        %v4023 = vpop.f32.mrb[0].mxu0
        %v4024 = vadd.f32 0.0, %v4023
        %v4025 = vpop.f32.mrb[0].mxu0
        %v4026 = vpop.f32.mrb[0].mxu0
        %v4027 = vadd.f32 0.0, %v4026
        %v4028 = vpop.f32.mrb[0].mxu0
        %4029 = vmatprep.mubr.bf16.mxu0 0
        %4030 = vmatmul.mubr.bf16.gmra.mrb[0].mxu0 %v3912
        %v4031 = vpop.f32.mrb[0].mxu0
        %v4032 = vadd.f32 0.0, %v4031
        %v4033 = vpop.f32.mrb[0].mxu0
        %v4034 = vpop.f32.mrb[0].mxu0
        %v4035 = vadd.f32 0.0, %v4034
        %v4036 = vpop.f32.mrb[0].mxu0
        %4037 = vmatprep.mubr.bf16.mxu0 0
        %4038 = vmatmul.mubr.bf16.gmra.mrb[0].mxu0 %v3915
        %v4039 = vpop.f32.mrb[0].mxu0
        %v4040 = vadd.f32 0.0, %v4039
        %v4041 = vpop.f32.mrb[0].mxu0
        %v4042 = vpop.f32.mrb[0].mxu0
        %v4043 = vadd.f32 0.0, %v4042
        %v4044 = vpop.f32.mrb[0].mxu0
        %4045 = vmatprep.mubr.bf16.mxu0 0
        %4046 = vmatmul.mubr.bf16.gmra.mrb[0].mxu0 %v3918
        %v4047 = vpop.f32.mrb[0].mxu0
        %v4048 = vadd.f32 0.0, %v4047
        %v4049 = vpop.f32.mrb[0].mxu0
        %v4050 = vpop.f32.mrb[0].mxu0
        %v4051 = vadd.f32 0.0, %v4050
        %v4052 = vpop.f32.mrb[0].mxu0
        %4053 = vmatprep.mubr.bf16.mxu0 0
        %4054 = vmatmul.mubr.bf16.gmra.mrb[0].mxu0 %v3921
        %v4055 = vpop.f32.mrb[0].mxu0
        %v4056 = vadd.f32 0.0, %v4055
        %v4057 = vpop.f32.mrb[0].mxu0
        %v4058 = vpop.f32.mrb[0].mxu0
        %v4059 = vadd.f32 0.0, %v4058
        %v4060 = vpop.f32.mrb[0].mxu0
        %4061 = vmatprep.mubr.bf16.mxu0 0
        %4062 = vmatmul.mubr.bf16.gmra.mrb[0].mxu0 %v3924
        %v4063 = vpop.f32.mrb[0].mxu0
        %v4064 = vadd.f32 0.0, %v4063
        %v4065 = vpop.f32.mrb[0].mxu0
        %v4066 = vpop.f32.mrb[0].mxu0
        %v4067 = vadd.f32 0.0, %v4066
        %v4068 = vpop.f32.mrb[0].mxu0
        %4069 = vmatprep.mubr.bf16.mxu0 0
        %4070 = vmatmul.mubr.bf16.gmra.mrb[0].mxu0 %v3927
        %v4071 = vpop.f32.mrb[0].mxu0
        %v4072 = vadd.f32 0.0, %v4071
        %v4073 = vpop.f32.mrb[0].mxu0
        %v4074 = vpop.f32.mrb[0].mxu0
        %v4075 = vadd.f32 0.0, %v4074
        %v4076 = vpop.f32.mrb[0].mxu0
        %4077 = vmatprep.mubr.bf16.mxu0 0
        %4078 = vmatmul.mubr.bf16.gmra.mrb[0].mxu0 %v3930
        %v4079 = vpop.f32.mrb[0].mxu0
        %v4080 = vadd.f32 0.0, %v4079
        %v4081 = vpop.f32.mrb[0].mxu0
        %v4082 = vpop.f32.mrb[0].mxu0
        %v4083 = vadd.f32 0.0, %v4082
        %v4084 = vpop.f32.mrb[0].mxu0
        %4085 = vmatprep.mubr.bf16.mxu0 0
        %4086 = vmatmul.mubr.bf16.gmra.mrb[0].mxu0 %v3933
        %v4087 = vpop.f32.mrb[0].mxu0
        %v4088 = vadd.f32 0.0, %v4087
        %v4089 = vpop.f32.mrb[0].mxu0
        %v4090 = vpop.f32.mrb[0].mxu0
        %v4091 = vadd.f32 0.0, %v4090
        %v4092 = vpop.f32.mrb[0].mxu0
        %4093 = vmatprep.mubr.bf16.mxu0 0
        %4094 = vmatmul.mubr.bf16.gmra.mrb[0].mxu0 %v3936
        %v4095 = vpop.f32.mrb[0].mxu0
        %v4096 = vadd.f32 0.0, %v4095
        %v4097 = vpop.f32.mrb[0].mxu0
        %v4098 = vpop.f32.mrb[0].mxu0
        %v4099 = vadd.f32 0.0, %v4098
        %v4100 = vpop.f32.mrb[0].mxu0
        %4101 = vdwg.mxu0
        %v4102 = vadd.f32 %v3426, %v3976
        %v4103 = vadd.f32 %v3427, %v3979
        %v4104 = vadd.f32 %v3428, %v3984
        %v4105 = vadd.f32 %v3429, %v3987
        %v4106 = vadd.f32 %v3430, %v3992
        %v4107 = vadd.f32 %v3431, %v3995
        %v4108 = vadd.f32 %v3432, %v4000
        %v4109 = vadd.f32 %v3433, %v4003
        %v4110 = vadd.f32 %v3434, %v4008
        %v4111 = vadd.f32 %v3435, %v4011
        %v4112 = vadd.f32 %v3436, %v4016
        %v4113 = vadd.f32 %v3437, %v4019
        %v4114 = vadd.f32 %v3438, %v4024
        %v4115 = vadd.f32 %v3439, %v4027
        %v4116 = vadd.f32 %v3440, %v4032
        %v4117 = vadd.f32 %v3441, %v4035
        %v4118 = vadd.f32 %v3442, %v4040
        %v4119 = vadd.f32 %v3443, %v4043
        %v4120 = vadd.f32 %v3444, %v4048
        %v4121 = vadd.f32 %v3445, %v4051
        %v4122 = vadd.f32 %v3446, %v4056
        %v4123 = vadd.f32 %v3447, %v4059
        %v4124 = vadd.f32 %v3448, %v4064
        %v4125 = vadd.f32 %v3449, %v4067
        %v4126 = vadd.f32 %v3450, %v4072
        %v4127 = vadd.f32 %v3451, %v4075
        %v4128 = vadd.f32 %v3452, %v4080
        %v4129 = vadd.f32 %v3453, %v4083
        %v4130 = vadd.f32 %v3454, %v4088
        %v4131 = vadd.f32 %v3455, %v4091
        %v4132 = vadd.f32 %v3456, %v4096
        %v4133 = vadd.f32 %v3457, %v4099
        %v4150 = vrot.slane %v3086, 5
        %v4151 = vrot.slane %v4150, 4
        %v4152 = vrot.slane %v3087, 5
        %v4153 = vsel %vm1205, %v4151, %v4152
        %v4154 = vrot.slane %v4152, 4
        %v4155 = vrot.slane %v3088, 5
        %v4156 = vsel %vm1205, %v4154, %v4155
        %v4157 = vrot.slane %v3089, 5
        %v4158 = vrot.slane %v4157, 4
        %v4159 = vrot.slane %v3090, 5
        %v4160 = vsel %vm1205, %v4158, %v4159
        %v4161 = vrot.slane %v4159, 4
        %v4162 = vrot.slane %v3091, 5
        %v4163 = vsel %vm1205, %v4161, %v4162
        %v4164 = vrot.slane %v3092, 5
        %v4165 = vrot.slane %v4164, 4
        %v4166 = vrot.slane %v3093, 5
        %v4167 = vsel %vm1205, %v4165, %v4166
        %v4168 = vrot.slane %v4166, 4
        %v4169 = vrot.slane %v3094, 5
        %v4170 = vsel %vm1205, %v4168, %v4169
        %v4171 = vrot.slane %v3095, 5
        %v4172 = vrot.slane %v4171, 4
        %v4173 = vrot.slane %v3096, 5
        %v4174 = vsel %vm1205, %v4172, %v4173
        %v4175 = vrot.slane %v4173, 4
        %v4176 = vrot.slane %v3097, 5
        %v4177 = vsel %vm1205, %v4175, %v4176
        %v4178 = vrot.slane %v3098, 5
        %v4179 = vrot.slane %v4178, 4
        %v4180 = vrot.slane %v3099, 5
        %v4181 = vsel %vm1205, %v4179, %v4180
        %v4182 = vrot.slane %v4180, 4
        %v4183 = vrot.slane %v3100, 5
        %v4184 = vsel %vm1205, %v4182, %v4183
        %v4185 = vrot.slane %v3101, 5
        %v4186 = vrot.slane %v4185, 4
        %v4187 = vrot.slane %v3102, 5
        %v4188 = vsel %vm1205, %v4186, %v4187
        %v4189 = vrot.slane %v4187, 4
        %v4190 = vrot.slane %v3103, 5
        %v4191 = vsel %vm1205, %v4189, %v4190
        %v4192 = vrot.slane %v3104, 5
        %v4193 = vrot.slane %v4192, 4
        %v4194 = vrot.slane %v3105, 5
        %v4195 = vsel %vm1205, %v4193, %v4194
        %v4196 = vrot.slane %v4194, 4
        %v4197 = vrot.slane %v3106, 5
        %v4198 = vsel %vm1205, %v4196, %v4197
        %v4199 = vrot.slane %v3107, 5
        %v4200 = vrot.slane %v4199, 4
        %v4201 = vrot.slane %v3108, 5
        %v4202 = vsel %vm1205, %v4200, %v4201
        %v4203 = vrot.slane %v4201, 4
        %v4204 = vrot.slane %v3109, 5
        %v4205 = vsel %vm1205, %v4203, %v4204
        %v4206 = vrot.slane %v3110, 5
        %v4207 = vrot.slane %v4206, 4
        %v4208 = vrot.slane %v3111, 5
        %v4209 = vsel %vm1205, %v4207, %v4208
        %v4210 = vrot.slane %v4208, 4
        %v4211 = vrot.slane %v3112, 5
        %v4212 = vsel %vm1205, %v4210, %v4211
        %v4213 = vrot.slane %v3113, 5
        %v4214 = vrot.slane %v4213, 4
        %v4215 = vrot.slane %v3114, 5
        %v4216 = vsel %vm1205, %v4214, %v4215
        %v4217 = vrot.slane %v4215, 4
        %v4218 = vrot.slane %v3115, 5
        %v4219 = vsel %vm1205, %v4217, %v4218
        %v4220 = vrot.slane %v3116, 5
        %v4221 = vrot.slane %v4220, 4
        %v4222 = vrot.slane %v3117, 5
        %v4223 = vsel %vm1205, %v4221, %v4222
        %v4224 = vrot.slane %v4222, 4
        %v4225 = vrot.slane %v3118, 5
        %v4226 = vsel %vm1205, %v4224, %v4225
        %v4227 = vrot.slane %v3119, 5
        %v4228 = vrot.slane %v4227, 4
        %v4229 = vrot.slane %v3120, 5
        %v4230 = vsel %vm1205, %v4228, %v4229
        %v4231 = vrot.slane %v4229, 4
        %v4232 = vrot.slane %v3121, 5
        %v4233 = vsel %vm1205, %v4231, %v4232
        %v4234 = vrot.slane %v3122, 5
        %v4235 = vrot.slane %v4234, 4
        %v4236 = vrot.slane %v3123, 5
        %v4237 = vsel %vm1205, %v4235, %v4236
        %v4238 = vrot.slane %v4236, 4
        %v4239 = vrot.slane %v3124, 5
        %v4240 = vsel %vm1205, %v4238, %v4239
        %v4241 = vrot.slane %v3125, 5
        %v4242 = vrot.slane %v4241, 4
        %v4243 = vrot.slane %v3126, 5
        %v4244 = vsel %vm1205, %v4242, %v4243
        %v4245 = vrot.slane %v4243, 4
        %v4246 = vrot.slane %v3127, 5
        %v4247 = vsel %vm1205, %v4245, %v4246
        %v4248 = vrot.slane %v3128, 5
        %v4249 = vrot.slane %v4248, 4
        %v4250 = vrot.slane %v3129, 5
        %v4251 = vsel %vm1205, %v4249, %v4250
        %v4252 = vrot.slane %v4250, 4
        %v4253 = vrot.slane %v3130, 5
        %v4254 = vsel %vm1205, %v4252, %v4253
        %v4255 = vrot.slane %v3131, 5
        %v4256 = vrot.slane %v4255, 4
        %v4257 = vrot.slane %v3132, 5
        %v4258 = vsel %vm1205, %v4256, %v4257
        %v4259 = vrot.slane %v4257, 4
        %v4260 = vrot.slane %v3133, 5
        %v4261 = vsel %vm1205, %v4259, %v4260
        %v4262 = vunpack.c.l.b16 %v4153
        %v4263 = vunpack.c.l.b16 %v4156
        %v4264 = vunpack.c.l.b16 %v4160
        %v4265 = vunpack.c.l.b16 %v4163
        %v4266 = vunpack.c.l.b16 %v4167
        %v4267 = vunpack.c.l.b16 %v4170
        %v4268 = vunpack.c.l.b16 %v4174
        %v4269 = vunpack.c.l.b16 %v4177
        %v4270 = vunpack.c.l.b16 %v4181
        %v4271 = vunpack.c.l.b16 %v4184
        %v4272 = vunpack.c.l.b16 %v4188
        %v4273 = vunpack.c.l.b16 %v4191
        %v4274 = vunpack.c.l.b16 %v4195
        %v4275 = vunpack.c.l.b16 %v4198
        %v4276 = vunpack.c.l.b16 %v4202
        %v4277 = vunpack.c.l.b16 %v4205
        %v4278 = vunpack.c.l.b16 %v4209
        %v4279 = vunpack.c.l.b16 %v4212
        %v4280 = vunpack.c.l.b16 %v4216
        %v4281 = vunpack.c.l.b16 %v4219
        %v4282 = vunpack.c.l.b16 %v4223
        %v4283 = vunpack.c.l.b16 %v4226
        %v4284 = vunpack.c.l.b16 %v4230
        %v4285 = vunpack.c.l.b16 %v4233
        %v4286 = vunpack.c.l.b16 %v4237
        %v4287 = vunpack.c.l.b16 %v4240
        %v4288 = vunpack.c.l.b16 %v4244
        %v4289 = vunpack.c.l.b16 %v4247
        %v4290 = vunpack.c.l.b16 %v4251
        %v4291 = vunpack.c.l.b16 %v4254
        %v4292 = vunpack.c.l.b16 %v4258
        %v4293 = vunpack.c.l.b16 %v4261
        %v4294 = vpack.c.b16 %v4263, %v4262
        %v4295 = vpack.c.b16 %v4265, %v4264
        %v4296 = vpack.c.b16 %v4267, %v4266
        %v4297 = vpack.c.b16 %v4269, %v4268
        %v4298 = vpack.c.b16 %v4271, %v4270
        %v4299 = vpack.c.b16 %v4273, %v4272
        %v4300 = vpack.c.b16 %v4275, %v4274
        %v4301 = vpack.c.b16 %v4277, %v4276
        %v4302 = vpack.c.b16 %v4279, %v4278
        %v4303 = vpack.c.b16 %v4281, %v4280
        %v4304 = vpack.c.b16 %v4283, %v4282
        %v4305 = vpack.c.b16 %v4285, %v4284
        %v4306 = vpack.c.b16 %v4287, %v4286
        %v4307 = vpack.c.b16 %v4289, %v4288
        %v4308 = vpack.c.b16 %v4291, %v4290
        %v4309 = vpack.c.b16 %v4293, %v4292
        %v4311 = vsel %vm681, %v4294, 0
        %v4314 = vsel %vm681, %v4295, 0
        %v4317 = vsel %vm681, %v4296, 0
        %v4320 = vsel %vm681, %v4297, 0
        %v4323 = vsel %vm681, %v4298, 0
        %v4326 = vsel %vm681, %v4299, 0
        %v4329 = vsel %vm681, %v4300, 0
        %v4332 = vsel %vm681, %v4301, 0
        %v4335 = vsel %vm681, %v4302, 0
        %v4338 = vsel %vm681, %v4303, 0
        %v4341 = vsel %vm681, %v4304, 0
        %v4344 = vsel %vm681, %v4305, 0
        %v4347 = vsel %vm681, %v4306, 0
        %v4350 = vsel %vm681, %v4307, 0
        %v4353 = vsel %vm681, %v4308, 0
        %v4356 = vsel %vm681, %v4309, 0
        %v4359 = vsel %vm730, %v194, 0
        %4361 = vmatprep.subr.bf16.mxu0 0
        %4362 = vmatpush1.bf16.msra.mxu0 %v4359
        %4363 = vmatprep.subr.bf16.mxu0 0
        %4364 = vmatpush1.bf16.msra.mxu0 0
        %4365 = vmatprep.subr.bf16.mxu0 0
        %4366 = vmatpush1.bf16.msra.mxu0 0
        %4367 = vmatprep.subr.bf16.mxu0 0
        %4368 = vmatpush1.bf16.msra.mxu0 0
        %4369 = vmatprep.subr.bf16.mxu0 0
        %4370 = vmatpush1.bf16.msra.mxu0 0
        %4371 = vmatprep.subr.bf16.mxu0 0
        %4372 = vmatpush1.bf16.msra.mxu0 0
        %4373 = vmatprep.subr.bf16.mxu0 0
        %4374 = vmatpush1.bf16.msra.mxu0 0
        %4375 = vmatprep.subr.bf16.mxu0 0
        %4376 = vmatpush1.bf16.msra.mxu0 0
        %4377 = vmatprep.subr.bf16.mxu0 0
        %4378 = vmatpush1.bf16.msra.mxu0 0
        %4379 = vmatprep.subr.bf16.mxu0 0
        %4380 = vmatpush1.bf16.msra.mxu0 0
        %4381 = vmatprep.subr.bf16.mxu0 0
        %4382 = vmatpush1.bf16.msra.mxu0 0
        %4383 = vmatprep.subr.bf16.mxu0 0
        %4384 = vmatpush1.bf16.msra.mxu0 0
        %4385 = vmatprep.subr.bf16.mxu0 0
        %4386 = vmatpush1.bf16.msra.mxu0 0
        %4387 = vmatprep.subr.bf16.mxu0 0
        %4388 = vmatpush1.bf16.msra.mxu0 0
        %4389 = vmatprep.subr.bf16.mxu0 0
        %4390 = vmatpush1.bf16.msra.mxu0 0
        %4391 = vmatprep.subr.bf16.mxu0 0
        %4392 = vmatpush1.bf16.msra.mxu0 0
        %4393 = vmatprep.mubr.bf16.mxu0 0
        %4394 = vmatmul.mubr.bf16.gmra.mrb[0].mxu0 %v4311
        %v4395 = vpop.f32.mrb[0].mxu0
        %v4396 = vadd.f32 0.0, %v4395
        %v4397 = vpop.f32.mrb[0].mxu0
        %v4398 = vpop.f32.mrb[0].mxu0
        %v4399 = vadd.f32 0.0, %v4398
        %v4400 = vpop.f32.mrb[0].mxu0
        %4401 = vmatprep.mubr.bf16.mxu0 0
        %4402 = vmatmul.mubr.bf16.gmra.mrb[0].mxu0 %v4314
        %v4403 = vpop.f32.mrb[0].mxu0
        %v4404 = vadd.f32 0.0, %v4403
        %v4405 = vpop.f32.mrb[0].mxu0
        %v4406 = vpop.f32.mrb[0].mxu0
        %v4407 = vadd.f32 0.0, %v4406
        %v4408 = vpop.f32.mrb[0].mxu0
        %4409 = vmatprep.mubr.bf16.mxu0 0
        %4410 = vmatmul.mubr.bf16.gmra.mrb[0].mxu0 %v4317
        %v4411 = vpop.f32.mrb[0].mxu0
        %v4412 = vadd.f32 0.0, %v4411
        %v4413 = vpop.f32.mrb[0].mxu0
        %v4414 = vpop.f32.mrb[0].mxu0
        %v4415 = vadd.f32 0.0, %v4414
        %v4416 = vpop.f32.mrb[0].mxu0
        %4417 = vmatprep.mubr.bf16.mxu0 0
        %4418 = vmatmul.mubr.bf16.gmra.mrb[0].mxu0 %v4320
        %v4419 = vpop.f32.mrb[0].mxu0
        %v4420 = vadd.f32 0.0, %v4419
        %v4421 = vpop.f32.mrb[0].mxu0
        %v4422 = vpop.f32.mrb[0].mxu0
        %v4423 = vadd.f32 0.0, %v4422
        %v4424 = vpop.f32.mrb[0].mxu0
        %4425 = vmatprep.mubr.bf16.mxu0 0
        %4426 = vmatmul.mubr.bf16.gmra.mrb[0].mxu0 %v4323
        %v4427 = vpop.f32.mrb[0].mxu0
        %v4428 = vadd.f32 0.0, %v4427
        %v4429 = vpop.f32.mrb[0].mxu0
        %v4430 = vpop.f32.mrb[0].mxu0
        %v4431 = vadd.f32 0.0, %v4430
        %v4432 = vpop.f32.mrb[0].mxu0
        %4433 = vmatprep.mubr.bf16.mxu0 0
        %4434 = vmatmul.mubr.bf16.gmra.mrb[0].mxu0 %v4326
        %v4435 = vpop.f32.mrb[0].mxu0
        %v4436 = vadd.f32 0.0, %v4435
        %v4437 = vpop.f32.mrb[0].mxu0
        %v4438 = vpop.f32.mrb[0].mxu0
        %v4439 = vadd.f32 0.0, %v4438
        %v4440 = vpop.f32.mrb[0].mxu0
        %4441 = vmatprep.mubr.bf16.mxu0 0
        %4442 = vmatmul.mubr.bf16.gmra.mrb[0].mxu0 %v4329
        %v4443 = vpop.f32.mrb[0].mxu0
        %v4444 = vadd.f32 0.0, %v4443
        %v4445 = vpop.f32.mrb[0].mxu0
        %v4446 = vpop.f32.mrb[0].mxu0
        %v4447 = vadd.f32 0.0, %v4446
        %v4448 = vpop.f32.mrb[0].mxu0
        %4449 = vmatprep.mubr.bf16.mxu0 0
        %4450 = vmatmul.mubr.bf16.gmra.mrb[0].mxu0 %v4332
        %v4451 = vpop.f32.mrb[0].mxu0
        %v4452 = vadd.f32 0.0, %v4451
        %v4453 = vpop.f32.mrb[0].mxu0
        %v4454 = vpop.f32.mrb[0].mxu0
        %v4455 = vadd.f32 0.0, %v4454
        %v4456 = vpop.f32.mrb[0].mxu0
        %4457 = vmatprep.mubr.bf16.mxu0 0
        %4458 = vmatmul.mubr.bf16.gmra.mrb[0].mxu0 %v4335
        %v4459 = vpop.f32.mrb[0].mxu0
        %v4460 = vadd.f32 0.0, %v4459
        %v4461 = vpop.f32.mrb[0].mxu0
        %v4462 = vpop.f32.mrb[0].mxu0
        %v4463 = vadd.f32 0.0, %v4462
        %v4464 = vpop.f32.mrb[0].mxu0
        %4465 = vmatprep.mubr.bf16.mxu0 0
        %4466 = vmatmul.mubr.bf16.gmra.mrb[0].mxu0 %v4338
        %v4467 = vpop.f32.mrb[0].mxu0
        %v4468 = vadd.f32 0.0, %v4467
        %v4469 = vpop.f32.mrb[0].mxu0
        %v4470 = vpop.f32.mrb[0].mxu0
        %v4471 = vadd.f32 0.0, %v4470
        %v4472 = vpop.f32.mrb[0].mxu0
        %4473 = vmatprep.mubr.bf16.mxu0 0
        %4474 = vmatmul.mubr.bf16.gmra.mrb[0].mxu0 %v4341
        %v4475 = vpop.f32.mrb[0].mxu0
        %v4476 = vadd.f32 0.0, %v4475
        %v4477 = vpop.f32.mrb[0].mxu0
        %v4478 = vpop.f32.mrb[0].mxu0
        %v4479 = vadd.f32 0.0, %v4478
        %v4480 = vpop.f32.mrb[0].mxu0
        %4481 = vmatprep.mubr.bf16.mxu0 0
        %4482 = vmatmul.mubr.bf16.gmra.mrb[0].mxu0 %v4344
        %v4483 = vpop.f32.mrb[0].mxu0
        %v4484 = vadd.f32 0.0, %v4483
        %v4485 = vpop.f32.mrb[0].mxu0
        %v4486 = vpop.f32.mrb[0].mxu0
        %v4487 = vadd.f32 0.0, %v4486
        %v4488 = vpop.f32.mrb[0].mxu0
        %4489 = vmatprep.mubr.bf16.mxu0 0
        %4490 = vmatmul.mubr.bf16.gmra.mrb[0].mxu0 %v4347
        %v4491 = vpop.f32.mrb[0].mxu0
        %v4492 = vadd.f32 0.0, %v4491
        %v4493 = vpop.f32.mrb[0].mxu0
        %v4494 = vpop.f32.mrb[0].mxu0
        %v4495 = vadd.f32 0.0, %v4494
        %v4496 = vpop.f32.mrb[0].mxu0
        %4497 = vmatprep.mubr.bf16.mxu0 0
        %4498 = vmatmul.mubr.bf16.gmra.mrb[0].mxu0 %v4350
        %v4499 = vpop.f32.mrb[0].mxu0
        %v4500 = vadd.f32 0.0, %v4499
        %v4501 = vpop.f32.mrb[0].mxu0
        %v4502 = vpop.f32.mrb[0].mxu0
        %v4503 = vadd.f32 0.0, %v4502
        %v4504 = vpop.f32.mrb[0].mxu0
        %4505 = vmatprep.mubr.bf16.mxu0 0
        %4506 = vmatmul.mubr.bf16.gmra.mrb[0].mxu0 %v4353
        %v4507 = vpop.f32.mrb[0].mxu0
        %v4508 = vadd.f32 0.0, %v4507
        %v4509 = vpop.f32.mrb[0].mxu0
        %v4510 = vpop.f32.mrb[0].mxu0
        %v4511 = vadd.f32 0.0, %v4510
        %v4512 = vpop.f32.mrb[0].mxu0
        %4513 = vmatprep.mubr.bf16.mxu0 0
        %4514 = vmatmul.mubr.bf16.gmra.mrb[0].mxu0 %v4356
        %v4515 = vpop.f32.mrb[0].mxu0
        %v4516 = vadd.f32 0.0, %v4515
        %v4517 = vpop.f32.mrb[0].mxu0
        %v4518 = vpop.f32.mrb[0].mxu0
        %v4519 = vadd.f32 0.0, %v4518
        %v4520 = vpop.f32.mrb[0].mxu0
        %4521 = vdwg.mxu0
        %v4522 = vadd.f32 %v4102, %v4396
        %v4523 = vadd.f32 %v4103, %v4399
        %v4524 = vadd.f32 %v4104, %v4404
        %v4525 = vadd.f32 %v4105, %v4407
        %v4526 = vadd.f32 %v4106, %v4412
        %v4527 = vadd.f32 %v4107, %v4415
        %v4528 = vadd.f32 %v4108, %v4420
        %v4529 = vadd.f32 %v4109, %v4423
        %v4530 = vadd.f32 %v4110, %v4428
        %v4531 = vadd.f32 %v4111, %v4431
        %v4532 = vadd.f32 %v4112, %v4436
        %v4533 = vadd.f32 %v4113, %v4439
        %v4534 = vadd.f32 %v4114, %v4444
        %v4535 = vadd.f32 %v4115, %v4447
        %v4536 = vadd.f32 %v4116, %v4452
        %v4537 = vadd.f32 %v4117, %v4455
        %v4538 = vadd.f32 %v4118, %v4460
        %v4539 = vadd.f32 %v4119, %v4463
        %v4540 = vadd.f32 %v4120, %v4468
        %v4541 = vadd.f32 %v4121, %v4471
        %v4542 = vadd.f32 %v4122, %v4476
        %v4543 = vadd.f32 %v4123, %v4479
        %v4544 = vadd.f32 %v4124, %v4484
        %v4545 = vadd.f32 %v4125, %v4487
        %v4546 = vadd.f32 %v4126, %v4492
        %v4547 = vadd.f32 %v4127, %v4495
        %v4548 = vadd.f32 %v4128, %v4500
        %v4549 = vadd.f32 %v4129, %v4503
        %v4550 = vadd.f32 %v4130, %v4508
        %v4551 = vadd.f32 %v4131, %v4511
        %v4552 = vadd.f32 %v4132, %v4516
        %v4553 = vadd.f32 %v4133, %v4519
        %v4554 = vld [vmem:[%s2] sm:$0x1]
        %v4556 = vlaneseq
        %v4557 = vshrl.u32 %v4556, 7
        %v4558 = vsub.s32 0, %v4557
        %v4559 = vrot.slane %v4554, %v4558
        %v4561 = vadd.f32 %v4522, %v4559
        %v4562 = vadd.f32 %v4523, %v4559
        %v4563 = vadd.f32 %v4524, %v4559
        %v4564 = vadd.f32 %v4525, %v4559
        %v4565 = vadd.f32 %v4526, %v4559
        %v4566 = vadd.f32 %v4527, %v4559
        %v4567 = vadd.f32 %v4528, %v4559
        %v4568 = vadd.f32 %v4529, %v4559
        %v4569 = vadd.f32 %v4530, %v4559
        %v4570 = vadd.f32 %v4531, %v4559
        %v4571 = vadd.f32 %v4532, %v4559
        %v4572 = vadd.f32 %v4533, %v4559
        %v4573 = vadd.f32 %v4534, %v4559
        %v4574 = vadd.f32 %v4535, %v4559
        %v4575 = vadd.f32 %v4536, %v4559
        %v4576 = vadd.f32 %v4537, %v4559
        %v4577 = vadd.f32 %v4538, %v4559
        %v4578 = vadd.f32 %v4539, %v4559
        %v4579 = vadd.f32 %v4540, %v4559
        %v4580 = vadd.f32 %v4541, %v4559
        %v4581 = vadd.f32 %v4542, %v4559
        %v4582 = vadd.f32 %v4543, %v4559
        %v4583 = vadd.f32 %v4544, %v4559
        %v4584 = vadd.f32 %v4545, %v4559
        %v4585 = vadd.f32 %v4546, %v4559
        %v4586 = vadd.f32 %v4547, %v4559
        %v4587 = vadd.f32 %v4548, %v4559
        %v4588 = vadd.f32 %v4549, %v4559
        %v4589 = vadd.f32 %v4550, %v4559
        %v4590 = vadd.f32 %v4551, %v4559
        %v4591 = vadd.f32 %v4552, %v4559
        %v4592 = vadd.f32 %v4553, %v4559
        %4593 = vxpose.xlu0.b32.start [1/16] %v4561, 128
        %4594 = vxpose.xlu0.b32.cont [2/16] %v4562, 128
        %4595 = vxpose.xlu0.b32.cont [3/16] %v4563, 128
        %4596 = vxpose.xlu0.b32.cont [4/16] %v4564, 128
        %4597 = vxpose.xlu0.b32.cont [5/16] %v4565, 128
        %4598 = vxpose.xlu0.b32.cont [6/16] %v4566, 128
        %4599 = vxpose.xlu0.b32.cont [7/16] %v4567, 128
        %4600 = vxpose.xlu0.b32.cont [8/16] %v4568, 128
        %4601 = vxpose.xlu0.b32.cont [9/16] %v4569, 128
        %4602 = vxpose.xlu0.b32.cont [10/16] %v4570, 128
        %4603 = vxpose.xlu0.b32.cont [11/16] %v4571, 128
        %4604 = vxpose.xlu0.b32.cont [12/16] %v4572, 128
        %4605 = vxpose.xlu0.b32.cont [13/16] %v4573, 128
        %4606 = vxpose.xlu0.b32.cont [14/16] %v4574, 128
        %4607 = vxpose.xlu0.b32.cont [15/16] %v4575, 128
        %4608 = vxpose.xlu0.b32.end [16/16] %v4576, 128
        %v4609 = vpop.trf.xlu0
        %v4610 = vpop.trf.xlu0
        %v4611 = vpop.trf.xlu0
        %v4612 = vpop.trf.xlu0
        %v4613 = vpop.trf.xlu0
        %v4614 = vpop.trf.xlu0
        %v4615 = vpop.trf.xlu0
        %v4616 = vpop.trf.xlu0
        %v4617 = vpop.trf.xlu0
        %v4618 = vpop.trf.xlu0
        %v4619 = vpop.trf.xlu0
        %v4620 = vpop.trf.xlu0
        %v4621 = vpop.trf.xlu0
        %v4622 = vpop.trf.xlu0
        %v4623 = vpop.trf.xlu0
        %v4624 = vpop.trf.xlu0
        %4625 = vxpose.xlu0.b32.start [1/16] %v4577, 128
        %4626 = vxpose.xlu0.b32.cont [2/16] %v4578, 128
        %4627 = vxpose.xlu0.b32.cont [3/16] %v4579, 128
        %4628 = vxpose.xlu0.b32.cont [4/16] %v4580, 128
        %4629 = vxpose.xlu0.b32.cont [5/16] %v4581, 128
        %4630 = vxpose.xlu0.b32.cont [6/16] %v4582, 128
        %4631 = vxpose.xlu0.b32.cont [7/16] %v4583, 128
        %4632 = vxpose.xlu0.b32.cont [8/16] %v4584, 128
        %4633 = vxpose.xlu0.b32.cont [9/16] %v4585, 128
        %4634 = vxpose.xlu0.b32.cont [10/16] %v4586, 128
        %4635 = vxpose.xlu0.b32.cont [11/16] %v4587, 128
        %4636 = vxpose.xlu0.b32.cont [12/16] %v4588, 128
        %4637 = vxpose.xlu0.b32.cont [13/16] %v4589, 128
        %4638 = vxpose.xlu0.b32.cont [14/16] %v4590, 128
        %4639 = vxpose.xlu0.b32.cont [15/16] %v4591, 128
        %4640 = vxpose.xlu0.b32.end [16/16] %v4592, 128
        %v4641 = vpop.trf.xlu0
        %v4642 = vpop.trf.xlu0
        %v4643 = vpop.trf.xlu0
        %v4644 = vpop.trf.xlu0
        %v4645 = vpop.trf.xlu0
        %v4646 = vpop.trf.xlu0
        %v4647 = vpop.trf.xlu0
        %v4648 = vpop.trf.xlu0
        %v4649 = vpop.trf.xlu0
        %v4650 = vpop.trf.xlu0
        %v4651 = vpop.trf.xlu0
        %v4652 = vpop.trf.xlu0
        %v4653 = vpop.trf.xlu0
        %v4654 = vpop.trf.xlu0
        %v4655 = vpop.trf.xlu0
        %v4656 = vpop.trf.xlu0
        %4657 = vst [vmem:[%s177] sm:$0xff] %v4609
        %4658 = vst [vmem:[%s177 + $0x8] sm:$0xff] %v4641
        %s4659 = sand.u32 %s107, 1
        %s4660 = scalar_lea.sflag [#allocation3], %s4659
        %s4661 = sand.u32 %s107, 1
        %s4662 = smul.addr %s4661, 16
        %s4663 = scalar_lea.vmem [#allocation2], %s4662
        // Predicated region
        $region33: #{tpu_custom_call.1} parent=31 // pred_check
          %p4664 = pneg %p117
        $region34: #{tpu_custom_call.1} parent=31 // pred_check_branch
          %4666 = sbr.rel (%p4664) target = $region36
        $region35: #{tpu_custom_call.1} parent=31 // pred_region
          %s4667 = smul.u32 2, %s22
          %s4669 = ssub.s32 256, 256
          %4670 = vsyncadd %s4660, %s4669
          %s4671 = smul.addr %s21, 2
          %s4672 = sadd.s32 %s4667, %s4671
          %s4673 = smul.addr %s4672, 128
          %s4674 = scalar_lea.hbm %s3, %s4673
          %s4676 = sshll.u32 %s4663, 4
          %s4677 = int_to_ptr.vmem [resolvable:$true] %s4676
          %4679 = dma.vmem_to_hbm [thread:$0]  %s4677, 256, %s4674, %s4660
        $region36: #{tpu_custom_call.1} parent=31 // pred_fallthru
          _
      $region32: #{tpu_custom_call.1} parent=5 // pred_fallthru
        _
      %p4680 = scmp.le.s32.totalorder 2, %s12
      // Predicated region
      $region37: #{tpu_custom_call.1} parent=5 // pred_check
        %p4681 = pneg %p4680
      $region38: #{tpu_custom_call.1} parent=5 // pred_check_branch
        %4683 = sbr.rel (%p4681) target = $region40
      $region39: #{tpu_custom_call.1} parent=5 // pred_region
        %s4684 = ssub.s32 %s12, 2
        // Predicated region
        $region41: #{tpu_custom_call.1} parent=39 // pred_check
          %p4685 = pneg %p123
        $region42: #{tpu_custom_call.1} parent=39 // pred_check_branch
          %4687 = sbr.rel (%p4685) target = $region44
        $region43: #{tpu_custom_call.1} parent=39 // pred_region
          %s4688 = sand.u32 %s108, 1
          %s4689 = scalar_lea.sflag [#allocation3], %s4688
          %s4690 = sand.u32 %s108, 1
          %s4691 = smul.addr %s4690, 16
          %s4692 = scalar_lea.vmem [#allocation2], %s4691
          %4693 = dma.done %s4689, 256
        $region44: #{tpu_custom_call.1} parent=39 // pred_fallthru
          _
      $region40: #{tpu_custom_call.1} parent=5 // pred_fallthru
        _
    $region6: #{tpu_custom_call.1} parent=1 // loop_footer
      %s16 = sadd.s32 1, %s12
    $region7: #{tpu_custom_call.1} parent=1 // loop_footer_branch
      %11 = sbr.rel target = $region3
    $region8: #{tpu_custom_call.1} parent=1 // loop_exit
      _
    %4694 = vsyncpa [#allocation3], 1
    %s4695 = scalar_lea.sflag [#allocation3], 1
    %4696 = vsyncpa %s4695, 1

</llo_original>
